<compile_context>
chip_gen: v5e
topology: v5e:2x2
jax: 0.10.0
libtpu: 0.0.40
codegen_flags: <defaults>
</compile_context>

<pallas_src>
import functools

import jax
import jax.numpy as jnp
from jax.experimental import pallas as pl
from jax.experimental.pallas import tpu as pltpu

EPS = 1e-5  # nn.InstanceNorm2d default
# > 16/32 MiB scoped defaults, 24 MiB headroom under v7x's 64 MiB physical VMEM.
VMEM_LIMIT = 40 * 1024 * 1024


# --------------------------------------------------------------------------
# Shared in-kernel helpers
# --------------------------------------------------------------------------
def _instance_norm_relu(acc, n_pix):
    """Fused InstanceNorm(affine=False) + ReLU on an (n_pix, C) f32 tile.

    Single pass: sum and sum-of-squares together, biased variance clamped at 0.
    """
    inv_n = 1.0 / float(n_pix)
    s = jnp.sum(acc, axis=0, keepdims=True)            # (1, C)
    sq = jnp.sum(acc * acc, axis=0, keepdims=True)     # (1, C)
    mean = s * inv_n
    var = jnp.maximum(sq * inv_n - mean * mean, 0.0)
    y = (acc - mean) * jax.lax.rsqrt(var + EPS)
    return jnp.maximum(y, 0.0)                          # ReLU


def _pad_halo(xpad_ref, x_ref):
    """Zero only the 1-px halo ring, then write the interior (bf16, no casts).

    Re-done every grid step so behaviour does not depend on how the "parallel"
    batch axis is split across cores (scratch is per-core, uninitialized).
    """
    H, W, Cin = x_ref.shape[1], x_ref.shape[2], x_ref.shape[3]
    zrow = jnp.zeros((1, W + 2, Cin), xpad_ref.dtype)
    xpad_ref[0:1, :, :] = zrow                      # top halo row
    xpad_ref[H + 1:H + 2, :, :] = zrow              # bottom halo row
    zcol = jnp.zeros((H, 1, Cin), xpad_ref.dtype)
    xpad_ref[1:H + 1, 0:1, :] = zcol                # left halo column
    xpad_ref[1:H + 1, W + 1:W + 2, :] = zcol        # right halo column
    xpad_ref[1:H + 1, 1:W + 1, :] = x_ref[0]        # interior (already bf16)


def _conv3x3_acc(xpad_ref, w_ref, H, W, Cin, Cout):
    """3x3 conv accumulation in f32.  w_ref: (9, Cin, Cout) bf16, (ky*3+kx) major."""

    def tap(ky, kx):
        return xpad_ref[ky:ky + H, kx:kx + W, :].reshape(H * W, Cin)  # bf16

    if Cin >= 32:
        # Large Cin: one im2col matmul, K = 9*Cin >= 288 fills MXU depth.
        col = jnp.concatenate(
            [tap(ky, kx) for ky in range(3) for kx in range(3)], axis=-1)
        return jnp.dot(col, w_ref[...].reshape(9 * Cin, Cout),
                       preferred_element_type=jnp.float32)

    # Small Cin: per-tap accumulation straight off the padded scratch.
    # Avoids the 9x-sized im2col materialization; these layers are
    # memory/VPU-bound so the 9 small MXU issues are hidden anyway.
    acc = jnp.dot(tap(0, 0), w_ref[0], preferred_element_type=jnp.float32)
    for t in range(1, 9):
        acc = acc + jnp.dot(tap(t // 3, t % 3), w_ref[t],
                            preferred_element_type=jnp.float32)
    return acc


# --------------------------------------------------------------------------
# Kernels
# --------------------------------------------------------------------------
def conv3x3_in_relu_kernel(x_ref, w_ref, o_ref, xpad_ref):
    """3x3 conv (pad=1, no bias) + InstanceNorm + ReLU for one batch element.

    x_ref:    (1, H, W, Cin)    bf16 NHWC input block
    w_ref:    (9, Cin, Cout)    bf16 weights, tap-major (ky*3+kx)
    o_ref:    (1, H, W, Cout)   bf16 output block
    xpad_ref: (H+2, W+2, Cin)   bf16 VMEM scratch for the in-kernel halo
    """
    H, W, Cout = o_ref.shape[1], o_ref.shape[2], o_ref.shape[3]
    Cin = x_ref.shape[3]

    _pad_halo(xpad_ref, x_ref)
    acc = _conv3x3_acc(xpad_ref, w_ref, H, W, Cin, Cout)
    y = _instance_norm_relu(acc, H * W)
    o_ref[0] = y.reshape(H, W, Cout).astype(o_ref.dtype)


def down2x2_in_relu_kernel(x_ref, w_ref, o_ref):
    """2x2 stride-2 conv (no bias) + InstanceNorm + ReLU for one batch element.

    x_ref: (1, Ho, 2, Wo, 2*C)  bf16; row-major reshape of (1, H, W, C), so
                                 [0, ho, ky, wo, kx*C+c] == x[2ho+ky, 2wo+kx, c]
    w_ref: (2, 2*C, Cout)        bf16; w_hwio[ky, kx, ci, :] at [ky, kx*C+ci, :]
    o_ref: (1, Ho, Wo, Cout)     bf16
    """
    Ho, Wo, Cout = o_ref.shape[1], o_ref.shape[2], o_ref.shape[3]
    K = x_ref.shape[4]  # 2*C

    acc = jnp.dot(x_ref[0, :, 0, :, :].reshape(Ho * Wo, K), w_ref[0],
                  preferred_element_type=jnp.float32)
    acc = acc + jnp.dot(x_ref[0, :, 1, :, :].reshape(Ho * Wo, K), w_ref[1],
                        preferred_element_type=jnp.float32)

    y = _instance_norm_relu(acc, Ho * Wo)
    o_ref[0] = y.reshape(Ho, Wo, Cout).astype(o_ref.dtype)


# --------------------------------------------------------------------------
# Wrappers (pallas_call plumbing; only free/metadata-level layout glue here)
# --------------------------------------------------------------------------
def conv3x3_block(x_nhwc, w_hwio):
    N, H, W, Cin = x_nhwc.shape
    Cout = w_hwio.shape[-1]
    w_taps = w_hwio.astype(jnp.bfloat16).reshape(9, Cin, Cout)  # (ky*3+kx, ci, co)
    return pl.pallas_call(
        conv3x3_in_relu_kernel,
        out_shape=jax.ShapeDtypeStruct((N, H, W, Cout), jnp.bfloat16),
        grid=(N,),
        in_specs=[
            pl.BlockSpec((1, H, W, Cin), lambda n: (n, 0, 0, 0)),
            pl.BlockSpec((9, Cin, Cout), lambda n: (0, 0, 0)),
        ],
        out_specs=pl.BlockSpec((1, H, W, Cout), lambda n: (n, 0, 0, 0)),
        scratch_shapes=[pltpu.VMEM((H + 2, W + 2, Cin), jnp.bfloat16)],
        compiler_params=pltpu.CompilerParams(
            dimension_semantics=("parallel",),
            vmem_limit_bytes=VMEM_LIMIT),
    )(x_nhwc, w_taps)


def down2x2_block(x_nhwc, w_hwio):
    N, H, W, C = x_nhwc.shape
    Cout = w_hwio.shape[-1]
    # PyTorch stride-2 k=2 conv silently drops a trailing odd row/col.
    Ho, Wo = H // 2, W // 2
    x_nhwc = x_nhwc[:, :2 * Ho, :2 * Wo, :]
    # Space-to-depth without any transpose: a contiguous row-major reshape in
    # HBM (no data movement).  [n, ho, ky, wo, kx*C+c] == x[n, 2ho+ky, 2wo+kx, c]
    xs = x_nhwc.reshape(N, Ho, 2, Wo, 2 * C)
    wf = w_hwio.astype(jnp.bfloat16).reshape(2, 2 * C, Cout)    # (ky, kx*C+ci, co)
    return pl.pallas_call(
        down2x2_in_relu_kernel,
        out_shape=jax.ShapeDtypeStruct((N, Ho, Wo, Cout), jnp.bfloat16),
        grid=(N,),
        in_specs=[
            pl.BlockSpec((1, Ho, 2, Wo, 2 * C), lambda n: (n, 0, 0, 0, 0)),
            pl.BlockSpec((2, 2 * C, Cout), lambda n: (0, 0, 0)),
        ],
        out_specs=pl.BlockSpec((1, Ho, Wo, Cout), lambda n: (n, 0, 0, 0)),
        compiler_params=pltpu.CompilerParams(
            dimension_semantics=("parallel",),
            vmem_limit_bytes=VMEM_LIMIT),
    )(xs, wf)


# --------------------------------------------------------------------------
# Model construction / forward
# --------------------------------------------------------------------------
def build_params(cfg, c_dim, key):
    """Deterministic synthetic weights matching build_downsample shapes."""
    kinds, weights = [], []
    in_channels = 3 + c_dim
    for v in cfg:
        key, sub = jax.random.split(key)
        if v == 'M':
            w = 0.1 * jax.random.normal(
                sub, (2, 2, in_channels, in_channels), jnp.float32)
            kinds.append('down')
        else:
            w = 0.1 * jax.random.normal(
                sub, (3, 3, in_channels, v), jnp.float32)
            kinds.append('conv3')
            in_channels = v
        weights.append(w)
    return tuple(kinds), tuple(weights)


@functools.partial(jax.jit, static_argnames=("kinds",))
def pallas_forward(x_nchw, weights, kinds):
    # NCHW -> NHWC; bf16 inter-layer activations (f32 accumulation in-kernel).
    x = jnp.transpose(x_nchw, (0, 2, 3, 1)).astype(jnp.bfloat16)
    for kind, w in zip(kinds, weights):
        if kind == 'conv3':
            x = conv3x3_block(x, w)
        else:
            x = down2x2_block(x, w)
    return jnp.transpose(x, (0, 3, 1, 2)).astype(jnp.float32)  # NHWC -> NCHW


def reference_forward(x_nchw, weights, kinds):
    """Pure-JAX reference mirroring the kernels' bf16 casts, for verification."""
    x = jnp.transpose(x_nchw, (0, 2, 3, 1)).astype(jnp.bfloat16)
    dn = ('NHWC', 'HWIO', 'NHWC')
    for kind, w in zip(kinds, weights):
        wb = w.astype(jnp.bfloat16)
        if kind == 'conv3':
            y = jax.lax.conv_general_dilated(
                x, wb, (1, 1), ((1, 1), (1, 1)), dimension_numbers=dn,
                preferred_element_type=jnp.float32)
        else:
            H, W = x.shape[1], x.shape[2]
            y = jax.lax.conv_general_dilated(
                x[:, :2 * (H // 2), :2 * (W // 2), :], wb, (2, 2), 'VALID',
                dimension_numbers=dn, preferred_element_type=jnp.float32)
        mean = jnp.mean(y, axis=(1, 2), keepdims=True)
        var = jnp.var(y, axis=(1, 2), keepdims=True)
        y = (y - mean) * jax.lax.rsqrt(var + EPS)
        x = jnp.maximum(y, 0.0).astype(jnp.bfloat16)
    return jnp.transpose(x, (0, 3, 1, 2)).astype(jnp.float32)


if __name__ == "__main__":
    # Small config consistent with the module: c_dim=1 -> in_channels = 3+1 = 4.
    cfg = [8, 'M', 16, 'M']
    c_dim = 1

    key = jax.random.PRNGKey(0)
    key, xkey, wkey = jax.random.split(key, 3)

    x = jax.random.normal(xkey, (2, 3 + c_dim, 16, 16), jnp.float32)  # NCHW
    kinds, weights = build_params(cfg, c_dim, wkey)

    out = pallas_forward(x, weights, kinds=kinds)
    out = jax.block_until_ready(out)

    ref = reference_forward(x, weights, kinds)
    assert out.shape == (2, 16, 4, 4), out.shape
    max_err = float(jnp.max(jnp.abs(out - ref)))
    assert jnp.allclose(out, ref, rtol=5e-2, atol=5e-2), max_err

    print("KERNEL_OK")
</pallas_src>

<mosaic_0001>
module attributes {stable_mosaic.version = 11 : i64} {
  func.func @conv3x3_in_relu_kernel(%arg0: i32, %arg1: memref<1x16x16x4xbf16, #tpu.memory_space<vmem>>, %arg2: memref<9x4x8xbf16, #tpu.memory_space<vmem>>, %arg3: memref<1x16x16x8xbf16, #tpu.memory_space<vmem>>, %arg4: memref<18x18x4xbf16, #tpu.memory_space<vmem>>) attributes {dimension_semantics = [#tpu.dimension_semantics<parallel>], iteration_bounds = array<i64: 2>, scalar_prefetch = 0 : i64, scratch_operands = 1 : i64, tpu.core_type = #tpu.core_type<tc>, window_params = [{transform_indices = @transform_0, window_bounds = array<i64: 1, 16, 16, 4>}, {pipeline_mode = #tpu.pipeline_mode<synchronous>, transform_indices = @transform_1, window_bounds = array<i64: 9, 4, 8>}, {transform_indices = @transform_2, window_bounds = array<i64: 1, 16, 16, 8>}]} {
    %cst = arith.constant 0.000000e+00 : bf16
    %0 = vector.broadcast %cst : bf16 to vector<1x18x4xbf16>
    %c0 = arith.constant 0 : index
    %c0_0 = arith.constant 0 : index
    %c0_1 = arith.constant 0 : index
    %1 = vector.load %arg4[%c0, %c0_0, %c0_1] : memref<18x18x4xbf16, #tpu.memory_space<vmem>>, vector<1x18x4xbf16>
    tpu.vector_store %arg4[%c0, %c0_0, %c0_1], %0 {strides = array<i32>} : memref<18x18x4xbf16, #tpu.memory_space<vmem>>, vector<1x18x4xbf16>,
    %c17 = arith.constant 17 : index
    %c0_2 = arith.constant 0 : index
    %c0_3 = arith.constant 0 : index
    %2 = vector.load %arg4[%c17, %c0_2, %c0_3] : memref<18x18x4xbf16, #tpu.memory_space<vmem>>, vector<1x18x4xbf16>
    tpu.vector_store %arg4[%c17, %c0_2, %c0_3], %0 {strides = array<i32>} : memref<18x18x4xbf16, #tpu.memory_space<vmem>>, vector<1x18x4xbf16>,
    %cst_4 = arith.constant 0.000000e+00 : bf16
    %3 = vector.broadcast %cst_4 : bf16 to vector<16x1x4xbf16>
    %c1 = arith.constant 1 : index
    %c0_5 = arith.constant 0 : index
    %c0_6 = arith.constant 0 : index
    %4 = vector.load %arg4[%c1, %c0_5, %c0_6] : memref<18x18x4xbf16, #tpu.memory_space<vmem>>, vector<16x1x4xbf16>
    tpu.vector_store %arg4[%c1, %c0_5, %c0_6], %3 {strides = array<i32>} : memref<18x18x4xbf16, #tpu.memory_space<vmem>>, vector<16x1x4xbf16>,
    %c1_7 = arith.constant 1 : index
    %c17_8 = arith.constant 17 : index
    %c0_9 = arith.constant 0 : index
    %5 = vector.load %arg4[%c1_7, %c17_8, %c0_9] : memref<18x18x4xbf16, #tpu.memory_space<vmem>>, vector<16x1x4xbf16>
    tpu.vector_store %arg4[%c1_7, %c17_8, %c0_9], %3 {strides = array<i32>} : memref<18x18x4xbf16, #tpu.memory_space<vmem>>, vector<16x1x4xbf16>,
    %c0_10 = arith.constant 0 : index
    %c0_11 = arith.constant 0 : index
    %c0_12 = arith.constant 0 : index
    %c0_13 = arith.constant 0 : index
    %6 = vector.load %arg1[%c0_10, %c0_11, %c0_12, %c0_13] : memref<1x16x16x4xbf16, #tpu.memory_space<vmem>>, vector<1x16x16x4xbf16>
    %7 = vector.shape_cast %6 : vector<1x16x16x4xbf16> to vector<16x16x4xbf16>
    %c1_14 = arith.constant 1 : index
    %c1_15 = arith.constant 1 : index
    %c0_16 = arith.constant 0 : index
    %8 = vector.load %arg4[%c1_14, %c1_15, %c0_16] : memref<18x18x4xbf16, #tpu.memory_space<vmem>>, vector<16x16x4xbf16>
    tpu.vector_store %arg4[%c1_14, %c1_15, %c0_16], %7 {strides = array<i32>} : memref<18x18x4xbf16, #tpu.memory_space<vmem>>, vector<16x16x4xbf16>,
    %c0_17 = arith.constant 0 : index
    %c0_18 = arith.constant 0 : index
    %c0_19 = arith.constant 0 : index
    %9 = vector.load %arg4[%c0_17, %c0_18, %c0_19] : memref<18x18x4xbf16, #tpu.memory_space<vmem>>, vector<16x16x4xbf16>
    %10 = vector.shape_cast %9 : vector<16x16x4xbf16> to vector<256x4xbf16>
    %c0_20 = arith.constant 0 : index
    %c0_21 = arith.constant 0 : index
    %c0_22 = arith.constant 0 : index
    %11 = vector.load %arg2[%c0_20, %c0_21, %c0_22] : memref<9x4x8xbf16, #tpu.memory_space<vmem>>, vector<1x4x8xbf16>
    %12 = vector.shape_cast %11 : vector<1x4x8xbf16> to vector<4x8xbf16>
    %cst_23 = arith.constant dense<0.000000e+00> : vector<256x8xf32>
    %13 = tpu.matmul %10, %12, %cst_23 {dimension_numbers = #tpu.dot_dimension_numbers<[1], [0], [0], [1], [0, 0, 1, 1], [], []>} : vector<256x4xbf16>, vector<4x8xbf16>, vector<256x8xf32> -> vector<256x8xf32>
    %c0_24 = arith.constant 0 : index
    %c1_25 = arith.constant 1 : index
    %c0_26 = arith.constant 0 : index
    %14 = vector.load %arg4[%c0_24, %c1_25, %c0_26] : memref<18x18x4xbf16, #tpu.memory_space<vmem>>, vector<16x16x4xbf16>
    %15 = vector.shape_cast %14 : vector<16x16x4xbf16> to vector<256x4xbf16>
    %c1_27 = arith.constant 1 : index
    %c0_28 = arith.constant 0 : index
    %c0_29 = arith.constant 0 : index
    %16 = vector.load %arg2[%c1_27, %c0_28, %c0_29] : memref<9x4x8xbf16, #tpu.memory_space<vmem>>, vector<1x4x8xbf16>
    %17 = vector.shape_cast %16 : vector<1x4x8xbf16> to vector<4x8xbf16>
    %cst_30 = arith.constant dense<0.000000e+00> : vector<256x8xf32>
    %18 = tpu.matmul %15, %17, %cst_30 {dimension_numbers = #tpu.dot_dimension_numbers<[1], [0], [0], [1], [0, 0, 1, 1], [], []>} : vector<256x4xbf16>, vector<4x8xbf16>, vector<256x8xf32> -> vector<256x8xf32>
    %19 = arith.addf %13, %18 : vector<256x8xf32>
    %c0_31 = arith.constant 0 : index
    %c2 = arith.constant 2 : index
    %c0_32 = arith.constant 0 : index
    %20 = vector.load %arg4[%c0_31, %c2, %c0_32] : memref<18x18x4xbf16, #tpu.memory_space<vmem>>, vector<16x16x4xbf16>
    %21 = vector.shape_cast %20 : vector<16x16x4xbf16> to vector<256x4xbf16>
    %c2_33 = arith.constant 2 : index
    %c0_34 = arith.constant 0 : index
    %c0_35 = arith.constant 0 : index
    %22 = vector.load %arg2[%c2_33, %c0_34, %c0_35] : memref<9x4x8xbf16, #tpu.memory_space<vmem>>, vector<1x4x8xbf16>
    %23 = vector.shape_cast %22 : vector<1x4x8xbf16> to vector<4x8xbf16>
    %cst_36 = arith.constant dense<0.000000e+00> : vector<256x8xf32>
    %24 = tpu.matmul %21, %23, %cst_36 {dimension_numbers = #tpu.dot_dimension_numbers<[1], [0], [0], [1], [0, 0, 1, 1], [], []>} : vector<256x4xbf16>, vector<4x8xbf16>, vector<256x8xf32> -> vector<256x8xf32>
    %25 = arith.addf %19, %24 : vector<256x8xf32>
    %c1_37 = arith.constant 1 : index
    %c0_38 = arith.constant 0 : index
    %c0_39 = arith.constant 0 : index
    %26 = vector.load %arg4[%c1_37, %c0_38, %c0_39] : memref<18x18x4xbf16, #tpu.memory_space<vmem>>, vector<16x16x4xbf16>
    %27 = vector.shape_cast %26 : vector<16x16x4xbf16> to vector<256x4xbf16>
    %c3 = arith.constant 3 : index
    %c0_40 = arith.constant 0 : index
    %c0_41 = arith.constant 0 : index
    %28 = vector.load %arg2[%c3, %c0_40, %c0_41] : memref<9x4x8xbf16, #tpu.memory_space<vmem>>, vector<1x4x8xbf16>
    %29 = vector.shape_cast %28 : vector<1x4x8xbf16> to vector<4x8xbf16>
    %cst_42 = arith.constant dense<0.000000e+00> : vector<256x8xf32>
    %30 = tpu.matmul %27, %29, %cst_42 {dimension_numbers = #tpu.dot_dimension_numbers<[1], [0], [0], [1], [0, 0, 1, 1], [], []>} : vector<256x4xbf16>, vector<4x8xbf16>, vector<256x8xf32> -> vector<256x8xf32>
    %31 = arith.addf %25, %30 : vector<256x8xf32>
    %c1_43 = arith.constant 1 : index
    %c1_44 = arith.constant 1 : index
    %c0_45 = arith.constant 0 : index
    %32 = vector.load %arg4[%c1_43, %c1_44, %c0_45] : memref<18x18x4xbf16, #tpu.memory_space<vmem>>, vector<16x16x4xbf16>
    %33 = vector.shape_cast %32 : vector<16x16x4xbf16> to vector<256x4xbf16>
    %c4 = arith.constant 4 : index
    %c0_46 = arith.constant 0 : index
    %c0_47 = arith.constant 0 : index
    %34 = vector.load %arg2[%c4, %c0_46, %c0_47] : memref<9x4x8xbf16, #tpu.memory_space<vmem>>, vector<1x4x8xbf16>
    %35 = vector.shape_cast %34 : vector<1x4x8xbf16> to vector<4x8xbf16>
    %cst_48 = arith.constant dense<0.000000e+00> : vector<256x8xf32>
    %36 = tpu.matmul %33, %35, %cst_48 {dimension_numbers = #tpu.dot_dimension_numbers<[1], [0], [0], [1], [0, 0, 1, 1], [], []>} : vector<256x4xbf16>, vector<4x8xbf16>, vector<256x8xf32> -> vector<256x8xf32>
    %37 = arith.addf %31, %36 : vector<256x8xf32>
    %c1_49 = arith.constant 1 : index
    %c2_50 = arith.constant 2 : index
    %c0_51 = arith.constant 0 : index
    %38 = vector.load %arg4[%c1_49, %c2_50, %c0_51] : memref<18x18x4xbf16, #tpu.memory_space<vmem>>, vector<16x16x4xbf16>
    %39 = vector.shape_cast %38 : vector<16x16x4xbf16> to vector<256x4xbf16>
    %c5 = arith.constant 5 : index
    %c0_52 = arith.constant 0 : index
    %c0_53 = arith.constant 0 : index
    %40 = vector.load %arg2[%c5, %c0_52, %c0_53] : memref<9x4x8xbf16, #tpu.memory_space<vmem>>, vector<1x4x8xbf16>
    %41 = vector.shape_cast %40 : vector<1x4x8xbf16> to vector<4x8xbf16>
    %cst_54 = arith.constant dense<0.000000e+00> : vector<256x8xf32>
    %42 = tpu.matmul %39, %41, %cst_54 {dimension_numbers = #tpu.dot_dimension_numbers<[1], [0], [0], [1], [0, 0, 1, 1], [], []>} : vector<256x4xbf16>, vector<4x8xbf16>, vector<256x8xf32> -> vector<256x8xf32>
    %43 = arith.addf %37, %42 : vector<256x8xf32>
    %c2_55 = arith.constant 2 : index
    %c0_56 = arith.constant 0 : index
    %c0_57 = arith.constant 0 : index
    %44 = vector.load %arg4[%c2_55, %c0_56, %c0_57] : memref<18x18x4xbf16, #tpu.memory_space<vmem>>, vector<16x16x4xbf16>
    %45 = vector.shape_cast %44 : vector<16x16x4xbf16> to vector<256x4xbf16>
    %c6 = arith.constant 6 : index
    %c0_58 = arith.constant 0 : index
    %c0_59 = arith.constant 0 : index
    %46 = vector.load %arg2[%c6, %c0_58, %c0_59] : memref<9x4x8xbf16, #tpu.memory_space<vmem>>, vector<1x4x8xbf16>
    %47 = vector.shape_cast %46 : vector<1x4x8xbf16> to vector<4x8xbf16>
    %cst_60 = arith.constant dense<0.000000e+00> : vector<256x8xf32>
    %48 = tpu.matmul %45, %47, %cst_60 {dimension_numbers = #tpu.dot_dimension_numbers<[1], [0], [0], [1], [0, 0, 1, 1], [], []>} : vector<256x4xbf16>, vector<4x8xbf16>, vector<256x8xf32> -> vector<256x8xf32>
    %49 = arith.addf %43, %48 : vector<256x8xf32>
    %c2_61 = arith.constant 2 : index
    %c1_62 = arith.constant 1 : index
    %c0_63 = arith.constant 0 : index
    %50 = vector.load %arg4[%c2_61, %c1_62, %c0_63] : memref<18x18x4xbf16, #tpu.memory_space<vmem>>, vector<16x16x4xbf16>
    %51 = vector.shape_cast %50 : vector<16x16x4xbf16> to vector<256x4xbf16>
    %c7 = arith.constant 7 : index
    %c0_64 = arith.constant 0 : index
    %c0_65 = arith.constant 0 : index
    %52 = vector.load %arg2[%c7, %c0_64, %c0_65] : memref<9x4x8xbf16, #tpu.memory_space<vmem>>, vector<1x4x8xbf16>
    %53 = vector.shape_cast %52 : vector<1x4x8xbf16> to vector<4x8xbf16>
    %cst_66 = arith.constant dense<0.000000e+00> : vector<256x8xf32>
    %54 = tpu.matmul %51, %53, %cst_66 {dimension_numbers = #tpu.dot_dimension_numbers<[1], [0], [0], [1], [0, 0, 1, 1], [], []>} : vector<256x4xbf16>, vector<4x8xbf16>, vector<256x8xf32> -> vector<256x8xf32>
    %55 = arith.addf %49, %54 : vector<256x8xf32>
    %c2_67 = arith.constant 2 : index
    %c2_68 = arith.constant 2 : index
    %c0_69 = arith.constant 0 : index
    %56 = vector.load %arg4[%c2_67, %c2_68, %c0_69] : memref<18x18x4xbf16, #tpu.memory_space<vmem>>, vector<16x16x4xbf16>
    %57 = vector.shape_cast %56 : vector<16x16x4xbf16> to vector<256x4xbf16>
    %c8 = arith.constant 8 : index
    %c0_70 = arith.constant 0 : index
    %c0_71 = arith.constant 0 : index
    %58 = vector.load %arg2[%c8, %c0_70, %c0_71] : memref<9x4x8xbf16, #tpu.memory_space<vmem>>, vector<1x4x8xbf16>
    %59 = vector.shape_cast %58 : vector<1x4x8xbf16> to vector<4x8xbf16>
    %cst_72 = arith.constant dense<0.000000e+00> : vector<256x8xf32>
    %60 = tpu.matmul %57, %59, %cst_72 {dimension_numbers = #tpu.dot_dimension_numbers<[1], [0], [0], [1], [0, 0, 1, 1], [], []>} : vector<256x4xbf16>, vector<4x8xbf16>, vector<256x8xf32> -> vector<256x8xf32>
    %61 = arith.addf %55, %60 : vector<256x8xf32>
    %cst_73 = arith.constant dense<0.000000e+00> : vector<8xf32>
    %62 = vector.multi_reduction <add>, %61, %cst_73 [0] : vector<256x8xf32> to vector<8xf32>
    %63 = vector.shape_cast %62 : vector<8xf32> to vector<1x8xf32>
    %64 = arith.mulf %61, %61 : vector<256x8xf32>
    %cst_74 = arith.constant dense<0.000000e+00> : vector<8xf32>
    %65 = vector.multi_reduction <add>, %64, %cst_74 [0] : vector<256x8xf32> to vector<8xf32>
    %66 = vector.shape_cast %65 : vector<8xf32> to vector<1x8xf32>
    %cst_75 = arith.constant 3.906250e-03 : f32
    %67 = vector.broadcast %cst_75 : f32 to vector<1x8xf32>
    %68 = arith.mulf %63, %67 : vector<1x8xf32>
    %cst_76 = arith.constant 3.906250e-03 : f32
    %69 = vector.broadcast %cst_76 : f32 to vector<1x8xf32>
    %70 = arith.mulf %66, %69 : vector<1x8xf32>
    %71 = arith.mulf %68, %68 : vector<1x8xf32>
    %72 = arith.subf %70, %71 : vector<1x8xf32>
    %cst_77 = arith.constant 0.000000e+00 : f32
    %73 = vector.broadcast %cst_77 : f32 to vector<1x8xf32>
    %74 = arith.maximumf %72, %73 : vector<1x8xf32>
    %75 = vector.broadcast %68 : vector<1x8xf32> to vector<256x8xf32>
    %76 = arith.subf %61, %75 : vector<256x8xf32>
    %cst_78 = arith.constant 9.99999974E-6 : f32
    %77 = vector.broadcast %cst_78 : f32 to vector<1x8xf32>
    %78 = arith.addf %74, %77 : vector<1x8xf32>
    %79 = math.rsqrt %78 : vector<1x8xf32>
    %80 = vector.broadcast %79 : vector<1x8xf32> to vector<256x8xf32>
    %81 = arith.mulf %76, %80 : vector<256x8xf32>
    %cst_79 = arith.constant 0.000000e+00 : f32
    %82 = vector.broadcast %cst_79 : f32 to vector<256x8xf32>
    %83 = arith.maximumf %81, %82 : vector<256x8xf32>
    %84 = vector.shape_cast %83 : vector<256x8xf32> to vector<16x16x8xf32>
    %85 = arith.truncf %84 : vector<16x16x8xf32> to vector<16x16x8xbf16>
    %c0_80 = arith.constant 0 : index
    %c0_81 = arith.constant 0 : index
    %c0_82 = arith.constant 0 : index
    %c0_83 = arith.constant 0 : index
    %86 = vector.load %arg3[%c0_80, %c0_81, %c0_82, %c0_83] : memref<1x16x16x8xbf16, #tpu.memory_space<vmem>>, vector<1x16x16x8xbf16>
    %87 = vector.shape_cast %86 : vector<1x16x16x8xbf16> to vector<16x16x8xbf16>
    %88 = vector.shape_cast %85 : vector<16x16x8xbf16> to vector<1x16x16x8xbf16>
    tpu.vector_store %arg3[%c0_80, %c0_81, %c0_82, %c0_83], %88 {strides = array<i32>} : memref<1x16x16x8xbf16, #tpu.memory_space<vmem>>, vector<1x16x16x8xbf16>,
    return
  }
  func.func @transform_0(%arg0: i32) -> (i32, i32, i32, i32) {
    %c0_i32 = arith.constant 0 : i32
    %c0_i32_0 = arith.constant 0 : i32
    %c0_i32_1 = arith.constant 0 : i32
    %c0_i32_2 = arith.constant 0 : i32
    return %arg0, %c0_i32, %c0_i32_0, %c0_i32_1 : i32, i32, i32, i32
  }
  func.func @transform_1(%arg0: i32) -> (i32, i32, i32) {
    %c0_i32 = arith.constant 0 : i32
    %c0_i32_0 = arith.constant 0 : i32
    %c0_i32_1 = arith.constant 0 : i32
    %c0_i32_2 = arith.constant 0 : i32
    return %c0_i32, %c0_i32_0, %c0_i32_1 : i32, i32, i32
  }
  func.func @transform_2(%arg0: i32) -> (i32, i32, i32, i32) {
    %c0_i32 = arith.constant 0 : i32
    %c0_i32_0 = arith.constant 0 : i32
    %c0_i32_1 = arith.constant 0 : i32
    %c0_i32_2 = arith.constant 0 : i32
    return %arg0, %c0_i32, %c0_i32_0, %c0_i32_1 : i32, i32, i32, i32
  }
}

module attributes {stable_mosaic.version = 11 : i64} {
  func.func @down2x2_in_relu_kernel(%arg0: i32, %arg1: memref<1x8x2x8x16xbf16, #tpu.memory_space<vmem>>, %arg2: memref<2x16x8xbf16, #tpu.memory_space<vmem>>, %arg3: memref<1x8x8x8xbf16, #tpu.memory_space<vmem>>) attributes {dimension_semantics = [#tpu.dimension_semantics<parallel>], iteration_bounds = array<i64: 2>, scalar_prefetch = 0 : i64, scratch_operands = 0 : i64, tpu.core_type = #tpu.core_type<tc>, window_params = [{transform_indices = @transform_0, window_bounds = array<i64: 1, 8, 2, 8, 16>}, {pipeline_mode = #tpu.pipeline_mode<synchronous>, transform_indices = @transform_1, window_bounds = array<i64: 2, 16, 8>}, {transform_indices = @transform_2, window_bounds = array<i64: 1, 8, 8, 8>}]} {
    %c0 = arith.constant 0 : index
    %c0_0 = arith.constant 0 : index
    %c0_1 = arith.constant 0 : index
    %c0_2 = arith.constant 0 : index
    %c0_3 = arith.constant 0 : index
    %0 = vector.load %arg1[%c0, %c0_0, %c0_1, %c0_2, %c0_3] : memref<1x8x2x8x16xbf16, #tpu.memory_space<vmem>>, vector<1x8x1x8x16xbf16>
    %1 = vector.shape_cast %0 : vector<1x8x1x8x16xbf16> to vector<8x8x16xbf16>
    %2 = vector.shape_cast %1 : vector<8x8x16xbf16> to vector<64x16xbf16>
    %c0_4 = arith.constant 0 : index
    %c0_5 = arith.constant 0 : index
    %c0_6 = arith.constant 0 : index
    %3 = vector.load %arg2[%c0_4, %c0_5, %c0_6] : memref<2x16x8xbf16, #tpu.memory_space<vmem>>, vector<1x16x8xbf16>
    %4 = vector.shape_cast %3 : vector<1x16x8xbf16> to vector<16x8xbf16>
    %cst = arith.constant dense<0.000000e+00> : vector<64x8xf32>
    %5 = tpu.matmul %2, %4, %cst {dimension_numbers = #tpu.dot_dimension_numbers<[1], [0], [0], [1], [0, 0, 1, 1], [], []>} : vector<64x16xbf16>, vector<16x8xbf16>, vector<64x8xf32> -> vector<64x8xf32>
    %c0_7 = arith.constant 0 : index
    %c0_8 = arith.constant 0 : index
    %c1 = arith.constant 1 : index
    %c0_9 = arith.constant 0 : index
    %c0_10 = arith.constant 0 : index
    %6 = vector.load %arg1[%c0_7, %c0_8, %c1, %c0_9, %c0_10] : memref<1x8x2x8x16xbf16, #tpu.memory_space<vmem>>, vector<1x8x1x8x16xbf16>
    %7 = vector.shape_cast %6 : vector<1x8x1x8x16xbf16> to vector<8x8x16xbf16>
    %8 = vector.shape_cast %7 : vector<8x8x16xbf16> to vector<64x16xbf16>
    %c1_11 = arith.constant 1 : index
    %c0_12 = arith.constant 0 : index
    %c0_13 = arith.constant 0 : index
    %9 = vector.load %arg2[%c1_11, %c0_12, %c0_13] : memref<2x16x8xbf16, #tpu.memory_space<vmem>>, vector<1x16x8xbf16>
    %10 = vector.shape_cast %9 : vector<1x16x8xbf16> to vector<16x8xbf16>
    %cst_14 = arith.constant dense<0.000000e+00> : vector<64x8xf32>
    %11 = tpu.matmul %8, %10, %cst_14 {dimension_numbers = #tpu.dot_dimension_numbers<[1], [0], [0], [1], [0, 0, 1, 1], [], []>} : vector<64x16xbf16>, vector<16x8xbf16>, vector<64x8xf32> -> vector<64x8xf32>
    %12 = arith.addf %5, %11 : vector<64x8xf32>
    %cst_15 = arith.constant dense<0.000000e+00> : vector<8xf32>
    %13 = vector.multi_reduction <add>, %12, %cst_15 [0] : vector<64x8xf32> to vector<8xf32>
    %14 = vector.shape_cast %13 : vector<8xf32> to vector<1x8xf32>
    %15 = arith.mulf %12, %12 : vector<64x8xf32>
    %cst_16 = arith.constant dense<0.000000e+00> : vector<8xf32>
    %16 = vector.multi_reduction <add>, %15, %cst_16 [0] : vector<64x8xf32> to vector<8xf32>
    %17 = vector.shape_cast %16 : vector<8xf32> to vector<1x8xf32>
    %cst_17 = arith.constant 1.562500e-02 : f32
    %18 = vector.broadcast %cst_17 : f32 to vector<1x8xf32>
    %19 = arith.mulf %14, %18 : vector<1x8xf32>
    %cst_18 = arith.constant 1.562500e-02 : f32
    %20 = vector.broadcast %cst_18 : f32 to vector<1x8xf32>
    %21 = arith.mulf %17, %20 : vector<1x8xf32>
    %22 = arith.mulf %19, %19 : vector<1x8xf32>
    %23 = arith.subf %21, %22 : vector<1x8xf32>
    %cst_19 = arith.constant 0.000000e+00 : f32
    %24 = vector.broadcast %cst_19 : f32 to vector<1x8xf32>
    %25 = arith.maximumf %23, %24 : vector<1x8xf32>
    %26 = vector.broadcast %19 : vector<1x8xf32> to vector<64x8xf32>
    %27 = arith.subf %12, %26 : vector<64x8xf32>
    %cst_20 = arith.constant 9.99999974E-6 : f32
    %28 = vector.broadcast %cst_20 : f32 to vector<1x8xf32>
    %29 = arith.addf %25, %28 : vector<1x8xf32>
    %30 = math.rsqrt %29 : vector<1x8xf32>
    %31 = vector.broadcast %30 : vector<1x8xf32> to vector<64x8xf32>
    %32 = arith.mulf %27, %31 : vector<64x8xf32>
    %cst_21 = arith.constant 0.000000e+00 : f32
    %33 = vector.broadcast %cst_21 : f32 to vector<64x8xf32>
    %34 = arith.maximumf %32, %33 : vector<64x8xf32>
    %35 = vector.shape_cast %34 : vector<64x8xf32> to vector<8x8x8xf32>
    %36 = arith.truncf %35 : vector<8x8x8xf32> to vector<8x8x8xbf16>
    %c0_22 = arith.constant 0 : index
    %c0_23 = arith.constant 0 : index
    %c0_24 = arith.constant 0 : index
    %c0_25 = arith.constant 0 : index
    %37 = vector.load %arg3[%c0_22, %c0_23, %c0_24, %c0_25] : memref<1x8x8x8xbf16, #tpu.memory_space<vmem>>, vector<1x8x8x8xbf16>
    %38 = vector.shape_cast %37 : vector<1x8x8x8xbf16> to vector<8x8x8xbf16>
    %39 = vector.shape_cast %36 : vector<8x8x8xbf16> to vector<1x8x8x8xbf16>
    tpu.vector_store %arg3[%c0_22, %c0_23, %c0_24, %c0_25], %39 {strides = array<i32>} : memref<1x8x8x8xbf16, #tpu.memory_space<vmem>>, vector<1x8x8x8xbf16>,
    return
  }
  func.func @transform_0(%arg0: i32) -> (i32, i32, i32, i32, i32) {
    %c0_i32 = arith.constant 0 : i32
    %c0_i32_0 = arith.constant 0 : i32
    %c0_i32_1 = arith.constant 0 : i32
    %c0_i32_2 = arith.constant 0 : i32
    %c0_i32_3 = arith.constant 0 : i32
    return %arg0, %c0_i32, %c0_i32_0, %c0_i32_1, %c0_i32_2 : i32, i32, i32, i32, i32
  }
  func.func @transform_1(%arg0: i32) -> (i32, i32, i32) {
    %c0_i32 = arith.constant 0 : i32
    %c0_i32_0 = arith.constant 0 : i32
    %c0_i32_1 = arith.constant 0 : i32
    %c0_i32_2 = arith.constant 0 : i32
    return %c0_i32, %c0_i32_0, %c0_i32_1 : i32, i32, i32
  }
  func.func @transform_2(%arg0: i32) -> (i32, i32, i32, i32) {
    %c0_i32 = arith.constant 0 : i32
    %c0_i32_0 = arith.constant 0 : i32
    %c0_i32_1 = arith.constant 0 : i32
    %c0_i32_2 = arith.constant 0 : i32
    return %arg0, %c0_i32, %c0_i32_0, %c0_i32_1 : i32, i32, i32, i32
  }
}

module attributes {stable_mosaic.version = 11 : i64} {
  func.func @conv3x3_in_relu_kernel(%arg0: i32, %arg1: memref<1x8x8x8xbf16, #tpu.memory_space<vmem>>, %arg2: memref<9x8x16xbf16, #tpu.memory_space<vmem>>, %arg3: memref<1x8x8x16xbf16, #tpu.memory_space<vmem>>, %arg4: memref<10x10x8xbf16, #tpu.memory_space<vmem>>) attributes {dimension_semantics = [#tpu.dimension_semantics<parallel>], iteration_bounds = array<i64: 2>, scalar_prefetch = 0 : i64, scratch_operands = 1 : i64, tpu.core_type = #tpu.core_type<tc>, window_params = [{transform_indices = @transform_0, window_bounds = array<i64: 1, 8, 8, 8>}, {pipeline_mode = #tpu.pipeline_mode<synchronous>, transform_indices = @transform_1, window_bounds = array<i64: 9, 8, 16>}, {transform_indices = @transform_2, window_bounds = array<i64: 1, 8, 8, 16>}]} {
    %cst = arith.constant 0.000000e+00 : bf16
    %0 = vector.broadcast %cst : bf16 to vector<1x10x8xbf16>
    %c0 = arith.constant 0 : index
    %c0_0 = arith.constant 0 : index
    %c0_1 = arith.constant 0 : index
    %1 = vector.load %arg4[%c0, %c0_0, %c0_1] : memref<10x10x8xbf16, #tpu.memory_space<vmem>>, vector<1x10x8xbf16>
    tpu.vector_store %arg4[%c0, %c0_0, %c0_1], %0 {strides = array<i32>} : memref<10x10x8xbf16, #tpu.memory_space<vmem>>, vector<1x10x8xbf16>,
    %c9 = arith.constant 9 : index
    %c0_2 = arith.constant 0 : index
    %c0_3 = arith.constant 0 : index
    %2 = vector.load %arg4[%c9, %c0_2, %c0_3] : memref<10x10x8xbf16, #tpu.memory_space<vmem>>, vector<1x10x8xbf16>
    tpu.vector_store %arg4[%c9, %c0_2, %c0_3], %0 {strides = array<i32>} : memref<10x10x8xbf16, #tpu.memory_space<vmem>>, vector<1x10x8xbf16>,
    %cst_4 = arith.constant 0.000000e+00 : bf16
    %3 = vector.broadcast %cst_4 : bf16 to vector<8x1x8xbf16>
    %c1 = arith.constant 1 : index
    %c0_5 = arith.constant 0 : index
    %c0_6 = arith.constant 0 : index
    %4 = vector.load %arg4[%c1, %c0_5, %c0_6] : memref<10x10x8xbf16, #tpu.memory_space<vmem>>, vector<8x1x8xbf16>
    tpu.vector_store %arg4[%c1, %c0_5, %c0_6], %3 {strides = array<i32>} : memref<10x10x8xbf16, #tpu.memory_space<vmem>>, vector<8x1x8xbf16>,
    %c1_7 = arith.constant 1 : index
    %c9_8 = arith.constant 9 : index
    %c0_9 = arith.constant 0 : index
    %5 = vector.load %arg4[%c1_7, %c9_8, %c0_9] : memref<10x10x8xbf16, #tpu.memory_space<vmem>>, vector<8x1x8xbf16>
    tpu.vector_store %arg4[%c1_7, %c9_8, %c0_9], %3 {strides = array<i32>} : memref<10x10x8xbf16, #tpu.memory_space<vmem>>, vector<8x1x8xbf16>,
    %c0_10 = arith.constant 0 : index
    %c0_11 = arith.constant 0 : index
    %c0_12 = arith.constant 0 : index
    %c0_13 = arith.constant 0 : index
    %6 = vector.load %arg1[%c0_10, %c0_11, %c0_12, %c0_13] : memref<1x8x8x8xbf16, #tpu.memory_space<vmem>>, vector<1x8x8x8xbf16>
    %7 = vector.shape_cast %6 : vector<1x8x8x8xbf16> to vector<8x8x8xbf16>
    %c1_14 = arith.constant 1 : index
    %c1_15 = arith.constant 1 : index
    %c0_16 = arith.constant 0 : index
    %8 = vector.load %arg4[%c1_14, %c1_15, %c0_16] : memref<10x10x8xbf16, #tpu.memory_space<vmem>>, vector<8x8x8xbf16>
    tpu.vector_store %arg4[%c1_14, %c1_15, %c0_16], %7 {strides = array<i32>} : memref<10x10x8xbf16, #tpu.memory_space<vmem>>, vector<8x8x8xbf16>,
    %c0_17 = arith.constant 0 : index
    %c0_18 = arith.constant 0 : index
    %c0_19 = arith.constant 0 : index
    %9 = vector.load %arg4[%c0_17, %c0_18, %c0_19] : memref<10x10x8xbf16, #tpu.memory_space<vmem>>, vector<8x8x8xbf16>
    %10 = vector.shape_cast %9 : vector<8x8x8xbf16> to vector<64x8xbf16>
    %c0_20 = arith.constant 0 : index
    %c0_21 = arith.constant 0 : index
    %c0_22 = arith.constant 0 : index
    %11 = vector.load %arg2[%c0_20, %c0_21, %c0_22] : memref<9x8x16xbf16, #tpu.memory_space<vmem>>, vector<1x8x16xbf16>
    %12 = vector.shape_cast %11 : vector<1x8x16xbf16> to vector<8x16xbf16>
    %cst_23 = arith.constant dense<0.000000e+00> : vector<64x16xf32>
    %13 = tpu.matmul %10, %12, %cst_23 {dimension_numbers = #tpu.dot_dimension_numbers<[1], [0], [0], [1], [0, 0, 1, 1], [], []>} : vector<64x8xbf16>, vector<8x16xbf16>, vector<64x16xf32> -> vector<64x16xf32>
    %c0_24 = arith.constant 0 : index
    %c1_25 = arith.constant 1 : index
    %c0_26 = arith.constant 0 : index
    %14 = vector.load %arg4[%c0_24, %c1_25, %c0_26] : memref<10x10x8xbf16, #tpu.memory_space<vmem>>, vector<8x8x8xbf16>
    %15 = vector.shape_cast %14 : vector<8x8x8xbf16> to vector<64x8xbf16>
    %c1_27 = arith.constant 1 : index
    %c0_28 = arith.constant 0 : index
    %c0_29 = arith.constant 0 : index
    %16 = vector.load %arg2[%c1_27, %c0_28, %c0_29] : memref<9x8x16xbf16, #tpu.memory_space<vmem>>, vector<1x8x16xbf16>
    %17 = vector.shape_cast %16 : vector<1x8x16xbf16> to vector<8x16xbf16>
    %cst_30 = arith.constant dense<0.000000e+00> : vector<64x16xf32>
    %18 = tpu.matmul %15, %17, %cst_30 {dimension_numbers = #tpu.dot_dimension_numbers<[1], [0], [0], [1], [0, 0, 1, 1], [], []>} : vector<64x8xbf16>, vector<8x16xbf16>, vector<64x16xf32> -> vector<64x16xf32>
    %19 = arith.addf %13, %18 : vector<64x16xf32>
    %c0_31 = arith.constant 0 : index
    %c2 = arith.constant 2 : index
    %c0_32 = arith.constant 0 : index
    %20 = vector.load %arg4[%c0_31, %c2, %c0_32] : memref<10x10x8xbf16, #tpu.memory_space<vmem>>, vector<8x8x8xbf16>
    %21 = vector.shape_cast %20 : vector<8x8x8xbf16> to vector<64x8xbf16>
    %c2_33 = arith.constant 2 : index
    %c0_34 = arith.constant 0 : index
    %c0_35 = arith.constant 0 : index
    %22 = vector.load %arg2[%c2_33, %c0_34, %c0_35] : memref<9x8x16xbf16, #tpu.memory_space<vmem>>, vector<1x8x16xbf16>
    %23 = vector.shape_cast %22 : vector<1x8x16xbf16> to vector<8x16xbf16>
    %cst_36 = arith.constant dense<0.000000e+00> : vector<64x16xf32>
    %24 = tpu.matmul %21, %23, %cst_36 {dimension_numbers = #tpu.dot_dimension_numbers<[1], [0], [0], [1], [0, 0, 1, 1], [], []>} : vector<64x8xbf16>, vector<8x16xbf16>, vector<64x16xf32> -> vector<64x16xf32>
    %25 = arith.addf %19, %24 : vector<64x16xf32>
    %c1_37 = arith.constant 1 : index
    %c0_38 = arith.constant 0 : index
    %c0_39 = arith.constant 0 : index
    %26 = vector.load %arg4[%c1_37, %c0_38, %c0_39] : memref<10x10x8xbf16, #tpu.memory_space<vmem>>, vector<8x8x8xbf16>
    %27 = vector.shape_cast %26 : vector<8x8x8xbf16> to vector<64x8xbf16>
    %c3 = arith.constant 3 : index
    %c0_40 = arith.constant 0 : index
    %c0_41 = arith.constant 0 : index
    %28 = vector.load %arg2[%c3, %c0_40, %c0_41] : memref<9x8x16xbf16, #tpu.memory_space<vmem>>, vector<1x8x16xbf16>
    %29 = vector.shape_cast %28 : vector<1x8x16xbf16> to vector<8x16xbf16>
    %cst_42 = arith.constant dense<0.000000e+00> : vector<64x16xf32>
    %30 = tpu.matmul %27, %29, %cst_42 {dimension_numbers = #tpu.dot_dimension_numbers<[1], [0], [0], [1], [0, 0, 1, 1], [], []>} : vector<64x8xbf16>, vector<8x16xbf16>, vector<64x16xf32> -> vector<64x16xf32>
    %31 = arith.addf %25, %30 : vector<64x16xf32>
    %c1_43 = arith.constant 1 : index
    %c1_44 = arith.constant 1 : index
    %c0_45 = arith.constant 0 : index
    %32 = vector.load %arg4[%c1_43, %c1_44, %c0_45] : memref<10x10x8xbf16, #tpu.memory_space<vmem>>, vector<8x8x8xbf16>
    %33 = vector.shape_cast %32 : vector<8x8x8xbf16> to vector<64x8xbf16>
    %c4 = arith.constant 4 : index
    %c0_46 = arith.constant 0 : index
    %c0_47 = arith.constant 0 : index
    %34 = vector.load %arg2[%c4, %c0_46, %c0_47] : memref<9x8x16xbf16, #tpu.memory_space<vmem>>, vector<1x8x16xbf16>
    %35 = vector.shape_cast %34 : vector<1x8x16xbf16> to vector<8x16xbf16>
    %cst_48 = arith.constant dense<0.000000e+00> : vector<64x16xf32>
    %36 = tpu.matmul %33, %35, %cst_48 {dimension_numbers = #tpu.dot_dimension_numbers<[1], [0], [0], [1], [0, 0, 1, 1], [], []>} : vector<64x8xbf16>, vector<8x16xbf16>, vector<64x16xf32> -> vector<64x16xf32>
    %37 = arith.addf %31, %36 : vector<64x16xf32>
    %c1_49 = arith.constant 1 : index
    %c2_50 = arith.constant 2 : index
    %c0_51 = arith.constant 0 : index
    %38 = vector.load %arg4[%c1_49, %c2_50, %c0_51] : memref<10x10x8xbf16, #tpu.memory_space<vmem>>, vector<8x8x8xbf16>
    %39 = vector.shape_cast %38 : vector<8x8x8xbf16> to vector<64x8xbf16>
    %c5 = arith.constant 5 : index
    %c0_52 = arith.constant 0 : index
    %c0_53 = arith.constant 0 : index
    %40 = vector.load %arg2[%c5, %c0_52, %c0_53] : memref<9x8x16xbf16, #tpu.memory_space<vmem>>, vector<1x8x16xbf16>
    %41 = vector.shape_cast %40 : vector<1x8x16xbf16> to vector<8x16xbf16>
    %cst_54 = arith.constant dense<0.000000e+00> : vector<64x16xf32>
    %42 = tpu.matmul %39, %41, %cst_54 {dimension_numbers = #tpu.dot_dimension_numbers<[1], [0], [0], [1], [0, 0, 1, 1], [], []>} : vector<64x8xbf16>, vector<8x16xbf16>, vector<64x16xf32> -> vector<64x16xf32>
    %43 = arith.addf %37, %42 : vector<64x16xf32>
    %c2_55 = arith.constant 2 : index
    %c0_56 = arith.constant 0 : index
    %c0_57 = arith.constant 0 : index
    %44 = vector.load %arg4[%c2_55, %c0_56, %c0_57] : memref<10x10x8xbf16, #tpu.memory_space<vmem>>, vector<8x8x8xbf16>
    %45 = vector.shape_cast %44 : vector<8x8x8xbf16> to vector<64x8xbf16>
    %c6 = arith.constant 6 : index
    %c0_58 = arith.constant 0 : index
    %c0_59 = arith.constant 0 : index
    %46 = vector.load %arg2[%c6, %c0_58, %c0_59] : memref<9x8x16xbf16, #tpu.memory_space<vmem>>, vector<1x8x16xbf16>
    %47 = vector.shape_cast %46 : vector<1x8x16xbf16> to vector<8x16xbf16>
    %cst_60 = arith.constant dense<0.000000e+00> : vector<64x16xf32>
    %48 = tpu.matmul %45, %47, %cst_60 {dimension_numbers = #tpu.dot_dimension_numbers<[1], [0], [0], [1], [0, 0, 1, 1], [], []>} : vector<64x8xbf16>, vector<8x16xbf16>, vector<64x16xf32> -> vector<64x16xf32>
    %49 = arith.addf %43, %48 : vector<64x16xf32>
    %c2_61 = arith.constant 2 : index
    %c1_62 = arith.constant 1 : index
    %c0_63 = arith.constant 0 : index
    %50 = vector.load %arg4[%c2_61, %c1_62, %c0_63] : memref<10x10x8xbf16, #tpu.memory_space<vmem>>, vector<8x8x8xbf16>
    %51 = vector.shape_cast %50 : vector<8x8x8xbf16> to vector<64x8xbf16>
    %c7 = arith.constant 7 : index
    %c0_64 = arith.constant 0 : index
    %c0_65 = arith.constant 0 : index
    %52 = vector.load %arg2[%c7, %c0_64, %c0_65] : memref<9x8x16xbf16, #tpu.memory_space<vmem>>, vector<1x8x16xbf16>
    %53 = vector.shape_cast %52 : vector<1x8x16xbf16> to vector<8x16xbf16>
    %cst_66 = arith.constant dense<0.000000e+00> : vector<64x16xf32>
    %54 = tpu.matmul %51, %53, %cst_66 {dimension_numbers = #tpu.dot_dimension_numbers<[1], [0], [0], [1], [0, 0, 1, 1], [], []>} : vector<64x8xbf16>, vector<8x16xbf16>, vector<64x16xf32> -> vector<64x16xf32>
    %55 = arith.addf %49, %54 : vector<64x16xf32>
    %c2_67 = arith.constant 2 : index
    %c2_68 = arith.constant 2 : index
    %c0_69 = arith.constant 0 : index
    %56 = vector.load %arg4[%c2_67, %c2_68, %c0_69] : memref<10x10x8xbf16, #tpu.memory_space<vmem>>, vector<8x8x8xbf16>
    %57 = vector.shape_cast %56 : vector<8x8x8xbf16> to vector<64x8xbf16>
    %c8 = arith.constant 8 : index
    %c0_70 = arith.constant 0 : index
    %c0_71 = arith.constant 0 : index
    %58 = vector.load %arg2[%c8, %c0_70, %c0_71] : memref<9x8x16xbf16, #tpu.memory_space<vmem>>, vector<1x8x16xbf16>
    %59 = vector.shape_cast %58 : vector<1x8x16xbf16> to vector<8x16xbf16>
    %cst_72 = arith.constant dense<0.000000e+00> : vector<64x16xf32>
    %60 = tpu.matmul %57, %59, %cst_72 {dimension_numbers = #tpu.dot_dimension_numbers<[1], [0], [0], [1], [0, 0, 1, 1], [], []>} : vector<64x8xbf16>, vector<8x16xbf16>, vector<64x16xf32> -> vector<64x16xf32>
    %61 = arith.addf %55, %60 : vector<64x16xf32>
    %cst_73 = arith.constant dense<0.000000e+00> : vector<16xf32>
    %62 = vector.multi_reduction <add>, %61, %cst_73 [0] : vector<64x16xf32> to vector<16xf32>
    %63 = vector.shape_cast %62 : vector<16xf32> to vector<1x16xf32>
    %64 = arith.mulf %61, %61 : vector<64x16xf32>
    %cst_74 = arith.constant dense<0.000000e+00> : vector<16xf32>
    %65 = vector.multi_reduction <add>, %64, %cst_74 [0] : vector<64x16xf32> to vector<16xf32>
    %66 = vector.shape_cast %65 : vector<16xf32> to vector<1x16xf32>
    %cst_75 = arith.constant 1.562500e-02 : f32
    %67 = vector.broadcast %cst_75 : f32 to vector<1x16xf32>
    %68 = arith.mulf %63, %67 : vector<1x16xf32>
    %cst_76 = arith.constant 1.562500e-02 : f32
    %69 = vector.broadcast %cst_76 : f32 to vector<1x16xf32>
    %70 = arith.mulf %66, %69 : vector<1x16xf32>
    %71 = arith.mulf %68, %68 : vector<1x16xf32>
    %72 = arith.subf %70, %71 : vector<1x16xf32>
    %cst_77 = arith.constant 0.000000e+00 : f32
    %73 = vector.broadcast %cst_77 : f32 to vector<1x16xf32>
    %74 = arith.maximumf %72, %73 : vector<1x16xf32>
    %75 = vector.broadcast %68 : vector<1x16xf32> to vector<64x16xf32>
    %76 = arith.subf %61, %75 : vector<64x16xf32>
    %cst_78 = arith.constant 9.99999974E-6 : f32
    %77 = vector.broadcast %cst_78 : f32 to vector<1x16xf32>
    %78 = arith.addf %74, %77 : vector<1x16xf32>
    %79 = math.rsqrt %78 : vector<1x16xf32>
    %80 = vector.broadcast %79 : vector<1x16xf32> to vector<64x16xf32>
    %81 = arith.mulf %76, %80 : vector<64x16xf32>
    %cst_79 = arith.constant 0.000000e+00 : f32
    %82 = vector.broadcast %cst_79 : f32 to vector<64x16xf32>
    %83 = arith.maximumf %81, %82 : vector<64x16xf32>
    %84 = vector.shape_cast %83 : vector<64x16xf32> to vector<8x8x16xf32>
    %85 = arith.truncf %84 : vector<8x8x16xf32> to vector<8x8x16xbf16>
    %c0_80 = arith.constant 0 : index
    %c0_81 = arith.constant 0 : index
    %c0_82 = arith.constant 0 : index
    %c0_83 = arith.constant 0 : index
    %86 = vector.load %arg3[%c0_80, %c0_81, %c0_82, %c0_83] : memref<1x8x8x16xbf16, #tpu.memory_space<vmem>>, vector<1x8x8x16xbf16>
    %87 = vector.shape_cast %86 : vector<1x8x8x16xbf16> to vector<8x8x16xbf16>
    %88 = vector.shape_cast %85 : vector<8x8x16xbf16> to vector<1x8x8x16xbf16>
    tpu.vector_store %arg3[%c0_80, %c0_81, %c0_82, %c0_83], %88 {strides = array<i32>} : memref<1x8x8x16xbf16, #tpu.memory_space<vmem>>, vector<1x8x8x16xbf16>,
    return
  }
  func.func @transform_0(%arg0: i32) -> (i32, i32, i32, i32) {
    %c0_i32 = arith.constant 0 : i32
    %c0_i32_0 = arith.constant 0 : i32
    %c0_i32_1 = arith.constant 0 : i32
    %c0_i32_2 = arith.constant 0 : i32
    return %arg0, %c0_i32, %c0_i32_0, %c0_i32_1 : i32, i32, i32, i32
  }
  func.func @transform_1(%arg0: i32) -> (i32, i32, i32) {
    %c0_i32 = arith.constant 0 : i32
    %c0_i32_0 = arith.constant 0 : i32
    %c0_i32_1 = arith.constant 0 : i32
    %c0_i32_2 = arith.constant 0 : i32
    return %c0_i32, %c0_i32_0, %c0_i32_1 : i32, i32, i32
  }
  func.func @transform_2(%arg0: i32) -> (i32, i32, i32, i32) {
    %c0_i32 = arith.constant 0 : i32
    %c0_i32_0 = arith.constant 0 : i32
    %c0_i32_1 = arith.constant 0 : i32
    %c0_i32_2 = arith.constant 0 : i32
    return %arg0, %c0_i32, %c0_i32_0, %c0_i32_1 : i32, i32, i32, i32
  }
}

module attributes {stable_mosaic.version = 11 : i64} {
  func.func @down2x2_in_relu_kernel(%arg0: i32, %arg1: memref<1x4x2x4x32xbf16, #tpu.memory_space<vmem>>, %arg2: memref<2x32x16xbf16, #tpu.memory_space<vmem>>, %arg3: memref<1x4x4x16xbf16, #tpu.memory_space<vmem>>) attributes {dimension_semantics = [#tpu.dimension_semantics<parallel>], iteration_bounds = array<i64: 2>, scalar_prefetch = 0 : i64, scratch_operands = 0 : i64, tpu.core_type = #tpu.core_type<tc>, window_params = [{transform_indices = @transform_0, window_bounds = array<i64: 1, 4, 2, 4, 32>}, {pipeline_mode = #tpu.pipeline_mode<synchronous>, transform_indices = @transform_1, window_bounds = array<i64: 2, 32, 16>}, {transform_indices = @transform_2, window_bounds = array<i64: 1, 4, 4, 16>}]} {
    %c0 = arith.constant 0 : index
    %c0_0 = arith.constant 0 : index
    %c0_1 = arith.constant 0 : index
    %c0_2 = arith.constant 0 : index
    %c0_3 = arith.constant 0 : index
    %0 = vector.load %arg1[%c0, %c0_0, %c0_1, %c0_2, %c0_3] : memref<1x4x2x4x32xbf16, #tpu.memory_space<vmem>>, vector<1x4x1x4x32xbf16>
    %1 = vector.shape_cast %0 : vector<1x4x1x4x32xbf16> to vector<4x4x32xbf16>
    %2 = vector.shape_cast %1 : vector<4x4x32xbf16> to vector<16x32xbf16>
    %c0_4 = arith.constant 0 : index
    %c0_5 = arith.constant 0 : index
    %c0_6 = arith.constant 0 : index
    %3 = vector.load %arg2[%c0_4, %c0_5, %c0_6] : memref<2x32x16xbf16, #tpu.memory_space<vmem>>, vector<1x32x16xbf16>
    %4 = vector.shape_cast %3 : vector<1x32x16xbf16> to vector<32x16xbf16>
    %cst = arith.constant dense<0.000000e+00> : vector<16x16xf32>
    %5 = tpu.matmul %2, %4, %cst {dimension_numbers = #tpu.dot_dimension_numbers<[1], [0], [0], [1], [0, 0, 1, 1], [], []>} : vector<16x32xbf16>, vector<32x16xbf16>, vector<16x16xf32> -> vector<16x16xf32>
    %c0_7 = arith.constant 0 : index
    %c0_8 = arith.constant 0 : index
    %c1 = arith.constant 1 : index
    %c0_9 = arith.constant 0 : index
    %c0_10 = arith.constant 0 : index
    %6 = vector.load %arg1[%c0_7, %c0_8, %c1, %c0_9, %c0_10] : memref<1x4x2x4x32xbf16, #tpu.memory_space<vmem>>, vector<1x4x1x4x32xbf16>
    %7 = vector.shape_cast %6 : vector<1x4x1x4x32xbf16> to vector<4x4x32xbf16>
    %8 = vector.shape_cast %7 : vector<4x4x32xbf16> to vector<16x32xbf16>
    %c1_11 = arith.constant 1 : index
    %c0_12 = arith.constant 0 : index
    %c0_13 = arith.constant 0 : index
    %9 = vector.load %arg2[%c1_11, %c0_12, %c0_13] : memref<2x32x16xbf16, #tpu.memory_space<vmem>>, vector<1x32x16xbf16>
    %10 = vector.shape_cast %9 : vector<1x32x16xbf16> to vector<32x16xbf16>
    %cst_14 = arith.constant dense<0.000000e+00> : vector<16x16xf32>
    %11 = tpu.matmul %8, %10, %cst_14 {dimension_numbers = #tpu.dot_dimension_numbers<[1], [0], [0], [1], [0, 0, 1, 1], [], []>} : vector<16x32xbf16>, vector<32x16xbf16>, vector<16x16xf32> -> vector<16x16xf32>
    %12 = arith.addf %5, %11 : vector<16x16xf32>
    %cst_15 = arith.constant dense<0.000000e+00> : vector<16xf32>
    %13 = vector.multi_reduction <add>, %12, %cst_15 [0] : vector<16x16xf32> to vector<16xf32>
    %14 = vector.shape_cast %13 : vector<16xf32> to vector<1x16xf32>
    %15 = arith.mulf %12, %12 : vector<16x16xf32>
    %cst_16 = arith.constant dense<0.000000e+00> : vector<16xf32>
    %16 = vector.multi_reduction <add>, %15, %cst_16 [0] : vector<16x16xf32> to vector<16xf32>
    %17 = vector.shape_cast %16 : vector<16xf32> to vector<1x16xf32>
    %cst_17 = arith.constant 6.250000e-02 : f32
    %18 = vector.broadcast %cst_17 : f32 to vector<1x16xf32>
    %19 = arith.mulf %14, %18 : vector<1x16xf32>
    %cst_18 = arith.constant 6.250000e-02 : f32
    %20 = vector.broadcast %cst_18 : f32 to vector<1x16xf32>
    %21 = arith.mulf %17, %20 : vector<1x16xf32>
    %22 = arith.mulf %19, %19 : vector<1x16xf32>
    %23 = arith.subf %21, %22 : vector<1x16xf32>
    %cst_19 = arith.constant 0.000000e+00 : f32
    %24 = vector.broadcast %cst_19 : f32 to vector<1x16xf32>
    %25 = arith.maximumf %23, %24 : vector<1x16xf32>
    %26 = vector.broadcast %19 : vector<1x16xf32> to vector<16x16xf32>
    %27 = arith.subf %12, %26 : vector<16x16xf32>
    %cst_20 = arith.constant 9.99999974E-6 : f32
    %28 = vector.broadcast %cst_20 : f32 to vector<1x16xf32>
    %29 = arith.addf %25, %28 : vector<1x16xf32>
    %30 = math.rsqrt %29 : vector<1x16xf32>
    %31 = vector.broadcast %30 : vector<1x16xf32> to vector<16x16xf32>
    %32 = arith.mulf %27, %31 : vector<16x16xf32>
    %cst_21 = arith.constant 0.000000e+00 : f32
    %33 = vector.broadcast %cst_21 : f32 to vector<16x16xf32>
    %34 = arith.maximumf %32, %33 : vector<16x16xf32>
    %35 = vector.shape_cast %34 : vector<16x16xf32> to vector<4x4x16xf32>
    %36 = arith.truncf %35 : vector<4x4x16xf32> to vector<4x4x16xbf16>
    %c0_22 = arith.constant 0 : index
    %c0_23 = arith.constant 0 : index
    %c0_24 = arith.constant 0 : index
    %c0_25 = arith.constant 0 : index
    %37 = vector.load %arg3[%c0_22, %c0_23, %c0_24, %c0_25] : memref<1x4x4x16xbf16, #tpu.memory_space<vmem>>, vector<1x4x4x16xbf16>
    %38 = vector.shape_cast %37 : vector<1x4x4x16xbf16> to vector<4x4x16xbf16>
    %39 = vector.shape_cast %36 : vector<4x4x16xbf16> to vector<1x4x4x16xbf16>
    tpu.vector_store %arg3[%c0_22, %c0_23, %c0_24, %c0_25], %39 {strides = array<i32>} : memref<1x4x4x16xbf16, #tpu.memory_space<vmem>>, vector<1x4x4x16xbf16>,
    return
  }
  func.func @transform_0(%arg0: i32) -> (i32, i32, i32, i32, i32) {
    %c0_i32 = arith.constant 0 : i32
    %c0_i32_0 = arith.constant 0 : i32
    %c0_i32_1 = arith.constant 0 : i32
    %c0_i32_2 = arith.constant 0 : i32
    %c0_i32_3 = arith.constant 0 : i32
    return %arg0, %c0_i32, %c0_i32_0, %c0_i32_1, %c0_i32_2 : i32, i32, i32, i32, i32
  }
  func.func @transform_1(%arg0: i32) -> (i32, i32, i32) {
    %c0_i32 = arith.constant 0 : i32
    %c0_i32_0 = arith.constant 0 : i32
    %c0_i32_1 = arith.constant 0 : i32
    %c0_i32_2 = arith.constant 0 : i32
    return %c0_i32, %c0_i32_0, %c0_i32_1 : i32, i32, i32
  }
  func.func @transform_2(%arg0: i32) -> (i32, i32, i32, i32) {
    %c0_i32 = arith.constant 0 : i32
    %c0_i32_0 = arith.constant 0 : i32
    %c0_i32_1 = arith.constant 0 : i32
    %c0_i32_2 = arith.constant 0 : i32
    return %arg0, %c0_i32, %c0_i32_0, %c0_i32_1 : i32, i32, i32, i32
  }
}

</mosaic_0001>

<llo_original>
// kernel: pallas_forward.5
$region0: #{pallas_forward.5}
  #allocation0 [shape = 'u32[]', space=smem, size = 0x4, offset = 0x4, fixed_abs, tag = 'smem constant byte address 0x4 - core index']
  #allocation1 [shape = 'u32[72,128]{1,0:T(1,128)}', space=vmem, size = 0x9000, scoped, tag = 'internal scratch']
  %s0 = inlined_call_operand.vmem [shape: bf16[2,8,2,8,16], index: 0, kind: input, shape index: {}]
  %s1 = inlined_call_operand.vmem [shape: bf16[2,16,8], index: 1, kind: input, shape index: {}]
  %s2 = inlined_call_operand.vmem [shape: bf16[2,8,8,8], index: 2, kind: output, shape index: {}]
  %s3 = sld [smem:[#allocation0]]
  $region41: #{pallas_forward.5} parent=0
    _
  %s5 = ssub.s32 1, %s3
  %s6 = scalar_select 0, %s5, %s3
  loop: start=0, step=1, limit=4
  $region2: #{pallas_forward.5} parent=0 // loop_pre_header
    _
  $region3: #{pallas_forward.5} parent=0 // loop_header
    %s8 = sphi 0, %s12
    %p9 = scmp.ge.s32.totalorder %s8, 4
    %s18 = sphi 0, %s20
    %s21 = sphi 0, %s18
    %s22 = sphi 0, %s21
    %s38 = sphi 0, %s22
    %s42 = sphi 0, %s42
    %s44 = sphi 0, %s42
    %s45 = sphi 0, %s44
    %s59 = sphi 0, %s45
    %s65 = sphi 0, %s67
    %s68 = sphi 0, %s65
    %s69 = sphi 0, %s68
    %s85 = sphi 0, %s69
  $region4: #{pallas_forward.5} parent=0 // loop_header_branch
    %11 = sbr.rel (%p9) target = $region8
  $region5: #{pallas_forward.5} parent=0 // loop_body
    %s13 = ssub.s32 %s8, 1
    %s14 = ssub.s32 %s8, 2
    %s15 = sadd.s32 %s8, 1
    %s16 = ssub.s32 %s8, %s15
    %p17 = scmp.eq.s32.totalorder %s16, 0
    %s19 = sadd.s32 %s18, 1
    %s20 = scalar_select %p17, %s18, %s19
    %p23 = pneg %p17
    %p24 = scmp.eq.s32.totalorder %s8, 1
    %p25 = por %p23, %p24
    %p26 = scmp.ne.s32.totalorder %s18, %s21
    %p27 = scmp.eq.s32.totalorder %s8, 0
    %p28 = por %p26, %p27
    %p29 = scmp.ne.s32.totalorder %s18, %s21
    %p30 = scmp.eq.s32.totalorder %s13, 1
    %p31 = por %p29, %p30
    %p32 = scmp.ne.s32.totalorder %s21, %s22
    %p33 = scmp.eq.s32.totalorder %s13, 0
    %p34 = por %p32, %p33
    %p35 = scmp.ne.s32.totalorder %s21, %s22
    %p36 = scmp.eq.s32.totalorder %s14, 1
    %p37 = por %p35, %p36
    %p39 = scmp.ne.s32.totalorder %s22, %s38
    %p40 = scmp.eq.s32.totalorder %s14, 0
    %p41 = por %p39, %p40
    %s43 = sadd.s32 %s42, 1
    %p46 = scmp.eq.s32.totalorder %s8, 1
    %p47 = scmp.ne.s32.totalorder %s42, %s44
    %p48 = scmp.eq.s32.totalorder %s8, 0
    %p49 = por %p47, %p48
    %p50 = scmp.ne.s32.totalorder %s42, %s44
    %p51 = scmp.eq.s32.totalorder %s13, 1
    %p52 = por %p50, %p51
    %p53 = scmp.ne.s32.totalorder %s44, %s45
    %p54 = scmp.eq.s32.totalorder %s13, 0
    %p55 = por %p53, %p54
    %p56 = scmp.ne.s32.totalorder %s44, %s45
    %p57 = scmp.eq.s32.totalorder %s14, 1
    %p58 = por %p56, %p57
    %p60 = scmp.ne.s32.totalorder %s45, %s59
    %p61 = scmp.eq.s32.totalorder %s14, 0
    %p62 = por %p60, %p61
    %s63 = ssub.s32 %s8, %s15
    %p64 = scmp.eq.s32.totalorder %s63, 0
    %s66 = sadd.s32 %s65, 1
    %s67 = scalar_select %p64, %s65, %s66
    %p70 = pneg %p64
    %p71 = scmp.eq.s32.totalorder %s8, 1
    %p72 = por %p70, %p71
    %p73 = scmp.ne.s32.totalorder %s65, %s68
    %p74 = scmp.eq.s32.totalorder %s8, 0
    %p75 = por %p73, %p74
    %p76 = scmp.ne.s32.totalorder %s65, %s68
    %p77 = scmp.eq.s32.totalorder %s13, 1
    %p78 = por %p76, %p77
    %p79 = scmp.ne.s32.totalorder %s68, %s69
    %p80 = scmp.eq.s32.totalorder %s13, 0
    %p81 = por %p79, %p80
    %p82 = scmp.ne.s32.totalorder %s68, %s69
    %p83 = scmp.eq.s32.totalorder %s14, 1
    %p84 = por %p82, %p83
    %p86 = scmp.ne.s32.totalorder %s69, %s85
    %p87 = scmp.eq.s32.totalorder %s14, 0
    %p88 = por %p86, %p87
    %p89 = scmp.le.s32.totalorder 1, %s8
    %p90 = scmp.lt.s32.totalorder %s8, 3
    %p91 = pnand %p89, %p90
    %p92 = pneg %p91
    // Predicated region
    $region9: #{pallas_forward.5} parent=5 // pred_check
      _
    $region10: #{pallas_forward.5} parent=5 // pred_check_branch
      %94 = sbr.rel (%p91) target = $region12
    $region11: #{pallas_forward.5} parent=5 // pred_region
      %s95 = ssub.s32 %s8, 1
      // Predicated region
      $region13: #{pallas_forward.5} parent=11 // pred_check
        %p96 = pneg %p55
      $region14: #{pallas_forward.5} parent=11 // pred_check_branch
        %98 = sbr.rel (%p96) target = $region16
      $region15: #{pallas_forward.5} parent=11 // pred_region
        _
      $region16: #{pallas_forward.5} parent=11 // pred_fallthru
        _
    $region12: #{pallas_forward.5} parent=5 // pred_fallthru
      _
    %p99 = scmp.lt.s32.totalorder %s8, 2
    // Predicated region
    $region17: #{pallas_forward.5} parent=5 // pred_check
      %p100 = pneg %p99
    $region18: #{pallas_forward.5} parent=5 // pred_check_branch
      %102 = sbr.rel (%p100) target = $region20
    $region19: #{pallas_forward.5} parent=5 // pred_region
      // Predicated region
      $region21: #{pallas_forward.5} parent=19 // pred_check
        %p103 = pneg %p28
      $region22: #{pallas_forward.5} parent=19 // pred_check_branch
        %105 = sbr.rel (%p103) target = $region24
      $region23: #{pallas_forward.5} parent=19 // pred_region
        %p106 = scmp.lt.s32.totalorder %s8, 1
        %s107 = scalar_select %p106, %s8, 1
        %s108 = smul.addr %s107, 16
        %s109 = smul.addr %s108, 4
        %s110 = scalar_lea.vmem %s0, %s109
      $region24: #{pallas_forward.5} parent=19 // pred_fallthru
        _
    $region20: #{pallas_forward.5} parent=5 // pred_fallthru
      _
    %p111 = scmp.le.s32.totalorder 1, %s8
    %p112 = scmp.lt.s32.totalorder %s8, 3
    %p113 = pnand %p111, %p112
    %p114 = pneg %p113
    // Predicated region
    $region25: #{pallas_forward.5} parent=5 // pred_check
      _
    $region26: #{pallas_forward.5} parent=5 // pred_check_branch
      %116 = sbr.rel (%p113) target = $region28
    $region27: #{pallas_forward.5} parent=5 // pred_region
      %s117 = ssub.s32 %s8, 1
      %p118 = scmp.lt.s32.totalorder %s13, 1
      %s119 = scalar_select %p118, %s13, 1
      %s120 = smul.addr %s119, 16
      %s121 = smul.addr %s120, 4
      %s122 = scalar_lea.vmem %s0, %s121
      %p123 = pneg %p34
      %p124 = pneg %p31
      %p125 = pneg %p55
      %p126 = pneg %p52
      %p127 = pneg %p81
      %p128 = pneg %p78
      %p129 = scmp.lt.s32.totalorder %s13, 1
      %s130 = scalar_select %p129, %s13, 1
      %s131 = smul.addr %s130, 8
      %s132 = smul.addr %s131, 4
      %s133 = scalar_lea.vmem %s2, %s132
      %p134 = scmp.lt.s32.totalorder %s13, 1
      %s135 = scalar_select %p134, %s13, 1
      %s136 = smul.addr %s135, 16
      %s137 = smul.addr %s136, 4
      %s138 = scalar_lea.vmem %s0, %s137
      %p139 = scmp.lt.s32.totalorder %s13, 1
      %s140 = scalar_select %p139, %s13, 1
      %s141 = smul.addr %s140, 8
      %s142 = smul.addr %s141, 4
      %s143 = scalar_lea.vmem %s2, %s142
      %v145 = vld [vmem:[%s138] sm:$0xf]
      %v146 = vld [vmem:[%s138 + $0x8] sm:$0xf]
      %v147 = vld [vmem:[%s138 + $0x10] sm:$0xf]
      %v148 = vld [vmem:[%s138 + $0x18] sm:$0xf]
      %v149 = vld [vmem:[%s138 + $0x20] sm:$0xf]
      %v150 = vld [vmem:[%s138 + $0x28] sm:$0xf]
      %v151 = vld [vmem:[%s138 + $0x30] sm:$0xf]
      %v152 = vld [vmem:[%s138 + $0x38] sm:$0xf]
      %v153 = vld [vmem:[%s1] sm:$0xf]
      %v154 = vld [vmem:[%s1 + $0x4] sm:$0xf]
      %s155 = scalar_lea.vmem %s138, 4
      %v156 = vld [vmem:[%s155] sm:$0xf]
      %v157 = vld [vmem:[%s155 + $0x8] sm:$0xf]
      %v158 = vld [vmem:[%s155 + $0x10] sm:$0xf]
      %v159 = vld [vmem:[%s155 + $0x18] sm:$0xf]
      %v160 = vld [vmem:[%s155 + $0x20] sm:$0xf]
      %v161 = vld [vmem:[%s155 + $0x28] sm:$0xf]
      %v162 = vld [vmem:[%s155 + $0x30] sm:$0xf]
      %v163 = vld [vmem:[%s155 + $0x38] sm:$0xf]
      %s164 = scalar_lea.vmem %s1, 8
      %v165 = vld [vmem:[%s164] sm:$0xf]
      %v166 = vld [vmem:[%s164 + $0x4] sm:$0xf]
      %v175 = vunpack.c.l.b16 %v156
      %v176 = vunpack.c.l.b16 %v157
      %v177 = vunpack.c.l.b16 %v158
      %v178 = vunpack.c.l.b16 %v159
      %v179 = vunpack.c.l.b16 %v160
      %v180 = vunpack.c.l.b16 %v161
      %v181 = vunpack.c.l.b16 %v162
      %v182 = vunpack.c.l.b16 %v163
      %v183 = vpack.c.b16 %v176, %v175
      %v184 = vpack.c.b16 %v178, %v177
      %v185 = vpack.c.b16 %v180, %v179
      %v186 = vpack.c.b16 %v182, %v181
      %v189 = vunpack.c.l.b16 %v165
      %v190 = vunpack.c.l.b16 %v166
      %v191 = vpack.c.b16 %v190, %v189
      %vm193 = vcmask 130048
      %v195 = vsel %vm193, %v183, 0
      %v198 = vsel %vm193, %v184, 0
      %v201 = vsel %vm193, %v185, 0
      %v204 = vsel %vm193, %v186, 0
      %206 = vmatpush.bf16.msra.mxu0 0
      %207 = vmatpush.bf16.msra.mxu0 0
      %208 = vmatpush.bf16.msra.mxu0 0
      %209 = vmatpush.bf16.msra.mxu0 0
      %210 = vmatpush.bf16.msra.mxu0 0
      %211 = vmatpush.bf16.msra.mxu0 0
      %212 = vmatpush.bf16.msra.mxu0 0
      %213 = vmatpush.bf16.msra.mxu0 %v191
      %214 = vmatmul.bf16.gmra.mxu0 %v195
      %v215 = vpop.f32.mrf.mxu0
      %v216 = vadd.f32 0.0, %v215
      %v217 = vpop.f32.mrf.mxu0
      %v218 = vadd.f32 0.0, %v217
      %219 = vmatmul.bf16.gmra.mxu0 %v198
      %v220 = vpop.f32.mrf.mxu0
      %v221 = vadd.f32 0.0, %v220
      %v222 = vpop.f32.mrf.mxu0
      %v223 = vadd.f32 0.0, %v222
      %224 = vmatmul.bf16.gmra.mxu0 %v201
      %v225 = vpop.f32.mrf.mxu0
      %v226 = vadd.f32 0.0, %v225
      %v227 = vpop.f32.mrf.mxu0
      %v228 = vadd.f32 0.0, %v227
      %229 = vmatmul.bf16.gmra.mxu0 %v204
      %v230 = vpop.f32.mrf.mxu0
      %v231 = vadd.f32 0.0, %v230
      %v232 = vpop.f32.mrf.mxu0
      %v233 = vadd.f32 0.0, %v232
      %234 = vdwg.mxu0
      %v243 = vunpack.c.l.b16 %v145
      %v244 = vunpack.c.l.b16 %v146
      %v245 = vunpack.c.l.b16 %v147
      %v246 = vunpack.c.l.b16 %v148
      %v247 = vunpack.c.l.b16 %v149
      %v248 = vunpack.c.l.b16 %v150
      %v249 = vunpack.c.l.b16 %v151
      %v250 = vunpack.c.l.b16 %v152
      %v251 = vpack.c.b16 %v244, %v243
      %v252 = vpack.c.b16 %v246, %v245
      %v253 = vpack.c.b16 %v248, %v247
      %v254 = vpack.c.b16 %v250, %v249
      %v257 = vunpack.c.l.b16 %v153
      %v258 = vunpack.c.l.b16 %v154
      %v259 = vpack.c.b16 %v258, %v257
      %v262 = vsel %vm193, %v251, 0
      %v265 = vsel %vm193, %v252, 0
      %v268 = vsel %vm193, %v253, 0
      %v271 = vsel %vm193, %v254, 0
      %273 = vmatpush.bf16.msra.mxu0 0
      %274 = vmatpush.bf16.msra.mxu0 0
      %275 = vmatpush.bf16.msra.mxu0 0
      %276 = vmatpush.bf16.msra.mxu0 0
      %277 = vmatpush.bf16.msra.mxu0 0
      %278 = vmatpush.bf16.msra.mxu0 0
      %279 = vmatpush.bf16.msra.mxu0 0
      %280 = vmatpush.bf16.msra.mxu0 %v259
      %281 = vmatmul.bf16.gmra.mxu0 %v262
      %v282 = vpop.f32.mrf.mxu0
      %v283 = vadd.f32 %v216, %v282
      %v284 = vpop.f32.mrf.mxu0
      %v285 = vadd.f32 %v218, %v284
      %286 = vmatmul.bf16.gmra.mxu0 %v265
      %v287 = vpop.f32.mrf.mxu0
      %v288 = vadd.f32 %v221, %v287
      %v289 = vpop.f32.mrf.mxu0
      %v290 = vadd.f32 %v223, %v289
      %291 = vmatmul.bf16.gmra.mxu0 %v268
      %v292 = vpop.f32.mrf.mxu0
      %v293 = vadd.f32 %v226, %v292
      %v294 = vpop.f32.mrf.mxu0
      %v295 = vadd.f32 %v228, %v294
      %296 = vmatmul.bf16.gmra.mxu0 %v271
      %v297 = vpop.f32.mrf.mxu0
      %v298 = vadd.f32 %v231, %v297
      %v299 = vpop.f32.mrf.mxu0
      %v300 = vadd.f32 %v233, %v299
      %301 = vdwg.mxu0
      %vm302 = vcmask 64512
      %v303 = vsel %vm302, %v283, 0.0
      %v304 = vsel %vm302, %v285, 0.0
      %v305 = vadd.f32 %v303, %v304
      %v306 = vsel %vm302, %v288, 0.0
      %v307 = vadd.f32 %v305, %v306
      %v308 = vsel %vm302, %v290, 0.0
      %v309 = vadd.f32 %v307, %v308
      %v310 = vsel %vm302, %v293, 0.0
      %v311 = vadd.f32 %v309, %v310
      %v312 = vsel %vm302, %v295, 0.0
      %v313 = vadd.f32 %v311, %v312
      %v314 = vsel %vm302, %v298, 0.0
      %v315 = vadd.f32 %v313, %v314
      %v316 = vsel %vm302, %v300, 0.0
      %v317 = vadd.f32 %v315, %v316
      %v318 = vrot.slane %v317, 4
      %v319 = vadd.f32 %v317, %v318
      %v320 = vrot.slane %v319, 2
      %v321 = vadd.f32 %v319, %v320
      %v322 = vrot.slane %v321, 1
      %v323 = vadd.f32 %v321, %v322
      %v324 = vmul.f32 %v283, %v283
      %v325 = vmul.f32 %v285, %v285
      %v326 = vmul.f32 %v288, %v288
      %v327 = vmul.f32 %v290, %v290
      %v328 = vmul.f32 %v293, %v293
      %v329 = vmul.f32 %v295, %v295
      %v330 = vmul.f32 %v298, %v298
      %v331 = vmul.f32 %v300, %v300
      %v332 = vsel %vm302, %v324, 0.0
      %v333 = vsel %vm302, %v325, 0.0
      %v334 = vadd.f32 %v332, %v333
      %v335 = vsel %vm302, %v326, 0.0
      %v336 = vadd.f32 %v334, %v335
      %v337 = vsel %vm302, %v327, 0.0
      %v338 = vadd.f32 %v336, %v337
      %v339 = vsel %vm302, %v328, 0.0
      %v340 = vadd.f32 %v338, %v339
      %v341 = vsel %vm302, %v329, 0.0
      %v342 = vadd.f32 %v340, %v341
      %v343 = vsel %vm302, %v330, 0.0
      %v344 = vadd.f32 %v342, %v343
      %v345 = vsel %vm302, %v331, 0.0
      %v346 = vadd.f32 %v344, %v345
      %v347 = vrot.slane %v346, 4
      %v348 = vadd.f32 %v346, %v347
      %v349 = vrot.slane %v348, 2
      %v350 = vadd.f32 %v348, %v349
      %v351 = vrot.slane %v350, 1
      %v352 = vadd.f32 %v350, %v351
      %v353 = vmul.f32 %v323, 0.015625
      %v354 = vmul.f32 %v352, 0.015625
      %v355 = vmul.f32 %v353, %v353
      %v356 = vsub.f32 %v354, %v355
      %v357 = vmax.f32 %v356, 0.0
      %v358 = vsub.f32 %v283, %v353
      %v359 = vsub.f32 %v285, %v353
      %v360 = vsub.f32 %v288, %v353
      %v361 = vsub.f32 %v290, %v353
      %v362 = vsub.f32 %v293, %v353
      %v363 = vsub.f32 %v295, %v353
      %v364 = vsub.f32 %v298, %v353
      %v365 = vsub.f32 %v300, %v353
      %v366 = vadd.f32 %v357, 1e-05
      %v367 = vrsqrt.pop %v366
      %v368 = vmul.f32 %v367, %v366
      %v369 = vmul.f32 %v368, %v367
      %v370 = vmul.f32 0.5, %v369
      %v371 = vsub.f32 1.5, %v370
      %v372 = vmul.f32 %v367, %v371
      %vm373 = vweird.f32 %v366
      %vm374 = vweird.f32 %v367
      %vm375 = vmor %vm373, %vm374
      %v376 = vsel %vm375, %v367, %v372
      %v377 = vmul.f32 %v358, %v376
      %v378 = vmul.f32 %v359, %v376
      %v379 = vmul.f32 %v360, %v376
      %v380 = vmul.f32 %v361, %v376
      %v381 = vmul.f32 %v362, %v376
      %v382 = vmul.f32 %v363, %v376
      %v383 = vmul.f32 %v364, %v376
      %v384 = vmul.f32 %v365, %v376
      %v385 = vmax.f32 %v377, 0.0
      %v386 = vmax.f32 %v378, 0.0
      %v387 = vmax.f32 %v379, 0.0
      %v388 = vmax.f32 %v380, 0.0
      %v389 = vmax.f32 %v381, 0.0
      %v390 = vmax.f32 %v382, 0.0
      %v391 = vmax.f32 %v383, 0.0
      %v392 = vmax.f32 %v384, 0.0
      %v393 = vpack.c.bf16 %v385, %v385
      %v394 = vpack.c.bf16 %v386, %v386
      %v395 = vpack.c.bf16 %v387, %v387
      %v396 = vpack.c.bf16 %v388, %v388
      %v397 = vpack.c.bf16 %v389, %v389
      %v398 = vpack.c.bf16 %v390, %v390
      %v399 = vpack.c.bf16 %v391, %v391
      %v400 = vpack.c.bf16 %v392, %v392
      %vm401 = vcmask 60416
      %402 = vst.msk [vmem:[%s143] sm:$0xf] %vm401, %v393
      %403 = vst.msk [vmem:[%s143 + $0x4] sm:$0xf] %vm401, %v394
      %404 = vst.msk [vmem:[%s143 + $0x8] sm:$0xf] %vm401, %v395
      %405 = vst.msk [vmem:[%s143 + $0xc] sm:$0xf] %vm401, %v396
      %406 = vst.msk [vmem:[%s143 + $0x10] sm:$0xf] %vm401, %v397
      %407 = vst.msk [vmem:[%s143 + $0x14] sm:$0xf] %vm401, %v398
      %408 = vst.msk [vmem:[%s143 + $0x18] sm:$0xf] %vm401, %v399
      %409 = vst.msk [vmem:[%s143 + $0x1c] sm:$0xf] %vm401, %v400
      %p410 = scmp.lt.s32.totalorder %s13, 1
      %s411 = scalar_select %p410, %s13, 1
      %s412 = smul.addr %s411, 8
      %s413 = smul.addr %s412, 4
      %s414 = scalar_lea.vmem %s2, %s413
      // Predicated region
      $region29: #{pallas_forward.5} parent=27 // pred_check
        %p415 = pneg %p78
      $region30: #{pallas_forward.5} parent=27 // pred_check_branch
        %417 = sbr.rel (%p415) target = $region32
      $region31: #{pallas_forward.5} parent=27 // pred_region
        _
      $region32: #{pallas_forward.5} parent=27 // pred_fallthru
        _
    $region28: #{pallas_forward.5} parent=5 // pred_fallthru
      _
    %p418 = scmp.le.s32.totalorder 2, %s8
    // Predicated region
    $region33: #{pallas_forward.5} parent=5 // pred_check
      %p419 = pneg %p418
    $region34: #{pallas_forward.5} parent=5 // pred_check_branch
      %421 = sbr.rel (%p419) target = $region36
    $region35: #{pallas_forward.5} parent=5 // pred_region
      %s422 = ssub.s32 %s8, 2
      // Predicated region
      $region37: #{pallas_forward.5} parent=35 // pred_check
        %p423 = pneg %p84
      $region38: #{pallas_forward.5} parent=35 // pred_check_branch
        %425 = sbr.rel (%p423) target = $region40
      $region39: #{pallas_forward.5} parent=35 // pred_region
        %p426 = scmp.lt.s32.totalorder %s14, 1
        %s427 = scalar_select %p426, %s14, 1
        %s428 = smul.addr %s427, 8
        %s429 = smul.addr %s428, 4
        %s430 = scalar_lea.vmem %s2, %s429
      $region40: #{pallas_forward.5} parent=35 // pred_fallthru
        _
    $region36: #{pallas_forward.5} parent=5 // pred_fallthru
      _
  $region6: #{pallas_forward.5} parent=0 // loop_footer
    %s12 = sadd.s32 1, %s8
  $region7: #{pallas_forward.5} parent=0 // loop_footer_branch
    %7 = sbr.rel target = $region3
  $region8: #{pallas_forward.5} parent=0 // loop_exit
    _

// kernel: pallas_forward.6
$region0: #{pallas_forward.6}
  #allocation0 [shape = 'u32[]', space=smem, size = 0x4, offset = 0x4, fixed_abs, tag = 'smem constant byte address 0x4 - core index']
  #allocation1 [shape = 'u32[72,128]{1,0:T(1,128)}', space=vmem, size = 0x9000, scoped, tag = 'internal scratch']
  #allocation2 [shape = 'bf16[10,10,8]{2,1,0:T(8,128)(2,1)}', space=vmem, size = 0xa000, scoped, tag = 'scratch operand']
  %s0 = inlined_call_operand.vmem [shape: bf16[2,8,8,8], index: 0, kind: input, shape index: {}]
  %s1 = inlined_call_operand.vmem [shape: bf16[9,8,16], index: 1, kind: input, shape index: {}]
  %s2 = inlined_call_operand.vmem [shape: bf16[2,8,8,16], index: 2, kind: output, shape index: {}]
  %s3 = sld [smem:[#allocation0]]
  $region41: #{pallas_forward.6} parent=0
    _
  %s5 = ssub.s32 1, %s3
  %s6 = scalar_select 0, %s5, %s3
  loop: start=0, step=1, limit=4
  $region2: #{pallas_forward.6} parent=0 // loop_pre_header
    _
  $region3: #{pallas_forward.6} parent=0 // loop_header
    %s8 = sphi 0, %s12
    %p9 = scmp.ge.s32.totalorder %s8, 4
    %s18 = sphi 0, %s20
    %s21 = sphi 0, %s18
    %s22 = sphi 0, %s21
    %s38 = sphi 0, %s22
    %s42 = sphi 0, %s42
    %s44 = sphi 0, %s42
    %s45 = sphi 0, %s44
    %s59 = sphi 0, %s45
    %s65 = sphi 0, %s67
    %s68 = sphi 0, %s65
    %s69 = sphi 0, %s68
    %s85 = sphi 0, %s69
  $region4: #{pallas_forward.6} parent=0 // loop_header_branch
    %11 = sbr.rel (%p9) target = $region8
  $region5: #{pallas_forward.6} parent=0 // loop_body
    %s13 = ssub.s32 %s8, 1
    %s14 = ssub.s32 %s8, 2
    %s15 = sadd.s32 %s8, 1
    %s16 = ssub.s32 %s8, %s15
    %p17 = scmp.eq.s32.totalorder %s16, 0
    %s19 = sadd.s32 %s18, 1
    %s20 = scalar_select %p17, %s18, %s19
    %p23 = pneg %p17
    %p24 = scmp.eq.s32.totalorder %s8, 1
    %p25 = por %p23, %p24
    %p26 = scmp.ne.s32.totalorder %s18, %s21
    %p27 = scmp.eq.s32.totalorder %s8, 0
    %p28 = por %p26, %p27
    %p29 = scmp.ne.s32.totalorder %s18, %s21
    %p30 = scmp.eq.s32.totalorder %s13, 1
    %p31 = por %p29, %p30
    %p32 = scmp.ne.s32.totalorder %s21, %s22
    %p33 = scmp.eq.s32.totalorder %s13, 0
    %p34 = por %p32, %p33
    %p35 = scmp.ne.s32.totalorder %s21, %s22
    %p36 = scmp.eq.s32.totalorder %s14, 1
    %p37 = por %p35, %p36
    %p39 = scmp.ne.s32.totalorder %s22, %s38
    %p40 = scmp.eq.s32.totalorder %s14, 0
    %p41 = por %p39, %p40
    %s43 = sadd.s32 %s42, 1
    %p46 = scmp.eq.s32.totalorder %s8, 1
    %p47 = scmp.ne.s32.totalorder %s42, %s44
    %p48 = scmp.eq.s32.totalorder %s8, 0
    %p49 = por %p47, %p48
    %p50 = scmp.ne.s32.totalorder %s42, %s44
    %p51 = scmp.eq.s32.totalorder %s13, 1
    %p52 = por %p50, %p51
    %p53 = scmp.ne.s32.totalorder %s44, %s45
    %p54 = scmp.eq.s32.totalorder %s13, 0
    %p55 = por %p53, %p54
    %p56 = scmp.ne.s32.totalorder %s44, %s45
    %p57 = scmp.eq.s32.totalorder %s14, 1
    %p58 = por %p56, %p57
    %p60 = scmp.ne.s32.totalorder %s45, %s59
    %p61 = scmp.eq.s32.totalorder %s14, 0
    %p62 = por %p60, %p61
    %s63 = ssub.s32 %s8, %s15
    %p64 = scmp.eq.s32.totalorder %s63, 0
    %s66 = sadd.s32 %s65, 1
    %s67 = scalar_select %p64, %s65, %s66
    %p70 = pneg %p64
    %p71 = scmp.eq.s32.totalorder %s8, 1
    %p72 = por %p70, %p71
    %p73 = scmp.ne.s32.totalorder %s65, %s68
    %p74 = scmp.eq.s32.totalorder %s8, 0
    %p75 = por %p73, %p74
    %p76 = scmp.ne.s32.totalorder %s65, %s68
    %p77 = scmp.eq.s32.totalorder %s13, 1
    %p78 = por %p76, %p77
    %p79 = scmp.ne.s32.totalorder %s68, %s69
    %p80 = scmp.eq.s32.totalorder %s13, 0
    %p81 = por %p79, %p80
    %p82 = scmp.ne.s32.totalorder %s68, %s69
    %p83 = scmp.eq.s32.totalorder %s14, 1
    %p84 = por %p82, %p83
    %p86 = scmp.ne.s32.totalorder %s69, %s85
    %p87 = scmp.eq.s32.totalorder %s14, 0
    %p88 = por %p86, %p87
    %p89 = scmp.le.s32.totalorder 1, %s8
    %p90 = scmp.lt.s32.totalorder %s8, 3
    %p91 = pnand %p89, %p90
    %p92 = pneg %p91
    // Predicated region
    $region9: #{pallas_forward.6} parent=5 // pred_check
      _
    $region10: #{pallas_forward.6} parent=5 // pred_check_branch
      %94 = sbr.rel (%p91) target = $region12
    $region11: #{pallas_forward.6} parent=5 // pred_region
      %s95 = ssub.s32 %s8, 1
      // Predicated region
      $region13: #{pallas_forward.6} parent=11 // pred_check
        %p96 = pneg %p55
      $region14: #{pallas_forward.6} parent=11 // pred_check_branch
        %98 = sbr.rel (%p96) target = $region16
      $region15: #{pallas_forward.6} parent=11 // pred_region
        _
      $region16: #{pallas_forward.6} parent=11 // pred_fallthru
        _
    $region12: #{pallas_forward.6} parent=5 // pred_fallthru
      _
    %p99 = scmp.lt.s32.totalorder %s8, 2
    // Predicated region
    $region17: #{pallas_forward.6} parent=5 // pred_check
      %p100 = pneg %p99
    $region18: #{pallas_forward.6} parent=5 // pred_check_branch
      %102 = sbr.rel (%p100) target = $region20
    $region19: #{pallas_forward.6} parent=5 // pred_region
      // Predicated region
      $region21: #{pallas_forward.6} parent=19 // pred_check
        %p103 = pneg %p28
      $region22: #{pallas_forward.6} parent=19 // pred_check_branch
        %105 = sbr.rel (%p103) target = $region24
      $region23: #{pallas_forward.6} parent=19 // pred_region
        %p106 = scmp.lt.s32.totalorder %s8, 1
        %s107 = scalar_select %p106, %s8, 1
        %s108 = smul.addr %s107, 8
        %s109 = smul.addr %s108, 4
        %s110 = scalar_lea.vmem %s0, %s109
      $region24: #{pallas_forward.6} parent=19 // pred_fallthru
        _
    $region20: #{pallas_forward.6} parent=5 // pred_fallthru
      _
    %p111 = scmp.le.s32.totalorder 1, %s8
    %p112 = scmp.lt.s32.totalorder %s8, 3
    %p113 = pnand %p111, %p112
    %p114 = pneg %p113
    // Predicated region
    $region25: #{pallas_forward.6} parent=5 // pred_check
      _
    $region26: #{pallas_forward.6} parent=5 // pred_check_branch
      %116 = sbr.rel (%p113) target = $region28
    $region27: #{pallas_forward.6} parent=5 // pred_region
      %s117 = ssub.s32 %s8, 1
      %p118 = scmp.lt.s32.totalorder %s13, 1
      %s119 = scalar_select %p118, %s13, 1
      %s120 = smul.addr %s119, 8
      %s121 = smul.addr %s120, 4
      %s122 = scalar_lea.vmem %s0, %s121
      %p123 = pneg %p34
      %p124 = pneg %p31
      %p125 = pneg %p55
      %p126 = pneg %p52
      %p127 = pneg %p81
      %p128 = pneg %p78
      %p129 = scmp.lt.s32.totalorder %s13, 1
      %s130 = scalar_select %p129, %s13, 1
      %s131 = smul.addr %s130, 8
      %s132 = smul.addr %s131, 4
      %s133 = scalar_lea.vmem %s2, %s132
      %p134 = scmp.lt.s32.totalorder %s13, 1
      %s135 = scalar_select %p134, %s13, 1
      %s136 = smul.addr %s135, 8
      %s137 = smul.addr %s136, 4
      %s138 = scalar_lea.vmem %s0, %s137
      %p139 = scmp.lt.s32.totalorder %s13, 1
      %s140 = scalar_select %p139, %s13, 1
      %s141 = smul.addr %s140, 8
      %s142 = smul.addr %s141, 4
      %s143 = scalar_lea.vmem %s2, %s142
      %vm145 = vcmask 60416
      %146 = vst.msk [vmem:[#allocation2] sm:$0xf] %vm145, 0
      %vm147 = vcmask 57344
      %148 = vst.msk [vmem:[#allocation2 + $0x4] sm:$0x1] %vm147, 0
      %s149 = scalar_lea.vmem [#allocation2], 72
      %150 = vst.msk [vmem:[%s149] sm:$0xf] %vm145, 0
      %151 = vst.msk [vmem:[%s149 + $0x4] sm:$0x1] %vm147, 0
      %s152 = scalar_lea.vmem [#allocation2], 8
      %vm153 = vcmask 57344
      %vm154 = vsmask.f32 256
      %vm155 = vmand %vm153, %vm154
      %v156 = vld [vmem:[%s152] sm:$0x1]
      %v157 = vsel %vm155, 0, %v156
      %158 = vst [vmem:[%s152] sm:$0x1] %v157
      %v159 = vld [vmem:[%s152 + $0x8] sm:$0x1]
      %v160 = vsel %vm155, 0, %v159
      %161 = vst [vmem:[%s152 + $0x8] sm:$0x1] %v160
      %v162 = vld [vmem:[%s152 + $0x10] sm:$0x1]
      %v163 = vsel %vm155, 0, %v162
      %164 = vst [vmem:[%s152 + $0x10] sm:$0x1] %v163
      %v165 = vld [vmem:[%s152 + $0x18] sm:$0x1]
      %v166 = vsel %vm155, 0, %v165
      %167 = vst [vmem:[%s152 + $0x18] sm:$0x1] %v166
      %v168 = vld [vmem:[%s152 + $0x20] sm:$0x1]
      %v169 = vsel %vm155, 0, %v168
      %170 = vst [vmem:[%s152 + $0x20] sm:$0x1] %v169
      %v171 = vld [vmem:[%s152 + $0x28] sm:$0x1]
      %v172 = vsel %vm155, 0, %v171
      %173 = vst [vmem:[%s152 + $0x28] sm:$0x1] %v172
      %v174 = vld [vmem:[%s152 + $0x30] sm:$0x1]
      %v175 = vsel %vm155, 0, %v174
      %176 = vst [vmem:[%s152 + $0x30] sm:$0x1] %v175
      %v177 = vld [vmem:[%s152 + $0x38] sm:$0x1]
      %v178 = vsel %vm155, 0, %v177
      %179 = vst [vmem:[%s152 + $0x38] sm:$0x1] %v178
      %vm180 = vsmask.f32 7938
      %vm181 = vmand %vm153, %vm180
      %v182 = vld [vmem:[%s152 + $0x4] sm:$0x1]
      %v183 = vsel %vm181, 0, %v182
      %184 = vst [vmem:[%s152 + $0x4] sm:$0x1] %v183
      %v185 = vld [vmem:[%s152 + $0xc] sm:$0x1]
      %v186 = vsel %vm181, 0, %v185
      %187 = vst [vmem:[%s152 + $0xc] sm:$0x1] %v186
      %v188 = vld [vmem:[%s152 + $0x14] sm:$0x1]
      %v189 = vsel %vm181, 0, %v188
      %190 = vst [vmem:[%s152 + $0x14] sm:$0x1] %v189
      %v191 = vld [vmem:[%s152 + $0x1c] sm:$0x1]
      %v192 = vsel %vm181, 0, %v191
      %193 = vst [vmem:[%s152 + $0x1c] sm:$0x1] %v192
      %v194 = vld [vmem:[%s152 + $0x24] sm:$0x1]
      %v195 = vsel %vm181, 0, %v194
      %196 = vst [vmem:[%s152 + $0x24] sm:$0x1] %v195
      %v197 = vld [vmem:[%s152 + $0x2c] sm:$0x1]
      %v198 = vsel %vm181, 0, %v197
      %199 = vst [vmem:[%s152 + $0x2c] sm:$0x1] %v198
      %v200 = vld [vmem:[%s152 + $0x34] sm:$0x1]
      %v201 = vsel %vm181, 0, %v200
      %202 = vst [vmem:[%s152 + $0x34] sm:$0x1] %v201
      %v203 = vld [vmem:[%s152 + $0x3c] sm:$0x1]
      %v204 = vsel %vm181, 0, %v203
      %205 = vst [vmem:[%s152 + $0x3c] sm:$0x1] %v204
      %v206 = vld [vmem:[%s138] sm:$0xf]
      %v207 = vld [vmem:[%s138 + $0x4] sm:$0xf]
      %v208 = vld [vmem:[%s138 + $0x8] sm:$0xf]
      %v209 = vld [vmem:[%s138 + $0xc] sm:$0xf]
      %v210 = vld [vmem:[%s138 + $0x10] sm:$0xf]
      %v211 = vld [vmem:[%s138 + $0x14] sm:$0xf]
      %v212 = vld [vmem:[%s138 + $0x18] sm:$0xf]
      %v213 = vld [vmem:[%s138 + $0x1c] sm:$0xf]
      %v215 = vshrl.u32 %v206, 16
      %v217 = vrot.slane %v215, 7
      %v218 = vshll.u32 %v206, 16
      %v220 = vor.u32 %v217, %v218
      %v221 = vrot.slane %v217, 4
      %v223 = vshrl.u32 %v207, 16
      %v225 = vrot.slane %v223, 7
      %v226 = vshll.u32 %v207, 16
      %v228 = vor.u32 %v225, %v226
      %v229 = vrot.slane %v225, 4
      %v231 = vshrl.u32 %v208, 16
      %v233 = vrot.slane %v231, 7
      %v234 = vshll.u32 %v208, 16
      %v236 = vor.u32 %v233, %v234
      %v237 = vrot.slane %v233, 4
      %v239 = vshrl.u32 %v209, 16
      %v241 = vrot.slane %v239, 7
      %v242 = vshll.u32 %v209, 16
      %v244 = vor.u32 %v241, %v242
      %v245 = vrot.slane %v241, 4
      %v247 = vshrl.u32 %v210, 16
      %v249 = vrot.slane %v247, 7
      %v250 = vshll.u32 %v210, 16
      %v252 = vor.u32 %v249, %v250
      %v253 = vrot.slane %v249, 4
      %v255 = vshrl.u32 %v211, 16
      %v257 = vrot.slane %v255, 7
      %v258 = vshll.u32 %v211, 16
      %v260 = vor.u32 %v257, %v258
      %v261 = vrot.slane %v257, 4
      %v263 = vshrl.u32 %v212, 16
      %v265 = vrot.slane %v263, 7
      %v266 = vshll.u32 %v212, 16
      %v268 = vor.u32 %v265, %v266
      %v269 = vrot.slane %v265, 4
      %v271 = vshrl.u32 %v213, 16
      %v273 = vrot.slane %v271, 7
      %v274 = vshll.u32 %v213, 16
      %v276 = vor.u32 %v273, %v274
      %v277 = vrot.slane %v273, 4
      %vm294 = vcmask 60416
      %vm295 = vmand %vm294, %vm180
      %v296 = vld [vmem:[%s152] sm:$0xf]
      %v297 = vsel %vm295, %v220, %v296
      %298 = vst [vmem:[%s152] sm:$0xf] %v297
      %v299 = vld [vmem:[%s152 + $0x4] sm:$0x1]
      %v300 = vsel %vm155, %v221, %v299
      %301 = vst [vmem:[%s152 + $0x4] sm:$0x1] %v300
      %v302 = vld [vmem:[%s152 + $0x8] sm:$0xf]
      %v303 = vsel %vm295, %v228, %v302
      %304 = vst [vmem:[%s152 + $0x8] sm:$0xf] %v303
      %v305 = vld [vmem:[%s152 + $0xc] sm:$0x1]
      %v306 = vsel %vm155, %v229, %v305
      %307 = vst [vmem:[%s152 + $0xc] sm:$0x1] %v306
      %v308 = vld [vmem:[%s152 + $0x10] sm:$0xf]
      %v309 = vsel %vm295, %v236, %v308
      %310 = vst [vmem:[%s152 + $0x10] sm:$0xf] %v309
      %v311 = vld [vmem:[%s152 + $0x14] sm:$0x1]
      %v312 = vsel %vm155, %v237, %v311
      %313 = vst [vmem:[%s152 + $0x14] sm:$0x1] %v312
      %v314 = vld [vmem:[%s152 + $0x18] sm:$0xf]
      %v315 = vsel %vm295, %v244, %v314
      %316 = vst [vmem:[%s152 + $0x18] sm:$0xf] %v315
      %v317 = vld [vmem:[%s152 + $0x1c] sm:$0x1]
      %v318 = vsel %vm155, %v245, %v317
      %319 = vst [vmem:[%s152 + $0x1c] sm:$0x1] %v318
      %v320 = vld [vmem:[%s152 + $0x20] sm:$0xf]
      %v321 = vsel %vm295, %v252, %v320
      %322 = vst [vmem:[%s152 + $0x20] sm:$0xf] %v321
      %v323 = vld [vmem:[%s152 + $0x24] sm:$0x1]
      %v324 = vsel %vm155, %v253, %v323
      %325 = vst [vmem:[%s152 + $0x24] sm:$0x1] %v324
      %v326 = vld [vmem:[%s152 + $0x28] sm:$0xf]
      %v327 = vsel %vm295, %v260, %v326
      %328 = vst [vmem:[%s152 + $0x28] sm:$0xf] %v327
      %v329 = vld [vmem:[%s152 + $0x2c] sm:$0x1]
      %v330 = vsel %vm155, %v261, %v329
      %331 = vst [vmem:[%s152 + $0x2c] sm:$0x1] %v330
      %v332 = vld [vmem:[%s152 + $0x30] sm:$0xf]
      %v333 = vsel %vm295, %v268, %v332
      %334 = vst [vmem:[%s152 + $0x30] sm:$0xf] %v333
      %v335 = vld [vmem:[%s152 + $0x34] sm:$0x1]
      %v336 = vsel %vm155, %v269, %v335
      %337 = vst [vmem:[%s152 + $0x34] sm:$0x1] %v336
      %v338 = vld [vmem:[%s152 + $0x38] sm:$0xf]
      %v339 = vsel %vm295, %v276, %v338
      %340 = vst [vmem:[%s152 + $0x38] sm:$0xf] %v339
      %v341 = vld [vmem:[%s152 + $0x3c] sm:$0x1]
      %v342 = vsel %vm155, %v277, %v341
      %343 = vst [vmem:[%s152 + $0x3c] sm:$0x1] %v342
      %v344 = vld [vmem:[#allocation2] sm:$0xf]
      %v345 = vld [vmem:[#allocation2 + $0x8] sm:$0xf]
      %v346 = vld [vmem:[#allocation2 + $0x10] sm:$0xf]
      %v347 = vld [vmem:[#allocation2 + $0x18] sm:$0xf]
      %v348 = vld [vmem:[#allocation2 + $0x20] sm:$0xf]
      %v349 = vld [vmem:[#allocation2 + $0x28] sm:$0xf]
      %v350 = vld [vmem:[#allocation2 + $0x30] sm:$0xf]
      %v351 = vld [vmem:[#allocation2 + $0x38] sm:$0xf]
      %v352 = vld [vmem:[%s1] sm:$0xf]
      %v353 = vld [vmem:[#allocation2 + $0x4] sm:$0x1]
      %v354 = vld [vmem:[#allocation2 + $0xc] sm:$0x1]
      %v355 = vld [vmem:[#allocation2 + $0x14] sm:$0x1]
      %v356 = vld [vmem:[#allocation2 + $0x1c] sm:$0x1]
      %v357 = vld [vmem:[#allocation2 + $0x24] sm:$0x1]
      %v358 = vld [vmem:[#allocation2 + $0x2c] sm:$0x1]
      %v359 = vld [vmem:[#allocation2 + $0x34] sm:$0x1]
      %v360 = vld [vmem:[#allocation2 + $0x3c] sm:$0x1]
      %vm361 = vsmask.f32 3328
      %vm362 = vsmask.f32 7440
      %vm363 = vmor %vm361, %vm362
      %v365 = vshrl.u32 %v344, 16
      %v367 = vrot.slane %v365, 4
      %v368 = vshll.u32 %v344, 16
      %v370 = vrot.slane %v368, 5
      %v371 = vor.u32 %v367, %v370
      %v372 = vrot.slane %v371, 4
      %v374 = vshll.u32 %v353, 16
      %v376 = vrot.slane %v374, 5
      %v377 = vsel %vm363, %v372, %v376
      %v379 = vshrl.u32 %v345, 16
      %v381 = vrot.slane %v379, 4
      %v382 = vshll.u32 %v345, 16
      %v384 = vrot.slane %v382, 5
      %v385 = vor.u32 %v381, %v384
      %v386 = vrot.slane %v385, 4
      %v388 = vshll.u32 %v354, 16
      %v390 = vrot.slane %v388, 5
      %v391 = vsel %vm363, %v386, %v390
      %v393 = vshrl.u32 %v346, 16
      %v395 = vrot.slane %v393, 4
      %v396 = vshll.u32 %v346, 16
      %v398 = vrot.slane %v396, 5
      %v399 = vor.u32 %v395, %v398
      %v400 = vrot.slane %v399, 4
      %v402 = vshll.u32 %v355, 16
      %v404 = vrot.slane %v402, 5
      %v405 = vsel %vm363, %v400, %v404
      %v407 = vshrl.u32 %v347, 16
      %v409 = vrot.slane %v407, 4
      %v410 = vshll.u32 %v347, 16
      %v412 = vrot.slane %v410, 5
      %v413 = vor.u32 %v409, %v412
      %v414 = vrot.slane %v413, 4
      %v416 = vshll.u32 %v356, 16
      %v418 = vrot.slane %v416, 5
      %v419 = vsel %vm363, %v414, %v418
      %v421 = vshrl.u32 %v348, 16
      %v423 = vrot.slane %v421, 4
      %v424 = vshll.u32 %v348, 16
      %v426 = vrot.slane %v424, 5
      %v427 = vor.u32 %v423, %v426
      %v428 = vrot.slane %v427, 4
      %v430 = vshll.u32 %v357, 16
      %v432 = vrot.slane %v430, 5
      %v433 = vsel %vm363, %v428, %v432
      %v435 = vshrl.u32 %v349, 16
      %v437 = vrot.slane %v435, 4
      %v438 = vshll.u32 %v349, 16
      %v440 = vrot.slane %v438, 5
      %v441 = vor.u32 %v437, %v440
      %v442 = vrot.slane %v441, 4
      %v444 = vshll.u32 %v358, 16
      %v446 = vrot.slane %v444, 5
      %v447 = vsel %vm363, %v442, %v446
      %v449 = vshrl.u32 %v350, 16
      %v451 = vrot.slane %v449, 4
      %v452 = vshll.u32 %v350, 16
      %v454 = vrot.slane %v452, 5
      %v455 = vor.u32 %v451, %v454
      %v456 = vrot.slane %v455, 4
      %v458 = vshll.u32 %v359, 16
      %v460 = vrot.slane %v458, 5
      %v461 = vsel %vm363, %v456, %v460
      %v463 = vshrl.u32 %v351, 16
      %v465 = vrot.slane %v463, 4
      %v466 = vshll.u32 %v351, 16
      %v468 = vrot.slane %v466, 5
      %v469 = vor.u32 %v465, %v468
      %v470 = vrot.slane %v469, 4
      %v472 = vshll.u32 %v360, 16
      %v474 = vrot.slane %v472, 5
      %v475 = vsel %vm363, %v470, %v474
      %s476 = scalar_lea.vmem %s1, 4
      %v477 = vld [vmem:[%s476] sm:$0xf]
      %v478 = vunpack.c.l.b16 %v377
      %v479 = vunpack.c.l.b16 %v391
      %v480 = vunpack.c.l.b16 %v405
      %v481 = vunpack.c.l.b16 %v419
      %v482 = vunpack.c.l.b16 %v433
      %v483 = vunpack.c.l.b16 %v447
      %v484 = vunpack.c.l.b16 %v461
      %v485 = vunpack.c.l.b16 %v475
      %v486 = vpack.c.b16 %v479, %v478
      %v487 = vpack.c.b16 %v481, %v480
      %v488 = vpack.c.b16 %v483, %v482
      %v489 = vpack.c.b16 %v485, %v484
      %vm490 = vcmask 64512
      %v492 = vsel %vm490, %v486, 0
      %v495 = vsel %vm490, %v487, 0
      %v498 = vsel %vm490, %v488, 0
      %v501 = vsel %vm490, %v489, 0
      %vm503 = vcmask 1043456
      %v505 = vsel %vm503, %v477, 0
      %507 = vmatpush.bf16.msra.mxu0 0
      %508 = vmatpush.bf16.msra.mxu0 0
      %509 = vmatpush.bf16.msra.mxu0 0
      %510 = vmatpush.bf16.msra.mxu0 0
      %511 = vmatpush.bf16.msra.mxu0 0
      %512 = vmatpush.bf16.msra.mxu0 0
      %513 = vmatpush.bf16.msra.mxu0 0
      %514 = vmatpush.bf16.msra.mxu0 %v505
      %515 = vmatmul.bf16.gmra.mxu0 %v492
      %v516 = vpop.f32.mrf.mxu0
      %v517 = vadd.f32 0.0, %v516
      %v518 = vpop.f32.mrf.mxu0
      %v519 = vadd.f32 0.0, %v518
      %520 = vmatmul.bf16.gmra.mxu0 %v495
      %v521 = vpop.f32.mrf.mxu0
      %v522 = vadd.f32 0.0, %v521
      %v523 = vpop.f32.mrf.mxu0
      %v524 = vadd.f32 0.0, %v523
      %525 = vmatmul.bf16.gmra.mxu0 %v498
      %v526 = vpop.f32.mrf.mxu0
      %v527 = vadd.f32 0.0, %v526
      %v528 = vpop.f32.mrf.mxu0
      %v529 = vadd.f32 0.0, %v528
      %530 = vmatmul.bf16.gmra.mxu0 %v501
      %v531 = vpop.f32.mrf.mxu0
      %v532 = vadd.f32 0.0, %v531
      %v533 = vpop.f32.mrf.mxu0
      %v534 = vadd.f32 0.0, %v533
      %535 = vdwg.mxu0
      %v544 = vunpack.c.l.b16 %v344
      %v545 = vunpack.c.l.b16 %v345
      %v546 = vunpack.c.l.b16 %v346
      %v547 = vunpack.c.l.b16 %v347
      %v548 = vunpack.c.l.b16 %v348
      %v549 = vunpack.c.l.b16 %v349
      %v550 = vunpack.c.l.b16 %v350
      %v551 = vunpack.c.l.b16 %v351
      %v552 = vpack.c.b16 %v545, %v544
      %v553 = vpack.c.b16 %v547, %v546
      %v554 = vpack.c.b16 %v549, %v548
      %v555 = vpack.c.b16 %v551, %v550
      %v557 = vsel %vm490, %v552, 0
      %v560 = vsel %vm490, %v553, 0
      %v563 = vsel %vm490, %v554, 0
      %v566 = vsel %vm490, %v555, 0
      %v569 = vsel %vm503, %v352, 0
      %571 = vmatpush.bf16.msra.mxu0 0
      %572 = vmatpush.bf16.msra.mxu0 0
      %573 = vmatpush.bf16.msra.mxu0 0
      %574 = vmatpush.bf16.msra.mxu0 0
      %575 = vmatpush.bf16.msra.mxu0 0
      %576 = vmatpush.bf16.msra.mxu0 0
      %577 = vmatpush.bf16.msra.mxu0 0
      %578 = vmatpush.bf16.msra.mxu0 %v569
      %579 = vmatmul.bf16.gmra.mxu0 %v557
      %v580 = vpop.f32.mrf.mxu0
      %v581 = vadd.f32 %v517, %v580
      %v582 = vpop.f32.mrf.mxu0
      %v583 = vadd.f32 %v519, %v582
      %584 = vmatmul.bf16.gmra.mxu0 %v560
      %v585 = vpop.f32.mrf.mxu0
      %v586 = vadd.f32 %v522, %v585
      %v587 = vpop.f32.mrf.mxu0
      %v588 = vadd.f32 %v524, %v587
      %589 = vmatmul.bf16.gmra.mxu0 %v563
      %v590 = vpop.f32.mrf.mxu0
      %v591 = vadd.f32 %v527, %v590
      %v592 = vpop.f32.mrf.mxu0
      %v593 = vadd.f32 %v529, %v592
      %594 = vmatmul.bf16.gmra.mxu0 %v566
      %v595 = vpop.f32.mrf.mxu0
      %v596 = vadd.f32 %v532, %v595
      %v597 = vpop.f32.mrf.mxu0
      %v598 = vadd.f32 %v534, %v597
      %599 = vdwg.mxu0
      %v600 = vld [vmem:[#allocation2] sm:$0xe]
      %v601 = vld [vmem:[#allocation2 + $0x8] sm:$0xe]
      %v602 = vld [vmem:[#allocation2 + $0x10] sm:$0xe]
      %v603 = vld [vmem:[#allocation2 + $0x18] sm:$0xe]
      %v604 = vld [vmem:[#allocation2 + $0x20] sm:$0xe]
      %v605 = vld [vmem:[#allocation2 + $0x28] sm:$0xe]
      %v606 = vld [vmem:[#allocation2 + $0x30] sm:$0xe]
      %v607 = vld [vmem:[#allocation2 + $0x38] sm:$0xe]
      %vm624 = vcmask 1042432
      %vm625 = vcmask 1046532
      %vm626 = vmor %vm624, %vm625
      %v627 = vrot.slane %v600, 5
      %v628 = vrot.slane %v627, 4
      %v629 = vrot.slane %v353, 5
      %v630 = vsel %vm626, %v628, %v629
      %v631 = vrot.slane %v601, 5
      %v632 = vrot.slane %v631, 4
      %v633 = vrot.slane %v354, 5
      %v634 = vsel %vm626, %v632, %v633
      %v635 = vrot.slane %v602, 5
      %v636 = vrot.slane %v635, 4
      %v637 = vrot.slane %v355, 5
      %v638 = vsel %vm626, %v636, %v637
      %v639 = vrot.slane %v603, 5
      %v640 = vrot.slane %v639, 4
      %v641 = vrot.slane %v356, 5
      %v642 = vsel %vm626, %v640, %v641
      %v643 = vrot.slane %v604, 5
      %v644 = vrot.slane %v643, 4
      %v645 = vrot.slane %v357, 5
      %v646 = vsel %vm626, %v644, %v645
      %v647 = vrot.slane %v605, 5
      %v648 = vrot.slane %v647, 4
      %v649 = vrot.slane %v358, 5
      %v650 = vsel %vm626, %v648, %v649
      %v651 = vrot.slane %v606, 5
      %v652 = vrot.slane %v651, 4
      %v653 = vrot.slane %v359, 5
      %v654 = vsel %vm626, %v652, %v653
      %v655 = vrot.slane %v607, 5
      %v656 = vrot.slane %v655, 4
      %v657 = vrot.slane %v360, 5
      %v658 = vsel %vm626, %v656, %v657
      %s659 = scalar_lea.vmem %s1, 8
      %v660 = vld [vmem:[%s659] sm:$0xf]
      %v661 = vunpack.c.l.b16 %v630
      %v662 = vunpack.c.l.b16 %v634
      %v663 = vunpack.c.l.b16 %v638
      %v664 = vunpack.c.l.b16 %v642
      %v665 = vunpack.c.l.b16 %v646
      %v666 = vunpack.c.l.b16 %v650
      %v667 = vunpack.c.l.b16 %v654
      %v668 = vunpack.c.l.b16 %v658
      %v669 = vpack.c.b16 %v662, %v661
      %v670 = vpack.c.b16 %v664, %v663
      %v671 = vpack.c.b16 %v666, %v665
      %v672 = vpack.c.b16 %v668, %v667
      %v674 = vsel %vm490, %v669, 0
      %v677 = vsel %vm490, %v670, 0
      %v680 = vsel %vm490, %v671, 0
      %v683 = vsel %vm490, %v672, 0
      %v686 = vsel %vm503, %v660, 0
      %688 = vmatpush.bf16.msra.mxu0 0
      %689 = vmatpush.bf16.msra.mxu0 0
      %690 = vmatpush.bf16.msra.mxu0 0
      %691 = vmatpush.bf16.msra.mxu0 0
      %692 = vmatpush.bf16.msra.mxu0 0
      %693 = vmatpush.bf16.msra.mxu0 0
      %694 = vmatpush.bf16.msra.mxu0 0
      %695 = vmatpush.bf16.msra.mxu0 %v686
      %696 = vmatmul.bf16.gmra.mxu0 %v674
      %v697 = vpop.f32.mrf.mxu0
      %v698 = vadd.f32 0.0, %v697
      %v699 = vpop.f32.mrf.mxu0
      %v700 = vadd.f32 0.0, %v699
      %701 = vmatmul.bf16.gmra.mxu0 %v677
      %v702 = vpop.f32.mrf.mxu0
      %v703 = vadd.f32 0.0, %v702
      %v704 = vpop.f32.mrf.mxu0
      %v705 = vadd.f32 0.0, %v704
      %706 = vmatmul.bf16.gmra.mxu0 %v680
      %v707 = vpop.f32.mrf.mxu0
      %v708 = vadd.f32 0.0, %v707
      %v709 = vpop.f32.mrf.mxu0
      %v710 = vadd.f32 0.0, %v709
      %711 = vmatmul.bf16.gmra.mxu0 %v683
      %v712 = vpop.f32.mrf.mxu0
      %v713 = vadd.f32 0.0, %v712
      %v714 = vpop.f32.mrf.mxu0
      %v715 = vadd.f32 0.0, %v714
      %716 = vdwg.mxu0
      %v717 = vadd.f32 %v581, %v698
      %v718 = vadd.f32 %v583, %v700
      %v719 = vadd.f32 %v586, %v703
      %v720 = vadd.f32 %v588, %v705
      %v721 = vadd.f32 %v591, %v708
      %v722 = vadd.f32 %v593, %v710
      %v723 = vadd.f32 %v596, %v713
      %v724 = vadd.f32 %v598, %v715
      %v725 = vld [vmem:[%s152] sm:$0xf]
      %v726 = vld [vmem:[%s152 + $0x8] sm:$0xf]
      %v727 = vld [vmem:[%s152 + $0x10] sm:$0xf]
      %v728 = vld [vmem:[%s152 + $0x18] sm:$0xf]
      %v729 = vld [vmem:[%s152 + $0x20] sm:$0xf]
      %v730 = vld [vmem:[%s152 + $0x28] sm:$0xf]
      %v731 = vld [vmem:[%s152 + $0x30] sm:$0xf]
      %v732 = vld [vmem:[%s152 + $0x38] sm:$0xf]
      %s733 = scalar_lea.vmem %s1, 12
      %v734 = vld [vmem:[%s733] sm:$0xf]
      %v743 = vunpack.c.l.b16 %v725
      %v744 = vunpack.c.l.b16 %v726
      %v745 = vunpack.c.l.b16 %v727
      %v746 = vunpack.c.l.b16 %v728
      %v747 = vunpack.c.l.b16 %v729
      %v748 = vunpack.c.l.b16 %v730
      %v749 = vunpack.c.l.b16 %v731
      %v750 = vunpack.c.l.b16 %v732
      %v751 = vpack.c.b16 %v744, %v743
      %v752 = vpack.c.b16 %v746, %v745
      %v753 = vpack.c.b16 %v748, %v747
      %v754 = vpack.c.b16 %v750, %v749
      %v756 = vsel %vm490, %v751, 0
      %v759 = vsel %vm490, %v752, 0
      %v762 = vsel %vm490, %v753, 0
      %v765 = vsel %vm490, %v754, 0
      %v768 = vsel %vm503, %v734, 0
      %770 = vmatpush.bf16.msra.mxu0 0
      %771 = vmatpush.bf16.msra.mxu0 0
      %772 = vmatpush.bf16.msra.mxu0 0
      %773 = vmatpush.bf16.msra.mxu0 0
      %774 = vmatpush.bf16.msra.mxu0 0
      %775 = vmatpush.bf16.msra.mxu0 0
      %776 = vmatpush.bf16.msra.mxu0 0
      %777 = vmatpush.bf16.msra.mxu0 %v768
      %778 = vmatmul.bf16.gmra.mxu0 %v756
      %v779 = vpop.f32.mrf.mxu0
      %v780 = vadd.f32 0.0, %v779
      %v781 = vpop.f32.mrf.mxu0
      %v782 = vadd.f32 0.0, %v781
      %783 = vmatmul.bf16.gmra.mxu0 %v759
      %v784 = vpop.f32.mrf.mxu0
      %v785 = vadd.f32 0.0, %v784
      %v786 = vpop.f32.mrf.mxu0
      %v787 = vadd.f32 0.0, %v786
      %788 = vmatmul.bf16.gmra.mxu0 %v762
      %v789 = vpop.f32.mrf.mxu0
      %v790 = vadd.f32 0.0, %v789
      %v791 = vpop.f32.mrf.mxu0
      %v792 = vadd.f32 0.0, %v791
      %793 = vmatmul.bf16.gmra.mxu0 %v765
      %v794 = vpop.f32.mrf.mxu0
      %v795 = vadd.f32 0.0, %v794
      %v796 = vpop.f32.mrf.mxu0
      %v797 = vadd.f32 0.0, %v796
      %798 = vdwg.mxu0
      %v799 = vadd.f32 %v717, %v780
      %v800 = vadd.f32 %v718, %v782
      %v801 = vadd.f32 %v719, %v785
      %v802 = vadd.f32 %v720, %v787
      %v803 = vadd.f32 %v721, %v790
      %v804 = vadd.f32 %v722, %v792
      %v805 = vadd.f32 %v723, %v795
      %v806 = vadd.f32 %v724, %v797
      %v807 = vld [vmem:[%s152] sm:$0xf]
      %v808 = vld [vmem:[%s152 + $0x4] sm:$0x1]
      %v809 = vld [vmem:[%s152 + $0x8] sm:$0xf]
      %v810 = vld [vmem:[%s152 + $0xc] sm:$0x1]
      %v811 = vld [vmem:[%s152 + $0x10] sm:$0xf]
      %v812 = vld [vmem:[%s152 + $0x14] sm:$0x1]
      %v813 = vld [vmem:[%s152 + $0x18] sm:$0xf]
      %v814 = vld [vmem:[%s152 + $0x1c] sm:$0x1]
      %v815 = vld [vmem:[%s152 + $0x20] sm:$0xf]
      %v816 = vld [vmem:[%s152 + $0x24] sm:$0x1]
      %v817 = vld [vmem:[%s152 + $0x28] sm:$0xf]
      %v818 = vld [vmem:[%s152 + $0x2c] sm:$0x1]
      %v819 = vld [vmem:[%s152 + $0x30] sm:$0xf]
      %v820 = vld [vmem:[%s152 + $0x34] sm:$0x1]
      %v821 = vld [vmem:[%s152 + $0x38] sm:$0xf]
      %v822 = vld [vmem:[%s152 + $0x3c] sm:$0x1]
      %v824 = vshrl.u32 %v807, 16
      %v826 = vrot.slane %v824, 4
      %v827 = vshll.u32 %v807, 16
      %v829 = vrot.slane %v827, 5
      %v830 = vor.u32 %v826, %v829
      %v831 = vrot.slane %v830, 4
      %v833 = vshll.u32 %v808, 16
      %v835 = vrot.slane %v833, 5
      %v836 = vsel %vm363, %v831, %v835
      %v838 = vshrl.u32 %v809, 16
      %v840 = vrot.slane %v838, 4
      %v841 = vshll.u32 %v809, 16
      %v843 = vrot.slane %v841, 5
      %v844 = vor.u32 %v840, %v843
      %v845 = vrot.slane %v844, 4
      %v847 = vshll.u32 %v810, 16
      %v849 = vrot.slane %v847, 5
      %v850 = vsel %vm363, %v845, %v849
      %v852 = vshrl.u32 %v811, 16
      %v854 = vrot.slane %v852, 4
      %v855 = vshll.u32 %v811, 16
      %v857 = vrot.slane %v855, 5
      %v858 = vor.u32 %v854, %v857
      %v859 = vrot.slane %v858, 4
      %v861 = vshll.u32 %v812, 16
      %v863 = vrot.slane %v861, 5
      %v864 = vsel %vm363, %v859, %v863
      %v866 = vshrl.u32 %v813, 16
      %v868 = vrot.slane %v866, 4
      %v869 = vshll.u32 %v813, 16
      %v871 = vrot.slane %v869, 5
      %v872 = vor.u32 %v868, %v871
      %v873 = vrot.slane %v872, 4
      %v875 = vshll.u32 %v814, 16
      %v877 = vrot.slane %v875, 5
      %v878 = vsel %vm363, %v873, %v877
      %v880 = vshrl.u32 %v815, 16
      %v882 = vrot.slane %v880, 4
      %v883 = vshll.u32 %v815, 16
      %v885 = vrot.slane %v883, 5
      %v886 = vor.u32 %v882, %v885
      %v887 = vrot.slane %v886, 4
      %v889 = vshll.u32 %v816, 16
      %v891 = vrot.slane %v889, 5
      %v892 = vsel %vm363, %v887, %v891
      %v894 = vshrl.u32 %v817, 16
      %v896 = vrot.slane %v894, 4
      %v897 = vshll.u32 %v817, 16
      %v899 = vrot.slane %v897, 5
      %v900 = vor.u32 %v896, %v899
      %v901 = vrot.slane %v900, 4
      %v903 = vshll.u32 %v818, 16
      %v905 = vrot.slane %v903, 5
      %v906 = vsel %vm363, %v901, %v905
      %v908 = vshrl.u32 %v819, 16
      %v910 = vrot.slane %v908, 4
      %v911 = vshll.u32 %v819, 16
      %v913 = vrot.slane %v911, 5
      %v914 = vor.u32 %v910, %v913
      %v915 = vrot.slane %v914, 4
      %v917 = vshll.u32 %v820, 16
      %v919 = vrot.slane %v917, 5
      %v920 = vsel %vm363, %v915, %v919
      %v922 = vshrl.u32 %v821, 16
      %v924 = vrot.slane %v922, 4
      %v925 = vshll.u32 %v821, 16
      %v927 = vrot.slane %v925, 5
      %v928 = vor.u32 %v924, %v927
      %v929 = vrot.slane %v928, 4
      %v931 = vshll.u32 %v822, 16
      %v933 = vrot.slane %v931, 5
      %v934 = vsel %vm363, %v929, %v933
      %s935 = scalar_lea.vmem %s1, 16
      %v936 = vld [vmem:[%s935] sm:$0xf]
      %v937 = vunpack.c.l.b16 %v836
      %v938 = vunpack.c.l.b16 %v850
      %v939 = vunpack.c.l.b16 %v864
      %v940 = vunpack.c.l.b16 %v878
      %v941 = vunpack.c.l.b16 %v892
      %v942 = vunpack.c.l.b16 %v906
      %v943 = vunpack.c.l.b16 %v920
      %v944 = vunpack.c.l.b16 %v934
      %v945 = vpack.c.b16 %v938, %v937
      %v946 = vpack.c.b16 %v940, %v939
      %v947 = vpack.c.b16 %v942, %v941
      %v948 = vpack.c.b16 %v944, %v943
      %v950 = vsel %vm490, %v945, 0
      %v953 = vsel %vm490, %v946, 0
      %v956 = vsel %vm490, %v947, 0
      %v959 = vsel %vm490, %v948, 0
      %v962 = vsel %vm503, %v936, 0
      %964 = vmatpush.bf16.msra.mxu0 0
      %965 = vmatpush.bf16.msra.mxu0 0
      %966 = vmatpush.bf16.msra.mxu0 0
      %967 = vmatpush.bf16.msra.mxu0 0
      %968 = vmatpush.bf16.msra.mxu0 0
      %969 = vmatpush.bf16.msra.mxu0 0
      %970 = vmatpush.bf16.msra.mxu0 0
      %971 = vmatpush.bf16.msra.mxu0 %v962
      %972 = vmatmul.bf16.gmra.mxu0 %v950
      %v973 = vpop.f32.mrf.mxu0
      %v974 = vadd.f32 0.0, %v973
      %v975 = vpop.f32.mrf.mxu0
      %v976 = vadd.f32 0.0, %v975
      %977 = vmatmul.bf16.gmra.mxu0 %v953
      %v978 = vpop.f32.mrf.mxu0
      %v979 = vadd.f32 0.0, %v978
      %v980 = vpop.f32.mrf.mxu0
      %v981 = vadd.f32 0.0, %v980
      %982 = vmatmul.bf16.gmra.mxu0 %v956
      %v983 = vpop.f32.mrf.mxu0
      %v984 = vadd.f32 0.0, %v983
      %v985 = vpop.f32.mrf.mxu0
      %v986 = vadd.f32 0.0, %v985
      %987 = vmatmul.bf16.gmra.mxu0 %v959
      %v988 = vpop.f32.mrf.mxu0
      %v989 = vadd.f32 0.0, %v988
      %v990 = vpop.f32.mrf.mxu0
      %v991 = vadd.f32 0.0, %v990
      %992 = vdwg.mxu0
      %v993 = vadd.f32 %v799, %v974
      %v994 = vadd.f32 %v800, %v976
      %v995 = vadd.f32 %v801, %v979
      %v996 = vadd.f32 %v802, %v981
      %v997 = vadd.f32 %v803, %v984
      %v998 = vadd.f32 %v804, %v986
      %v999 = vadd.f32 %v805, %v989
      %v1000 = vadd.f32 %v806, %v991
      %v1001 = vld [vmem:[%s152] sm:$0xe]
      %v1002 = vld [vmem:[%s152 + $0x8] sm:$0xe]
      %v1003 = vld [vmem:[%s152 + $0x10] sm:$0xe]
      %v1004 = vld [vmem:[%s152 + $0x18] sm:$0xe]
      %v1005 = vld [vmem:[%s152 + $0x20] sm:$0xe]
      %v1006 = vld [vmem:[%s152 + $0x28] sm:$0xe]
      %v1007 = vld [vmem:[%s152 + $0x30] sm:$0xe]
      %v1008 = vld [vmem:[%s152 + $0x38] sm:$0xe]
      %v1025 = vrot.slane %v1001, 5
      %v1026 = vrot.slane %v1025, 4
      %v1027 = vrot.slane %v808, 5
      %v1028 = vsel %vm626, %v1026, %v1027
      %v1029 = vrot.slane %v1002, 5
      %v1030 = vrot.slane %v1029, 4
      %v1031 = vrot.slane %v810, 5
      %v1032 = vsel %vm626, %v1030, %v1031
      %v1033 = vrot.slane %v1003, 5
      %v1034 = vrot.slane %v1033, 4
      %v1035 = vrot.slane %v812, 5
      %v1036 = vsel %vm626, %v1034, %v1035
      %v1037 = vrot.slane %v1004, 5
      %v1038 = vrot.slane %v1037, 4
      %v1039 = vrot.slane %v814, 5
      %v1040 = vsel %vm626, %v1038, %v1039
      %v1041 = vrot.slane %v1005, 5
      %v1042 = vrot.slane %v1041, 4
      %v1043 = vrot.slane %v816, 5
      %v1044 = vsel %vm626, %v1042, %v1043
      %v1045 = vrot.slane %v1006, 5
      %v1046 = vrot.slane %v1045, 4
      %v1047 = vrot.slane %v818, 5
      %v1048 = vsel %vm626, %v1046, %v1047
      %v1049 = vrot.slane %v1007, 5
      %v1050 = vrot.slane %v1049, 4
      %v1051 = vrot.slane %v820, 5
      %v1052 = vsel %vm626, %v1050, %v1051
      %v1053 = vrot.slane %v1008, 5
      %v1054 = vrot.slane %v1053, 4
      %v1055 = vrot.slane %v822, 5
      %v1056 = vsel %vm626, %v1054, %v1055
      %s1057 = scalar_lea.vmem %s1, 20
      %v1058 = vld [vmem:[%s1057] sm:$0xf]
      %v1059 = vunpack.c.l.b16 %v1028
      %v1060 = vunpack.c.l.b16 %v1032
      %v1061 = vunpack.c.l.b16 %v1036
      %v1062 = vunpack.c.l.b16 %v1040
      %v1063 = vunpack.c.l.b16 %v1044
      %v1064 = vunpack.c.l.b16 %v1048
      %v1065 = vunpack.c.l.b16 %v1052
      %v1066 = vunpack.c.l.b16 %v1056
      %v1067 = vpack.c.b16 %v1060, %v1059
      %v1068 = vpack.c.b16 %v1062, %v1061
      %v1069 = vpack.c.b16 %v1064, %v1063
      %v1070 = vpack.c.b16 %v1066, %v1065
      %v1072 = vsel %vm490, %v1067, 0
      %v1075 = vsel %vm490, %v1068, 0
      %v1078 = vsel %vm490, %v1069, 0
      %v1081 = vsel %vm490, %v1070, 0
      %v1084 = vsel %vm503, %v1058, 0
      %1086 = vmatpush.bf16.msra.mxu0 0
      %1087 = vmatpush.bf16.msra.mxu0 0
      %1088 = vmatpush.bf16.msra.mxu0 0
      %1089 = vmatpush.bf16.msra.mxu0 0
      %1090 = vmatpush.bf16.msra.mxu0 0
      %1091 = vmatpush.bf16.msra.mxu0 0
      %1092 = vmatpush.bf16.msra.mxu0 0
      %1093 = vmatpush.bf16.msra.mxu0 %v1084
      %1094 = vmatmul.bf16.gmra.mxu0 %v1072
      %v1095 = vpop.f32.mrf.mxu0
      %v1096 = vadd.f32 0.0, %v1095
      %v1097 = vpop.f32.mrf.mxu0
      %v1098 = vadd.f32 0.0, %v1097
      %1099 = vmatmul.bf16.gmra.mxu0 %v1075
      %v1100 = vpop.f32.mrf.mxu0
      %v1101 = vadd.f32 0.0, %v1100
      %v1102 = vpop.f32.mrf.mxu0
      %v1103 = vadd.f32 0.0, %v1102
      %1104 = vmatmul.bf16.gmra.mxu0 %v1078
      %v1105 = vpop.f32.mrf.mxu0
      %v1106 = vadd.f32 0.0, %v1105
      %v1107 = vpop.f32.mrf.mxu0
      %v1108 = vadd.f32 0.0, %v1107
      %1109 = vmatmul.bf16.gmra.mxu0 %v1081
      %v1110 = vpop.f32.mrf.mxu0
      %v1111 = vadd.f32 0.0, %v1110
      %v1112 = vpop.f32.mrf.mxu0
      %v1113 = vadd.f32 0.0, %v1112
      %1114 = vdwg.mxu0
      %v1115 = vadd.f32 %v993, %v1096
      %v1116 = vadd.f32 %v994, %v1098
      %v1117 = vadd.f32 %v995, %v1101
      %v1118 = vadd.f32 %v996, %v1103
      %v1119 = vadd.f32 %v997, %v1106
      %v1120 = vadd.f32 %v998, %v1108
      %v1121 = vadd.f32 %v999, %v1111
      %v1122 = vadd.f32 %v1000, %v1113
      %s1123 = scalar_lea.vmem [#allocation2], 16
      %v1124 = vld [vmem:[%s1123] sm:$0xf]
      %v1125 = vld [vmem:[%s1123 + $0x8] sm:$0xf]
      %v1126 = vld [vmem:[%s1123 + $0x10] sm:$0xf]
      %v1127 = vld [vmem:[%s1123 + $0x18] sm:$0xf]
      %v1128 = vld [vmem:[%s1123 + $0x20] sm:$0xf]
      %v1129 = vld [vmem:[%s1123 + $0x28] sm:$0xf]
      %v1130 = vld [vmem:[%s1123 + $0x30] sm:$0xf]
      %v1131 = vld [vmem:[%s1123 + $0x38] sm:$0xf]
      %s1132 = scalar_lea.vmem %s1, 24
      %v1133 = vld [vmem:[%s1132] sm:$0xf]
      %v1142 = vunpack.c.l.b16 %v1124
      %v1143 = vunpack.c.l.b16 %v1125
      %v1144 = vunpack.c.l.b16 %v1126
      %v1145 = vunpack.c.l.b16 %v1127
      %v1146 = vunpack.c.l.b16 %v1128
      %v1147 = vunpack.c.l.b16 %v1129
      %v1148 = vunpack.c.l.b16 %v1130
      %v1149 = vunpack.c.l.b16 %v1131
      %v1150 = vpack.c.b16 %v1143, %v1142
      %v1151 = vpack.c.b16 %v1145, %v1144
      %v1152 = vpack.c.b16 %v1147, %v1146
      %v1153 = vpack.c.b16 %v1149, %v1148
      %v1155 = vsel %vm490, %v1150, 0
      %v1158 = vsel %vm490, %v1151, 0
      %v1161 = vsel %vm490, %v1152, 0
      %v1164 = vsel %vm490, %v1153, 0
      %v1167 = vsel %vm503, %v1133, 0
      %1169 = vmatpush.bf16.msra.mxu0 0
      %1170 = vmatpush.bf16.msra.mxu0 0
      %1171 = vmatpush.bf16.msra.mxu0 0
      %1172 = vmatpush.bf16.msra.mxu0 0
      %1173 = vmatpush.bf16.msra.mxu0 0
      %1174 = vmatpush.bf16.msra.mxu0 0
      %1175 = vmatpush.bf16.msra.mxu0 0
      %1176 = vmatpush.bf16.msra.mxu0 %v1167
      %1177 = vmatmul.bf16.gmra.mxu0 %v1155
      %v1178 = vpop.f32.mrf.mxu0
      %v1179 = vadd.f32 0.0, %v1178
      %v1180 = vpop.f32.mrf.mxu0
      %v1181 = vadd.f32 0.0, %v1180
      %1182 = vmatmul.bf16.gmra.mxu0 %v1158
      %v1183 = vpop.f32.mrf.mxu0
      %v1184 = vadd.f32 0.0, %v1183
      %v1185 = vpop.f32.mrf.mxu0
      %v1186 = vadd.f32 0.0, %v1185
      %1187 = vmatmul.bf16.gmra.mxu0 %v1161
      %v1188 = vpop.f32.mrf.mxu0
      %v1189 = vadd.f32 0.0, %v1188
      %v1190 = vpop.f32.mrf.mxu0
      %v1191 = vadd.f32 0.0, %v1190
      %1192 = vmatmul.bf16.gmra.mxu0 %v1164
      %v1193 = vpop.f32.mrf.mxu0
      %v1194 = vadd.f32 0.0, %v1193
      %v1195 = vpop.f32.mrf.mxu0
      %v1196 = vadd.f32 0.0, %v1195
      %1197 = vdwg.mxu0
      %v1198 = vadd.f32 %v1115, %v1179
      %v1199 = vadd.f32 %v1116, %v1181
      %v1200 = vadd.f32 %v1117, %v1184
      %v1201 = vadd.f32 %v1118, %v1186
      %v1202 = vadd.f32 %v1119, %v1189
      %v1203 = vadd.f32 %v1120, %v1191
      %v1204 = vadd.f32 %v1121, %v1194
      %v1205 = vadd.f32 %v1122, %v1196
      %v1206 = vld [vmem:[%s1123] sm:$0xf]
      %v1207 = vld [vmem:[%s1123 + $0x4] sm:$0x1]
      %v1208 = vld [vmem:[%s1123 + $0x8] sm:$0xf]
      %v1209 = vld [vmem:[%s1123 + $0xc] sm:$0x1]
      %v1210 = vld [vmem:[%s1123 + $0x10] sm:$0xf]
      %v1211 = vld [vmem:[%s1123 + $0x14] sm:$0x1]
      %v1212 = vld [vmem:[%s1123 + $0x18] sm:$0xf]
      %v1213 = vld [vmem:[%s1123 + $0x1c] sm:$0x1]
      %v1214 = vld [vmem:[%s1123 + $0x20] sm:$0xf]
      %v1215 = vld [vmem:[%s1123 + $0x24] sm:$0x1]
      %v1216 = vld [vmem:[%s1123 + $0x28] sm:$0xf]
      %v1217 = vld [vmem:[%s1123 + $0x2c] sm:$0x1]
      %v1218 = vld [vmem:[%s1123 + $0x30] sm:$0xf]
      %v1219 = vld [vmem:[%s1123 + $0x34] sm:$0x1]
      %v1220 = vld [vmem:[%s1123 + $0x38] sm:$0xf]
      %v1221 = vld [vmem:[%s1123 + $0x3c] sm:$0x1]
      %v1223 = vshrl.u32 %v1206, 16
      %v1225 = vrot.slane %v1223, 4
      %v1226 = vshll.u32 %v1206, 16
      %v1228 = vrot.slane %v1226, 5
      %v1229 = vor.u32 %v1225, %v1228
      %v1230 = vrot.slane %v1229, 4
      %v1232 = vshll.u32 %v1207, 16
      %v1234 = vrot.slane %v1232, 5
      %v1235 = vsel %vm363, %v1230, %v1234
      %v1237 = vshrl.u32 %v1208, 16
      %v1239 = vrot.slane %v1237, 4
      %v1240 = vshll.u32 %v1208, 16
      %v1242 = vrot.slane %v1240, 5
      %v1243 = vor.u32 %v1239, %v1242
      %v1244 = vrot.slane %v1243, 4
      %v1246 = vshll.u32 %v1209, 16
      %v1248 = vrot.slane %v1246, 5
      %v1249 = vsel %vm363, %v1244, %v1248
      %v1251 = vshrl.u32 %v1210, 16
      %v1253 = vrot.slane %v1251, 4
      %v1254 = vshll.u32 %v1210, 16
      %v1256 = vrot.slane %v1254, 5
      %v1257 = vor.u32 %v1253, %v1256
      %v1258 = vrot.slane %v1257, 4
      %v1260 = vshll.u32 %v1211, 16
      %v1262 = vrot.slane %v1260, 5
      %v1263 = vsel %vm363, %v1258, %v1262
      %v1265 = vshrl.u32 %v1212, 16
      %v1267 = vrot.slane %v1265, 4
      %v1268 = vshll.u32 %v1212, 16
      %v1270 = vrot.slane %v1268, 5
      %v1271 = vor.u32 %v1267, %v1270
      %v1272 = vrot.slane %v1271, 4
      %v1274 = vshll.u32 %v1213, 16
      %v1276 = vrot.slane %v1274, 5
      %v1277 = vsel %vm363, %v1272, %v1276
      %v1279 = vshrl.u32 %v1214, 16
      %v1281 = vrot.slane %v1279, 4
      %v1282 = vshll.u32 %v1214, 16
      %v1284 = vrot.slane %v1282, 5
      %v1285 = vor.u32 %v1281, %v1284
      %v1286 = vrot.slane %v1285, 4
      %v1288 = vshll.u32 %v1215, 16
      %v1290 = vrot.slane %v1288, 5
      %v1291 = vsel %vm363, %v1286, %v1290
      %v1293 = vshrl.u32 %v1216, 16
      %v1295 = vrot.slane %v1293, 4
      %v1296 = vshll.u32 %v1216, 16
      %v1298 = vrot.slane %v1296, 5
      %v1299 = vor.u32 %v1295, %v1298
      %v1300 = vrot.slane %v1299, 4
      %v1302 = vshll.u32 %v1217, 16
      %v1304 = vrot.slane %v1302, 5
      %v1305 = vsel %vm363, %v1300, %v1304
      %v1307 = vshrl.u32 %v1218, 16
      %v1309 = vrot.slane %v1307, 4
      %v1310 = vshll.u32 %v1218, 16
      %v1312 = vrot.slane %v1310, 5
      %v1313 = vor.u32 %v1309, %v1312
      %v1314 = vrot.slane %v1313, 4
      %v1316 = vshll.u32 %v1219, 16
      %v1318 = vrot.slane %v1316, 5
      %v1319 = vsel %vm363, %v1314, %v1318
      %v1321 = vshrl.u32 %v1220, 16
      %v1323 = vrot.slane %v1321, 4
      %v1324 = vshll.u32 %v1220, 16
      %v1326 = vrot.slane %v1324, 5
      %v1327 = vor.u32 %v1323, %v1326
      %v1328 = vrot.slane %v1327, 4
      %v1330 = vshll.u32 %v1221, 16
      %v1332 = vrot.slane %v1330, 5
      %v1333 = vsel %vm363, %v1328, %v1332
      %s1334 = scalar_lea.vmem %s1, 28
      %v1335 = vld [vmem:[%s1334] sm:$0xf]
      %v1336 = vunpack.c.l.b16 %v1235
      %v1337 = vunpack.c.l.b16 %v1249
      %v1338 = vunpack.c.l.b16 %v1263
      %v1339 = vunpack.c.l.b16 %v1277
      %v1340 = vunpack.c.l.b16 %v1291
      %v1341 = vunpack.c.l.b16 %v1305
      %v1342 = vunpack.c.l.b16 %v1319
      %v1343 = vunpack.c.l.b16 %v1333
      %v1344 = vpack.c.b16 %v1337, %v1336
      %v1345 = vpack.c.b16 %v1339, %v1338
      %v1346 = vpack.c.b16 %v1341, %v1340
      %v1347 = vpack.c.b16 %v1343, %v1342
      %v1349 = vsel %vm490, %v1344, 0
      %v1352 = vsel %vm490, %v1345, 0
      %v1355 = vsel %vm490, %v1346, 0
      %v1358 = vsel %vm490, %v1347, 0
      %v1361 = vsel %vm503, %v1335, 0
      %1363 = vmatpush.bf16.msra.mxu0 0
      %1364 = vmatpush.bf16.msra.mxu0 0
      %1365 = vmatpush.bf16.msra.mxu0 0
      %1366 = vmatpush.bf16.msra.mxu0 0
      %1367 = vmatpush.bf16.msra.mxu0 0
      %1368 = vmatpush.bf16.msra.mxu0 0
      %1369 = vmatpush.bf16.msra.mxu0 0
      %1370 = vmatpush.bf16.msra.mxu0 %v1361
      %1371 = vmatmul.bf16.gmra.mxu0 %v1349
      %v1372 = vpop.f32.mrf.mxu0
      %v1373 = vadd.f32 0.0, %v1372
      %v1374 = vpop.f32.mrf.mxu0
      %v1375 = vadd.f32 0.0, %v1374
      %1376 = vmatmul.bf16.gmra.mxu0 %v1352
      %v1377 = vpop.f32.mrf.mxu0
      %v1378 = vadd.f32 0.0, %v1377
      %v1379 = vpop.f32.mrf.mxu0
      %v1380 = vadd.f32 0.0, %v1379
      %1381 = vmatmul.bf16.gmra.mxu0 %v1355
      %v1382 = vpop.f32.mrf.mxu0
      %v1383 = vadd.f32 0.0, %v1382
      %v1384 = vpop.f32.mrf.mxu0
      %v1385 = vadd.f32 0.0, %v1384
      %1386 = vmatmul.bf16.gmra.mxu0 %v1358
      %v1387 = vpop.f32.mrf.mxu0
      %v1388 = vadd.f32 0.0, %v1387
      %v1389 = vpop.f32.mrf.mxu0
      %v1390 = vadd.f32 0.0, %v1389
      %1391 = vdwg.mxu0
      %v1392 = vadd.f32 %v1198, %v1373
      %v1393 = vadd.f32 %v1199, %v1375
      %v1394 = vadd.f32 %v1200, %v1378
      %v1395 = vadd.f32 %v1201, %v1380
      %v1396 = vadd.f32 %v1202, %v1383
      %v1397 = vadd.f32 %v1203, %v1385
      %v1398 = vadd.f32 %v1204, %v1388
      %v1399 = vadd.f32 %v1205, %v1390
      %v1400 = vld [vmem:[%s1123] sm:$0xe]
      %v1401 = vld [vmem:[%s1123 + $0x8] sm:$0xe]
      %v1402 = vld [vmem:[%s1123 + $0x10] sm:$0xe]
      %v1403 = vld [vmem:[%s1123 + $0x18] sm:$0xe]
      %v1404 = vld [vmem:[%s1123 + $0x20] sm:$0xe]
      %v1405 = vld [vmem:[%s1123 + $0x28] sm:$0xe]
      %v1406 = vld [vmem:[%s1123 + $0x30] sm:$0xe]
      %v1407 = vld [vmem:[%s1123 + $0x38] sm:$0xe]
      %v1424 = vrot.slane %v1400, 5
      %v1425 = vrot.slane %v1424, 4
      %v1426 = vrot.slane %v1207, 5
      %v1427 = vsel %vm626, %v1425, %v1426
      %v1428 = vrot.slane %v1401, 5
      %v1429 = vrot.slane %v1428, 4
      %v1430 = vrot.slane %v1209, 5
      %v1431 = vsel %vm626, %v1429, %v1430
      %v1432 = vrot.slane %v1402, 5
      %v1433 = vrot.slane %v1432, 4
      %v1434 = vrot.slane %v1211, 5
      %v1435 = vsel %vm626, %v1433, %v1434
      %v1436 = vrot.slane %v1403, 5
      %v1437 = vrot.slane %v1436, 4
      %v1438 = vrot.slane %v1213, 5
      %v1439 = vsel %vm626, %v1437, %v1438
      %v1440 = vrot.slane %v1404, 5
      %v1441 = vrot.slane %v1440, 4
      %v1442 = vrot.slane %v1215, 5
      %v1443 = vsel %vm626, %v1441, %v1442
      %v1444 = vrot.slane %v1405, 5
      %v1445 = vrot.slane %v1444, 4
      %v1446 = vrot.slane %v1217, 5
      %v1447 = vsel %vm626, %v1445, %v1446
      %v1448 = vrot.slane %v1406, 5
      %v1449 = vrot.slane %v1448, 4
      %v1450 = vrot.slane %v1219, 5
      %v1451 = vsel %vm626, %v1449, %v1450
      %v1452 = vrot.slane %v1407, 5
      %v1453 = vrot.slane %v1452, 4
      %v1454 = vrot.slane %v1221, 5
      %v1455 = vsel %vm626, %v1453, %v1454
      %s1456 = scalar_lea.vmem %s1, 32
      %v1457 = vld [vmem:[%s1456] sm:$0xf]
      %v1458 = vunpack.c.l.b16 %v1427
      %v1459 = vunpack.c.l.b16 %v1431
      %v1460 = vunpack.c.l.b16 %v1435
      %v1461 = vunpack.c.l.b16 %v1439
      %v1462 = vunpack.c.l.b16 %v1443
      %v1463 = vunpack.c.l.b16 %v1447
      %v1464 = vunpack.c.l.b16 %v1451
      %v1465 = vunpack.c.l.b16 %v1455
      %v1466 = vpack.c.b16 %v1459, %v1458
      %v1467 = vpack.c.b16 %v1461, %v1460
      %v1468 = vpack.c.b16 %v1463, %v1462
      %v1469 = vpack.c.b16 %v1465, %v1464
      %v1471 = vsel %vm490, %v1466, 0
      %v1474 = vsel %vm490, %v1467, 0
      %v1477 = vsel %vm490, %v1468, 0
      %v1480 = vsel %vm490, %v1469, 0
      %v1483 = vsel %vm503, %v1457, 0
      %1485 = vmatpush.bf16.msra.mxu0 0
      %1486 = vmatpush.bf16.msra.mxu0 0
      %1487 = vmatpush.bf16.msra.mxu0 0
      %1488 = vmatpush.bf16.msra.mxu0 0
      %1489 = vmatpush.bf16.msra.mxu0 0
      %1490 = vmatpush.bf16.msra.mxu0 0
      %1491 = vmatpush.bf16.msra.mxu0 0
      %1492 = vmatpush.bf16.msra.mxu0 %v1483
      %1493 = vmatmul.bf16.gmra.mxu0 %v1471
      %v1494 = vpop.f32.mrf.mxu0
      %v1495 = vadd.f32 0.0, %v1494
      %v1496 = vpop.f32.mrf.mxu0
      %v1497 = vadd.f32 0.0, %v1496
      %1498 = vmatmul.bf16.gmra.mxu0 %v1474
      %v1499 = vpop.f32.mrf.mxu0
      %v1500 = vadd.f32 0.0, %v1499
      %v1501 = vpop.f32.mrf.mxu0
      %v1502 = vadd.f32 0.0, %v1501
      %1503 = vmatmul.bf16.gmra.mxu0 %v1477
      %v1504 = vpop.f32.mrf.mxu0
      %v1505 = vadd.f32 0.0, %v1504
      %v1506 = vpop.f32.mrf.mxu0
      %v1507 = vadd.f32 0.0, %v1506
      %1508 = vmatmul.bf16.gmra.mxu0 %v1480
      %v1509 = vpop.f32.mrf.mxu0
      %v1510 = vadd.f32 0.0, %v1509
      %v1511 = vpop.f32.mrf.mxu0
      %v1512 = vadd.f32 0.0, %v1511
      %1513 = vdwg.mxu0
      %v1514 = vadd.f32 %v1392, %v1495
      %v1515 = vadd.f32 %v1393, %v1497
      %v1516 = vadd.f32 %v1394, %v1500
      %v1517 = vadd.f32 %v1395, %v1502
      %v1518 = vadd.f32 %v1396, %v1505
      %v1519 = vadd.f32 %v1397, %v1507
      %v1520 = vadd.f32 %v1398, %v1510
      %v1521 = vadd.f32 %v1399, %v1512
      %vm1522 = vcmask 130048
      %v1523 = vsel %vm1522, %v1514, 0.0
      %v1524 = vsel %vm1522, %v1515, 0.0
      %v1525 = vadd.f32 %v1523, %v1524
      %v1526 = vsel %vm1522, %v1516, 0.0
      %v1527 = vadd.f32 %v1525, %v1526
      %v1528 = vsel %vm1522, %v1517, 0.0
      %v1529 = vadd.f32 %v1527, %v1528
      %v1530 = vsel %vm1522, %v1518, 0.0
      %v1531 = vadd.f32 %v1529, %v1530
      %v1532 = vsel %vm1522, %v1519, 0.0
      %v1533 = vadd.f32 %v1531, %v1532
      %v1534 = vsel %vm1522, %v1520, 0.0
      %v1535 = vadd.f32 %v1533, %v1534
      %v1536 = vsel %vm1522, %v1521, 0.0
      %v1537 = vadd.f32 %v1535, %v1536
      %v1538 = vrot.slane %v1537, 4
      %v1539 = vadd.f32 %v1537, %v1538
      %v1540 = vrot.slane %v1539, 2
      %v1541 = vadd.f32 %v1539, %v1540
      %v1542 = vrot.slane %v1541, 1
      %v1543 = vadd.f32 %v1541, %v1542
      %v1544 = vmul.f32 %v1514, %v1514
      %v1545 = vmul.f32 %v1515, %v1515
      %v1546 = vmul.f32 %v1516, %v1516
      %v1547 = vmul.f32 %v1517, %v1517
      %v1548 = vmul.f32 %v1518, %v1518
      %v1549 = vmul.f32 %v1519, %v1519
      %v1550 = vmul.f32 %v1520, %v1520
      %v1551 = vmul.f32 %v1521, %v1521
      %v1552 = vsel %vm1522, %v1544, 0.0
      %v1553 = vsel %vm1522, %v1545, 0.0
      %v1554 = vadd.f32 %v1552, %v1553
      %v1555 = vsel %vm1522, %v1546, 0.0
      %v1556 = vadd.f32 %v1554, %v1555
      %v1557 = vsel %vm1522, %v1547, 0.0
      %v1558 = vadd.f32 %v1556, %v1557
      %v1559 = vsel %vm1522, %v1548, 0.0
      %v1560 = vadd.f32 %v1558, %v1559
      %v1561 = vsel %vm1522, %v1549, 0.0
      %v1562 = vadd.f32 %v1560, %v1561
      %v1563 = vsel %vm1522, %v1550, 0.0
      %v1564 = vadd.f32 %v1562, %v1563
      %v1565 = vsel %vm1522, %v1551, 0.0
      %v1566 = vadd.f32 %v1564, %v1565
      %v1567 = vrot.slane %v1566, 4
      %v1568 = vadd.f32 %v1566, %v1567
      %v1569 = vrot.slane %v1568, 2
      %v1570 = vadd.f32 %v1568, %v1569
      %v1571 = vrot.slane %v1570, 1
      %v1572 = vadd.f32 %v1570, %v1571
      %v1573 = vmul.f32 %v1543, 0.015625
      %v1574 = vmul.f32 %v1572, 0.015625
      %v1575 = vmul.f32 %v1573, %v1573
      %v1576 = vsub.f32 %v1574, %v1575
      %v1577 = vmax.f32 %v1576, 0.0
      %v1578 = vsub.f32 %v1514, %v1573
      %v1579 = vsub.f32 %v1515, %v1573
      %v1580 = vsub.f32 %v1516, %v1573
      %v1581 = vsub.f32 %v1517, %v1573
      %v1582 = vsub.f32 %v1518, %v1573
      %v1583 = vsub.f32 %v1519, %v1573
      %v1584 = vsub.f32 %v1520, %v1573
      %v1585 = vsub.f32 %v1521, %v1573
      %v1586 = vadd.f32 %v1577, 1e-05
      %v1587 = vrsqrt.pop %v1586
      %v1588 = vmul.f32 %v1587, %v1586
      %v1589 = vmul.f32 %v1588, %v1587
      %v1590 = vmul.f32 0.5, %v1589
      %v1591 = vsub.f32 1.5, %v1590
      %v1592 = vmul.f32 %v1587, %v1591
      %vm1593 = vweird.f32 %v1586
      %vm1594 = vweird.f32 %v1587
      %vm1595 = vmor %vm1593, %vm1594
      %v1596 = vsel %vm1595, %v1587, %v1592
      %v1597 = vmul.f32 %v1578, %v1596
      %v1598 = vmul.f32 %v1579, %v1596
      %v1599 = vmul.f32 %v1580, %v1596
      %v1600 = vmul.f32 %v1581, %v1596
      %v1601 = vmul.f32 %v1582, %v1596
      %v1602 = vmul.f32 %v1583, %v1596
      %v1603 = vmul.f32 %v1584, %v1596
      %v1604 = vmul.f32 %v1585, %v1596
      %v1605 = vmax.f32 %v1597, 0.0
      %v1606 = vmax.f32 %v1598, 0.0
      %v1607 = vmax.f32 %v1599, 0.0
      %v1608 = vmax.f32 %v1600, 0.0
      %v1609 = vmax.f32 %v1601, 0.0
      %v1610 = vmax.f32 %v1602, 0.0
      %v1611 = vmax.f32 %v1603, 0.0
      %v1612 = vmax.f32 %v1604, 0.0
      %v1613 = vpack.c.bf16 %v1605, %v1605
      %v1614 = vpack.c.bf16 %v1606, %v1606
      %v1615 = vpack.c.bf16 %v1607, %v1607
      %v1616 = vpack.c.bf16 %v1608, %v1608
      %v1617 = vpack.c.bf16 %v1609, %v1609
      %v1618 = vpack.c.bf16 %v1610, %v1610
      %v1619 = vpack.c.bf16 %v1611, %v1611
      %v1620 = vpack.c.bf16 %v1612, %v1612
      %vm1621 = vcmask 125952
      %1622 = vst.msk [vmem:[%s143] sm:$0xf] %vm1621, %v1613
      %1623 = vst.msk [vmem:[%s143 + $0x4] sm:$0xf] %vm1621, %v1614
      %1624 = vst.msk [vmem:[%s143 + $0x8] sm:$0xf] %vm1621, %v1615
      %1625 = vst.msk [vmem:[%s143 + $0xc] sm:$0xf] %vm1621, %v1616
      %1626 = vst.msk [vmem:[%s143 + $0x10] sm:$0xf] %vm1621, %v1617
      %1627 = vst.msk [vmem:[%s143 + $0x14] sm:$0xf] %vm1621, %v1618
      %1628 = vst.msk [vmem:[%s143 + $0x18] sm:$0xf] %vm1621, %v1619
      %1629 = vst.msk [vmem:[%s143 + $0x1c] sm:$0xf] %vm1621, %v1620
      %p1630 = scmp.lt.s32.totalorder %s13, 1
      %s1631 = scalar_select %p1630, %s13, 1
      %s1632 = smul.addr %s1631, 8
      %s1633 = smul.addr %s1632, 4
      %s1634 = scalar_lea.vmem %s2, %s1633
      // Predicated region
      $region29: #{pallas_forward.6} parent=27 // pred_check
        %p1635 = pneg %p78
      $region30: #{pallas_forward.6} parent=27 // pred_check_branch
        %1637 = sbr.rel (%p1635) target = $region32
      $region31: #{pallas_forward.6} parent=27 // pred_region
        _
      $region32: #{pallas_forward.6} parent=27 // pred_fallthru
        _
    $region28: #{pallas_forward.6} parent=5 // pred_fallthru
      _
    %p1638 = scmp.le.s32.totalorder 2, %s8
    // Predicated region
    $region33: #{pallas_forward.6} parent=5 // pred_check
      %p1639 = pneg %p1638
    $region34: #{pallas_forward.6} parent=5 // pred_check_branch
      %1641 = sbr.rel (%p1639) target = $region36
    $region35: #{pallas_forward.6} parent=5 // pred_region
      %s1642 = ssub.s32 %s8, 2
      // Predicated region
      $region37: #{pallas_forward.6} parent=35 // pred_check
        %p1643 = pneg %p84
      $region38: #{pallas_forward.6} parent=35 // pred_check_branch
        %1645 = sbr.rel (%p1643) target = $region40
      $region39: #{pallas_forward.6} parent=35 // pred_region
        %p1646 = scmp.lt.s32.totalorder %s14, 1
        %s1647 = scalar_select %p1646, %s14, 1
        %s1648 = smul.addr %s1647, 8
        %s1649 = smul.addr %s1648, 4
        %s1650 = scalar_lea.vmem %s2, %s1649
      $region40: #{pallas_forward.6} parent=35 // pred_fallthru
        _
    $region36: #{pallas_forward.6} parent=5 // pred_fallthru
      _
  $region6: #{pallas_forward.6} parent=0 // loop_footer
    %s12 = sadd.s32 1, %s8
  $region7: #{pallas_forward.6} parent=0 // loop_footer_branch
    %7 = sbr.rel target = $region3
  $region8: #{pallas_forward.6} parent=0 // loop_exit
    _

// kernel: pallas_forward.7
$region0: #{pallas_forward.7}
  #allocation0 [shape = 'u32[]', space=smem, size = 0x4, offset = 0x4, fixed_abs, tag = 'smem constant byte address 0x4 - core index']
  #allocation1 [shape = 'u32[72,128]{1,0:T(1,128)}', space=vmem, size = 0x9000, scoped, tag = 'internal scratch']
  %s0 = inlined_call_operand.vmem [shape: bf16[2,4,2,4,32], index: 0, kind: input, shape index: {}]
  %s1 = inlined_call_operand.vmem [shape: bf16[2,32,16], index: 1, kind: input, shape index: {}]
  %s2 = inlined_call_operand.vmem [shape: bf16[2,4,4,16], index: 2, kind: output, shape index: {}]
  %s3 = sld [smem:[#allocation0]]
  $region41: #{pallas_forward.7} parent=0
    _
  %s5 = ssub.s32 1, %s3
  %s6 = scalar_select 0, %s5, %s3
  loop: start=0, step=1, limit=4
  $region2: #{pallas_forward.7} parent=0 // loop_pre_header
    _
  $region3: #{pallas_forward.7} parent=0 // loop_header
    %s8 = sphi 0, %s12
    %p9 = scmp.ge.s32.totalorder %s8, 4
    %s18 = sphi 0, %s20
    %s21 = sphi 0, %s18
    %s22 = sphi 0, %s21
    %s38 = sphi 0, %s22
    %s42 = sphi 0, %s42
    %s44 = sphi 0, %s42
    %s45 = sphi 0, %s44
    %s59 = sphi 0, %s45
    %s65 = sphi 0, %s67
    %s68 = sphi 0, %s65
    %s69 = sphi 0, %s68
    %s85 = sphi 0, %s69
  $region4: #{pallas_forward.7} parent=0 // loop_header_branch
    %11 = sbr.rel (%p9) target = $region8
  $region5: #{pallas_forward.7} parent=0 // loop_body
    %s13 = ssub.s32 %s8, 1
    %s14 = ssub.s32 %s8, 2
    %s15 = sadd.s32 %s8, 1
    %s16 = ssub.s32 %s8, %s15
    %p17 = scmp.eq.s32.totalorder %s16, 0
    %s19 = sadd.s32 %s18, 1
    %s20 = scalar_select %p17, %s18, %s19
    %p23 = pneg %p17
    %p24 = scmp.eq.s32.totalorder %s8, 1
    %p25 = por %p23, %p24
    %p26 = scmp.ne.s32.totalorder %s18, %s21
    %p27 = scmp.eq.s32.totalorder %s8, 0
    %p28 = por %p26, %p27
    %p29 = scmp.ne.s32.totalorder %s18, %s21
    %p30 = scmp.eq.s32.totalorder %s13, 1
    %p31 = por %p29, %p30
    %p32 = scmp.ne.s32.totalorder %s21, %s22
    %p33 = scmp.eq.s32.totalorder %s13, 0
    %p34 = por %p32, %p33
    %p35 = scmp.ne.s32.totalorder %s21, %s22
    %p36 = scmp.eq.s32.totalorder %s14, 1
    %p37 = por %p35, %p36
    %p39 = scmp.ne.s32.totalorder %s22, %s38
    %p40 = scmp.eq.s32.totalorder %s14, 0
    %p41 = por %p39, %p40
    %s43 = sadd.s32 %s42, 1
    %p46 = scmp.eq.s32.totalorder %s8, 1
    %p47 = scmp.ne.s32.totalorder %s42, %s44
    %p48 = scmp.eq.s32.totalorder %s8, 0
    %p49 = por %p47, %p48
    %p50 = scmp.ne.s32.totalorder %s42, %s44
    %p51 = scmp.eq.s32.totalorder %s13, 1
    %p52 = por %p50, %p51
    %p53 = scmp.ne.s32.totalorder %s44, %s45
    %p54 = scmp.eq.s32.totalorder %s13, 0
    %p55 = por %p53, %p54
    %p56 = scmp.ne.s32.totalorder %s44, %s45
    %p57 = scmp.eq.s32.totalorder %s14, 1
    %p58 = por %p56, %p57
    %p60 = scmp.ne.s32.totalorder %s45, %s59
    %p61 = scmp.eq.s32.totalorder %s14, 0
    %p62 = por %p60, %p61
    %s63 = ssub.s32 %s8, %s15
    %p64 = scmp.eq.s32.totalorder %s63, 0
    %s66 = sadd.s32 %s65, 1
    %s67 = scalar_select %p64, %s65, %s66
    %p70 = pneg %p64
    %p71 = scmp.eq.s32.totalorder %s8, 1
    %p72 = por %p70, %p71
    %p73 = scmp.ne.s32.totalorder %s65, %s68
    %p74 = scmp.eq.s32.totalorder %s8, 0
    %p75 = por %p73, %p74
    %p76 = scmp.ne.s32.totalorder %s65, %s68
    %p77 = scmp.eq.s32.totalorder %s13, 1
    %p78 = por %p76, %p77
    %p79 = scmp.ne.s32.totalorder %s68, %s69
    %p80 = scmp.eq.s32.totalorder %s13, 0
    %p81 = por %p79, %p80
    %p82 = scmp.ne.s32.totalorder %s68, %s69
    %p83 = scmp.eq.s32.totalorder %s14, 1
    %p84 = por %p82, %p83
    %p86 = scmp.ne.s32.totalorder %s69, %s85
    %p87 = scmp.eq.s32.totalorder %s14, 0
    %p88 = por %p86, %p87
    %p89 = scmp.le.s32.totalorder 1, %s8
    %p90 = scmp.lt.s32.totalorder %s8, 3
    %p91 = pnand %p89, %p90
    %p92 = pneg %p91
    // Predicated region
    $region9: #{pallas_forward.7} parent=5 // pred_check
      _
    $region10: #{pallas_forward.7} parent=5 // pred_check_branch
      %94 = sbr.rel (%p91) target = $region12
    $region11: #{pallas_forward.7} parent=5 // pred_region
      %s95 = ssub.s32 %s8, 1
      // Predicated region
      $region13: #{pallas_forward.7} parent=11 // pred_check
        %p96 = pneg %p55
      $region14: #{pallas_forward.7} parent=11 // pred_check_branch
        %98 = sbr.rel (%p96) target = $region16
      $region15: #{pallas_forward.7} parent=11 // pred_region
        _
      $region16: #{pallas_forward.7} parent=11 // pred_fallthru
        _
    $region12: #{pallas_forward.7} parent=5 // pred_fallthru
      _
    %p99 = scmp.lt.s32.totalorder %s8, 2
    // Predicated region
    $region17: #{pallas_forward.7} parent=5 // pred_check
      %p100 = pneg %p99
    $region18: #{pallas_forward.7} parent=5 // pred_check_branch
      %102 = sbr.rel (%p100) target = $region20
    $region19: #{pallas_forward.7} parent=5 // pred_region
      // Predicated region
      $region21: #{pallas_forward.7} parent=19 // pred_check
        %p103 = pneg %p28
      $region22: #{pallas_forward.7} parent=19 // pred_check_branch
        %105 = sbr.rel (%p103) target = $region24
      $region23: #{pallas_forward.7} parent=19 // pred_region
        %p106 = scmp.lt.s32.totalorder %s8, 1
        %s107 = scalar_select %p106, %s8, 1
        %s108 = smul.addr %s107, 8
        %s109 = smul.addr %s108, 2
        %s110 = scalar_lea.vmem %s0, %s109
      $region24: #{pallas_forward.7} parent=19 // pred_fallthru
        _
    $region20: #{pallas_forward.7} parent=5 // pred_fallthru
      _
    %p111 = scmp.le.s32.totalorder 1, %s8
    %p112 = scmp.lt.s32.totalorder %s8, 3
    %p113 = pnand %p111, %p112
    %p114 = pneg %p113
    // Predicated region
    $region25: #{pallas_forward.7} parent=5 // pred_check
      _
    $region26: #{pallas_forward.7} parent=5 // pred_check_branch
      %116 = sbr.rel (%p113) target = $region28
    $region27: #{pallas_forward.7} parent=5 // pred_region
      %s117 = ssub.s32 %s8, 1
      %p118 = scmp.lt.s32.totalorder %s13, 1
      %s119 = scalar_select %p118, %s13, 1
      %s120 = smul.addr %s119, 8
      %s121 = smul.addr %s120, 2
      %s122 = scalar_lea.vmem %s0, %s121
      %p123 = pneg %p34
      %p124 = pneg %p31
      %p125 = pneg %p55
      %p126 = pneg %p52
      %p127 = pneg %p81
      %p128 = pneg %p78
      %p129 = scmp.lt.s32.totalorder %s13, 1
      %s130 = scalar_select %p129, %s13, 1
      %s131 = smul.addr %s130, 4
      %s132 = smul.addr %s131, 2
      %s133 = scalar_lea.vmem %s2, %s132
      %p134 = scmp.lt.s32.totalorder %s13, 1
      %s135 = scalar_select %p134, %s13, 1
      %s136 = smul.addr %s135, 8
      %s137 = smul.addr %s136, 2
      %s138 = scalar_lea.vmem %s0, %s137
      %p139 = scmp.lt.s32.totalorder %s13, 1
      %s140 = scalar_select %p139, %s13, 1
      %s141 = smul.addr %s140, 4
      %s142 = smul.addr %s141, 2
      %s143 = scalar_lea.vmem %s2, %s142
      %v145 = vld [vmem:[%s138] sm:$0x3]
      %v146 = vld [vmem:[%s138 + $0x4] sm:$0x3]
      %v147 = vld [vmem:[%s138 + $0x8] sm:$0x3]
      %v148 = vld [vmem:[%s138 + $0xc] sm:$0x3]
      %v149 = vld [vmem:[%s1] sm:$0xf]
      %v150 = vld [vmem:[%s1 + $0x4] sm:$0xf]
      %v151 = vld [vmem:[%s1 + $0x8] sm:$0xf]
      %v152 = vld [vmem:[%s1 + $0xc] sm:$0xf]
      %s153 = scalar_lea.vmem %s138, 2
      %v154 = vld [vmem:[%s153] sm:$0x3]
      %v155 = vld [vmem:[%s153 + $0x4] sm:$0x3]
      %v156 = vld [vmem:[%s153 + $0x8] sm:$0x3]
      %v157 = vld [vmem:[%s153 + $0xc] sm:$0x3]
      %s158 = scalar_lea.vmem %s1, 16
      %v159 = vld [vmem:[%s158] sm:$0xf]
      %v160 = vld [vmem:[%s158 + $0x4] sm:$0xf]
      %v161 = vld [vmem:[%s158 + $0x8] sm:$0xf]
      %v162 = vld [vmem:[%s158 + $0xc] sm:$0xf]
      %164 = vst [vmem:[#allocation1] ss:$4 sm:$0xff] %v154
      %s166 = scalar_lea.vmem [#allocation1], 1
      %167 = vst [vmem:[%s166] ss:$4 sm:$0xff] %v155
      %s169 = scalar_lea.vmem [#allocation1], 2
      %170 = vst [vmem:[%s169] ss:$4 sm:$0xff] %v156
      %s172 = scalar_lea.vmem [#allocation1], 3
      %173 = vst [vmem:[%s172] ss:$4 sm:$0xff] %v157
      %v174 = vld.sshfl [vmem:[#allocation1] sm:$0xff pattern:$0x73625140]
      %v179 = vunpack.c.l.b16 %v159
      %v180 = vunpack.c.l.b16 %v160
      %v181 = vunpack.c.l.b16 %v161
      %v182 = vunpack.c.l.b16 %v162
      %v183 = vpack.c.b16 %v180, %v179
      %v184 = vpack.c.b16 %v182, %v181
      %vm187 = vcmask 261120
      %v188 = vsel %vm187, %v174, 0
      %190 = vmatpush.bf16.msra.mxu0 0
      %191 = vmatpush.bf16.msra.mxu0 0
      %192 = vmatpush.bf16.msra.mxu0 0
      %193 = vmatpush.bf16.msra.mxu0 0
      %194 = vmatpush.bf16.msra.mxu0 0
      %195 = vmatpush.bf16.msra.mxu0 0
      %196 = vmatpush.bf16.msra.mxu0 %v184
      %197 = vmatpush.bf16.msra.mxu0 %v183
      %198 = vmatmul.bf16.gmra.mxu0 %v188
      %v199 = vpop.f32.mrf.mxu0
      %v200 = vadd.f32 0.0, %v199
      %v201 = vpop.f32.mrf.mxu0
      %v202 = vadd.f32 0.0, %v201
      %203 = vdwg.mxu0
      %205 = vst [vmem:[#allocation1] ss:$4 sm:$0xff] %v145
      %s207 = scalar_lea.vmem [#allocation1], 1
      %208 = vst [vmem:[%s207] ss:$4 sm:$0xff] %v146
      %s210 = scalar_lea.vmem [#allocation1], 2
      %211 = vst [vmem:[%s210] ss:$4 sm:$0xff] %v147
      %s213 = scalar_lea.vmem [#allocation1], 3
      %214 = vst [vmem:[%s213] ss:$4 sm:$0xff] %v148
      %v215 = vld.sshfl [vmem:[#allocation1] sm:$0xff pattern:$0x73625140]
      %v220 = vunpack.c.l.b16 %v149
      %v221 = vunpack.c.l.b16 %v150
      %v222 = vunpack.c.l.b16 %v151
      %v223 = vunpack.c.l.b16 %v152
      %v224 = vpack.c.b16 %v221, %v220
      %v225 = vpack.c.b16 %v223, %v222
      %v228 = vsel %vm187, %v215, 0
      %230 = vmatpush.bf16.msra.mxu0 0
      %231 = vmatpush.bf16.msra.mxu0 0
      %232 = vmatpush.bf16.msra.mxu0 0
      %233 = vmatpush.bf16.msra.mxu0 0
      %234 = vmatpush.bf16.msra.mxu0 0
      %235 = vmatpush.bf16.msra.mxu0 0
      %236 = vmatpush.bf16.msra.mxu0 %v225
      %237 = vmatpush.bf16.msra.mxu0 %v224
      %238 = vmatmul.bf16.gmra.mxu0 %v228
      %v239 = vpop.f32.mrf.mxu0
      %v240 = vadd.f32 %v200, %v239
      %v241 = vpop.f32.mrf.mxu0
      %v242 = vadd.f32 %v202, %v241
      %243 = vdwg.mxu0
      %vm244 = vcmask 130048
      %v245 = vsel %vm244, %v240, 0.0
      %v246 = vsel %vm244, %v242, 0.0
      %v247 = vadd.f32 %v245, %v246
      %v248 = vrot.slane %v247, 4
      %v249 = vadd.f32 %v247, %v248
      %v250 = vrot.slane %v249, 2
      %v251 = vadd.f32 %v249, %v250
      %v252 = vrot.slane %v251, 1
      %v253 = vadd.f32 %v251, %v252
      %v254 = vmul.f32 %v240, %v240
      %v255 = vmul.f32 %v242, %v242
      %v256 = vsel %vm244, %v254, 0.0
      %v257 = vsel %vm244, %v255, 0.0
      %v258 = vadd.f32 %v256, %v257
      %v259 = vrot.slane %v258, 4
      %v260 = vadd.f32 %v258, %v259
      %v261 = vrot.slane %v260, 2
      %v262 = vadd.f32 %v260, %v261
      %v263 = vrot.slane %v262, 1
      %v264 = vadd.f32 %v262, %v263
      %v265 = vmul.f32 %v253, 0.0625
      %v266 = vmul.f32 %v264, 0.0625
      %v267 = vmul.f32 %v265, %v265
      %v268 = vsub.f32 %v266, %v267
      %v269 = vmax.f32 %v268, 0.0
      %v270 = vsub.f32 %v240, %v265
      %v271 = vsub.f32 %v242, %v265
      %v272 = vadd.f32 %v269, 1e-05
      %v273 = vrsqrt.pop %v272
      %v274 = vmul.f32 %v273, %v272
      %v275 = vmul.f32 %v274, %v273
      %v276 = vmul.f32 0.5, %v275
      %v277 = vsub.f32 1.5, %v276
      %v278 = vmul.f32 %v273, %v277
      %vm279 = vweird.f32 %v272
      %vm280 = vweird.f32 %v273
      %vm281 = vmor %vm279, %vm280
      %v282 = vsel %vm281, %v273, %v278
      %v283 = vmul.f32 %v270, %v282
      %v284 = vmul.f32 %v271, %v282
      %v285 = vmax.f32 %v283, 0.0
      %v286 = vmax.f32 %v284, 0.0
      %v289 = vrot.slane %v285, 4
      %v290 = vrot.slane %v286, 4
      %v293 = vpack.c.bf16 %v285, %v285
      %v294 = vpack.c.bf16 %v289, %v289
      %v295 = vpack.c.bf16 %v286, %v286
      %v296 = vpack.c.bf16 %v290, %v290
      %vm297 = vcmask 123904
      %298 = vst.msk [vmem:[%s143] sm:$0x3] %vm297, %v293
      %299 = vst.msk [vmem:[%s143 + $0x2] sm:$0x3] %vm297, %v294
      %300 = vst.msk [vmem:[%s143 + $0x4] sm:$0x3] %vm297, %v295
      %301 = vst.msk [vmem:[%s143 + $0x6] sm:$0x3] %vm297, %v296
      %p302 = scmp.lt.s32.totalorder %s13, 1
      %s303 = scalar_select %p302, %s13, 1
      %s304 = smul.addr %s303, 4
      %s305 = smul.addr %s304, 2
      %s306 = scalar_lea.vmem %s2, %s305
      // Predicated region
      $region29: #{pallas_forward.7} parent=27 // pred_check
        %p307 = pneg %p78
      $region30: #{pallas_forward.7} parent=27 // pred_check_branch
        %309 = sbr.rel (%p307) target = $region32
      $region31: #{pallas_forward.7} parent=27 // pred_region
        _
      $region32: #{pallas_forward.7} parent=27 // pred_fallthru
        _
    $region28: #{pallas_forward.7} parent=5 // pred_fallthru
      _
    %p310 = scmp.le.s32.totalorder 2, %s8
    // Predicated region
    $region33: #{pallas_forward.7} parent=5 // pred_check
      %p311 = pneg %p310
    $region34: #{pallas_forward.7} parent=5 // pred_check_branch
      %313 = sbr.rel (%p311) target = $region36
    $region35: #{pallas_forward.7} parent=5 // pred_region
      %s314 = ssub.s32 %s8, 2
      // Predicated region
      $region37: #{pallas_forward.7} parent=35 // pred_check
        %p315 = pneg %p84
      $region38: #{pallas_forward.7} parent=35 // pred_check_branch
        %317 = sbr.rel (%p315) target = $region40
      $region39: #{pallas_forward.7} parent=35 // pred_region
        %p318 = scmp.lt.s32.totalorder %s14, 1
        %s319 = scalar_select %p318, %s14, 1
        %s320 = smul.addr %s319, 4
        %s321 = smul.addr %s320, 2
        %s322 = scalar_lea.vmem %s2, %s321
      $region40: #{pallas_forward.7} parent=35 // pred_fallthru
        _
    $region36: #{pallas_forward.7} parent=5 // pred_fallthru
      _
  $region6: #{pallas_forward.7} parent=0 // loop_footer
    %s12 = sadd.s32 1, %s8
  $region7: #{pallas_forward.7} parent=0 // loop_footer_branch
    %7 = sbr.rel target = $region3
  $region8: #{pallas_forward.7} parent=0 // loop_exit
    _

// kernel: pallas_forward.4
$region0: #{pallas_forward.4}
  #allocation0 [shape = 'u32[]', space=smem, size = 0x4, offset = 0x4, fixed_abs, tag = 'smem constant byte address 0x4 - core index']
  #allocation1 [shape = 'u32[72,128]{1,0:T(1,128)}', space=vmem, size = 0x9000, scoped, tag = 'internal scratch']
  #allocation2 [shape = 'bf16[18,18,4]{2,1,0:T(8,128)(2,1)}', space=vmem, size = 0x1b000, scoped, tag = 'scratch operand']
  %s0 = inlined_call_operand.vmem [shape: bf16[2,16,16,4], index: 0, kind: input, shape index: {}]
  %s1 = inlined_call_operand.vmem [shape: bf16[9,4,8], index: 1, kind: input, shape index: {}]
  %s2 = inlined_call_operand.vmem [shape: bf16[2,16,16,8], index: 2, kind: output, shape index: {}]
  %s3 = sld [smem:[#allocation0]]
  $region41: #{pallas_forward.4} parent=0
    _
  %s5 = ssub.s32 1, %s3
  %s6 = scalar_select 0, %s5, %s3
  loop: start=0, step=1, limit=4
  $region2: #{pallas_forward.4} parent=0 // loop_pre_header
    _
  $region3: #{pallas_forward.4} parent=0 // loop_header
    %s8 = sphi 0, %s12
    %p9 = scmp.ge.s32.totalorder %s8, 4
    %s18 = sphi 0, %s20
    %s21 = sphi 0, %s18
    %s22 = sphi 0, %s21
    %s38 = sphi 0, %s22
    %s42 = sphi 0, %s42
    %s44 = sphi 0, %s42
    %s45 = sphi 0, %s44
    %s59 = sphi 0, %s45
    %s65 = sphi 0, %s67
    %s68 = sphi 0, %s65
    %s69 = sphi 0, %s68
    %s85 = sphi 0, %s69
  $region4: #{pallas_forward.4} parent=0 // loop_header_branch
    %11 = sbr.rel (%p9) target = $region8
  $region5: #{pallas_forward.4} parent=0 // loop_body
    %s13 = ssub.s32 %s8, 1
    %s14 = ssub.s32 %s8, 2
    %s15 = sadd.s32 %s8, 1
    %s16 = ssub.s32 %s8, %s15
    %p17 = scmp.eq.s32.totalorder %s16, 0
    %s19 = sadd.s32 %s18, 1
    %s20 = scalar_select %p17, %s18, %s19
    %p23 = pneg %p17
    %p24 = scmp.eq.s32.totalorder %s8, 1
    %p25 = por %p23, %p24
    %p26 = scmp.ne.s32.totalorder %s18, %s21
    %p27 = scmp.eq.s32.totalorder %s8, 0
    %p28 = por %p26, %p27
    %p29 = scmp.ne.s32.totalorder %s18, %s21
    %p30 = scmp.eq.s32.totalorder %s13, 1
    %p31 = por %p29, %p30
    %p32 = scmp.ne.s32.totalorder %s21, %s22
    %p33 = scmp.eq.s32.totalorder %s13, 0
    %p34 = por %p32, %p33
    %p35 = scmp.ne.s32.totalorder %s21, %s22
    %p36 = scmp.eq.s32.totalorder %s14, 1
    %p37 = por %p35, %p36
    %p39 = scmp.ne.s32.totalorder %s22, %s38
    %p40 = scmp.eq.s32.totalorder %s14, 0
    %p41 = por %p39, %p40
    %s43 = sadd.s32 %s42, 1
    %p46 = scmp.eq.s32.totalorder %s8, 1
    %p47 = scmp.ne.s32.totalorder %s42, %s44
    %p48 = scmp.eq.s32.totalorder %s8, 0
    %p49 = por %p47, %p48
    %p50 = scmp.ne.s32.totalorder %s42, %s44
    %p51 = scmp.eq.s32.totalorder %s13, 1
    %p52 = por %p50, %p51
    %p53 = scmp.ne.s32.totalorder %s44, %s45
    %p54 = scmp.eq.s32.totalorder %s13, 0
    %p55 = por %p53, %p54
    %p56 = scmp.ne.s32.totalorder %s44, %s45
    %p57 = scmp.eq.s32.totalorder %s14, 1
    %p58 = por %p56, %p57
    %p60 = scmp.ne.s32.totalorder %s45, %s59
    %p61 = scmp.eq.s32.totalorder %s14, 0
    %p62 = por %p60, %p61
    %s63 = ssub.s32 %s8, %s15
    %p64 = scmp.eq.s32.totalorder %s63, 0
    %s66 = sadd.s32 %s65, 1
    %s67 = scalar_select %p64, %s65, %s66
    %p70 = pneg %p64
    %p71 = scmp.eq.s32.totalorder %s8, 1
    %p72 = por %p70, %p71
    %p73 = scmp.ne.s32.totalorder %s65, %s68
    %p74 = scmp.eq.s32.totalorder %s8, 0
    %p75 = por %p73, %p74
    %p76 = scmp.ne.s32.totalorder %s65, %s68
    %p77 = scmp.eq.s32.totalorder %s13, 1
    %p78 = por %p76, %p77
    %p79 = scmp.ne.s32.totalorder %s68, %s69
    %p80 = scmp.eq.s32.totalorder %s13, 0
    %p81 = por %p79, %p80
    %p82 = scmp.ne.s32.totalorder %s68, %s69
    %p83 = scmp.eq.s32.totalorder %s14, 1
    %p84 = por %p82, %p83
    %p86 = scmp.ne.s32.totalorder %s69, %s85
    %p87 = scmp.eq.s32.totalorder %s14, 0
    %p88 = por %p86, %p87
    %p89 = scmp.le.s32.totalorder 1, %s8
    %p90 = scmp.lt.s32.totalorder %s8, 3
    %p91 = pnand %p89, %p90
    %p92 = pneg %p91
    // Predicated region
    $region9: #{pallas_forward.4} parent=5 // pred_check
      _
    $region10: #{pallas_forward.4} parent=5 // pred_check_branch
      %94 = sbr.rel (%p91) target = $region12
    $region11: #{pallas_forward.4} parent=5 // pred_region
      %s95 = ssub.s32 %s8, 1
      // Predicated region
      $region13: #{pallas_forward.4} parent=11 // pred_check
        %p96 = pneg %p55
      $region14: #{pallas_forward.4} parent=11 // pred_check_branch
        %98 = sbr.rel (%p96) target = $region16
      $region15: #{pallas_forward.4} parent=11 // pred_region
        _
      $region16: #{pallas_forward.4} parent=11 // pred_fallthru
        _
    $region12: #{pallas_forward.4} parent=5 // pred_fallthru
      _
    %p99 = scmp.lt.s32.totalorder %s8, 2
    // Predicated region
    $region17: #{pallas_forward.4} parent=5 // pred_check
      %p100 = pneg %p99
    $region18: #{pallas_forward.4} parent=5 // pred_check_branch
      %102 = sbr.rel (%p100) target = $region20
    $region19: #{pallas_forward.4} parent=5 // pred_region
      // Predicated region
      $region21: #{pallas_forward.4} parent=19 // pred_check
        %p103 = pneg %p28
      $region22: #{pallas_forward.4} parent=19 // pred_check_branch
        %105 = sbr.rel (%p103) target = $region24
      $region23: #{pallas_forward.4} parent=19 // pred_region
        %p106 = scmp.lt.s32.totalorder %s8, 1
        %s107 = scalar_select %p106, %s8, 1
        %s108 = smul.addr %s107, 32
        %s109 = smul.addr %s108, 4
        %s110 = scalar_lea.vmem %s0, %s109
      $region24: #{pallas_forward.4} parent=19 // pred_fallthru
        _
    $region20: #{pallas_forward.4} parent=5 // pred_fallthru
      _
    %p111 = scmp.le.s32.totalorder 1, %s8
    %p112 = scmp.lt.s32.totalorder %s8, 3
    %p113 = pnand %p111, %p112
    %p114 = pneg %p113
    // Predicated region
    $region25: #{pallas_forward.4} parent=5 // pred_check
      _
    $region26: #{pallas_forward.4} parent=5 // pred_check_branch
      %116 = sbr.rel (%p113) target = $region28
    $region27: #{pallas_forward.4} parent=5 // pred_region
      %s117 = ssub.s32 %s8, 1
      %p118 = scmp.lt.s32.totalorder %s13, 1
      %s119 = scalar_select %p118, %s13, 1
      %s120 = smul.addr %s119, 32
      %s121 = smul.addr %s120, 4
      %s122 = scalar_lea.vmem %s0, %s121
      %p123 = pneg %p34
      %p124 = pneg %p31
      %p125 = pneg %p55
      %p126 = pneg %p52
      %p127 = pneg %p81
      %p128 = pneg %p78
      %p129 = scmp.lt.s32.totalorder %s13, 1
      %s130 = scalar_select %p129, %s13, 1
      %s131 = smul.addr %s130, 32
      %s132 = smul.addr %s131, 4
      %s133 = scalar_lea.vmem %s2, %s132
      %p134 = scmp.lt.s32.totalorder %s13, 1
      %s135 = scalar_select %p134, %s13, 1
      %s136 = smul.addr %s135, 32
      %s137 = smul.addr %s136, 4
      %s138 = scalar_lea.vmem %s0, %s137
      %p139 = scmp.lt.s32.totalorder %s13, 1
      %s140 = scalar_select %p139, %s13, 1
      %s141 = smul.addr %s140, 32
      %s142 = smul.addr %s141, 4
      %s143 = scalar_lea.vmem %s2, %s142
      %vm145 = vcmask 27648
      %146 = vst.msk [vmem:[#allocation2] sm:$0xf] %vm145, 0
      %147 = vst.msk [vmem:[#allocation2 + $0x4] sm:$0xf] %vm145, 0
      %vm148 = vcmask 24576
      %149 = vst.msk [vmem:[#allocation2 + $0x8] sm:$0x1] %vm148, 0
      %s150 = scalar_lea.vmem [#allocation2], 204
      %151 = vst.msk [vmem:[%s150] sm:$0xf] %vm145, 0
      %152 = vst.msk [vmem:[%s150 + $0x4] sm:$0xf] %vm145, 0
      %153 = vst.msk [vmem:[%s150 + $0x8] sm:$0x1] %vm148, 0
      %s154 = scalar_lea.vmem [#allocation2], 12
      %vm155 = vcmask 24576
      %vm156 = vsmask.f32 256
      %vm157 = vmand %vm155, %vm156
      %v158 = vld [vmem:[%s154] sm:$0x1]
      %v159 = vsel %vm157, 0, %v158
      %160 = vst [vmem:[%s154] sm:$0x1] %v159
      %v161 = vld [vmem:[%s154 + $0xc] sm:$0x1]
      %v162 = vsel %vm157, 0, %v161
      %163 = vst [vmem:[%s154 + $0xc] sm:$0x1] %v162
      %v164 = vld [vmem:[%s154 + $0x18] sm:$0x1]
      %v165 = vsel %vm157, 0, %v164
      %166 = vst [vmem:[%s154 + $0x18] sm:$0x1] %v165
      %v167 = vld [vmem:[%s154 + $0x24] sm:$0x1]
      %v168 = vsel %vm157, 0, %v167
      %169 = vst [vmem:[%s154 + $0x24] sm:$0x1] %v168
      %v170 = vld [vmem:[%s154 + $0x30] sm:$0x1]
      %v171 = vsel %vm157, 0, %v170
      %172 = vst [vmem:[%s154 + $0x30] sm:$0x1] %v171
      %v173 = vld [vmem:[%s154 + $0x3c] sm:$0x1]
      %v174 = vsel %vm157, 0, %v173
      %175 = vst [vmem:[%s154 + $0x3c] sm:$0x1] %v174
      %v176 = vld [vmem:[%s154 + $0x48] sm:$0x1]
      %v177 = vsel %vm157, 0, %v176
      %178 = vst [vmem:[%s154 + $0x48] sm:$0x1] %v177
      %v179 = vld [vmem:[%s154 + $0x54] sm:$0x1]
      %v180 = vsel %vm157, 0, %v179
      %181 = vst [vmem:[%s154 + $0x54] sm:$0x1] %v180
      %v182 = vld [vmem:[%s154 + $0x60] sm:$0x1]
      %v183 = vsel %vm157, 0, %v182
      %184 = vst [vmem:[%s154 + $0x60] sm:$0x1] %v183
      %v185 = vld [vmem:[%s154 + $0x6c] sm:$0x1]
      %v186 = vsel %vm157, 0, %v185
      %187 = vst [vmem:[%s154 + $0x6c] sm:$0x1] %v186
      %v188 = vld [vmem:[%s154 + $0x78] sm:$0x1]
      %v189 = vsel %vm157, 0, %v188
      %190 = vst [vmem:[%s154 + $0x78] sm:$0x1] %v189
      %v191 = vld [vmem:[%s154 + $0x84] sm:$0x1]
      %v192 = vsel %vm157, 0, %v191
      %193 = vst [vmem:[%s154 + $0x84] sm:$0x1] %v192
      %v194 = vld [vmem:[%s154 + $0x90] sm:$0x1]
      %v195 = vsel %vm157, 0, %v194
      %196 = vst [vmem:[%s154 + $0x90] sm:$0x1] %v195
      %v197 = vld [vmem:[%s154 + $0x9c] sm:$0x1]
      %v198 = vsel %vm157, 0, %v197
      %199 = vst [vmem:[%s154 + $0x9c] sm:$0x1] %v198
      %v200 = vld [vmem:[%s154 + $0xa8] sm:$0x1]
      %v201 = vsel %vm157, 0, %v200
      %202 = vst [vmem:[%s154 + $0xa8] sm:$0x1] %v201
      %v203 = vld [vmem:[%s154 + $0xb4] sm:$0x1]
      %v204 = vsel %vm157, 0, %v203
      %205 = vst [vmem:[%s154 + $0xb4] sm:$0x1] %v204
      %vm206 = vsmask.f32 7938
      %vm207 = vmand %vm155, %vm206
      %v208 = vld [vmem:[%s154 + $0x8] sm:$0x1]
      %v209 = vsel %vm207, 0, %v208
      %210 = vst [vmem:[%s154 + $0x8] sm:$0x1] %v209
      %v211 = vld [vmem:[%s154 + $0x14] sm:$0x1]
      %v212 = vsel %vm207, 0, %v211
      %213 = vst [vmem:[%s154 + $0x14] sm:$0x1] %v212
      %v214 = vld [vmem:[%s154 + $0x20] sm:$0x1]
      %v215 = vsel %vm207, 0, %v214
      %216 = vst [vmem:[%s154 + $0x20] sm:$0x1] %v215
      %v217 = vld [vmem:[%s154 + $0x2c] sm:$0x1]
      %v218 = vsel %vm207, 0, %v217
      %219 = vst [vmem:[%s154 + $0x2c] sm:$0x1] %v218
      %v220 = vld [vmem:[%s154 + $0x38] sm:$0x1]
      %v221 = vsel %vm207, 0, %v220
      %222 = vst [vmem:[%s154 + $0x38] sm:$0x1] %v221
      %v223 = vld [vmem:[%s154 + $0x44] sm:$0x1]
      %v224 = vsel %vm207, 0, %v223
      %225 = vst [vmem:[%s154 + $0x44] sm:$0x1] %v224
      %v226 = vld [vmem:[%s154 + $0x50] sm:$0x1]
      %v227 = vsel %vm207, 0, %v226
      %228 = vst [vmem:[%s154 + $0x50] sm:$0x1] %v227
      %v229 = vld [vmem:[%s154 + $0x5c] sm:$0x1]
      %v230 = vsel %vm207, 0, %v229
      %231 = vst [vmem:[%s154 + $0x5c] sm:$0x1] %v230
      %v232 = vld [vmem:[%s154 + $0x68] sm:$0x1]
      %v233 = vsel %vm207, 0, %v232
      %234 = vst [vmem:[%s154 + $0x68] sm:$0x1] %v233
      %v235 = vld [vmem:[%s154 + $0x74] sm:$0x1]
      %v236 = vsel %vm207, 0, %v235
      %237 = vst [vmem:[%s154 + $0x74] sm:$0x1] %v236
      %v238 = vld [vmem:[%s154 + $0x80] sm:$0x1]
      %v239 = vsel %vm207, 0, %v238
      %240 = vst [vmem:[%s154 + $0x80] sm:$0x1] %v239
      %v241 = vld [vmem:[%s154 + $0x8c] sm:$0x1]
      %v242 = vsel %vm207, 0, %v241
      %243 = vst [vmem:[%s154 + $0x8c] sm:$0x1] %v242
      %v244 = vld [vmem:[%s154 + $0x98] sm:$0x1]
      %v245 = vsel %vm207, 0, %v244
      %246 = vst [vmem:[%s154 + $0x98] sm:$0x1] %v245
      %v247 = vld [vmem:[%s154 + $0xa4] sm:$0x1]
      %v248 = vsel %vm207, 0, %v247
      %249 = vst [vmem:[%s154 + $0xa4] sm:$0x1] %v248
      %v250 = vld [vmem:[%s154 + $0xb0] sm:$0x1]
      %v251 = vsel %vm207, 0, %v250
      %252 = vst [vmem:[%s154 + $0xb0] sm:$0x1] %v251
      %v253 = vld [vmem:[%s154 + $0xbc] sm:$0x1]
      %v254 = vsel %vm207, 0, %v253
      %255 = vst [vmem:[%s154 + $0xbc] sm:$0x1] %v254
      %v256 = vld [vmem:[%s138] sm:$0xf]
      %v257 = vld [vmem:[%s138 + $0x4] sm:$0xf]
      %v258 = vld [vmem:[%s138 + $0x8] sm:$0xf]
      %v259 = vld [vmem:[%s138 + $0xc] sm:$0xf]
      %v260 = vld [vmem:[%s138 + $0x10] sm:$0xf]
      %v261 = vld [vmem:[%s138 + $0x14] sm:$0xf]
      %v262 = vld [vmem:[%s138 + $0x18] sm:$0xf]
      %v263 = vld [vmem:[%s138 + $0x1c] sm:$0xf]
      %v264 = vld [vmem:[%s138 + $0x20] sm:$0xf]
      %v265 = vld [vmem:[%s138 + $0x24] sm:$0xf]
      %v266 = vld [vmem:[%s138 + $0x28] sm:$0xf]
      %v267 = vld [vmem:[%s138 + $0x2c] sm:$0xf]
      %v268 = vld [vmem:[%s138 + $0x30] sm:$0xf]
      %v269 = vld [vmem:[%s138 + $0x34] sm:$0xf]
      %v270 = vld [vmem:[%s138 + $0x38] sm:$0xf]
      %v271 = vld [vmem:[%s138 + $0x3c] sm:$0xf]
      %v272 = vld [vmem:[%s138 + $0x40] sm:$0xf]
      %v273 = vld [vmem:[%s138 + $0x44] sm:$0xf]
      %v274 = vld [vmem:[%s138 + $0x48] sm:$0xf]
      %v275 = vld [vmem:[%s138 + $0x4c] sm:$0xf]
      %v276 = vld [vmem:[%s138 + $0x50] sm:$0xf]
      %v277 = vld [vmem:[%s138 + $0x54] sm:$0xf]
      %v278 = vld [vmem:[%s138 + $0x58] sm:$0xf]
      %v279 = vld [vmem:[%s138 + $0x5c] sm:$0xf]
      %v280 = vld [vmem:[%s138 + $0x60] sm:$0xf]
      %v281 = vld [vmem:[%s138 + $0x64] sm:$0xf]
      %v282 = vld [vmem:[%s138 + $0x68] sm:$0xf]
      %v283 = vld [vmem:[%s138 + $0x6c] sm:$0xf]
      %v284 = vld [vmem:[%s138 + $0x70] sm:$0xf]
      %v285 = vld [vmem:[%s138 + $0x74] sm:$0xf]
      %v286 = vld [vmem:[%s138 + $0x78] sm:$0xf]
      %v287 = vld [vmem:[%s138 + $0x7c] sm:$0xf]
      %vm288 = vsmask.f32 4368
      %vm289 = vmor %vm156, %vm288
      %v291 = vshrl.u32 %v256, 16
      %v293 = vrot.slane %v291, 7
      %v294 = vshll.u32 %v256, 16
      %v296 = vor.u32 %v293, %v294
      %v297 = vrot.slane %v293, 4
      %v299 = vshrl.u32 %v257, 16
      %v301 = vrot.slane %v299, 7
      %v302 = vshll.u32 %v257, 16
      %v304 = vor.u32 %v301, %v302
      %v305 = vsel %vm289, %v297, %v304
      %v306 = vrot.slane %v301, 4
      %v308 = vshrl.u32 %v258, 16
      %v310 = vrot.slane %v308, 7
      %v311 = vshll.u32 %v258, 16
      %v313 = vor.u32 %v310, %v311
      %v314 = vrot.slane %v310, 4
      %v316 = vshrl.u32 %v259, 16
      %v318 = vrot.slane %v316, 7
      %v319 = vshll.u32 %v259, 16
      %v321 = vor.u32 %v318, %v319
      %v322 = vsel %vm289, %v314, %v321
      %v323 = vrot.slane %v318, 4
      %v325 = vshrl.u32 %v260, 16
      %v327 = vrot.slane %v325, 7
      %v328 = vshll.u32 %v260, 16
      %v330 = vor.u32 %v327, %v328
      %v331 = vrot.slane %v327, 4
      %v333 = vshrl.u32 %v261, 16
      %v335 = vrot.slane %v333, 7
      %v336 = vshll.u32 %v261, 16
      %v338 = vor.u32 %v335, %v336
      %v339 = vsel %vm289, %v331, %v338
      %v340 = vrot.slane %v335, 4
      %v342 = vshrl.u32 %v262, 16
      %v344 = vrot.slane %v342, 7
      %v345 = vshll.u32 %v262, 16
      %v347 = vor.u32 %v344, %v345
      %v348 = vrot.slane %v344, 4
      %v350 = vshrl.u32 %v263, 16
      %v352 = vrot.slane %v350, 7
      %v353 = vshll.u32 %v263, 16
      %v355 = vor.u32 %v352, %v353
      %v356 = vsel %vm289, %v348, %v355
      %v357 = vrot.slane %v352, 4
      %v359 = vshrl.u32 %v264, 16
      %v361 = vrot.slane %v359, 7
      %v362 = vshll.u32 %v264, 16
      %v364 = vor.u32 %v361, %v362
      %v365 = vrot.slane %v361, 4
      %v367 = vshrl.u32 %v265, 16
      %v369 = vrot.slane %v367, 7
      %v370 = vshll.u32 %v265, 16
      %v372 = vor.u32 %v369, %v370
      %v373 = vsel %vm289, %v365, %v372
      %v374 = vrot.slane %v369, 4
      %v376 = vshrl.u32 %v266, 16
      %v378 = vrot.slane %v376, 7
      %v379 = vshll.u32 %v266, 16
      %v381 = vor.u32 %v378, %v379
      %v382 = vrot.slane %v378, 4
      %v384 = vshrl.u32 %v267, 16
      %v386 = vrot.slane %v384, 7
      %v387 = vshll.u32 %v267, 16
      %v389 = vor.u32 %v386, %v387
      %v390 = vsel %vm289, %v382, %v389
      %v391 = vrot.slane %v386, 4
      %v393 = vshrl.u32 %v268, 16
      %v395 = vrot.slane %v393, 7
      %v396 = vshll.u32 %v268, 16
      %v398 = vor.u32 %v395, %v396
      %v399 = vrot.slane %v395, 4
      %v401 = vshrl.u32 %v269, 16
      %v403 = vrot.slane %v401, 7
      %v404 = vshll.u32 %v269, 16
      %v406 = vor.u32 %v403, %v404
      %v407 = vsel %vm289, %v399, %v406
      %v408 = vrot.slane %v403, 4
      %v410 = vshrl.u32 %v270, 16
      %v412 = vrot.slane %v410, 7
      %v413 = vshll.u32 %v270, 16
      %v415 = vor.u32 %v412, %v413
      %v416 = vrot.slane %v412, 4
      %v418 = vshrl.u32 %v271, 16
      %v420 = vrot.slane %v418, 7
      %v421 = vshll.u32 %v271, 16
      %v423 = vor.u32 %v420, %v421
      %v424 = vsel %vm289, %v416, %v423
      %v425 = vrot.slane %v420, 4
      %v427 = vshrl.u32 %v272, 16
      %v429 = vrot.slane %v427, 7
      %v430 = vshll.u32 %v272, 16
      %v432 = vor.u32 %v429, %v430
      %v433 = vrot.slane %v429, 4
      %v435 = vshrl.u32 %v273, 16
      %v437 = vrot.slane %v435, 7
      %v438 = vshll.u32 %v273, 16
      %v440 = vor.u32 %v437, %v438
      %v441 = vsel %vm289, %v433, %v440
      %v442 = vrot.slane %v437, 4
      %v444 = vshrl.u32 %v274, 16
      %v446 = vrot.slane %v444, 7
      %v447 = vshll.u32 %v274, 16
      %v449 = vor.u32 %v446, %v447
      %v450 = vrot.slane %v446, 4
      %v452 = vshrl.u32 %v275, 16
      %v454 = vrot.slane %v452, 7
      %v455 = vshll.u32 %v275, 16
      %v457 = vor.u32 %v454, %v455
      %v458 = vsel %vm289, %v450, %v457
      %v459 = vrot.slane %v454, 4
      %v461 = vshrl.u32 %v276, 16
      %v463 = vrot.slane %v461, 7
      %v464 = vshll.u32 %v276, 16
      %v466 = vor.u32 %v463, %v464
      %v467 = vrot.slane %v463, 4
      %v469 = vshrl.u32 %v277, 16
      %v471 = vrot.slane %v469, 7
      %v472 = vshll.u32 %v277, 16
      %v474 = vor.u32 %v471, %v472
      %v475 = vsel %vm289, %v467, %v474
      %v476 = vrot.slane %v471, 4
      %v478 = vshrl.u32 %v278, 16
      %v480 = vrot.slane %v478, 7
      %v481 = vshll.u32 %v278, 16
      %v483 = vor.u32 %v480, %v481
      %v484 = vrot.slane %v480, 4
      %v486 = vshrl.u32 %v279, 16
      %v488 = vrot.slane %v486, 7
      %v489 = vshll.u32 %v279, 16
      %v491 = vor.u32 %v488, %v489
      %v492 = vsel %vm289, %v484, %v491
      %v493 = vrot.slane %v488, 4
      %v495 = vshrl.u32 %v280, 16
      %v497 = vrot.slane %v495, 7
      %v498 = vshll.u32 %v280, 16
      %v500 = vor.u32 %v497, %v498
      %v501 = vrot.slane %v497, 4
      %v503 = vshrl.u32 %v281, 16
      %v505 = vrot.slane %v503, 7
      %v506 = vshll.u32 %v281, 16
      %v508 = vor.u32 %v505, %v506
      %v509 = vsel %vm289, %v501, %v508
      %v510 = vrot.slane %v505, 4
      %v512 = vshrl.u32 %v282, 16
      %v514 = vrot.slane %v512, 7
      %v515 = vshll.u32 %v282, 16
      %v517 = vor.u32 %v514, %v515
      %v518 = vrot.slane %v514, 4
      %v520 = vshrl.u32 %v283, 16
      %v522 = vrot.slane %v520, 7
      %v523 = vshll.u32 %v283, 16
      %v525 = vor.u32 %v522, %v523
      %v526 = vsel %vm289, %v518, %v525
      %v527 = vrot.slane %v522, 4
      %v529 = vshrl.u32 %v284, 16
      %v531 = vrot.slane %v529, 7
      %v532 = vshll.u32 %v284, 16
      %v534 = vor.u32 %v531, %v532
      %v535 = vrot.slane %v531, 4
      %v537 = vshrl.u32 %v285, 16
      %v539 = vrot.slane %v537, 7
      %v540 = vshll.u32 %v285, 16
      %v542 = vor.u32 %v539, %v540
      %v543 = vsel %vm289, %v535, %v542
      %v544 = vrot.slane %v539, 4
      %v546 = vshrl.u32 %v286, 16
      %v548 = vrot.slane %v546, 7
      %v549 = vshll.u32 %v286, 16
      %v551 = vor.u32 %v548, %v549
      %v552 = vrot.slane %v548, 4
      %v554 = vshrl.u32 %v287, 16
      %v556 = vrot.slane %v554, 7
      %v557 = vshll.u32 %v287, 16
      %v559 = vor.u32 %v556, %v557
      %v560 = vsel %vm289, %v552, %v559
      %v561 = vrot.slane %v556, 4
      %vm610 = vcmask 27648
      %vm611 = vmand %vm610, %vm206
      %v612 = vld [vmem:[%s154] sm:$0xf]
      %v613 = vsel %vm611, %v296, %v612
      %614 = vst [vmem:[%s154] sm:$0xf] %v613
      %615 = vst.msk [vmem:[%s154 + $0x4] sm:$0xf] %vm145, %v305
      %v616 = vld [vmem:[%s154 + $0x8] sm:$0x1]
      %v617 = vsel %vm157, %v306, %v616
      %618 = vst [vmem:[%s154 + $0x8] sm:$0x1] %v617
      %v619 = vld [vmem:[%s154 + $0xc] sm:$0xf]
      %v620 = vsel %vm611, %v313, %v619
      %621 = vst [vmem:[%s154 + $0xc] sm:$0xf] %v620
      %622 = vst.msk [vmem:[%s154 + $0x10] sm:$0xf] %vm145, %v322
      %v623 = vld [vmem:[%s154 + $0x14] sm:$0x1]
      %v624 = vsel %vm157, %v323, %v623
      %625 = vst [vmem:[%s154 + $0x14] sm:$0x1] %v624
      %v626 = vld [vmem:[%s154 + $0x18] sm:$0xf]
      %v627 = vsel %vm611, %v330, %v626
      %628 = vst [vmem:[%s154 + $0x18] sm:$0xf] %v627
      %629 = vst.msk [vmem:[%s154 + $0x1c] sm:$0xf] %vm145, %v339
      %v630 = vld [vmem:[%s154 + $0x20] sm:$0x1]
      %v631 = vsel %vm157, %v340, %v630
      %632 = vst [vmem:[%s154 + $0x20] sm:$0x1] %v631
      %v633 = vld [vmem:[%s154 + $0x24] sm:$0xf]
      %v634 = vsel %vm611, %v347, %v633
      %635 = vst [vmem:[%s154 + $0x24] sm:$0xf] %v634
      %636 = vst.msk [vmem:[%s154 + $0x28] sm:$0xf] %vm145, %v356
      %v637 = vld [vmem:[%s154 + $0x2c] sm:$0x1]
      %v638 = vsel %vm157, %v357, %v637
      %639 = vst [vmem:[%s154 + $0x2c] sm:$0x1] %v638
      %v640 = vld [vmem:[%s154 + $0x30] sm:$0xf]
      %v641 = vsel %vm611, %v364, %v640
      %642 = vst [vmem:[%s154 + $0x30] sm:$0xf] %v641
      %643 = vst.msk [vmem:[%s154 + $0x34] sm:$0xf] %vm145, %v373
      %v644 = vld [vmem:[%s154 + $0x38] sm:$0x1]
      %v645 = vsel %vm157, %v374, %v644
      %646 = vst [vmem:[%s154 + $0x38] sm:$0x1] %v645
      %v647 = vld [vmem:[%s154 + $0x3c] sm:$0xf]
      %v648 = vsel %vm611, %v381, %v647
      %649 = vst [vmem:[%s154 + $0x3c] sm:$0xf] %v648
      %650 = vst.msk [vmem:[%s154 + $0x40] sm:$0xf] %vm145, %v390
      %v651 = vld [vmem:[%s154 + $0x44] sm:$0x1]
      %v652 = vsel %vm157, %v391, %v651
      %653 = vst [vmem:[%s154 + $0x44] sm:$0x1] %v652
      %v654 = vld [vmem:[%s154 + $0x48] sm:$0xf]
      %v655 = vsel %vm611, %v398, %v654
      %656 = vst [vmem:[%s154 + $0x48] sm:$0xf] %v655
      %657 = vst.msk [vmem:[%s154 + $0x4c] sm:$0xf] %vm145, %v407
      %v658 = vld [vmem:[%s154 + $0x50] sm:$0x1]
      %v659 = vsel %vm157, %v408, %v658
      %660 = vst [vmem:[%s154 + $0x50] sm:$0x1] %v659
      %v661 = vld [vmem:[%s154 + $0x54] sm:$0xf]
      %v662 = vsel %vm611, %v415, %v661
      %663 = vst [vmem:[%s154 + $0x54] sm:$0xf] %v662
      %664 = vst.msk [vmem:[%s154 + $0x58] sm:$0xf] %vm145, %v424
      %v665 = vld [vmem:[%s154 + $0x5c] sm:$0x1]
      %v666 = vsel %vm157, %v425, %v665
      %667 = vst [vmem:[%s154 + $0x5c] sm:$0x1] %v666
      %v668 = vld [vmem:[%s154 + $0x60] sm:$0xf]
      %v669 = vsel %vm611, %v432, %v668
      %670 = vst [vmem:[%s154 + $0x60] sm:$0xf] %v669
      %671 = vst.msk [vmem:[%s154 + $0x64] sm:$0xf] %vm145, %v441
      %v672 = vld [vmem:[%s154 + $0x68] sm:$0x1]
      %v673 = vsel %vm157, %v442, %v672
      %674 = vst [vmem:[%s154 + $0x68] sm:$0x1] %v673
      %v675 = vld [vmem:[%s154 + $0x6c] sm:$0xf]
      %v676 = vsel %vm611, %v449, %v675
      %677 = vst [vmem:[%s154 + $0x6c] sm:$0xf] %v676
      %678 = vst.msk [vmem:[%s154 + $0x70] sm:$0xf] %vm145, %v458
      %v679 = vld [vmem:[%s154 + $0x74] sm:$0x1]
      %v680 = vsel %vm157, %v459, %v679
      %681 = vst [vmem:[%s154 + $0x74] sm:$0x1] %v680
      %v682 = vld [vmem:[%s154 + $0x78] sm:$0xf]
      %v683 = vsel %vm611, %v466, %v682
      %684 = vst [vmem:[%s154 + $0x78] sm:$0xf] %v683
      %685 = vst.msk [vmem:[%s154 + $0x7c] sm:$0xf] %vm145, %v475
      %v686 = vld [vmem:[%s154 + $0x80] sm:$0x1]
      %v687 = vsel %vm157, %v476, %v686
      %688 = vst [vmem:[%s154 + $0x80] sm:$0x1] %v687
      %v689 = vld [vmem:[%s154 + $0x84] sm:$0xf]
      %v690 = vsel %vm611, %v483, %v689
      %691 = vst [vmem:[%s154 + $0x84] sm:$0xf] %v690
      %692 = vst.msk [vmem:[%s154 + $0x88] sm:$0xf] %vm145, %v492
      %v693 = vld [vmem:[%s154 + $0x8c] sm:$0x1]
      %v694 = vsel %vm157, %v493, %v693
      %695 = vst [vmem:[%s154 + $0x8c] sm:$0x1] %v694
      %v696 = vld [vmem:[%s154 + $0x90] sm:$0xf]
      %v697 = vsel %vm611, %v500, %v696
      %698 = vst [vmem:[%s154 + $0x90] sm:$0xf] %v697
      %699 = vst.msk [vmem:[%s154 + $0x94] sm:$0xf] %vm145, %v509
      %v700 = vld [vmem:[%s154 + $0x98] sm:$0x1]
      %v701 = vsel %vm157, %v510, %v700
      %702 = vst [vmem:[%s154 + $0x98] sm:$0x1] %v701
      %v703 = vld [vmem:[%s154 + $0x9c] sm:$0xf]
      %v704 = vsel %vm611, %v517, %v703
      %705 = vst [vmem:[%s154 + $0x9c] sm:$0xf] %v704
      %706 = vst.msk [vmem:[%s154 + $0xa0] sm:$0xf] %vm145, %v526
      %v707 = vld [vmem:[%s154 + $0xa4] sm:$0x1]
      %v708 = vsel %vm157, %v527, %v707
      %709 = vst [vmem:[%s154 + $0xa4] sm:$0x1] %v708
      %v710 = vld [vmem:[%s154 + $0xa8] sm:$0xf]
      %v711 = vsel %vm611, %v534, %v710
      %712 = vst [vmem:[%s154 + $0xa8] sm:$0xf] %v711
      %713 = vst.msk [vmem:[%s154 + $0xac] sm:$0xf] %vm145, %v543
      %v714 = vld [vmem:[%s154 + $0xb0] sm:$0x1]
      %v715 = vsel %vm157, %v544, %v714
      %716 = vst [vmem:[%s154 + $0xb0] sm:$0x1] %v715
      %v717 = vld [vmem:[%s154 + $0xb4] sm:$0xf]
      %v718 = vsel %vm611, %v551, %v717
      %719 = vst [vmem:[%s154 + $0xb4] sm:$0xf] %v718
      %720 = vst.msk [vmem:[%s154 + $0xb8] sm:$0xf] %vm145, %v560
      %v721 = vld [vmem:[%s154 + $0xbc] sm:$0x1]
      %v722 = vsel %vm157, %v561, %v721
      %723 = vst [vmem:[%s154 + $0xbc] sm:$0x1] %v722
      %v724 = vld [vmem:[#allocation2] sm:$0xf]
      %v725 = vld [vmem:[#allocation2 + $0x4] sm:$0xf]
      %v726 = vld [vmem:[#allocation2 + $0xc] sm:$0xf]
      %v727 = vld [vmem:[#allocation2 + $0x10] sm:$0xf]
      %v728 = vld [vmem:[#allocation2 + $0x18] sm:$0xf]
      %v729 = vld [vmem:[#allocation2 + $0x1c] sm:$0xf]
      %v730 = vld [vmem:[#allocation2 + $0x24] sm:$0xf]
      %v731 = vld [vmem:[#allocation2 + $0x28] sm:$0xf]
      %v732 = vld [vmem:[#allocation2 + $0x30] sm:$0xf]
      %v733 = vld [vmem:[#allocation2 + $0x34] sm:$0xf]
      %v734 = vld [vmem:[#allocation2 + $0x3c] sm:$0xf]
      %v735 = vld [vmem:[#allocation2 + $0x40] sm:$0xf]
      %v736 = vld [vmem:[#allocation2 + $0x48] sm:$0xf]
      %v737 = vld [vmem:[#allocation2 + $0x4c] sm:$0xf]
      %v738 = vld [vmem:[#allocation2 + $0x54] sm:$0xf]
      %v739 = vld [vmem:[#allocation2 + $0x58] sm:$0xf]
      %v740 = vld [vmem:[#allocation2 + $0x60] sm:$0xf]
      %v741 = vld [vmem:[#allocation2 + $0x64] sm:$0xf]
      %v742 = vld [vmem:[#allocation2 + $0x6c] sm:$0xf]
      %v743 = vld [vmem:[#allocation2 + $0x70] sm:$0xf]
      %v744 = vld [vmem:[#allocation2 + $0x78] sm:$0xf]
      %v745 = vld [vmem:[#allocation2 + $0x7c] sm:$0xf]
      %v746 = vld [vmem:[#allocation2 + $0x84] sm:$0xf]
      %v747 = vld [vmem:[#allocation2 + $0x88] sm:$0xf]
      %v748 = vld [vmem:[#allocation2 + $0x90] sm:$0xf]
      %v749 = vld [vmem:[#allocation2 + $0x94] sm:$0xf]
      %v750 = vld [vmem:[#allocation2 + $0x9c] sm:$0xf]
      %v751 = vld [vmem:[#allocation2 + $0xa0] sm:$0xf]
      %v752 = vld [vmem:[#allocation2 + $0xa8] sm:$0xf]
      %v753 = vld [vmem:[#allocation2 + $0xac] sm:$0xf]
      %v754 = vld [vmem:[#allocation2 + $0xb4] sm:$0xf]
      %v755 = vld [vmem:[#allocation2 + $0xb8] sm:$0xf]
      %v756 = vld [vmem:[%s1] sm:$0x3]
      %v757 = vld [vmem:[#allocation2 + $0x8] sm:$0x1]
      %v758 = vld [vmem:[#allocation2 + $0x14] sm:$0x1]
      %v759 = vld [vmem:[#allocation2 + $0x20] sm:$0x1]
      %v760 = vld [vmem:[#allocation2 + $0x2c] sm:$0x1]
      %v761 = vld [vmem:[#allocation2 + $0x38] sm:$0x1]
      %v762 = vld [vmem:[#allocation2 + $0x44] sm:$0x1]
      %v763 = vld [vmem:[#allocation2 + $0x50] sm:$0x1]
      %v764 = vld [vmem:[#allocation2 + $0x5c] sm:$0x1]
      %v765 = vld [vmem:[#allocation2 + $0x68] sm:$0x1]
      %v766 = vld [vmem:[#allocation2 + $0x74] sm:$0x1]
      %v767 = vld [vmem:[#allocation2 + $0x80] sm:$0x1]
      %v768 = vld [vmem:[#allocation2 + $0x8c] sm:$0x1]
      %v769 = vld [vmem:[#allocation2 + $0x98] sm:$0x1]
      %v770 = vld [vmem:[#allocation2 + $0xa4] sm:$0x1]
      %v771 = vld [vmem:[#allocation2 + $0xb0] sm:$0x1]
      %v772 = vld [vmem:[#allocation2 + $0xbc] sm:$0x1]
      %vm773 = vsmask.f32 3328
      %vm774 = vsmask.f32 7440
      %vm775 = vmor %vm773, %vm774
      %v777 = vshrl.u32 %v724, 16
      %v779 = vrot.slane %v777, 4
      %v780 = vshll.u32 %v724, 16
      %v782 = vrot.slane %v780, 5
      %v783 = vor.u32 %v779, %v782
      %v784 = vrot.slane %v783, 4
      %v786 = vshll.u32 %v725, 16
      %v788 = vrot.slane %v786, 5
      %v789 = vsel %vm775, %v784, %v788
      %v790 = vshrl.u32 %v725, 16
      %v792 = vrot.slane %v790, 4
      %v793 = vor.u32 %v792, %v788
      %v794 = vrot.slane %v793, 4
      %v796 = vshll.u32 %v757, 16
      %v798 = vrot.slane %v796, 5
      %v799 = vsel %vm775, %v794, %v798
      %v801 = vshrl.u32 %v726, 16
      %v803 = vrot.slane %v801, 4
      %v804 = vshll.u32 %v726, 16
      %v806 = vrot.slane %v804, 5
      %v807 = vor.u32 %v803, %v806
      %v808 = vrot.slane %v807, 4
      %v810 = vshll.u32 %v727, 16
      %v812 = vrot.slane %v810, 5
      %v813 = vsel %vm775, %v808, %v812
      %v814 = vshrl.u32 %v727, 16
      %v816 = vrot.slane %v814, 4
      %v817 = vor.u32 %v816, %v812
      %v818 = vrot.slane %v817, 4
      %v820 = vshll.u32 %v758, 16
      %v822 = vrot.slane %v820, 5
      %v823 = vsel %vm775, %v818, %v822
      %v825 = vshrl.u32 %v728, 16
      %v827 = vrot.slane %v825, 4
      %v828 = vshll.u32 %v728, 16
      %v830 = vrot.slane %v828, 5
      %v831 = vor.u32 %v827, %v830
      %v832 = vrot.slane %v831, 4
      %v834 = vshll.u32 %v729, 16
      %v836 = vrot.slane %v834, 5
      %v837 = vsel %vm775, %v832, %v836
      %v838 = vshrl.u32 %v729, 16
      %v840 = vrot.slane %v838, 4
      %v841 = vor.u32 %v840, %v836
      %v842 = vrot.slane %v841, 4
      %v844 = vshll.u32 %v759, 16
      %v846 = vrot.slane %v844, 5
      %v847 = vsel %vm775, %v842, %v846
      %v849 = vshrl.u32 %v730, 16
      %v851 = vrot.slane %v849, 4
      %v852 = vshll.u32 %v730, 16
      %v854 = vrot.slane %v852, 5
      %v855 = vor.u32 %v851, %v854
      %v856 = vrot.slane %v855, 4
      %v858 = vshll.u32 %v731, 16
      %v860 = vrot.slane %v858, 5
      %v861 = vsel %vm775, %v856, %v860
      %v862 = vshrl.u32 %v731, 16
      %v864 = vrot.slane %v862, 4
      %v865 = vor.u32 %v864, %v860
      %v866 = vrot.slane %v865, 4
      %v868 = vshll.u32 %v760, 16
      %v870 = vrot.slane %v868, 5
      %v871 = vsel %vm775, %v866, %v870
      %v873 = vshrl.u32 %v732, 16
      %v875 = vrot.slane %v873, 4
      %v876 = vshll.u32 %v732, 16
      %v878 = vrot.slane %v876, 5
      %v879 = vor.u32 %v875, %v878
      %v880 = vrot.slane %v879, 4
      %v882 = vshll.u32 %v733, 16
      %v884 = vrot.slane %v882, 5
      %v885 = vsel %vm775, %v880, %v884
      %v886 = vshrl.u32 %v733, 16
      %v888 = vrot.slane %v886, 4
      %v889 = vor.u32 %v888, %v884
      %v890 = vrot.slane %v889, 4
      %v892 = vshll.u32 %v761, 16
      %v894 = vrot.slane %v892, 5
      %v895 = vsel %vm775, %v890, %v894
      %v897 = vshrl.u32 %v734, 16
      %v899 = vrot.slane %v897, 4
      %v900 = vshll.u32 %v734, 16
      %v902 = vrot.slane %v900, 5
      %v903 = vor.u32 %v899, %v902
      %v904 = vrot.slane %v903, 4
      %v906 = vshll.u32 %v735, 16
      %v908 = vrot.slane %v906, 5
      %v909 = vsel %vm775, %v904, %v908
      %v910 = vshrl.u32 %v735, 16
      %v912 = vrot.slane %v910, 4
      %v913 = vor.u32 %v912, %v908
      %v914 = vrot.slane %v913, 4
      %v916 = vshll.u32 %v762, 16
      %v918 = vrot.slane %v916, 5
      %v919 = vsel %vm775, %v914, %v918
      %v921 = vshrl.u32 %v736, 16
      %v923 = vrot.slane %v921, 4
      %v924 = vshll.u32 %v736, 16
      %v926 = vrot.slane %v924, 5
      %v927 = vor.u32 %v923, %v926
      %v928 = vrot.slane %v927, 4
      %v930 = vshll.u32 %v737, 16
      %v932 = vrot.slane %v930, 5
      %v933 = vsel %vm775, %v928, %v932
      %v934 = vshrl.u32 %v737, 16
      %v936 = vrot.slane %v934, 4
      %v937 = vor.u32 %v936, %v932
      %v938 = vrot.slane %v937, 4
      %v940 = vshll.u32 %v763, 16
      %v942 = vrot.slane %v940, 5
      %v943 = vsel %vm775, %v938, %v942
      %v945 = vshrl.u32 %v738, 16
      %v947 = vrot.slane %v945, 4
      %v948 = vshll.u32 %v738, 16
      %v950 = vrot.slane %v948, 5
      %v951 = vor.u32 %v947, %v950
      %v952 = vrot.slane %v951, 4
      %v954 = vshll.u32 %v739, 16
      %v956 = vrot.slane %v954, 5
      %v957 = vsel %vm775, %v952, %v956
      %v958 = vshrl.u32 %v739, 16
      %v960 = vrot.slane %v958, 4
      %v961 = vor.u32 %v960, %v956
      %v962 = vrot.slane %v961, 4
      %v964 = vshll.u32 %v764, 16
      %v966 = vrot.slane %v964, 5
      %v967 = vsel %vm775, %v962, %v966
      %v969 = vshrl.u32 %v740, 16
      %v971 = vrot.slane %v969, 4
      %v972 = vshll.u32 %v740, 16
      %v974 = vrot.slane %v972, 5
      %v975 = vor.u32 %v971, %v974
      %v976 = vrot.slane %v975, 4
      %v978 = vshll.u32 %v741, 16
      %v980 = vrot.slane %v978, 5
      %v981 = vsel %vm775, %v976, %v980
      %v982 = vshrl.u32 %v741, 16
      %v984 = vrot.slane %v982, 4
      %v985 = vor.u32 %v984, %v980
      %v986 = vrot.slane %v985, 4
      %v988 = vshll.u32 %v765, 16
      %v990 = vrot.slane %v988, 5
      %v991 = vsel %vm775, %v986, %v990
      %v993 = vshrl.u32 %v742, 16
      %v995 = vrot.slane %v993, 4
      %v996 = vshll.u32 %v742, 16
      %v998 = vrot.slane %v996, 5
      %v999 = vor.u32 %v995, %v998
      %v1000 = vrot.slane %v999, 4
      %v1002 = vshll.u32 %v743, 16
      %v1004 = vrot.slane %v1002, 5
      %v1005 = vsel %vm775, %v1000, %v1004
      %v1006 = vshrl.u32 %v743, 16
      %v1008 = vrot.slane %v1006, 4
      %v1009 = vor.u32 %v1008, %v1004
      %v1010 = vrot.slane %v1009, 4
      %v1012 = vshll.u32 %v766, 16
      %v1014 = vrot.slane %v1012, 5
      %v1015 = vsel %vm775, %v1010, %v1014
      %v1017 = vshrl.u32 %v744, 16
      %v1019 = vrot.slane %v1017, 4
      %v1020 = vshll.u32 %v744, 16
      %v1022 = vrot.slane %v1020, 5
      %v1023 = vor.u32 %v1019, %v1022
      %v1024 = vrot.slane %v1023, 4
      %v1026 = vshll.u32 %v745, 16
      %v1028 = vrot.slane %v1026, 5
      %v1029 = vsel %vm775, %v1024, %v1028
      %v1030 = vshrl.u32 %v745, 16
      %v1032 = vrot.slane %v1030, 4
      %v1033 = vor.u32 %v1032, %v1028
      %v1034 = vrot.slane %v1033, 4
      %v1036 = vshll.u32 %v767, 16
      %v1038 = vrot.slane %v1036, 5
      %v1039 = vsel %vm775, %v1034, %v1038
      %v1041 = vshrl.u32 %v746, 16
      %v1043 = vrot.slane %v1041, 4
      %v1044 = vshll.u32 %v746, 16
      %v1046 = vrot.slane %v1044, 5
      %v1047 = vor.u32 %v1043, %v1046
      %v1048 = vrot.slane %v1047, 4
      %v1050 = vshll.u32 %v747, 16
      %v1052 = vrot.slane %v1050, 5
      %v1053 = vsel %vm775, %v1048, %v1052
      %v1054 = vshrl.u32 %v747, 16
      %v1056 = vrot.slane %v1054, 4
      %v1057 = vor.u32 %v1056, %v1052
      %v1058 = vrot.slane %v1057, 4
      %v1060 = vshll.u32 %v768, 16
      %v1062 = vrot.slane %v1060, 5
      %v1063 = vsel %vm775, %v1058, %v1062
      %v1065 = vshrl.u32 %v748, 16
      %v1067 = vrot.slane %v1065, 4
      %v1068 = vshll.u32 %v748, 16
      %v1070 = vrot.slane %v1068, 5
      %v1071 = vor.u32 %v1067, %v1070
      %v1072 = vrot.slane %v1071, 4
      %v1074 = vshll.u32 %v749, 16
      %v1076 = vrot.slane %v1074, 5
      %v1077 = vsel %vm775, %v1072, %v1076
      %v1078 = vshrl.u32 %v749, 16
      %v1080 = vrot.slane %v1078, 4
      %v1081 = vor.u32 %v1080, %v1076
      %v1082 = vrot.slane %v1081, 4
      %v1084 = vshll.u32 %v769, 16
      %v1086 = vrot.slane %v1084, 5
      %v1087 = vsel %vm775, %v1082, %v1086
      %v1089 = vshrl.u32 %v750, 16
      %v1091 = vrot.slane %v1089, 4
      %v1092 = vshll.u32 %v750, 16
      %v1094 = vrot.slane %v1092, 5
      %v1095 = vor.u32 %v1091, %v1094
      %v1096 = vrot.slane %v1095, 4
      %v1098 = vshll.u32 %v751, 16
      %v1100 = vrot.slane %v1098, 5
      %v1101 = vsel %vm775, %v1096, %v1100
      %v1102 = vshrl.u32 %v751, 16
      %v1104 = vrot.slane %v1102, 4
      %v1105 = vor.u32 %v1104, %v1100
      %v1106 = vrot.slane %v1105, 4
      %v1108 = vshll.u32 %v770, 16
      %v1110 = vrot.slane %v1108, 5
      %v1111 = vsel %vm775, %v1106, %v1110
      %v1113 = vshrl.u32 %v752, 16
      %v1115 = vrot.slane %v1113, 4
      %v1116 = vshll.u32 %v752, 16
      %v1118 = vrot.slane %v1116, 5
      %v1119 = vor.u32 %v1115, %v1118
      %v1120 = vrot.slane %v1119, 4
      %v1122 = vshll.u32 %v753, 16
      %v1124 = vrot.slane %v1122, 5
      %v1125 = vsel %vm775, %v1120, %v1124
      %v1126 = vshrl.u32 %v753, 16
      %v1128 = vrot.slane %v1126, 4
      %v1129 = vor.u32 %v1128, %v1124
      %v1130 = vrot.slane %v1129, 4
      %v1132 = vshll.u32 %v771, 16
      %v1134 = vrot.slane %v1132, 5
      %v1135 = vsel %vm775, %v1130, %v1134
      %v1137 = vshrl.u32 %v754, 16
      %v1139 = vrot.slane %v1137, 4
      %v1140 = vshll.u32 %v754, 16
      %v1142 = vrot.slane %v1140, 5
      %v1143 = vor.u32 %v1139, %v1142
      %v1144 = vrot.slane %v1143, 4
      %v1146 = vshll.u32 %v755, 16
      %v1148 = vrot.slane %v1146, 5
      %v1149 = vsel %vm775, %v1144, %v1148
      %v1150 = vshrl.u32 %v755, 16
      %v1152 = vrot.slane %v1150, 4
      %v1153 = vor.u32 %v1152, %v1148
      %v1154 = vrot.slane %v1153, 4
      %v1156 = vshll.u32 %v772, 16
      %v1158 = vrot.slane %v1156, 5
      %v1159 = vsel %vm775, %v1154, %v1158
      %s1160 = scalar_lea.vmem %s1, 2
      %v1161 = vld [vmem:[%s1160] sm:$0x3]
      %v1162 = vunpack.c.l.b16 %v789
      %v1163 = vunpack.c.l.b16 %v799
      %v1164 = vunpack.c.l.b16 %v813
      %v1165 = vunpack.c.l.b16 %v823
      %v1166 = vunpack.c.l.b16 %v837
      %v1167 = vunpack.c.l.b16 %v847
      %v1168 = vunpack.c.l.b16 %v861
      %v1169 = vunpack.c.l.b16 %v871
      %v1170 = vunpack.c.l.b16 %v885
      %v1171 = vunpack.c.l.b16 %v895
      %v1172 = vunpack.c.l.b16 %v909
      %v1173 = vunpack.c.l.b16 %v919
      %v1174 = vunpack.c.l.b16 %v933
      %v1175 = vunpack.c.l.b16 %v943
      %v1176 = vunpack.c.l.b16 %v957
      %v1177 = vunpack.c.l.b16 %v967
      %v1178 = vunpack.c.l.b16 %v981
      %v1179 = vunpack.c.l.b16 %v991
      %v1180 = vunpack.c.l.b16 %v1005
      %v1181 = vunpack.c.l.b16 %v1015
      %v1182 = vunpack.c.l.b16 %v1029
      %v1183 = vunpack.c.l.b16 %v1039
      %v1184 = vunpack.c.l.b16 %v1053
      %v1185 = vunpack.c.l.b16 %v1063
      %v1186 = vunpack.c.l.b16 %v1077
      %v1187 = vunpack.c.l.b16 %v1087
      %v1188 = vunpack.c.l.b16 %v1101
      %v1189 = vunpack.c.l.b16 %v1111
      %v1190 = vunpack.c.l.b16 %v1125
      %v1191 = vunpack.c.l.b16 %v1135
      %v1192 = vunpack.c.l.b16 %v1149
      %v1193 = vunpack.c.l.b16 %v1159
      %v1194 = vpack.c.b16 %v1163, %v1162
      %v1195 = vpack.c.b16 %v1165, %v1164
      %v1196 = vpack.c.b16 %v1167, %v1166
      %v1197 = vpack.c.b16 %v1169, %v1168
      %v1198 = vpack.c.b16 %v1171, %v1170
      %v1199 = vpack.c.b16 %v1173, %v1172
      %v1200 = vpack.c.b16 %v1175, %v1174
      %v1201 = vpack.c.b16 %v1177, %v1176
      %v1202 = vpack.c.b16 %v1179, %v1178
      %v1203 = vpack.c.b16 %v1181, %v1180
      %v1204 = vpack.c.b16 %v1183, %v1182
      %v1205 = vpack.c.b16 %v1185, %v1184
      %v1206 = vpack.c.b16 %v1187, %v1186
      %v1207 = vpack.c.b16 %v1189, %v1188
      %v1208 = vpack.c.b16 %v1191, %v1190
      %v1209 = vpack.c.b16 %v1193, %v1192
      %vm1210 = vcmask 31744
      %v1212 = vsel %vm1210, %v1194, 0
      %v1215 = vsel %vm1210, %v1195, 0
      %v1218 = vsel %vm1210, %v1196, 0
      %v1221 = vsel %vm1210, %v1197, 0
      %v1224 = vsel %vm1210, %v1198, 0
      %v1227 = vsel %vm1210, %v1199, 0
      %v1230 = vsel %vm1210, %v1200, 0
      %v1233 = vsel %vm1210, %v1201, 0
      %v1236 = vsel %vm1210, %v1202, 0
      %v1239 = vsel %vm1210, %v1203, 0
      %v1242 = vsel %vm1210, %v1204, 0
      %v1245 = vsel %vm1210, %v1205, 0
      %v1248 = vsel %vm1210, %v1206, 0
      %v1251 = vsel %vm1210, %v1207, 0
      %v1254 = vsel %vm1210, %v1208, 0
      %v1257 = vsel %vm1210, %v1209, 0
      %vm1259 = vcmask 1041408
      %v1261 = vsel %vm1259, %v1161, 0
      %1263 = vmatpush.bf16.msra.mxu0 0
      %1264 = vmatpush.bf16.msra.mxu0 0
      %1265 = vmatpush.bf16.msra.mxu0 0
      %1266 = vmatpush.bf16.msra.mxu0 0
      %1267 = vmatpush.bf16.msra.mxu0 0
      %1268 = vmatpush.bf16.msra.mxu0 0
      %1269 = vmatpush.bf16.msra.mxu0 0
      %1270 = vmatpush.bf16.msra.mxu0 %v1261
      %1271 = vmatmul.bf16.gmra.mxu0 %v1212
      %v1272 = vpop.f32.mrf.mxu0
      %v1273 = vadd.f32 0.0, %v1272
      %v1274 = vpop.f32.mrf.mxu0
      %v1275 = vadd.f32 0.0, %v1274
      %1276 = vmatmul.bf16.gmra.mxu0 %v1215
      %v1277 = vpop.f32.mrf.mxu0
      %v1278 = vadd.f32 0.0, %v1277
      %v1279 = vpop.f32.mrf.mxu0
      %v1280 = vadd.f32 0.0, %v1279
      %1281 = vmatmul.bf16.gmra.mxu0 %v1218
      %v1282 = vpop.f32.mrf.mxu0
      %v1283 = vadd.f32 0.0, %v1282
      %v1284 = vpop.f32.mrf.mxu0
      %v1285 = vadd.f32 0.0, %v1284
      %1286 = vmatmul.bf16.gmra.mxu0 %v1221
      %v1287 = vpop.f32.mrf.mxu0
      %v1288 = vadd.f32 0.0, %v1287
      %v1289 = vpop.f32.mrf.mxu0
      %v1290 = vadd.f32 0.0, %v1289
      %1291 = vmatmul.bf16.gmra.mxu0 %v1224
      %v1292 = vpop.f32.mrf.mxu0
      %v1293 = vadd.f32 0.0, %v1292
      %v1294 = vpop.f32.mrf.mxu0
      %v1295 = vadd.f32 0.0, %v1294
      %1296 = vmatmul.bf16.gmra.mxu0 %v1227
      %v1297 = vpop.f32.mrf.mxu0
      %v1298 = vadd.f32 0.0, %v1297
      %v1299 = vpop.f32.mrf.mxu0
      %v1300 = vadd.f32 0.0, %v1299
      %1301 = vmatmul.bf16.gmra.mxu0 %v1230
      %v1302 = vpop.f32.mrf.mxu0
      %v1303 = vadd.f32 0.0, %v1302
      %v1304 = vpop.f32.mrf.mxu0
      %v1305 = vadd.f32 0.0, %v1304
      %1306 = vmatmul.bf16.gmra.mxu0 %v1233
      %v1307 = vpop.f32.mrf.mxu0
      %v1308 = vadd.f32 0.0, %v1307
      %v1309 = vpop.f32.mrf.mxu0
      %v1310 = vadd.f32 0.0, %v1309
      %1311 = vmatmul.bf16.gmra.mxu0 %v1236
      %v1312 = vpop.f32.mrf.mxu0
      %v1313 = vadd.f32 0.0, %v1312
      %v1314 = vpop.f32.mrf.mxu0
      %v1315 = vadd.f32 0.0, %v1314
      %1316 = vmatmul.bf16.gmra.mxu0 %v1239
      %v1317 = vpop.f32.mrf.mxu0
      %v1318 = vadd.f32 0.0, %v1317
      %v1319 = vpop.f32.mrf.mxu0
      %v1320 = vadd.f32 0.0, %v1319
      %1321 = vmatmul.bf16.gmra.mxu0 %v1242
      %v1322 = vpop.f32.mrf.mxu0
      %v1323 = vadd.f32 0.0, %v1322
      %v1324 = vpop.f32.mrf.mxu0
      %v1325 = vadd.f32 0.0, %v1324
      %1326 = vmatmul.bf16.gmra.mxu0 %v1245
      %v1327 = vpop.f32.mrf.mxu0
      %v1328 = vadd.f32 0.0, %v1327
      %v1329 = vpop.f32.mrf.mxu0
      %v1330 = vadd.f32 0.0, %v1329
      %1331 = vmatmul.bf16.gmra.mxu0 %v1248
      %v1332 = vpop.f32.mrf.mxu0
      %v1333 = vadd.f32 0.0, %v1332
      %v1334 = vpop.f32.mrf.mxu0
      %v1335 = vadd.f32 0.0, %v1334
      %1336 = vmatmul.bf16.gmra.mxu0 %v1251
      %v1337 = vpop.f32.mrf.mxu0
      %v1338 = vadd.f32 0.0, %v1337
      %v1339 = vpop.f32.mrf.mxu0
      %v1340 = vadd.f32 0.0, %v1339
      %1341 = vmatmul.bf16.gmra.mxu0 %v1254
      %v1342 = vpop.f32.mrf.mxu0
      %v1343 = vadd.f32 0.0, %v1342
      %v1344 = vpop.f32.mrf.mxu0
      %v1345 = vadd.f32 0.0, %v1344
      %1346 = vmatmul.bf16.gmra.mxu0 %v1257
      %v1347 = vpop.f32.mrf.mxu0
      %v1348 = vadd.f32 0.0, %v1347
      %v1349 = vpop.f32.mrf.mxu0
      %v1350 = vadd.f32 0.0, %v1349
      %1351 = vdwg.mxu0
      %v1384 = vunpack.c.l.b16 %v724
      %v1385 = vunpack.c.l.b16 %v725
      %v1386 = vunpack.c.l.b16 %v726
      %v1387 = vunpack.c.l.b16 %v727
      %v1388 = vunpack.c.l.b16 %v728
      %v1389 = vunpack.c.l.b16 %v729
      %v1390 = vunpack.c.l.b16 %v730
      %v1391 = vunpack.c.l.b16 %v731
      %v1392 = vunpack.c.l.b16 %v732
      %v1393 = vunpack.c.l.b16 %v733
      %v1394 = vunpack.c.l.b16 %v734
      %v1395 = vunpack.c.l.b16 %v735
      %v1396 = vunpack.c.l.b16 %v736
      %v1397 = vunpack.c.l.b16 %v737
      %v1398 = vunpack.c.l.b16 %v738
      %v1399 = vunpack.c.l.b16 %v739
      %v1400 = vunpack.c.l.b16 %v740
      %v1401 = vunpack.c.l.b16 %v741
      %v1402 = vunpack.c.l.b16 %v742
      %v1403 = vunpack.c.l.b16 %v743
      %v1404 = vunpack.c.l.b16 %v744
      %v1405 = vunpack.c.l.b16 %v745
      %v1406 = vunpack.c.l.b16 %v746
      %v1407 = vunpack.c.l.b16 %v747
      %v1408 = vunpack.c.l.b16 %v748
      %v1409 = vunpack.c.l.b16 %v749
      %v1410 = vunpack.c.l.b16 %v750
      %v1411 = vunpack.c.l.b16 %v751
      %v1412 = vunpack.c.l.b16 %v752
      %v1413 = vunpack.c.l.b16 %v753
      %v1414 = vunpack.c.l.b16 %v754
      %v1415 = vunpack.c.l.b16 %v755
      %v1416 = vpack.c.b16 %v1385, %v1384
      %v1417 = vpack.c.b16 %v1387, %v1386
      %v1418 = vpack.c.b16 %v1389, %v1388
      %v1419 = vpack.c.b16 %v1391, %v1390
      %v1420 = vpack.c.b16 %v1393, %v1392
      %v1421 = vpack.c.b16 %v1395, %v1394
      %v1422 = vpack.c.b16 %v1397, %v1396
      %v1423 = vpack.c.b16 %v1399, %v1398
      %v1424 = vpack.c.b16 %v1401, %v1400
      %v1425 = vpack.c.b16 %v1403, %v1402
      %v1426 = vpack.c.b16 %v1405, %v1404
      %v1427 = vpack.c.b16 %v1407, %v1406
      %v1428 = vpack.c.b16 %v1409, %v1408
      %v1429 = vpack.c.b16 %v1411, %v1410
      %v1430 = vpack.c.b16 %v1413, %v1412
      %v1431 = vpack.c.b16 %v1415, %v1414
      %v1433 = vsel %vm1210, %v1416, 0
      %v1436 = vsel %vm1210, %v1417, 0
      %v1439 = vsel %vm1210, %v1418, 0
      %v1442 = vsel %vm1210, %v1419, 0
      %v1445 = vsel %vm1210, %v1420, 0
      %v1448 = vsel %vm1210, %v1421, 0
      %v1451 = vsel %vm1210, %v1422, 0
      %v1454 = vsel %vm1210, %v1423, 0
      %v1457 = vsel %vm1210, %v1424, 0
      %v1460 = vsel %vm1210, %v1425, 0
      %v1463 = vsel %vm1210, %v1426, 0
      %v1466 = vsel %vm1210, %v1427, 0
      %v1469 = vsel %vm1210, %v1428, 0
      %v1472 = vsel %vm1210, %v1429, 0
      %v1475 = vsel %vm1210, %v1430, 0
      %v1478 = vsel %vm1210, %v1431, 0
      %v1481 = vsel %vm1259, %v756, 0
      %1483 = vmatpush.bf16.msra.mxu0 0
      %1484 = vmatpush.bf16.msra.mxu0 0
      %1485 = vmatpush.bf16.msra.mxu0 0
      %1486 = vmatpush.bf16.msra.mxu0 0
      %1487 = vmatpush.bf16.msra.mxu0 0
      %1488 = vmatpush.bf16.msra.mxu0 0
      %1489 = vmatpush.bf16.msra.mxu0 0
      %1490 = vmatpush.bf16.msra.mxu0 %v1481
      %1491 = vmatmul.bf16.gmra.mxu0 %v1433
      %v1492 = vpop.f32.mrf.mxu0
      %v1493 = vadd.f32 %v1273, %v1492
      %v1494 = vpop.f32.mrf.mxu0
      %v1495 = vadd.f32 %v1275, %v1494
      %1496 = vmatmul.bf16.gmra.mxu0 %v1436
      %v1497 = vpop.f32.mrf.mxu0
      %v1498 = vadd.f32 %v1278, %v1497
      %v1499 = vpop.f32.mrf.mxu0
      %v1500 = vadd.f32 %v1280, %v1499
      %1501 = vmatmul.bf16.gmra.mxu0 %v1439
      %v1502 = vpop.f32.mrf.mxu0
      %v1503 = vadd.f32 %v1283, %v1502
      %v1504 = vpop.f32.mrf.mxu0
      %v1505 = vadd.f32 %v1285, %v1504
      %1506 = vmatmul.bf16.gmra.mxu0 %v1442
      %v1507 = vpop.f32.mrf.mxu0
      %v1508 = vadd.f32 %v1288, %v1507
      %v1509 = vpop.f32.mrf.mxu0
      %v1510 = vadd.f32 %v1290, %v1509
      %1511 = vmatmul.bf16.gmra.mxu0 %v1445
      %v1512 = vpop.f32.mrf.mxu0
      %v1513 = vadd.f32 %v1293, %v1512
      %v1514 = vpop.f32.mrf.mxu0
      %v1515 = vadd.f32 %v1295, %v1514
      %1516 = vmatmul.bf16.gmra.mxu0 %v1448
      %v1517 = vpop.f32.mrf.mxu0
      %v1518 = vadd.f32 %v1298, %v1517
      %v1519 = vpop.f32.mrf.mxu0
      %v1520 = vadd.f32 %v1300, %v1519
      %1521 = vmatmul.bf16.gmra.mxu0 %v1451
      %v1522 = vpop.f32.mrf.mxu0
      %v1523 = vadd.f32 %v1303, %v1522
      %v1524 = vpop.f32.mrf.mxu0
      %v1525 = vadd.f32 %v1305, %v1524
      %1526 = vmatmul.bf16.gmra.mxu0 %v1454
      %v1527 = vpop.f32.mrf.mxu0
      %v1528 = vadd.f32 %v1308, %v1527
      %v1529 = vpop.f32.mrf.mxu0
      %v1530 = vadd.f32 %v1310, %v1529
      %1531 = vmatmul.bf16.gmra.mxu0 %v1457
      %v1532 = vpop.f32.mrf.mxu0
      %v1533 = vadd.f32 %v1313, %v1532
      %v1534 = vpop.f32.mrf.mxu0
      %v1535 = vadd.f32 %v1315, %v1534
      %1536 = vmatmul.bf16.gmra.mxu0 %v1460
      %v1537 = vpop.f32.mrf.mxu0
      %v1538 = vadd.f32 %v1318, %v1537
      %v1539 = vpop.f32.mrf.mxu0
      %v1540 = vadd.f32 %v1320, %v1539
      %1541 = vmatmul.bf16.gmra.mxu0 %v1463
      %v1542 = vpop.f32.mrf.mxu0
      %v1543 = vadd.f32 %v1323, %v1542
      %v1544 = vpop.f32.mrf.mxu0
      %v1545 = vadd.f32 %v1325, %v1544
      %1546 = vmatmul.bf16.gmra.mxu0 %v1466
      %v1547 = vpop.f32.mrf.mxu0
      %v1548 = vadd.f32 %v1328, %v1547
      %v1549 = vpop.f32.mrf.mxu0
      %v1550 = vadd.f32 %v1330, %v1549
      %1551 = vmatmul.bf16.gmra.mxu0 %v1469
      %v1552 = vpop.f32.mrf.mxu0
      %v1553 = vadd.f32 %v1333, %v1552
      %v1554 = vpop.f32.mrf.mxu0
      %v1555 = vadd.f32 %v1335, %v1554
      %1556 = vmatmul.bf16.gmra.mxu0 %v1472
      %v1557 = vpop.f32.mrf.mxu0
      %v1558 = vadd.f32 %v1338, %v1557
      %v1559 = vpop.f32.mrf.mxu0
      %v1560 = vadd.f32 %v1340, %v1559
      %1561 = vmatmul.bf16.gmra.mxu0 %v1475
      %v1562 = vpop.f32.mrf.mxu0
      %v1563 = vadd.f32 %v1343, %v1562
      %v1564 = vpop.f32.mrf.mxu0
      %v1565 = vadd.f32 %v1345, %v1564
      %1566 = vmatmul.bf16.gmra.mxu0 %v1478
      %v1567 = vpop.f32.mrf.mxu0
      %v1568 = vadd.f32 %v1348, %v1567
      %v1569 = vpop.f32.mrf.mxu0
      %v1570 = vadd.f32 %v1350, %v1569
      %1571 = vdwg.mxu0
      %v1572 = vld [vmem:[#allocation2] sm:$0xe]
      %v1573 = vld [vmem:[#allocation2 + $0xc] sm:$0xe]
      %v1574 = vld [vmem:[#allocation2 + $0x18] sm:$0xe]
      %v1575 = vld [vmem:[#allocation2 + $0x24] sm:$0xe]
      %v1576 = vld [vmem:[#allocation2 + $0x30] sm:$0xe]
      %v1577 = vld [vmem:[#allocation2 + $0x3c] sm:$0xe]
      %v1578 = vld [vmem:[#allocation2 + $0x48] sm:$0xe]
      %v1579 = vld [vmem:[#allocation2 + $0x54] sm:$0xe]
      %v1580 = vld [vmem:[#allocation2 + $0x60] sm:$0xe]
      %v1581 = vld [vmem:[#allocation2 + $0x6c] sm:$0xe]
      %v1582 = vld [vmem:[#allocation2 + $0x78] sm:$0xe]
      %v1583 = vld [vmem:[#allocation2 + $0x84] sm:$0xe]
      %v1584 = vld [vmem:[#allocation2 + $0x90] sm:$0xe]
      %v1585 = vld [vmem:[#allocation2 + $0x9c] sm:$0xe]
      %v1586 = vld [vmem:[#allocation2 + $0xa8] sm:$0xe]
      %v1587 = vld [vmem:[#allocation2 + $0xb4] sm:$0xe]
      %vm1620 = vcmask 1042432
      %vm1621 = vcmask 1046532
      %vm1622 = vmor %vm1620, %vm1621
      %v1623 = vrot.slane %v1572, 5
      %v1624 = vrot.slane %v1623, 4
      %v1625 = vrot.slane %v725, 5
      %v1626 = vsel %vm1622, %v1624, %v1625
      %v1627 = vrot.slane %v1625, 4
      %v1628 = vrot.slane %v757, 5
      %v1629 = vsel %vm1622, %v1627, %v1628
      %v1630 = vrot.slane %v1573, 5
      %v1631 = vrot.slane %v1630, 4
      %v1632 = vrot.slane %v727, 5
      %v1633 = vsel %vm1622, %v1631, %v1632
      %v1634 = vrot.slane %v1632, 4
      %v1635 = vrot.slane %v758, 5
      %v1636 = vsel %vm1622, %v1634, %v1635
      %v1637 = vrot.slane %v1574, 5
      %v1638 = vrot.slane %v1637, 4
      %v1639 = vrot.slane %v729, 5
      %v1640 = vsel %vm1622, %v1638, %v1639
      %v1641 = vrot.slane %v1639, 4
      %v1642 = vrot.slane %v759, 5
      %v1643 = vsel %vm1622, %v1641, %v1642
      %v1644 = vrot.slane %v1575, 5
      %v1645 = vrot.slane %v1644, 4
      %v1646 = vrot.slane %v731, 5
      %v1647 = vsel %vm1622, %v1645, %v1646
      %v1648 = vrot.slane %v1646, 4
      %v1649 = vrot.slane %v760, 5
      %v1650 = vsel %vm1622, %v1648, %v1649
      %v1651 = vrot.slane %v1576, 5
      %v1652 = vrot.slane %v1651, 4
      %v1653 = vrot.slane %v733, 5
      %v1654 = vsel %vm1622, %v1652, %v1653
      %v1655 = vrot.slane %v1653, 4
      %v1656 = vrot.slane %v761, 5
      %v1657 = vsel %vm1622, %v1655, %v1656
      %v1658 = vrot.slane %v1577, 5
      %v1659 = vrot.slane %v1658, 4
      %v1660 = vrot.slane %v735, 5
      %v1661 = vsel %vm1622, %v1659, %v1660
      %v1662 = vrot.slane %v1660, 4
      %v1663 = vrot.slane %v762, 5
      %v1664 = vsel %vm1622, %v1662, %v1663
      %v1665 = vrot.slane %v1578, 5
      %v1666 = vrot.slane %v1665, 4
      %v1667 = vrot.slane %v737, 5
      %v1668 = vsel %vm1622, %v1666, %v1667
      %v1669 = vrot.slane %v1667, 4
      %v1670 = vrot.slane %v763, 5
      %v1671 = vsel %vm1622, %v1669, %v1670
      %v1672 = vrot.slane %v1579, 5
      %v1673 = vrot.slane %v1672, 4
      %v1674 = vrot.slane %v739, 5
      %v1675 = vsel %vm1622, %v1673, %v1674
      %v1676 = vrot.slane %v1674, 4
      %v1677 = vrot.slane %v764, 5
      %v1678 = vsel %vm1622, %v1676, %v1677
      %v1679 = vrot.slane %v1580, 5
      %v1680 = vrot.slane %v1679, 4
      %v1681 = vrot.slane %v741, 5
      %v1682 = vsel %vm1622, %v1680, %v1681
      %v1683 = vrot.slane %v1681, 4
      %v1684 = vrot.slane %v765, 5
      %v1685 = vsel %vm1622, %v1683, %v1684
      %v1686 = vrot.slane %v1581, 5
      %v1687 = vrot.slane %v1686, 4
      %v1688 = vrot.slane %v743, 5
      %v1689 = vsel %vm1622, %v1687, %v1688
      %v1690 = vrot.slane %v1688, 4
      %v1691 = vrot.slane %v766, 5
      %v1692 = vsel %vm1622, %v1690, %v1691
      %v1693 = vrot.slane %v1582, 5
      %v1694 = vrot.slane %v1693, 4
      %v1695 = vrot.slane %v745, 5
      %v1696 = vsel %vm1622, %v1694, %v1695
      %v1697 = vrot.slane %v1695, 4
      %v1698 = vrot.slane %v767, 5
      %v1699 = vsel %vm1622, %v1697, %v1698
      %v1700 = vrot.slane %v1583, 5
      %v1701 = vrot.slane %v1700, 4
      %v1702 = vrot.slane %v747, 5
      %v1703 = vsel %vm1622, %v1701, %v1702
      %v1704 = vrot.slane %v1702, 4
      %v1705 = vrot.slane %v768, 5
      %v1706 = vsel %vm1622, %v1704, %v1705
      %v1707 = vrot.slane %v1584, 5
      %v1708 = vrot.slane %v1707, 4
      %v1709 = vrot.slane %v749, 5
      %v1710 = vsel %vm1622, %v1708, %v1709
      %v1711 = vrot.slane %v1709, 4
      %v1712 = vrot.slane %v769, 5
      %v1713 = vsel %vm1622, %v1711, %v1712
      %v1714 = vrot.slane %v1585, 5
      %v1715 = vrot.slane %v1714, 4
      %v1716 = vrot.slane %v751, 5
      %v1717 = vsel %vm1622, %v1715, %v1716
      %v1718 = vrot.slane %v1716, 4
      %v1719 = vrot.slane %v770, 5
      %v1720 = vsel %vm1622, %v1718, %v1719
      %v1721 = vrot.slane %v1586, 5
      %v1722 = vrot.slane %v1721, 4
      %v1723 = vrot.slane %v753, 5
      %v1724 = vsel %vm1622, %v1722, %v1723
      %v1725 = vrot.slane %v1723, 4
      %v1726 = vrot.slane %v771, 5
      %v1727 = vsel %vm1622, %v1725, %v1726
      %v1728 = vrot.slane %v1587, 5
      %v1729 = vrot.slane %v1728, 4
      %v1730 = vrot.slane %v755, 5
      %v1731 = vsel %vm1622, %v1729, %v1730
      %v1732 = vrot.slane %v1730, 4
      %v1733 = vrot.slane %v772, 5
      %v1734 = vsel %vm1622, %v1732, %v1733
      %s1735 = scalar_lea.vmem %s1, 4
      %v1736 = vld [vmem:[%s1735] sm:$0x3]
      %v1737 = vunpack.c.l.b16 %v1626
      %v1738 = vunpack.c.l.b16 %v1629
      %v1739 = vunpack.c.l.b16 %v1633
      %v1740 = vunpack.c.l.b16 %v1636
      %v1741 = vunpack.c.l.b16 %v1640
      %v1742 = vunpack.c.l.b16 %v1643
      %v1743 = vunpack.c.l.b16 %v1647
      %v1744 = vunpack.c.l.b16 %v1650
      %v1745 = vunpack.c.l.b16 %v1654
      %v1746 = vunpack.c.l.b16 %v1657
      %v1747 = vunpack.c.l.b16 %v1661
      %v1748 = vunpack.c.l.b16 %v1664
      %v1749 = vunpack.c.l.b16 %v1668
      %v1750 = vunpack.c.l.b16 %v1671
      %v1751 = vunpack.c.l.b16 %v1675
      %v1752 = vunpack.c.l.b16 %v1678
      %v1753 = vunpack.c.l.b16 %v1682
      %v1754 = vunpack.c.l.b16 %v1685
      %v1755 = vunpack.c.l.b16 %v1689
      %v1756 = vunpack.c.l.b16 %v1692
      %v1757 = vunpack.c.l.b16 %v1696
      %v1758 = vunpack.c.l.b16 %v1699
      %v1759 = vunpack.c.l.b16 %v1703
      %v1760 = vunpack.c.l.b16 %v1706
      %v1761 = vunpack.c.l.b16 %v1710
      %v1762 = vunpack.c.l.b16 %v1713
      %v1763 = vunpack.c.l.b16 %v1717
      %v1764 = vunpack.c.l.b16 %v1720
      %v1765 = vunpack.c.l.b16 %v1724
      %v1766 = vunpack.c.l.b16 %v1727
      %v1767 = vunpack.c.l.b16 %v1731
      %v1768 = vunpack.c.l.b16 %v1734
      %v1769 = vpack.c.b16 %v1738, %v1737
      %v1770 = vpack.c.b16 %v1740, %v1739
      %v1771 = vpack.c.b16 %v1742, %v1741
      %v1772 = vpack.c.b16 %v1744, %v1743
      %v1773 = vpack.c.b16 %v1746, %v1745
      %v1774 = vpack.c.b16 %v1748, %v1747
      %v1775 = vpack.c.b16 %v1750, %v1749
      %v1776 = vpack.c.b16 %v1752, %v1751
      %v1777 = vpack.c.b16 %v1754, %v1753
      %v1778 = vpack.c.b16 %v1756, %v1755
      %v1779 = vpack.c.b16 %v1758, %v1757
      %v1780 = vpack.c.b16 %v1760, %v1759
      %v1781 = vpack.c.b16 %v1762, %v1761
      %v1782 = vpack.c.b16 %v1764, %v1763
      %v1783 = vpack.c.b16 %v1766, %v1765
      %v1784 = vpack.c.b16 %v1768, %v1767
      %v1786 = vsel %vm1210, %v1769, 0
      %v1789 = vsel %vm1210, %v1770, 0
      %v1792 = vsel %vm1210, %v1771, 0
      %v1795 = vsel %vm1210, %v1772, 0
      %v1798 = vsel %vm1210, %v1773, 0
      %v1801 = vsel %vm1210, %v1774, 0
      %v1804 = vsel %vm1210, %v1775, 0
      %v1807 = vsel %vm1210, %v1776, 0
      %v1810 = vsel %vm1210, %v1777, 0
      %v1813 = vsel %vm1210, %v1778, 0
      %v1816 = vsel %vm1210, %v1779, 0
      %v1819 = vsel %vm1210, %v1780, 0
      %v1822 = vsel %vm1210, %v1781, 0
      %v1825 = vsel %vm1210, %v1782, 0
      %v1828 = vsel %vm1210, %v1783, 0
      %v1831 = vsel %vm1210, %v1784, 0
      %v1834 = vsel %vm1259, %v1736, 0
      %1836 = vmatpush.bf16.msra.mxu0 0
      %1837 = vmatpush.bf16.msra.mxu0 0
      %1838 = vmatpush.bf16.msra.mxu0 0
      %1839 = vmatpush.bf16.msra.mxu0 0
      %1840 = vmatpush.bf16.msra.mxu0 0
      %1841 = vmatpush.bf16.msra.mxu0 0
      %1842 = vmatpush.bf16.msra.mxu0 0
      %1843 = vmatpush.bf16.msra.mxu0 %v1834
      %1844 = vmatmul.bf16.gmra.mxu0 %v1786
      %v1845 = vpop.f32.mrf.mxu0
      %v1846 = vadd.f32 0.0, %v1845
      %v1847 = vpop.f32.mrf.mxu0
      %v1848 = vadd.f32 0.0, %v1847
      %1849 = vmatmul.bf16.gmra.mxu0 %v1789
      %v1850 = vpop.f32.mrf.mxu0
      %v1851 = vadd.f32 0.0, %v1850
      %v1852 = vpop.f32.mrf.mxu0
      %v1853 = vadd.f32 0.0, %v1852
      %1854 = vmatmul.bf16.gmra.mxu0 %v1792
      %v1855 = vpop.f32.mrf.mxu0
      %v1856 = vadd.f32 0.0, %v1855
      %v1857 = vpop.f32.mrf.mxu0
      %v1858 = vadd.f32 0.0, %v1857
      %1859 = vmatmul.bf16.gmra.mxu0 %v1795
      %v1860 = vpop.f32.mrf.mxu0
      %v1861 = vadd.f32 0.0, %v1860
      %v1862 = vpop.f32.mrf.mxu0
      %v1863 = vadd.f32 0.0, %v1862
      %1864 = vmatmul.bf16.gmra.mxu0 %v1798
      %v1865 = vpop.f32.mrf.mxu0
      %v1866 = vadd.f32 0.0, %v1865
      %v1867 = vpop.f32.mrf.mxu0
      %v1868 = vadd.f32 0.0, %v1867
      %1869 = vmatmul.bf16.gmra.mxu0 %v1801
      %v1870 = vpop.f32.mrf.mxu0
      %v1871 = vadd.f32 0.0, %v1870
      %v1872 = vpop.f32.mrf.mxu0
      %v1873 = vadd.f32 0.0, %v1872
      %1874 = vmatmul.bf16.gmra.mxu0 %v1804
      %v1875 = vpop.f32.mrf.mxu0
      %v1876 = vadd.f32 0.0, %v1875
      %v1877 = vpop.f32.mrf.mxu0
      %v1878 = vadd.f32 0.0, %v1877
      %1879 = vmatmul.bf16.gmra.mxu0 %v1807
      %v1880 = vpop.f32.mrf.mxu0
      %v1881 = vadd.f32 0.0, %v1880
      %v1882 = vpop.f32.mrf.mxu0
      %v1883 = vadd.f32 0.0, %v1882
      %1884 = vmatmul.bf16.gmra.mxu0 %v1810
      %v1885 = vpop.f32.mrf.mxu0
      %v1886 = vadd.f32 0.0, %v1885
      %v1887 = vpop.f32.mrf.mxu0
      %v1888 = vadd.f32 0.0, %v1887
      %1889 = vmatmul.bf16.gmra.mxu0 %v1813
      %v1890 = vpop.f32.mrf.mxu0
      %v1891 = vadd.f32 0.0, %v1890
      %v1892 = vpop.f32.mrf.mxu0
      %v1893 = vadd.f32 0.0, %v1892
      %1894 = vmatmul.bf16.gmra.mxu0 %v1816
      %v1895 = vpop.f32.mrf.mxu0
      %v1896 = vadd.f32 0.0, %v1895
      %v1897 = vpop.f32.mrf.mxu0
      %v1898 = vadd.f32 0.0, %v1897
      %1899 = vmatmul.bf16.gmra.mxu0 %v1819
      %v1900 = vpop.f32.mrf.mxu0
      %v1901 = vadd.f32 0.0, %v1900
      %v1902 = vpop.f32.mrf.mxu0
      %v1903 = vadd.f32 0.0, %v1902
      %1904 = vmatmul.bf16.gmra.mxu0 %v1822
      %v1905 = vpop.f32.mrf.mxu0
      %v1906 = vadd.f32 0.0, %v1905
      %v1907 = vpop.f32.mrf.mxu0
      %v1908 = vadd.f32 0.0, %v1907
      %1909 = vmatmul.bf16.gmra.mxu0 %v1825
      %v1910 = vpop.f32.mrf.mxu0
      %v1911 = vadd.f32 0.0, %v1910
      %v1912 = vpop.f32.mrf.mxu0
      %v1913 = vadd.f32 0.0, %v1912
      %1914 = vmatmul.bf16.gmra.mxu0 %v1828
      %v1915 = vpop.f32.mrf.mxu0
      %v1916 = vadd.f32 0.0, %v1915
      %v1917 = vpop.f32.mrf.mxu0
      %v1918 = vadd.f32 0.0, %v1917
      %1919 = vmatmul.bf16.gmra.mxu0 %v1831
      %v1920 = vpop.f32.mrf.mxu0
      %v1921 = vadd.f32 0.0, %v1920
      %v1922 = vpop.f32.mrf.mxu0
      %v1923 = vadd.f32 0.0, %v1922
      %1924 = vdwg.mxu0
      %v1925 = vadd.f32 %v1493, %v1846
      %v1926 = vadd.f32 %v1495, %v1848
      %v1927 = vadd.f32 %v1498, %v1851
      %v1928 = vadd.f32 %v1500, %v1853
      %v1929 = vadd.f32 %v1503, %v1856
      %v1930 = vadd.f32 %v1505, %v1858
      %v1931 = vadd.f32 %v1508, %v1861
      %v1932 = vadd.f32 %v1510, %v1863
      %v1933 = vadd.f32 %v1513, %v1866
      %v1934 = vadd.f32 %v1515, %v1868
      %v1935 = vadd.f32 %v1518, %v1871
      %v1936 = vadd.f32 %v1520, %v1873
      %v1937 = vadd.f32 %v1523, %v1876
      %v1938 = vadd.f32 %v1525, %v1878
      %v1939 = vadd.f32 %v1528, %v1881
      %v1940 = vadd.f32 %v1530, %v1883
      %v1941 = vadd.f32 %v1533, %v1886
      %v1942 = vadd.f32 %v1535, %v1888
      %v1943 = vadd.f32 %v1538, %v1891
      %v1944 = vadd.f32 %v1540, %v1893
      %v1945 = vadd.f32 %v1543, %v1896
      %v1946 = vadd.f32 %v1545, %v1898
      %v1947 = vadd.f32 %v1548, %v1901
      %v1948 = vadd.f32 %v1550, %v1903
      %v1949 = vadd.f32 %v1553, %v1906
      %v1950 = vadd.f32 %v1555, %v1908
      %v1951 = vadd.f32 %v1558, %v1911
      %v1952 = vadd.f32 %v1560, %v1913
      %v1953 = vadd.f32 %v1563, %v1916
      %v1954 = vadd.f32 %v1565, %v1918
      %v1955 = vadd.f32 %v1568, %v1921
      %v1956 = vadd.f32 %v1570, %v1923
      %v1957 = vld [vmem:[%s154] sm:$0xf]
      %v1958 = vld [vmem:[%s154 + $0x4] sm:$0xf]
      %v1959 = vld [vmem:[%s154 + $0xc] sm:$0xf]
      %v1960 = vld [vmem:[%s154 + $0x10] sm:$0xf]
      %v1961 = vld [vmem:[%s154 + $0x18] sm:$0xf]
      %v1962 = vld [vmem:[%s154 + $0x1c] sm:$0xf]
      %v1963 = vld [vmem:[%s154 + $0x24] sm:$0xf]
      %v1964 = vld [vmem:[%s154 + $0x28] sm:$0xf]
      %v1965 = vld [vmem:[%s154 + $0x30] sm:$0xf]
      %v1966 = vld [vmem:[%s154 + $0x34] sm:$0xf]
      %v1967 = vld [vmem:[%s154 + $0x3c] sm:$0xf]
      %v1968 = vld [vmem:[%s154 + $0x40] sm:$0xf]
      %v1969 = vld [vmem:[%s154 + $0x48] sm:$0xf]
      %v1970 = vld [vmem:[%s154 + $0x4c] sm:$0xf]
      %v1971 = vld [vmem:[%s154 + $0x54] sm:$0xf]
      %v1972 = vld [vmem:[%s154 + $0x58] sm:$0xf]
      %v1973 = vld [vmem:[%s154 + $0x60] sm:$0xf]
      %v1974 = vld [vmem:[%s154 + $0x64] sm:$0xf]
      %v1975 = vld [vmem:[%s154 + $0x6c] sm:$0xf]
      %v1976 = vld [vmem:[%s154 + $0x70] sm:$0xf]
      %v1977 = vld [vmem:[%s154 + $0x78] sm:$0xf]
      %v1978 = vld [vmem:[%s154 + $0x7c] sm:$0xf]
      %v1979 = vld [vmem:[%s154 + $0x84] sm:$0xf]
      %v1980 = vld [vmem:[%s154 + $0x88] sm:$0xf]
      %v1981 = vld [vmem:[%s154 + $0x90] sm:$0xf]
      %v1982 = vld [vmem:[%s154 + $0x94] sm:$0xf]
      %v1983 = vld [vmem:[%s154 + $0x9c] sm:$0xf]
      %v1984 = vld [vmem:[%s154 + $0xa0] sm:$0xf]
      %v1985 = vld [vmem:[%s154 + $0xa8] sm:$0xf]
      %v1986 = vld [vmem:[%s154 + $0xac] sm:$0xf]
      %v1987 = vld [vmem:[%s154 + $0xb4] sm:$0xf]
      %v1988 = vld [vmem:[%s154 + $0xb8] sm:$0xf]
      %s1989 = scalar_lea.vmem %s1, 6
      %v1990 = vld [vmem:[%s1989] sm:$0x3]
      %v2023 = vunpack.c.l.b16 %v1957
      %v2024 = vunpack.c.l.b16 %v1958
      %v2025 = vunpack.c.l.b16 %v1959
      %v2026 = vunpack.c.l.b16 %v1960
      %v2027 = vunpack.c.l.b16 %v1961
      %v2028 = vunpack.c.l.b16 %v1962
      %v2029 = vunpack.c.l.b16 %v1963
      %v2030 = vunpack.c.l.b16 %v1964
      %v2031 = vunpack.c.l.b16 %v1965
      %v2032 = vunpack.c.l.b16 %v1966
      %v2033 = vunpack.c.l.b16 %v1967
      %v2034 = vunpack.c.l.b16 %v1968
      %v2035 = vunpack.c.l.b16 %v1969
      %v2036 = vunpack.c.l.b16 %v1970
      %v2037 = vunpack.c.l.b16 %v1971
      %v2038 = vunpack.c.l.b16 %v1972
      %v2039 = vunpack.c.l.b16 %v1973
      %v2040 = vunpack.c.l.b16 %v1974
      %v2041 = vunpack.c.l.b16 %v1975
      %v2042 = vunpack.c.l.b16 %v1976
      %v2043 = vunpack.c.l.b16 %v1977
      %v2044 = vunpack.c.l.b16 %v1978
      %v2045 = vunpack.c.l.b16 %v1979
      %v2046 = vunpack.c.l.b16 %v1980
      %v2047 = vunpack.c.l.b16 %v1981
      %v2048 = vunpack.c.l.b16 %v1982
      %v2049 = vunpack.c.l.b16 %v1983
      %v2050 = vunpack.c.l.b16 %v1984
      %v2051 = vunpack.c.l.b16 %v1985
      %v2052 = vunpack.c.l.b16 %v1986
      %v2053 = vunpack.c.l.b16 %v1987
      %v2054 = vunpack.c.l.b16 %v1988
      %v2055 = vpack.c.b16 %v2024, %v2023
      %v2056 = vpack.c.b16 %v2026, %v2025
      %v2057 = vpack.c.b16 %v2028, %v2027
      %v2058 = vpack.c.b16 %v2030, %v2029
      %v2059 = vpack.c.b16 %v2032, %v2031
      %v2060 = vpack.c.b16 %v2034, %v2033
      %v2061 = vpack.c.b16 %v2036, %v2035
      %v2062 = vpack.c.b16 %v2038, %v2037
      %v2063 = vpack.c.b16 %v2040, %v2039
      %v2064 = vpack.c.b16 %v2042, %v2041
      %v2065 = vpack.c.b16 %v2044, %v2043
      %v2066 = vpack.c.b16 %v2046, %v2045
      %v2067 = vpack.c.b16 %v2048, %v2047
      %v2068 = vpack.c.b16 %v2050, %v2049
      %v2069 = vpack.c.b16 %v2052, %v2051
      %v2070 = vpack.c.b16 %v2054, %v2053
      %v2072 = vsel %vm1210, %v2055, 0
      %v2075 = vsel %vm1210, %v2056, 0
      %v2078 = vsel %vm1210, %v2057, 0
      %v2081 = vsel %vm1210, %v2058, 0
      %v2084 = vsel %vm1210, %v2059, 0
      %v2087 = vsel %vm1210, %v2060, 0
      %v2090 = vsel %vm1210, %v2061, 0
      %v2093 = vsel %vm1210, %v2062, 0
      %v2096 = vsel %vm1210, %v2063, 0
      %v2099 = vsel %vm1210, %v2064, 0
      %v2102 = vsel %vm1210, %v2065, 0
      %v2105 = vsel %vm1210, %v2066, 0
      %v2108 = vsel %vm1210, %v2067, 0
      %v2111 = vsel %vm1210, %v2068, 0
      %v2114 = vsel %vm1210, %v2069, 0
      %v2117 = vsel %vm1210, %v2070, 0
      %v2120 = vsel %vm1259, %v1990, 0
      %2122 = vmatpush.bf16.msra.mxu0 0
      %2123 = vmatpush.bf16.msra.mxu0 0
      %2124 = vmatpush.bf16.msra.mxu0 0
      %2125 = vmatpush.bf16.msra.mxu0 0
      %2126 = vmatpush.bf16.msra.mxu0 0
      %2127 = vmatpush.bf16.msra.mxu0 0
      %2128 = vmatpush.bf16.msra.mxu0 0
      %2129 = vmatpush.bf16.msra.mxu0 %v2120
      %2130 = vmatmul.bf16.gmra.mxu0 %v2072
      %v2131 = vpop.f32.mrf.mxu0
      %v2132 = vadd.f32 0.0, %v2131
      %v2133 = vpop.f32.mrf.mxu0
      %v2134 = vadd.f32 0.0, %v2133
      %2135 = vmatmul.bf16.gmra.mxu0 %v2075
      %v2136 = vpop.f32.mrf.mxu0
      %v2137 = vadd.f32 0.0, %v2136
      %v2138 = vpop.f32.mrf.mxu0
      %v2139 = vadd.f32 0.0, %v2138
      %2140 = vmatmul.bf16.gmra.mxu0 %v2078
      %v2141 = vpop.f32.mrf.mxu0
      %v2142 = vadd.f32 0.0, %v2141
      %v2143 = vpop.f32.mrf.mxu0
      %v2144 = vadd.f32 0.0, %v2143
      %2145 = vmatmul.bf16.gmra.mxu0 %v2081
      %v2146 = vpop.f32.mrf.mxu0
      %v2147 = vadd.f32 0.0, %v2146
      %v2148 = vpop.f32.mrf.mxu0
      %v2149 = vadd.f32 0.0, %v2148
      %2150 = vmatmul.bf16.gmra.mxu0 %v2084
      %v2151 = vpop.f32.mrf.mxu0
      %v2152 = vadd.f32 0.0, %v2151
      %v2153 = vpop.f32.mrf.mxu0
      %v2154 = vadd.f32 0.0, %v2153
      %2155 = vmatmul.bf16.gmra.mxu0 %v2087
      %v2156 = vpop.f32.mrf.mxu0
      %v2157 = vadd.f32 0.0, %v2156
      %v2158 = vpop.f32.mrf.mxu0
      %v2159 = vadd.f32 0.0, %v2158
      %2160 = vmatmul.bf16.gmra.mxu0 %v2090
      %v2161 = vpop.f32.mrf.mxu0
      %v2162 = vadd.f32 0.0, %v2161
      %v2163 = vpop.f32.mrf.mxu0
      %v2164 = vadd.f32 0.0, %v2163
      %2165 = vmatmul.bf16.gmra.mxu0 %v2093
      %v2166 = vpop.f32.mrf.mxu0
      %v2167 = vadd.f32 0.0, %v2166
      %v2168 = vpop.f32.mrf.mxu0
      %v2169 = vadd.f32 0.0, %v2168
      %2170 = vmatmul.bf16.gmra.mxu0 %v2096
      %v2171 = vpop.f32.mrf.mxu0
      %v2172 = vadd.f32 0.0, %v2171
      %v2173 = vpop.f32.mrf.mxu0
      %v2174 = vadd.f32 0.0, %v2173
      %2175 = vmatmul.bf16.gmra.mxu0 %v2099
      %v2176 = vpop.f32.mrf.mxu0
      %v2177 = vadd.f32 0.0, %v2176
      %v2178 = vpop.f32.mrf.mxu0
      %v2179 = vadd.f32 0.0, %v2178
      %2180 = vmatmul.bf16.gmra.mxu0 %v2102
      %v2181 = vpop.f32.mrf.mxu0
      %v2182 = vadd.f32 0.0, %v2181
      %v2183 = vpop.f32.mrf.mxu0
      %v2184 = vadd.f32 0.0, %v2183
      %2185 = vmatmul.bf16.gmra.mxu0 %v2105
      %v2186 = vpop.f32.mrf.mxu0
      %v2187 = vadd.f32 0.0, %v2186
      %v2188 = vpop.f32.mrf.mxu0
      %v2189 = vadd.f32 0.0, %v2188
      %2190 = vmatmul.bf16.gmra.mxu0 %v2108
      %v2191 = vpop.f32.mrf.mxu0
      %v2192 = vadd.f32 0.0, %v2191
      %v2193 = vpop.f32.mrf.mxu0
      %v2194 = vadd.f32 0.0, %v2193
      %2195 = vmatmul.bf16.gmra.mxu0 %v2111
      %v2196 = vpop.f32.mrf.mxu0
      %v2197 = vadd.f32 0.0, %v2196
      %v2198 = vpop.f32.mrf.mxu0
      %v2199 = vadd.f32 0.0, %v2198
      %2200 = vmatmul.bf16.gmra.mxu0 %v2114
      %v2201 = vpop.f32.mrf.mxu0
      %v2202 = vadd.f32 0.0, %v2201
      %v2203 = vpop.f32.mrf.mxu0
      %v2204 = vadd.f32 0.0, %v2203
      %2205 = vmatmul.bf16.gmra.mxu0 %v2117
      %v2206 = vpop.f32.mrf.mxu0
      %v2207 = vadd.f32 0.0, %v2206
      %v2208 = vpop.f32.mrf.mxu0
      %v2209 = vadd.f32 0.0, %v2208
      %2210 = vdwg.mxu0
      %v2211 = vadd.f32 %v1925, %v2132
      %v2212 = vadd.f32 %v1926, %v2134
      %v2213 = vadd.f32 %v1927, %v2137
      %v2214 = vadd.f32 %v1928, %v2139
      %v2215 = vadd.f32 %v1929, %v2142
      %v2216 = vadd.f32 %v1930, %v2144
      %v2217 = vadd.f32 %v1931, %v2147
      %v2218 = vadd.f32 %v1932, %v2149
      %v2219 = vadd.f32 %v1933, %v2152
      %v2220 = vadd.f32 %v1934, %v2154
      %v2221 = vadd.f32 %v1935, %v2157
      %v2222 = vadd.f32 %v1936, %v2159
      %v2223 = vadd.f32 %v1937, %v2162
      %v2224 = vadd.f32 %v1938, %v2164
      %v2225 = vadd.f32 %v1939, %v2167
      %v2226 = vadd.f32 %v1940, %v2169
      %v2227 = vadd.f32 %v1941, %v2172
      %v2228 = vadd.f32 %v1942, %v2174
      %v2229 = vadd.f32 %v1943, %v2177
      %v2230 = vadd.f32 %v1944, %v2179
      %v2231 = vadd.f32 %v1945, %v2182
      %v2232 = vadd.f32 %v1946, %v2184
      %v2233 = vadd.f32 %v1947, %v2187
      %v2234 = vadd.f32 %v1948, %v2189
      %v2235 = vadd.f32 %v1949, %v2192
      %v2236 = vadd.f32 %v1950, %v2194
      %v2237 = vadd.f32 %v1951, %v2197
      %v2238 = vadd.f32 %v1952, %v2199
      %v2239 = vadd.f32 %v1953, %v2202
      %v2240 = vadd.f32 %v1954, %v2204
      %v2241 = vadd.f32 %v1955, %v2207
      %v2242 = vadd.f32 %v1956, %v2209
      %v2243 = vld [vmem:[%s154] sm:$0xf]
      %v2244 = vld [vmem:[%s154 + $0x4] sm:$0xf]
      %v2245 = vld [vmem:[%s154 + $0x8] sm:$0x1]
      %v2246 = vld [vmem:[%s154 + $0xc] sm:$0xf]
      %v2247 = vld [vmem:[%s154 + $0x10] sm:$0xf]
      %v2248 = vld [vmem:[%s154 + $0x14] sm:$0x1]
      %v2249 = vld [vmem:[%s154 + $0x18] sm:$0xf]
      %v2250 = vld [vmem:[%s154 + $0x1c] sm:$0xf]
      %v2251 = vld [vmem:[%s154 + $0x20] sm:$0x1]
      %v2252 = vld [vmem:[%s154 + $0x24] sm:$0xf]
      %v2253 = vld [vmem:[%s154 + $0x28] sm:$0xf]
      %v2254 = vld [vmem:[%s154 + $0x2c] sm:$0x1]
      %v2255 = vld [vmem:[%s154 + $0x30] sm:$0xf]
      %v2256 = vld [vmem:[%s154 + $0x34] sm:$0xf]
      %v2257 = vld [vmem:[%s154 + $0x38] sm:$0x1]
      %v2258 = vld [vmem:[%s154 + $0x3c] sm:$0xf]
      %v2259 = vld [vmem:[%s154 + $0x40] sm:$0xf]
      %v2260 = vld [vmem:[%s154 + $0x44] sm:$0x1]
      %v2261 = vld [vmem:[%s154 + $0x48] sm:$0xf]
      %v2262 = vld [vmem:[%s154 + $0x4c] sm:$0xf]
      %v2263 = vld [vmem:[%s154 + $0x50] sm:$0x1]
      %v2264 = vld [vmem:[%s154 + $0x54] sm:$0xf]
      %v2265 = vld [vmem:[%s154 + $0x58] sm:$0xf]
      %v2266 = vld [vmem:[%s154 + $0x5c] sm:$0x1]
      %v2267 = vld [vmem:[%s154 + $0x60] sm:$0xf]
      %v2268 = vld [vmem:[%s154 + $0x64] sm:$0xf]
      %v2269 = vld [vmem:[%s154 + $0x68] sm:$0x1]
      %v2270 = vld [vmem:[%s154 + $0x6c] sm:$0xf]
      %v2271 = vld [vmem:[%s154 + $0x70] sm:$0xf]
      %v2272 = vld [vmem:[%s154 + $0x74] sm:$0x1]
      %v2273 = vld [vmem:[%s154 + $0x78] sm:$0xf]
      %v2274 = vld [vmem:[%s154 + $0x7c] sm:$0xf]
      %v2275 = vld [vmem:[%s154 + $0x80] sm:$0x1]
      %v2276 = vld [vmem:[%s154 + $0x84] sm:$0xf]
      %v2277 = vld [vmem:[%s154 + $0x88] sm:$0xf]
      %v2278 = vld [vmem:[%s154 + $0x8c] sm:$0x1]
      %v2279 = vld [vmem:[%s154 + $0x90] sm:$0xf]
      %v2280 = vld [vmem:[%s154 + $0x94] sm:$0xf]
      %v2281 = vld [vmem:[%s154 + $0x98] sm:$0x1]
      %v2282 = vld [vmem:[%s154 + $0x9c] sm:$0xf]
      %v2283 = vld [vmem:[%s154 + $0xa0] sm:$0xf]
      %v2284 = vld [vmem:[%s154 + $0xa4] sm:$0x1]
      %v2285 = vld [vmem:[%s154 + $0xa8] sm:$0xf]
      %v2286 = vld [vmem:[%s154 + $0xac] sm:$0xf]
      %v2287 = vld [vmem:[%s154 + $0xb0] sm:$0x1]
      %v2288 = vld [vmem:[%s154 + $0xb4] sm:$0xf]
      %v2289 = vld [vmem:[%s154 + $0xb8] sm:$0xf]
      %v2290 = vld [vmem:[%s154 + $0xbc] sm:$0x1]
      %v2292 = vshrl.u32 %v2243, 16
      %v2294 = vrot.slane %v2292, 4
      %v2295 = vshll.u32 %v2243, 16
      %v2297 = vrot.slane %v2295, 5
      %v2298 = vor.u32 %v2294, %v2297
      %v2299 = vrot.slane %v2298, 4
      %v2301 = vshll.u32 %v2244, 16
      %v2303 = vrot.slane %v2301, 5
      %v2304 = vsel %vm775, %v2299, %v2303
      %v2305 = vshrl.u32 %v2244, 16
      %v2307 = vrot.slane %v2305, 4
      %v2308 = vor.u32 %v2307, %v2303
      %v2309 = vrot.slane %v2308, 4
      %v2311 = vshll.u32 %v2245, 16
      %v2313 = vrot.slane %v2311, 5
      %v2314 = vsel %vm775, %v2309, %v2313
      %v2316 = vshrl.u32 %v2246, 16
      %v2318 = vrot.slane %v2316, 4
      %v2319 = vshll.u32 %v2246, 16
      %v2321 = vrot.slane %v2319, 5
      %v2322 = vor.u32 %v2318, %v2321
      %v2323 = vrot.slane %v2322, 4
      %v2325 = vshll.u32 %v2247, 16
      %v2327 = vrot.slane %v2325, 5
      %v2328 = vsel %vm775, %v2323, %v2327
      %v2329 = vshrl.u32 %v2247, 16
      %v2331 = vrot.slane %v2329, 4
      %v2332 = vor.u32 %v2331, %v2327
      %v2333 = vrot.slane %v2332, 4
      %v2335 = vshll.u32 %v2248, 16
      %v2337 = vrot.slane %v2335, 5
      %v2338 = vsel %vm775, %v2333, %v2337
      %v2340 = vshrl.u32 %v2249, 16
      %v2342 = vrot.slane %v2340, 4
      %v2343 = vshll.u32 %v2249, 16
      %v2345 = vrot.slane %v2343, 5
      %v2346 = vor.u32 %v2342, %v2345
      %v2347 = vrot.slane %v2346, 4
      %v2349 = vshll.u32 %v2250, 16
      %v2351 = vrot.slane %v2349, 5
      %v2352 = vsel %vm775, %v2347, %v2351
      %v2353 = vshrl.u32 %v2250, 16
      %v2355 = vrot.slane %v2353, 4
      %v2356 = vor.u32 %v2355, %v2351
      %v2357 = vrot.slane %v2356, 4
      %v2359 = vshll.u32 %v2251, 16
      %v2361 = vrot.slane %v2359, 5
      %v2362 = vsel %vm775, %v2357, %v2361
      %v2364 = vshrl.u32 %v2252, 16
      %v2366 = vrot.slane %v2364, 4
      %v2367 = vshll.u32 %v2252, 16
      %v2369 = vrot.slane %v2367, 5
      %v2370 = vor.u32 %v2366, %v2369
      %v2371 = vrot.slane %v2370, 4
      %v2373 = vshll.u32 %v2253, 16
      %v2375 = vrot.slane %v2373, 5
      %v2376 = vsel %vm775, %v2371, %v2375
      %v2377 = vshrl.u32 %v2253, 16
      %v2379 = vrot.slane %v2377, 4
      %v2380 = vor.u32 %v2379, %v2375
      %v2381 = vrot.slane %v2380, 4
      %v2383 = vshll.u32 %v2254, 16
      %v2385 = vrot.slane %v2383, 5
      %v2386 = vsel %vm775, %v2381, %v2385
      %v2388 = vshrl.u32 %v2255, 16
      %v2390 = vrot.slane %v2388, 4
      %v2391 = vshll.u32 %v2255, 16
      %v2393 = vrot.slane %v2391, 5
      %v2394 = vor.u32 %v2390, %v2393
      %v2395 = vrot.slane %v2394, 4
      %v2397 = vshll.u32 %v2256, 16
      %v2399 = vrot.slane %v2397, 5
      %v2400 = vsel %vm775, %v2395, %v2399
      %v2401 = vshrl.u32 %v2256, 16
      %v2403 = vrot.slane %v2401, 4
      %v2404 = vor.u32 %v2403, %v2399
      %v2405 = vrot.slane %v2404, 4
      %v2407 = vshll.u32 %v2257, 16
      %v2409 = vrot.slane %v2407, 5
      %v2410 = vsel %vm775, %v2405, %v2409
      %v2412 = vshrl.u32 %v2258, 16
      %v2414 = vrot.slane %v2412, 4
      %v2415 = vshll.u32 %v2258, 16
      %v2417 = vrot.slane %v2415, 5
      %v2418 = vor.u32 %v2414, %v2417
      %v2419 = vrot.slane %v2418, 4
      %v2421 = vshll.u32 %v2259, 16
      %v2423 = vrot.slane %v2421, 5
      %v2424 = vsel %vm775, %v2419, %v2423
      %v2425 = vshrl.u32 %v2259, 16
      %v2427 = vrot.slane %v2425, 4
      %v2428 = vor.u32 %v2427, %v2423
      %v2429 = vrot.slane %v2428, 4
      %v2431 = vshll.u32 %v2260, 16
      %v2433 = vrot.slane %v2431, 5
      %v2434 = vsel %vm775, %v2429, %v2433
      %v2436 = vshrl.u32 %v2261, 16
      %v2438 = vrot.slane %v2436, 4
      %v2439 = vshll.u32 %v2261, 16
      %v2441 = vrot.slane %v2439, 5
      %v2442 = vor.u32 %v2438, %v2441
      %v2443 = vrot.slane %v2442, 4
      %v2445 = vshll.u32 %v2262, 16
      %v2447 = vrot.slane %v2445, 5
      %v2448 = vsel %vm775, %v2443, %v2447
      %v2449 = vshrl.u32 %v2262, 16
      %v2451 = vrot.slane %v2449, 4
      %v2452 = vor.u32 %v2451, %v2447
      %v2453 = vrot.slane %v2452, 4
      %v2455 = vshll.u32 %v2263, 16
      %v2457 = vrot.slane %v2455, 5
      %v2458 = vsel %vm775, %v2453, %v2457
      %v2460 = vshrl.u32 %v2264, 16
      %v2462 = vrot.slane %v2460, 4
      %v2463 = vshll.u32 %v2264, 16
      %v2465 = vrot.slane %v2463, 5
      %v2466 = vor.u32 %v2462, %v2465
      %v2467 = vrot.slane %v2466, 4
      %v2469 = vshll.u32 %v2265, 16
      %v2471 = vrot.slane %v2469, 5
      %v2472 = vsel %vm775, %v2467, %v2471
      %v2473 = vshrl.u32 %v2265, 16
      %v2475 = vrot.slane %v2473, 4
      %v2476 = vor.u32 %v2475, %v2471
      %v2477 = vrot.slane %v2476, 4
      %v2479 = vshll.u32 %v2266, 16
      %v2481 = vrot.slane %v2479, 5
      %v2482 = vsel %vm775, %v2477, %v2481
      %v2484 = vshrl.u32 %v2267, 16
      %v2486 = vrot.slane %v2484, 4
      %v2487 = vshll.u32 %v2267, 16
      %v2489 = vrot.slane %v2487, 5
      %v2490 = vor.u32 %v2486, %v2489
      %v2491 = vrot.slane %v2490, 4
      %v2493 = vshll.u32 %v2268, 16
      %v2495 = vrot.slane %v2493, 5
      %v2496 = vsel %vm775, %v2491, %v2495
      %v2497 = vshrl.u32 %v2268, 16
      %v2499 = vrot.slane %v2497, 4
      %v2500 = vor.u32 %v2499, %v2495
      %v2501 = vrot.slane %v2500, 4
      %v2503 = vshll.u32 %v2269, 16
      %v2505 = vrot.slane %v2503, 5
      %v2506 = vsel %vm775, %v2501, %v2505
      %v2508 = vshrl.u32 %v2270, 16
      %v2510 = vrot.slane %v2508, 4
      %v2511 = vshll.u32 %v2270, 16
      %v2513 = vrot.slane %v2511, 5
      %v2514 = vor.u32 %v2510, %v2513
      %v2515 = vrot.slane %v2514, 4
      %v2517 = vshll.u32 %v2271, 16
      %v2519 = vrot.slane %v2517, 5
      %v2520 = vsel %vm775, %v2515, %v2519
      %v2521 = vshrl.u32 %v2271, 16
      %v2523 = vrot.slane %v2521, 4
      %v2524 = vor.u32 %v2523, %v2519
      %v2525 = vrot.slane %v2524, 4
      %v2527 = vshll.u32 %v2272, 16
      %v2529 = vrot.slane %v2527, 5
      %v2530 = vsel %vm775, %v2525, %v2529
      %v2532 = vshrl.u32 %v2273, 16
      %v2534 = vrot.slane %v2532, 4
      %v2535 = vshll.u32 %v2273, 16
      %v2537 = vrot.slane %v2535, 5
      %v2538 = vor.u32 %v2534, %v2537
      %v2539 = vrot.slane %v2538, 4
      %v2541 = vshll.u32 %v2274, 16
      %v2543 = vrot.slane %v2541, 5
      %v2544 = vsel %vm775, %v2539, %v2543
      %v2545 = vshrl.u32 %v2274, 16
      %v2547 = vrot.slane %v2545, 4
      %v2548 = vor.u32 %v2547, %v2543
      %v2549 = vrot.slane %v2548, 4
      %v2551 = vshll.u32 %v2275, 16
      %v2553 = vrot.slane %v2551, 5
      %v2554 = vsel %vm775, %v2549, %v2553
      %v2556 = vshrl.u32 %v2276, 16
      %v2558 = vrot.slane %v2556, 4
      %v2559 = vshll.u32 %v2276, 16
      %v2561 = vrot.slane %v2559, 5
      %v2562 = vor.u32 %v2558, %v2561
      %v2563 = vrot.slane %v2562, 4
      %v2565 = vshll.u32 %v2277, 16
      %v2567 = vrot.slane %v2565, 5
      %v2568 = vsel %vm775, %v2563, %v2567
      %v2569 = vshrl.u32 %v2277, 16
      %v2571 = vrot.slane %v2569, 4
      %v2572 = vor.u32 %v2571, %v2567
      %v2573 = vrot.slane %v2572, 4
      %v2575 = vshll.u32 %v2278, 16
      %v2577 = vrot.slane %v2575, 5
      %v2578 = vsel %vm775, %v2573, %v2577
      %v2580 = vshrl.u32 %v2279, 16
      %v2582 = vrot.slane %v2580, 4
      %v2583 = vshll.u32 %v2279, 16
      %v2585 = vrot.slane %v2583, 5
      %v2586 = vor.u32 %v2582, %v2585
      %v2587 = vrot.slane %v2586, 4
      %v2589 = vshll.u32 %v2280, 16
      %v2591 = vrot.slane %v2589, 5
      %v2592 = vsel %vm775, %v2587, %v2591
      %v2593 = vshrl.u32 %v2280, 16
      %v2595 = vrot.slane %v2593, 4
      %v2596 = vor.u32 %v2595, %v2591
      %v2597 = vrot.slane %v2596, 4
      %v2599 = vshll.u32 %v2281, 16
      %v2601 = vrot.slane %v2599, 5
      %v2602 = vsel %vm775, %v2597, %v2601
      %v2604 = vshrl.u32 %v2282, 16
      %v2606 = vrot.slane %v2604, 4
      %v2607 = vshll.u32 %v2282, 16
      %v2609 = vrot.slane %v2607, 5
      %v2610 = vor.u32 %v2606, %v2609
      %v2611 = vrot.slane %v2610, 4
      %v2613 = vshll.u32 %v2283, 16
      %v2615 = vrot.slane %v2613, 5
      %v2616 = vsel %vm775, %v2611, %v2615
      %v2617 = vshrl.u32 %v2283, 16
      %v2619 = vrot.slane %v2617, 4
      %v2620 = vor.u32 %v2619, %v2615
      %v2621 = vrot.slane %v2620, 4
      %v2623 = vshll.u32 %v2284, 16
      %v2625 = vrot.slane %v2623, 5
      %v2626 = vsel %vm775, %v2621, %v2625
      %v2628 = vshrl.u32 %v2285, 16
      %v2630 = vrot.slane %v2628, 4
      %v2631 = vshll.u32 %v2285, 16
      %v2633 = vrot.slane %v2631, 5
      %v2634 = vor.u32 %v2630, %v2633
      %v2635 = vrot.slane %v2634, 4
      %v2637 = vshll.u32 %v2286, 16
      %v2639 = vrot.slane %v2637, 5
      %v2640 = vsel %vm775, %v2635, %v2639
      %v2641 = vshrl.u32 %v2286, 16
      %v2643 = vrot.slane %v2641, 4
      %v2644 = vor.u32 %v2643, %v2639
      %v2645 = vrot.slane %v2644, 4
      %v2647 = vshll.u32 %v2287, 16
      %v2649 = vrot.slane %v2647, 5
      %v2650 = vsel %vm775, %v2645, %v2649
      %v2652 = vshrl.u32 %v2288, 16
      %v2654 = vrot.slane %v2652, 4
      %v2655 = vshll.u32 %v2288, 16
      %v2657 = vrot.slane %v2655, 5
      %v2658 = vor.u32 %v2654, %v2657
      %v2659 = vrot.slane %v2658, 4
      %v2661 = vshll.u32 %v2289, 16
      %v2663 = vrot.slane %v2661, 5
      %v2664 = vsel %vm775, %v2659, %v2663
      %v2665 = vshrl.u32 %v2289, 16
      %v2667 = vrot.slane %v2665, 4
      %v2668 = vor.u32 %v2667, %v2663
      %v2669 = vrot.slane %v2668, 4
      %v2671 = vshll.u32 %v2290, 16
      %v2673 = vrot.slane %v2671, 5
      %v2674 = vsel %vm775, %v2669, %v2673
      %s2675 = scalar_lea.vmem %s1, 8
      %v2676 = vld [vmem:[%s2675] sm:$0x3]
      %v2677 = vunpack.c.l.b16 %v2304
      %v2678 = vunpack.c.l.b16 %v2314
      %v2679 = vunpack.c.l.b16 %v2328
      %v2680 = vunpack.c.l.b16 %v2338
      %v2681 = vunpack.c.l.b16 %v2352
      %v2682 = vunpack.c.l.b16 %v2362
      %v2683 = vunpack.c.l.b16 %v2376
      %v2684 = vunpack.c.l.b16 %v2386
      %v2685 = vunpack.c.l.b16 %v2400
      %v2686 = vunpack.c.l.b16 %v2410
      %v2687 = vunpack.c.l.b16 %v2424
      %v2688 = vunpack.c.l.b16 %v2434
      %v2689 = vunpack.c.l.b16 %v2448
      %v2690 = vunpack.c.l.b16 %v2458
      %v2691 = vunpack.c.l.b16 %v2472
      %v2692 = vunpack.c.l.b16 %v2482
      %v2693 = vunpack.c.l.b16 %v2496
      %v2694 = vunpack.c.l.b16 %v2506
      %v2695 = vunpack.c.l.b16 %v2520
      %v2696 = vunpack.c.l.b16 %v2530
      %v2697 = vunpack.c.l.b16 %v2544
      %v2698 = vunpack.c.l.b16 %v2554
      %v2699 = vunpack.c.l.b16 %v2568
      %v2700 = vunpack.c.l.b16 %v2578
      %v2701 = vunpack.c.l.b16 %v2592
      %v2702 = vunpack.c.l.b16 %v2602
      %v2703 = vunpack.c.l.b16 %v2616
      %v2704 = vunpack.c.l.b16 %v2626
      %v2705 = vunpack.c.l.b16 %v2640
      %v2706 = vunpack.c.l.b16 %v2650
      %v2707 = vunpack.c.l.b16 %v2664
      %v2708 = vunpack.c.l.b16 %v2674
      %v2709 = vpack.c.b16 %v2678, %v2677
      %v2710 = vpack.c.b16 %v2680, %v2679
      %v2711 = vpack.c.b16 %v2682, %v2681
      %v2712 = vpack.c.b16 %v2684, %v2683
      %v2713 = vpack.c.b16 %v2686, %v2685
      %v2714 = vpack.c.b16 %v2688, %v2687
      %v2715 = vpack.c.b16 %v2690, %v2689
      %v2716 = vpack.c.b16 %v2692, %v2691
      %v2717 = vpack.c.b16 %v2694, %v2693
      %v2718 = vpack.c.b16 %v2696, %v2695
      %v2719 = vpack.c.b16 %v2698, %v2697
      %v2720 = vpack.c.b16 %v2700, %v2699
      %v2721 = vpack.c.b16 %v2702, %v2701
      %v2722 = vpack.c.b16 %v2704, %v2703
      %v2723 = vpack.c.b16 %v2706, %v2705
      %v2724 = vpack.c.b16 %v2708, %v2707
      %v2726 = vsel %vm1210, %v2709, 0
      %v2729 = vsel %vm1210, %v2710, 0
      %v2732 = vsel %vm1210, %v2711, 0
      %v2735 = vsel %vm1210, %v2712, 0
      %v2738 = vsel %vm1210, %v2713, 0
      %v2741 = vsel %vm1210, %v2714, 0
      %v2744 = vsel %vm1210, %v2715, 0
      %v2747 = vsel %vm1210, %v2716, 0
      %v2750 = vsel %vm1210, %v2717, 0
      %v2753 = vsel %vm1210, %v2718, 0
      %v2756 = vsel %vm1210, %v2719, 0
      %v2759 = vsel %vm1210, %v2720, 0
      %v2762 = vsel %vm1210, %v2721, 0
      %v2765 = vsel %vm1210, %v2722, 0
      %v2768 = vsel %vm1210, %v2723, 0
      %v2771 = vsel %vm1210, %v2724, 0
      %v2774 = vsel %vm1259, %v2676, 0
      %2776 = vmatpush.bf16.msra.mxu0 0
      %2777 = vmatpush.bf16.msra.mxu0 0
      %2778 = vmatpush.bf16.msra.mxu0 0
      %2779 = vmatpush.bf16.msra.mxu0 0
      %2780 = vmatpush.bf16.msra.mxu0 0
      %2781 = vmatpush.bf16.msra.mxu0 0
      %2782 = vmatpush.bf16.msra.mxu0 0
      %2783 = vmatpush.bf16.msra.mxu0 %v2774
      %2784 = vmatmul.bf16.gmra.mxu0 %v2726
      %v2785 = vpop.f32.mrf.mxu0
      %v2786 = vadd.f32 0.0, %v2785
      %v2787 = vpop.f32.mrf.mxu0
      %v2788 = vadd.f32 0.0, %v2787
      %2789 = vmatmul.bf16.gmra.mxu0 %v2729
      %v2790 = vpop.f32.mrf.mxu0
      %v2791 = vadd.f32 0.0, %v2790
      %v2792 = vpop.f32.mrf.mxu0
      %v2793 = vadd.f32 0.0, %v2792
      %2794 = vmatmul.bf16.gmra.mxu0 %v2732
      %v2795 = vpop.f32.mrf.mxu0
      %v2796 = vadd.f32 0.0, %v2795
      %v2797 = vpop.f32.mrf.mxu0
      %v2798 = vadd.f32 0.0, %v2797
      %2799 = vmatmul.bf16.gmra.mxu0 %v2735
      %v2800 = vpop.f32.mrf.mxu0
      %v2801 = vadd.f32 0.0, %v2800
      %v2802 = vpop.f32.mrf.mxu0
      %v2803 = vadd.f32 0.0, %v2802
      %2804 = vmatmul.bf16.gmra.mxu0 %v2738
      %v2805 = vpop.f32.mrf.mxu0
      %v2806 = vadd.f32 0.0, %v2805
      %v2807 = vpop.f32.mrf.mxu0
      %v2808 = vadd.f32 0.0, %v2807
      %2809 = vmatmul.bf16.gmra.mxu0 %v2741
      %v2810 = vpop.f32.mrf.mxu0
      %v2811 = vadd.f32 0.0, %v2810
      %v2812 = vpop.f32.mrf.mxu0
      %v2813 = vadd.f32 0.0, %v2812
      %2814 = vmatmul.bf16.gmra.mxu0 %v2744
      %v2815 = vpop.f32.mrf.mxu0
      %v2816 = vadd.f32 0.0, %v2815
      %v2817 = vpop.f32.mrf.mxu0
      %v2818 = vadd.f32 0.0, %v2817
      %2819 = vmatmul.bf16.gmra.mxu0 %v2747
      %v2820 = vpop.f32.mrf.mxu0
      %v2821 = vadd.f32 0.0, %v2820
      %v2822 = vpop.f32.mrf.mxu0
      %v2823 = vadd.f32 0.0, %v2822
      %2824 = vmatmul.bf16.gmra.mxu0 %v2750
      %v2825 = vpop.f32.mrf.mxu0
      %v2826 = vadd.f32 0.0, %v2825
      %v2827 = vpop.f32.mrf.mxu0
      %v2828 = vadd.f32 0.0, %v2827
      %2829 = vmatmul.bf16.gmra.mxu0 %v2753
      %v2830 = vpop.f32.mrf.mxu0
      %v2831 = vadd.f32 0.0, %v2830
      %v2832 = vpop.f32.mrf.mxu0
      %v2833 = vadd.f32 0.0, %v2832
      %2834 = vmatmul.bf16.gmra.mxu0 %v2756
      %v2835 = vpop.f32.mrf.mxu0
      %v2836 = vadd.f32 0.0, %v2835
      %v2837 = vpop.f32.mrf.mxu0
      %v2838 = vadd.f32 0.0, %v2837
      %2839 = vmatmul.bf16.gmra.mxu0 %v2759
      %v2840 = vpop.f32.mrf.mxu0
      %v2841 = vadd.f32 0.0, %v2840
      %v2842 = vpop.f32.mrf.mxu0
      %v2843 = vadd.f32 0.0, %v2842
      %2844 = vmatmul.bf16.gmra.mxu0 %v2762
      %v2845 = vpop.f32.mrf.mxu0
      %v2846 = vadd.f32 0.0, %v2845
      %v2847 = vpop.f32.mrf.mxu0
      %v2848 = vadd.f32 0.0, %v2847
      %2849 = vmatmul.bf16.gmra.mxu0 %v2765
      %v2850 = vpop.f32.mrf.mxu0
      %v2851 = vadd.f32 0.0, %v2850
      %v2852 = vpop.f32.mrf.mxu0
      %v2853 = vadd.f32 0.0, %v2852
      %2854 = vmatmul.bf16.gmra.mxu0 %v2768
      %v2855 = vpop.f32.mrf.mxu0
      %v2856 = vadd.f32 0.0, %v2855
      %v2857 = vpop.f32.mrf.mxu0
      %v2858 = vadd.f32 0.0, %v2857
      %2859 = vmatmul.bf16.gmra.mxu0 %v2771
      %v2860 = vpop.f32.mrf.mxu0
      %v2861 = vadd.f32 0.0, %v2860
      %v2862 = vpop.f32.mrf.mxu0
      %v2863 = vadd.f32 0.0, %v2862
      %2864 = vdwg.mxu0
      %v2865 = vadd.f32 %v2211, %v2786
      %v2866 = vadd.f32 %v2212, %v2788
      %v2867 = vadd.f32 %v2213, %v2791
      %v2868 = vadd.f32 %v2214, %v2793
      %v2869 = vadd.f32 %v2215, %v2796
      %v2870 = vadd.f32 %v2216, %v2798
      %v2871 = vadd.f32 %v2217, %v2801
      %v2872 = vadd.f32 %v2218, %v2803
      %v2873 = vadd.f32 %v2219, %v2806
      %v2874 = vadd.f32 %v2220, %v2808
      %v2875 = vadd.f32 %v2221, %v2811
      %v2876 = vadd.f32 %v2222, %v2813
      %v2877 = vadd.f32 %v2223, %v2816
      %v2878 = vadd.f32 %v2224, %v2818
      %v2879 = vadd.f32 %v2225, %v2821
      %v2880 = vadd.f32 %v2226, %v2823
      %v2881 = vadd.f32 %v2227, %v2826
      %v2882 = vadd.f32 %v2228, %v2828
      %v2883 = vadd.f32 %v2229, %v2831
      %v2884 = vadd.f32 %v2230, %v2833
      %v2885 = vadd.f32 %v2231, %v2836
      %v2886 = vadd.f32 %v2232, %v2838
      %v2887 = vadd.f32 %v2233, %v2841
      %v2888 = vadd.f32 %v2234, %v2843
      %v2889 = vadd.f32 %v2235, %v2846
      %v2890 = vadd.f32 %v2236, %v2848
      %v2891 = vadd.f32 %v2237, %v2851
      %v2892 = vadd.f32 %v2238, %v2853
      %v2893 = vadd.f32 %v2239, %v2856
      %v2894 = vadd.f32 %v2240, %v2858
      %v2895 = vadd.f32 %v2241, %v2861
      %v2896 = vadd.f32 %v2242, %v2863
      %v2897 = vld [vmem:[%s154] sm:$0xe]
      %v2898 = vld [vmem:[%s154 + $0xc] sm:$0xe]
      %v2899 = vld [vmem:[%s154 + $0x18] sm:$0xe]
      %v2900 = vld [vmem:[%s154 + $0x24] sm:$0xe]
      %v2901 = vld [vmem:[%s154 + $0x30] sm:$0xe]
      %v2902 = vld [vmem:[%s154 + $0x3c] sm:$0xe]
      %v2903 = vld [vmem:[%s154 + $0x48] sm:$0xe]
      %v2904 = vld [vmem:[%s154 + $0x54] sm:$0xe]
      %v2905 = vld [vmem:[%s154 + $0x60] sm:$0xe]
      %v2906 = vld [vmem:[%s154 + $0x6c] sm:$0xe]
      %v2907 = vld [vmem:[%s154 + $0x78] sm:$0xe]
      %v2908 = vld [vmem:[%s154 + $0x84] sm:$0xe]
      %v2909 = vld [vmem:[%s154 + $0x90] sm:$0xe]
      %v2910 = vld [vmem:[%s154 + $0x9c] sm:$0xe]
      %v2911 = vld [vmem:[%s154 + $0xa8] sm:$0xe]
      %v2912 = vld [vmem:[%s154 + $0xb4] sm:$0xe]
      %v2961 = vrot.slane %v2897, 5
      %v2962 = vrot.slane %v2961, 4
      %v2963 = vrot.slane %v2244, 5
      %v2964 = vsel %vm1622, %v2962, %v2963
      %v2965 = vrot.slane %v2963, 4
      %v2966 = vrot.slane %v2245, 5
      %v2967 = vsel %vm1622, %v2965, %v2966
      %v2968 = vrot.slane %v2898, 5
      %v2969 = vrot.slane %v2968, 4
      %v2970 = vrot.slane %v2247, 5
      %v2971 = vsel %vm1622, %v2969, %v2970
      %v2972 = vrot.slane %v2970, 4
      %v2973 = vrot.slane %v2248, 5
      %v2974 = vsel %vm1622, %v2972, %v2973
      %v2975 = vrot.slane %v2899, 5
      %v2976 = vrot.slane %v2975, 4
      %v2977 = vrot.slane %v2250, 5
      %v2978 = vsel %vm1622, %v2976, %v2977
      %v2979 = vrot.slane %v2977, 4
      %v2980 = vrot.slane %v2251, 5
      %v2981 = vsel %vm1622, %v2979, %v2980
      %v2982 = vrot.slane %v2900, 5
      %v2983 = vrot.slane %v2982, 4
      %v2984 = vrot.slane %v2253, 5
      %v2985 = vsel %vm1622, %v2983, %v2984
      %v2986 = vrot.slane %v2984, 4
      %v2987 = vrot.slane %v2254, 5
      %v2988 = vsel %vm1622, %v2986, %v2987
      %v2989 = vrot.slane %v2901, 5
      %v2990 = vrot.slane %v2989, 4
      %v2991 = vrot.slane %v2256, 5
      %v2992 = vsel %vm1622, %v2990, %v2991
      %v2993 = vrot.slane %v2991, 4
      %v2994 = vrot.slane %v2257, 5
      %v2995 = vsel %vm1622, %v2993, %v2994
      %v2996 = vrot.slane %v2902, 5
      %v2997 = vrot.slane %v2996, 4
      %v2998 = vrot.slane %v2259, 5
      %v2999 = vsel %vm1622, %v2997, %v2998
      %v3000 = vrot.slane %v2998, 4
      %v3001 = vrot.slane %v2260, 5
      %v3002 = vsel %vm1622, %v3000, %v3001
      %v3003 = vrot.slane %v2903, 5
      %v3004 = vrot.slane %v3003, 4
      %v3005 = vrot.slane %v2262, 5
      %v3006 = vsel %vm1622, %v3004, %v3005
      %v3007 = vrot.slane %v3005, 4
      %v3008 = vrot.slane %v2263, 5
      %v3009 = vsel %vm1622, %v3007, %v3008
      %v3010 = vrot.slane %v2904, 5
      %v3011 = vrot.slane %v3010, 4
      %v3012 = vrot.slane %v2265, 5
      %v3013 = vsel %vm1622, %v3011, %v3012
      %v3014 = vrot.slane %v3012, 4
      %v3015 = vrot.slane %v2266, 5
      %v3016 = vsel %vm1622, %v3014, %v3015
      %v3017 = vrot.slane %v2905, 5
      %v3018 = vrot.slane %v3017, 4
      %v3019 = vrot.slane %v2268, 5
      %v3020 = vsel %vm1622, %v3018, %v3019
      %v3021 = vrot.slane %v3019, 4
      %v3022 = vrot.slane %v2269, 5
      %v3023 = vsel %vm1622, %v3021, %v3022
      %v3024 = vrot.slane %v2906, 5
      %v3025 = vrot.slane %v3024, 4
      %v3026 = vrot.slane %v2271, 5
      %v3027 = vsel %vm1622, %v3025, %v3026
      %v3028 = vrot.slane %v3026, 4
      %v3029 = vrot.slane %v2272, 5
      %v3030 = vsel %vm1622, %v3028, %v3029
      %v3031 = vrot.slane %v2907, 5
      %v3032 = vrot.slane %v3031, 4
      %v3033 = vrot.slane %v2274, 5
      %v3034 = vsel %vm1622, %v3032, %v3033
      %v3035 = vrot.slane %v3033, 4
      %v3036 = vrot.slane %v2275, 5
      %v3037 = vsel %vm1622, %v3035, %v3036
      %v3038 = vrot.slane %v2908, 5
      %v3039 = vrot.slane %v3038, 4
      %v3040 = vrot.slane %v2277, 5
      %v3041 = vsel %vm1622, %v3039, %v3040
      %v3042 = vrot.slane %v3040, 4
      %v3043 = vrot.slane %v2278, 5
      %v3044 = vsel %vm1622, %v3042, %v3043
      %v3045 = vrot.slane %v2909, 5
      %v3046 = vrot.slane %v3045, 4
      %v3047 = vrot.slane %v2280, 5
      %v3048 = vsel %vm1622, %v3046, %v3047
      %v3049 = vrot.slane %v3047, 4
      %v3050 = vrot.slane %v2281, 5
      %v3051 = vsel %vm1622, %v3049, %v3050
      %v3052 = vrot.slane %v2910, 5
      %v3053 = vrot.slane %v3052, 4
      %v3054 = vrot.slane %v2283, 5
      %v3055 = vsel %vm1622, %v3053, %v3054
      %v3056 = vrot.slane %v3054, 4
      %v3057 = vrot.slane %v2284, 5
      %v3058 = vsel %vm1622, %v3056, %v3057
      %v3059 = vrot.slane %v2911, 5
      %v3060 = vrot.slane %v3059, 4
      %v3061 = vrot.slane %v2286, 5
      %v3062 = vsel %vm1622, %v3060, %v3061
      %v3063 = vrot.slane %v3061, 4
      %v3064 = vrot.slane %v2287, 5
      %v3065 = vsel %vm1622, %v3063, %v3064
      %v3066 = vrot.slane %v2912, 5
      %v3067 = vrot.slane %v3066, 4
      %v3068 = vrot.slane %v2289, 5
      %v3069 = vsel %vm1622, %v3067, %v3068
      %v3070 = vrot.slane %v3068, 4
      %v3071 = vrot.slane %v2290, 5
      %v3072 = vsel %vm1622, %v3070, %v3071
      %s3073 = scalar_lea.vmem %s1, 10
      %v3074 = vld [vmem:[%s3073] sm:$0x3]
      %v3075 = vunpack.c.l.b16 %v2964
      %v3076 = vunpack.c.l.b16 %v2967
      %v3077 = vunpack.c.l.b16 %v2971
      %v3078 = vunpack.c.l.b16 %v2974
      %v3079 = vunpack.c.l.b16 %v2978
      %v3080 = vunpack.c.l.b16 %v2981
      %v3081 = vunpack.c.l.b16 %v2985
      %v3082 = vunpack.c.l.b16 %v2988
      %v3083 = vunpack.c.l.b16 %v2992
      %v3084 = vunpack.c.l.b16 %v2995
      %v3085 = vunpack.c.l.b16 %v2999
      %v3086 = vunpack.c.l.b16 %v3002
      %v3087 = vunpack.c.l.b16 %v3006
      %v3088 = vunpack.c.l.b16 %v3009
      %v3089 = vunpack.c.l.b16 %v3013
      %v3090 = vunpack.c.l.b16 %v3016
      %v3091 = vunpack.c.l.b16 %v3020
      %v3092 = vunpack.c.l.b16 %v3023
      %v3093 = vunpack.c.l.b16 %v3027
      %v3094 = vunpack.c.l.b16 %v3030
      %v3095 = vunpack.c.l.b16 %v3034
      %v3096 = vunpack.c.l.b16 %v3037
      %v3097 = vunpack.c.l.b16 %v3041
      %v3098 = vunpack.c.l.b16 %v3044
      %v3099 = vunpack.c.l.b16 %v3048
      %v3100 = vunpack.c.l.b16 %v3051
      %v3101 = vunpack.c.l.b16 %v3055
      %v3102 = vunpack.c.l.b16 %v3058
      %v3103 = vunpack.c.l.b16 %v3062
      %v3104 = vunpack.c.l.b16 %v3065
      %v3105 = vunpack.c.l.b16 %v3069
      %v3106 = vunpack.c.l.b16 %v3072
      %v3107 = vpack.c.b16 %v3076, %v3075
      %v3108 = vpack.c.b16 %v3078, %v3077
      %v3109 = vpack.c.b16 %v3080, %v3079
      %v3110 = vpack.c.b16 %v3082, %v3081
      %v3111 = vpack.c.b16 %v3084, %v3083
      %v3112 = vpack.c.b16 %v3086, %v3085
      %v3113 = vpack.c.b16 %v3088, %v3087
      %v3114 = vpack.c.b16 %v3090, %v3089
      %v3115 = vpack.c.b16 %v3092, %v3091
      %v3116 = vpack.c.b16 %v3094, %v3093
      %v3117 = vpack.c.b16 %v3096, %v3095
      %v3118 = vpack.c.b16 %v3098, %v3097
      %v3119 = vpack.c.b16 %v3100, %v3099
      %v3120 = vpack.c.b16 %v3102, %v3101
      %v3121 = vpack.c.b16 %v3104, %v3103
      %v3122 = vpack.c.b16 %v3106, %v3105
      %v3124 = vsel %vm1210, %v3107, 0
      %v3127 = vsel %vm1210, %v3108, 0
      %v3130 = vsel %vm1210, %v3109, 0
      %v3133 = vsel %vm1210, %v3110, 0
      %v3136 = vsel %vm1210, %v3111, 0
      %v3139 = vsel %vm1210, %v3112, 0
      %v3142 = vsel %vm1210, %v3113, 0
      %v3145 = vsel %vm1210, %v3114, 0
      %v3148 = vsel %vm1210, %v3115, 0
      %v3151 = vsel %vm1210, %v3116, 0
      %v3154 = vsel %vm1210, %v3117, 0
      %v3157 = vsel %vm1210, %v3118, 0
      %v3160 = vsel %vm1210, %v3119, 0
      %v3163 = vsel %vm1210, %v3120, 0
      %v3166 = vsel %vm1210, %v3121, 0
      %v3169 = vsel %vm1210, %v3122, 0
      %v3172 = vsel %vm1259, %v3074, 0
      %3174 = vmatpush.bf16.msra.mxu0 0
      %3175 = vmatpush.bf16.msra.mxu0 0
      %3176 = vmatpush.bf16.msra.mxu0 0
      %3177 = vmatpush.bf16.msra.mxu0 0
      %3178 = vmatpush.bf16.msra.mxu0 0
      %3179 = vmatpush.bf16.msra.mxu0 0
      %3180 = vmatpush.bf16.msra.mxu0 0
      %3181 = vmatpush.bf16.msra.mxu0 %v3172
      %3182 = vmatmul.bf16.gmra.mxu0 %v3124
      %v3183 = vpop.f32.mrf.mxu0
      %v3184 = vadd.f32 0.0, %v3183
      %v3185 = vpop.f32.mrf.mxu0
      %v3186 = vadd.f32 0.0, %v3185
      %3187 = vmatmul.bf16.gmra.mxu0 %v3127
      %v3188 = vpop.f32.mrf.mxu0
      %v3189 = vadd.f32 0.0, %v3188
      %v3190 = vpop.f32.mrf.mxu0
      %v3191 = vadd.f32 0.0, %v3190
      %3192 = vmatmul.bf16.gmra.mxu0 %v3130
      %v3193 = vpop.f32.mrf.mxu0
      %v3194 = vadd.f32 0.0, %v3193
      %v3195 = vpop.f32.mrf.mxu0
      %v3196 = vadd.f32 0.0, %v3195
      %3197 = vmatmul.bf16.gmra.mxu0 %v3133
      %v3198 = vpop.f32.mrf.mxu0
      %v3199 = vadd.f32 0.0, %v3198
      %v3200 = vpop.f32.mrf.mxu0
      %v3201 = vadd.f32 0.0, %v3200
      %3202 = vmatmul.bf16.gmra.mxu0 %v3136
      %v3203 = vpop.f32.mrf.mxu0
      %v3204 = vadd.f32 0.0, %v3203
      %v3205 = vpop.f32.mrf.mxu0
      %v3206 = vadd.f32 0.0, %v3205
      %3207 = vmatmul.bf16.gmra.mxu0 %v3139
      %v3208 = vpop.f32.mrf.mxu0
      %v3209 = vadd.f32 0.0, %v3208
      %v3210 = vpop.f32.mrf.mxu0
      %v3211 = vadd.f32 0.0, %v3210
      %3212 = vmatmul.bf16.gmra.mxu0 %v3142
      %v3213 = vpop.f32.mrf.mxu0
      %v3214 = vadd.f32 0.0, %v3213
      %v3215 = vpop.f32.mrf.mxu0
      %v3216 = vadd.f32 0.0, %v3215
      %3217 = vmatmul.bf16.gmra.mxu0 %v3145
      %v3218 = vpop.f32.mrf.mxu0
      %v3219 = vadd.f32 0.0, %v3218
      %v3220 = vpop.f32.mrf.mxu0
      %v3221 = vadd.f32 0.0, %v3220
      %3222 = vmatmul.bf16.gmra.mxu0 %v3148
      %v3223 = vpop.f32.mrf.mxu0
      %v3224 = vadd.f32 0.0, %v3223
      %v3225 = vpop.f32.mrf.mxu0
      %v3226 = vadd.f32 0.0, %v3225
      %3227 = vmatmul.bf16.gmra.mxu0 %v3151
      %v3228 = vpop.f32.mrf.mxu0
      %v3229 = vadd.f32 0.0, %v3228
      %v3230 = vpop.f32.mrf.mxu0
      %v3231 = vadd.f32 0.0, %v3230
      %3232 = vmatmul.bf16.gmra.mxu0 %v3154
      %v3233 = vpop.f32.mrf.mxu0
      %v3234 = vadd.f32 0.0, %v3233
      %v3235 = vpop.f32.mrf.mxu0
      %v3236 = vadd.f32 0.0, %v3235
      %3237 = vmatmul.bf16.gmra.mxu0 %v3157
      %v3238 = vpop.f32.mrf.mxu0
      %v3239 = vadd.f32 0.0, %v3238
      %v3240 = vpop.f32.mrf.mxu0
      %v3241 = vadd.f32 0.0, %v3240
      %3242 = vmatmul.bf16.gmra.mxu0 %v3160
      %v3243 = vpop.f32.mrf.mxu0
      %v3244 = vadd.f32 0.0, %v3243
      %v3245 = vpop.f32.mrf.mxu0
      %v3246 = vadd.f32 0.0, %v3245
      %3247 = vmatmul.bf16.gmra.mxu0 %v3163
      %v3248 = vpop.f32.mrf.mxu0
      %v3249 = vadd.f32 0.0, %v3248
      %v3250 = vpop.f32.mrf.mxu0
      %v3251 = vadd.f32 0.0, %v3250
      %3252 = vmatmul.bf16.gmra.mxu0 %v3166
      %v3253 = vpop.f32.mrf.mxu0
      %v3254 = vadd.f32 0.0, %v3253
      %v3255 = vpop.f32.mrf.mxu0
      %v3256 = vadd.f32 0.0, %v3255
      %3257 = vmatmul.bf16.gmra.mxu0 %v3169
      %v3258 = vpop.f32.mrf.mxu0
      %v3259 = vadd.f32 0.0, %v3258
      %v3260 = vpop.f32.mrf.mxu0
      %v3261 = vadd.f32 0.0, %v3260
      %3262 = vdwg.mxu0
      %v3263 = vadd.f32 %v2865, %v3184
      %v3264 = vadd.f32 %v2866, %v3186
      %v3265 = vadd.f32 %v2867, %v3189
      %v3266 = vadd.f32 %v2868, %v3191
      %v3267 = vadd.f32 %v2869, %v3194
      %v3268 = vadd.f32 %v2870, %v3196
      %v3269 = vadd.f32 %v2871, %v3199
      %v3270 = vadd.f32 %v2872, %v3201
      %v3271 = vadd.f32 %v2873, %v3204
      %v3272 = vadd.f32 %v2874, %v3206
      %v3273 = vadd.f32 %v2875, %v3209
      %v3274 = vadd.f32 %v2876, %v3211
      %v3275 = vadd.f32 %v2877, %v3214
      %v3276 = vadd.f32 %v2878, %v3216
      %v3277 = vadd.f32 %v2879, %v3219
      %v3278 = vadd.f32 %v2880, %v3221
      %v3279 = vadd.f32 %v2881, %v3224
      %v3280 = vadd.f32 %v2882, %v3226
      %v3281 = vadd.f32 %v2883, %v3229
      %v3282 = vadd.f32 %v2884, %v3231
      %v3283 = vadd.f32 %v2885, %v3234
      %v3284 = vadd.f32 %v2886, %v3236
      %v3285 = vadd.f32 %v2887, %v3239
      %v3286 = vadd.f32 %v2888, %v3241
      %v3287 = vadd.f32 %v2889, %v3244
      %v3288 = vadd.f32 %v2890, %v3246
      %v3289 = vadd.f32 %v2891, %v3249
      %v3290 = vadd.f32 %v2892, %v3251
      %v3291 = vadd.f32 %v2893, %v3254
      %v3292 = vadd.f32 %v2894, %v3256
      %v3293 = vadd.f32 %v2895, %v3259
      %v3294 = vadd.f32 %v2896, %v3261
      %s3295 = scalar_lea.vmem [#allocation2], 24
      %v3296 = vld [vmem:[%s3295] sm:$0xf]
      %v3297 = vld [vmem:[%s3295 + $0x4] sm:$0xf]
      %v3298 = vld [vmem:[%s3295 + $0xc] sm:$0xf]
      %v3299 = vld [vmem:[%s3295 + $0x10] sm:$0xf]
      %v3300 = vld [vmem:[%s3295 + $0x18] sm:$0xf]
      %v3301 = vld [vmem:[%s3295 + $0x1c] sm:$0xf]
      %v3302 = vld [vmem:[%s3295 + $0x24] sm:$0xf]
      %v3303 = vld [vmem:[%s3295 + $0x28] sm:$0xf]
      %v3304 = vld [vmem:[%s3295 + $0x30] sm:$0xf]
      %v3305 = vld [vmem:[%s3295 + $0x34] sm:$0xf]
      %v3306 = vld [vmem:[%s3295 + $0x3c] sm:$0xf]
      %v3307 = vld [vmem:[%s3295 + $0x40] sm:$0xf]
      %v3308 = vld [vmem:[%s3295 + $0x48] sm:$0xf]
      %v3309 = vld [vmem:[%s3295 + $0x4c] sm:$0xf]
      %v3310 = vld [vmem:[%s3295 + $0x54] sm:$0xf]
      %v3311 = vld [vmem:[%s3295 + $0x58] sm:$0xf]
      %v3312 = vld [vmem:[%s3295 + $0x60] sm:$0xf]
      %v3313 = vld [vmem:[%s3295 + $0x64] sm:$0xf]
      %v3314 = vld [vmem:[%s3295 + $0x6c] sm:$0xf]
      %v3315 = vld [vmem:[%s3295 + $0x70] sm:$0xf]
      %v3316 = vld [vmem:[%s3295 + $0x78] sm:$0xf]
      %v3317 = vld [vmem:[%s3295 + $0x7c] sm:$0xf]
      %v3318 = vld [vmem:[%s3295 + $0x84] sm:$0xf]
      %v3319 = vld [vmem:[%s3295 + $0x88] sm:$0xf]
      %v3320 = vld [vmem:[%s3295 + $0x90] sm:$0xf]
      %v3321 = vld [vmem:[%s3295 + $0x94] sm:$0xf]
      %v3322 = vld [vmem:[%s3295 + $0x9c] sm:$0xf]
      %v3323 = vld [vmem:[%s3295 + $0xa0] sm:$0xf]
      %v3324 = vld [vmem:[%s3295 + $0xa8] sm:$0xf]
      %v3325 = vld [vmem:[%s3295 + $0xac] sm:$0xf]
      %v3326 = vld [vmem:[%s3295 + $0xb4] sm:$0xf]
      %v3327 = vld [vmem:[%s3295 + $0xb8] sm:$0xf]
      %s3328 = scalar_lea.vmem %s1, 12
      %v3329 = vld [vmem:[%s3328] sm:$0x3]
      %v3362 = vunpack.c.l.b16 %v3296
      %v3363 = vunpack.c.l.b16 %v3297
      %v3364 = vunpack.c.l.b16 %v3298
      %v3365 = vunpack.c.l.b16 %v3299
      %v3366 = vunpack.c.l.b16 %v3300
      %v3367 = vunpack.c.l.b16 %v3301
      %v3368 = vunpack.c.l.b16 %v3302
      %v3369 = vunpack.c.l.b16 %v3303
      %v3370 = vunpack.c.l.b16 %v3304
      %v3371 = vunpack.c.l.b16 %v3305
      %v3372 = vunpack.c.l.b16 %v3306
      %v3373 = vunpack.c.l.b16 %v3307
      %v3374 = vunpack.c.l.b16 %v3308
      %v3375 = vunpack.c.l.b16 %v3309
      %v3376 = vunpack.c.l.b16 %v3310
      %v3377 = vunpack.c.l.b16 %v3311
      %v3378 = vunpack.c.l.b16 %v3312
      %v3379 = vunpack.c.l.b16 %v3313
      %v3380 = vunpack.c.l.b16 %v3314
      %v3381 = vunpack.c.l.b16 %v3315
      %v3382 = vunpack.c.l.b16 %v3316
      %v3383 = vunpack.c.l.b16 %v3317
      %v3384 = vunpack.c.l.b16 %v3318
      %v3385 = vunpack.c.l.b16 %v3319
      %v3386 = vunpack.c.l.b16 %v3320
      %v3387 = vunpack.c.l.b16 %v3321
      %v3388 = vunpack.c.l.b16 %v3322
      %v3389 = vunpack.c.l.b16 %v3323
      %v3390 = vunpack.c.l.b16 %v3324
      %v3391 = vunpack.c.l.b16 %v3325
      %v3392 = vunpack.c.l.b16 %v3326
      %v3393 = vunpack.c.l.b16 %v3327
      %v3394 = vpack.c.b16 %v3363, %v3362
      %v3395 = vpack.c.b16 %v3365, %v3364
      %v3396 = vpack.c.b16 %v3367, %v3366
      %v3397 = vpack.c.b16 %v3369, %v3368
      %v3398 = vpack.c.b16 %v3371, %v3370
      %v3399 = vpack.c.b16 %v3373, %v3372
      %v3400 = vpack.c.b16 %v3375, %v3374
      %v3401 = vpack.c.b16 %v3377, %v3376
      %v3402 = vpack.c.b16 %v3379, %v3378
      %v3403 = vpack.c.b16 %v3381, %v3380
      %v3404 = vpack.c.b16 %v3383, %v3382
      %v3405 = vpack.c.b16 %v3385, %v3384
      %v3406 = vpack.c.b16 %v3387, %v3386
      %v3407 = vpack.c.b16 %v3389, %v3388
      %v3408 = vpack.c.b16 %v3391, %v3390
      %v3409 = vpack.c.b16 %v3393, %v3392
      %v3411 = vsel %vm1210, %v3394, 0
      %v3414 = vsel %vm1210, %v3395, 0
      %v3417 = vsel %vm1210, %v3396, 0
      %v3420 = vsel %vm1210, %v3397, 0
      %v3423 = vsel %vm1210, %v3398, 0
      %v3426 = vsel %vm1210, %v3399, 0
      %v3429 = vsel %vm1210, %v3400, 0
      %v3432 = vsel %vm1210, %v3401, 0
      %v3435 = vsel %vm1210, %v3402, 0
      %v3438 = vsel %vm1210, %v3403, 0
      %v3441 = vsel %vm1210, %v3404, 0
      %v3444 = vsel %vm1210, %v3405, 0
      %v3447 = vsel %vm1210, %v3406, 0
      %v3450 = vsel %vm1210, %v3407, 0
      %v3453 = vsel %vm1210, %v3408, 0
      %v3456 = vsel %vm1210, %v3409, 0
      %v3459 = vsel %vm1259, %v3329, 0
      %3461 = vmatpush.bf16.msra.mxu0 0
      %3462 = vmatpush.bf16.msra.mxu0 0
      %3463 = vmatpush.bf16.msra.mxu0 0
      %3464 = vmatpush.bf16.msra.mxu0 0
      %3465 = vmatpush.bf16.msra.mxu0 0
      %3466 = vmatpush.bf16.msra.mxu0 0
      %3467 = vmatpush.bf16.msra.mxu0 0
      %3468 = vmatpush.bf16.msra.mxu0 %v3459
      %3469 = vmatmul.bf16.gmra.mxu0 %v3411
      %v3470 = vpop.f32.mrf.mxu0
      %v3471 = vadd.f32 0.0, %v3470
      %v3472 = vpop.f32.mrf.mxu0
      %v3473 = vadd.f32 0.0, %v3472
      %3474 = vmatmul.bf16.gmra.mxu0 %v3414
      %v3475 = vpop.f32.mrf.mxu0
      %v3476 = vadd.f32 0.0, %v3475
      %v3477 = vpop.f32.mrf.mxu0
      %v3478 = vadd.f32 0.0, %v3477
      %3479 = vmatmul.bf16.gmra.mxu0 %v3417
      %v3480 = vpop.f32.mrf.mxu0
      %v3481 = vadd.f32 0.0, %v3480
      %v3482 = vpop.f32.mrf.mxu0
      %v3483 = vadd.f32 0.0, %v3482
      %3484 = vmatmul.bf16.gmra.mxu0 %v3420
      %v3485 = vpop.f32.mrf.mxu0
      %v3486 = vadd.f32 0.0, %v3485
      %v3487 = vpop.f32.mrf.mxu0
      %v3488 = vadd.f32 0.0, %v3487
      %3489 = vmatmul.bf16.gmra.mxu0 %v3423
      %v3490 = vpop.f32.mrf.mxu0
      %v3491 = vadd.f32 0.0, %v3490
      %v3492 = vpop.f32.mrf.mxu0
      %v3493 = vadd.f32 0.0, %v3492
      %3494 = vmatmul.bf16.gmra.mxu0 %v3426
      %v3495 = vpop.f32.mrf.mxu0
      %v3496 = vadd.f32 0.0, %v3495
      %v3497 = vpop.f32.mrf.mxu0
      %v3498 = vadd.f32 0.0, %v3497
      %3499 = vmatmul.bf16.gmra.mxu0 %v3429
      %v3500 = vpop.f32.mrf.mxu0
      %v3501 = vadd.f32 0.0, %v3500
      %v3502 = vpop.f32.mrf.mxu0
      %v3503 = vadd.f32 0.0, %v3502
      %3504 = vmatmul.bf16.gmra.mxu0 %v3432
      %v3505 = vpop.f32.mrf.mxu0
      %v3506 = vadd.f32 0.0, %v3505
      %v3507 = vpop.f32.mrf.mxu0
      %v3508 = vadd.f32 0.0, %v3507
      %3509 = vmatmul.bf16.gmra.mxu0 %v3435
      %v3510 = vpop.f32.mrf.mxu0
      %v3511 = vadd.f32 0.0, %v3510
      %v3512 = vpop.f32.mrf.mxu0
      %v3513 = vadd.f32 0.0, %v3512
      %3514 = vmatmul.bf16.gmra.mxu0 %v3438
      %v3515 = vpop.f32.mrf.mxu0
      %v3516 = vadd.f32 0.0, %v3515
      %v3517 = vpop.f32.mrf.mxu0
      %v3518 = vadd.f32 0.0, %v3517
      %3519 = vmatmul.bf16.gmra.mxu0 %v3441
      %v3520 = vpop.f32.mrf.mxu0
      %v3521 = vadd.f32 0.0, %v3520
      %v3522 = vpop.f32.mrf.mxu0
      %v3523 = vadd.f32 0.0, %v3522
      %3524 = vmatmul.bf16.gmra.mxu0 %v3444
      %v3525 = vpop.f32.mrf.mxu0
      %v3526 = vadd.f32 0.0, %v3525
      %v3527 = vpop.f32.mrf.mxu0
      %v3528 = vadd.f32 0.0, %v3527
      %3529 = vmatmul.bf16.gmra.mxu0 %v3447
      %v3530 = vpop.f32.mrf.mxu0
      %v3531 = vadd.f32 0.0, %v3530
      %v3532 = vpop.f32.mrf.mxu0
      %v3533 = vadd.f32 0.0, %v3532
      %3534 = vmatmul.bf16.gmra.mxu0 %v3450
      %v3535 = vpop.f32.mrf.mxu0
      %v3536 = vadd.f32 0.0, %v3535
      %v3537 = vpop.f32.mrf.mxu0
      %v3538 = vadd.f32 0.0, %v3537
      %3539 = vmatmul.bf16.gmra.mxu0 %v3453
      %v3540 = vpop.f32.mrf.mxu0
      %v3541 = vadd.f32 0.0, %v3540
      %v3542 = vpop.f32.mrf.mxu0
      %v3543 = vadd.f32 0.0, %v3542
      %3544 = vmatmul.bf16.gmra.mxu0 %v3456
      %v3545 = vpop.f32.mrf.mxu0
      %v3546 = vadd.f32 0.0, %v3545
      %v3547 = vpop.f32.mrf.mxu0
      %v3548 = vadd.f32 0.0, %v3547
      %3549 = vdwg.mxu0
      %v3550 = vadd.f32 %v3263, %v3471
      %v3551 = vadd.f32 %v3264, %v3473
      %v3552 = vadd.f32 %v3265, %v3476
      %v3553 = vadd.f32 %v3266, %v3478
      %v3554 = vadd.f32 %v3267, %v3481
      %v3555 = vadd.f32 %v3268, %v3483
      %v3556 = vadd.f32 %v3269, %v3486
      %v3557 = vadd.f32 %v3270, %v3488
      %v3558 = vadd.f32 %v3271, %v3491
      %v3559 = vadd.f32 %v3272, %v3493
      %v3560 = vadd.f32 %v3273, %v3496
      %v3561 = vadd.f32 %v3274, %v3498
      %v3562 = vadd.f32 %v3275, %v3501
      %v3563 = vadd.f32 %v3276, %v3503
      %v3564 = vadd.f32 %v3277, %v3506
      %v3565 = vadd.f32 %v3278, %v3508
      %v3566 = vadd.f32 %v3279, %v3511
      %v3567 = vadd.f32 %v3280, %v3513
      %v3568 = vadd.f32 %v3281, %v3516
      %v3569 = vadd.f32 %v3282, %v3518
      %v3570 = vadd.f32 %v3283, %v3521
      %v3571 = vadd.f32 %v3284, %v3523
      %v3572 = vadd.f32 %v3285, %v3526
      %v3573 = vadd.f32 %v3286, %v3528
      %v3574 = vadd.f32 %v3287, %v3531
      %v3575 = vadd.f32 %v3288, %v3533
      %v3576 = vadd.f32 %v3289, %v3536
      %v3577 = vadd.f32 %v3290, %v3538
      %v3578 = vadd.f32 %v3291, %v3541
      %v3579 = vadd.f32 %v3292, %v3543
      %v3580 = vadd.f32 %v3293, %v3546
      %v3581 = vadd.f32 %v3294, %v3548
      %v3582 = vld [vmem:[%s3295] sm:$0xf]
      %v3583 = vld [vmem:[%s3295 + $0x4] sm:$0xf]
      %v3584 = vld [vmem:[%s3295 + $0x8] sm:$0x1]
      %v3585 = vld [vmem:[%s3295 + $0xc] sm:$0xf]
      %v3586 = vld [vmem:[%s3295 + $0x10] sm:$0xf]
      %v3587 = vld [vmem:[%s3295 + $0x14] sm:$0x1]
      %v3588 = vld [vmem:[%s3295 + $0x18] sm:$0xf]
      %v3589 = vld [vmem:[%s3295 + $0x1c] sm:$0xf]
      %v3590 = vld [vmem:[%s3295 + $0x20] sm:$0x1]
      %v3591 = vld [vmem:[%s3295 + $0x24] sm:$0xf]
      %v3592 = vld [vmem:[%s3295 + $0x28] sm:$0xf]
      %v3593 = vld [vmem:[%s3295 + $0x2c] sm:$0x1]
      %v3594 = vld [vmem:[%s3295 + $0x30] sm:$0xf]
      %v3595 = vld [vmem:[%s3295 + $0x34] sm:$0xf]
      %v3596 = vld [vmem:[%s3295 + $0x38] sm:$0x1]
      %v3597 = vld [vmem:[%s3295 + $0x3c] sm:$0xf]
      %v3598 = vld [vmem:[%s3295 + $0x40] sm:$0xf]
      %v3599 = vld [vmem:[%s3295 + $0x44] sm:$0x1]
      %v3600 = vld [vmem:[%s3295 + $0x48] sm:$0xf]
      %v3601 = vld [vmem:[%s3295 + $0x4c] sm:$0xf]
      %v3602 = vld [vmem:[%s3295 + $0x50] sm:$0x1]
      %v3603 = vld [vmem:[%s3295 + $0x54] sm:$0xf]
      %v3604 = vld [vmem:[%s3295 + $0x58] sm:$0xf]
      %v3605 = vld [vmem:[%s3295 + $0x5c] sm:$0x1]
      %v3606 = vld [vmem:[%s3295 + $0x60] sm:$0xf]
      %v3607 = vld [vmem:[%s3295 + $0x64] sm:$0xf]
      %v3608 = vld [vmem:[%s3295 + $0x68] sm:$0x1]
      %v3609 = vld [vmem:[%s3295 + $0x6c] sm:$0xf]
      %v3610 = vld [vmem:[%s3295 + $0x70] sm:$0xf]
      %v3611 = vld [vmem:[%s3295 + $0x74] sm:$0x1]
      %v3612 = vld [vmem:[%s3295 + $0x78] sm:$0xf]
      %v3613 = vld [vmem:[%s3295 + $0x7c] sm:$0xf]
      %v3614 = vld [vmem:[%s3295 + $0x80] sm:$0x1]
      %v3615 = vld [vmem:[%s3295 + $0x84] sm:$0xf]
      %v3616 = vld [vmem:[%s3295 + $0x88] sm:$0xf]
      %v3617 = vld [vmem:[%s3295 + $0x8c] sm:$0x1]
      %v3618 = vld [vmem:[%s3295 + $0x90] sm:$0xf]
      %v3619 = vld [vmem:[%s3295 + $0x94] sm:$0xf]
      %v3620 = vld [vmem:[%s3295 + $0x98] sm:$0x1]
      %v3621 = vld [vmem:[%s3295 + $0x9c] sm:$0xf]
      %v3622 = vld [vmem:[%s3295 + $0xa0] sm:$0xf]
      %v3623 = vld [vmem:[%s3295 + $0xa4] sm:$0x1]
      %v3624 = vld [vmem:[%s3295 + $0xa8] sm:$0xf]
      %v3625 = vld [vmem:[%s3295 + $0xac] sm:$0xf]
      %v3626 = vld [vmem:[%s3295 + $0xb0] sm:$0x1]
      %v3627 = vld [vmem:[%s3295 + $0xb4] sm:$0xf]
      %v3628 = vld [vmem:[%s3295 + $0xb8] sm:$0xf]
      %v3629 = vld [vmem:[%s3295 + $0xbc] sm:$0x1]
      %v3631 = vshrl.u32 %v3582, 16
      %v3633 = vrot.slane %v3631, 4
      %v3634 = vshll.u32 %v3582, 16
      %v3636 = vrot.slane %v3634, 5
      %v3637 = vor.u32 %v3633, %v3636
      %v3638 = vrot.slane %v3637, 4
      %v3640 = vshll.u32 %v3583, 16
      %v3642 = vrot.slane %v3640, 5
      %v3643 = vsel %vm775, %v3638, %v3642
      %v3644 = vshrl.u32 %v3583, 16
      %v3646 = vrot.slane %v3644, 4
      %v3647 = vor.u32 %v3646, %v3642
      %v3648 = vrot.slane %v3647, 4
      %v3650 = vshll.u32 %v3584, 16
      %v3652 = vrot.slane %v3650, 5
      %v3653 = vsel %vm775, %v3648, %v3652
      %v3655 = vshrl.u32 %v3585, 16
      %v3657 = vrot.slane %v3655, 4
      %v3658 = vshll.u32 %v3585, 16
      %v3660 = vrot.slane %v3658, 5
      %v3661 = vor.u32 %v3657, %v3660
      %v3662 = vrot.slane %v3661, 4
      %v3664 = vshll.u32 %v3586, 16
      %v3666 = vrot.slane %v3664, 5
      %v3667 = vsel %vm775, %v3662, %v3666
      %v3668 = vshrl.u32 %v3586, 16
      %v3670 = vrot.slane %v3668, 4
      %v3671 = vor.u32 %v3670, %v3666
      %v3672 = vrot.slane %v3671, 4
      %v3674 = vshll.u32 %v3587, 16
      %v3676 = vrot.slane %v3674, 5
      %v3677 = vsel %vm775, %v3672, %v3676
      %v3679 = vshrl.u32 %v3588, 16
      %v3681 = vrot.slane %v3679, 4
      %v3682 = vshll.u32 %v3588, 16
      %v3684 = vrot.slane %v3682, 5
      %v3685 = vor.u32 %v3681, %v3684
      %v3686 = vrot.slane %v3685, 4
      %v3688 = vshll.u32 %v3589, 16
      %v3690 = vrot.slane %v3688, 5
      %v3691 = vsel %vm775, %v3686, %v3690
      %v3692 = vshrl.u32 %v3589, 16
      %v3694 = vrot.slane %v3692, 4
      %v3695 = vor.u32 %v3694, %v3690
      %v3696 = vrot.slane %v3695, 4
      %v3698 = vshll.u32 %v3590, 16
      %v3700 = vrot.slane %v3698, 5
      %v3701 = vsel %vm775, %v3696, %v3700
      %v3703 = vshrl.u32 %v3591, 16
      %v3705 = vrot.slane %v3703, 4
      %v3706 = vshll.u32 %v3591, 16
      %v3708 = vrot.slane %v3706, 5
      %v3709 = vor.u32 %v3705, %v3708
      %v3710 = vrot.slane %v3709, 4
      %v3712 = vshll.u32 %v3592, 16
      %v3714 = vrot.slane %v3712, 5
      %v3715 = vsel %vm775, %v3710, %v3714
      %v3716 = vshrl.u32 %v3592, 16
      %v3718 = vrot.slane %v3716, 4
      %v3719 = vor.u32 %v3718, %v3714
      %v3720 = vrot.slane %v3719, 4
      %v3722 = vshll.u32 %v3593, 16
      %v3724 = vrot.slane %v3722, 5
      %v3725 = vsel %vm775, %v3720, %v3724
      %v3727 = vshrl.u32 %v3594, 16
      %v3729 = vrot.slane %v3727, 4
      %v3730 = vshll.u32 %v3594, 16
      %v3732 = vrot.slane %v3730, 5
      %v3733 = vor.u32 %v3729, %v3732
      %v3734 = vrot.slane %v3733, 4
      %v3736 = vshll.u32 %v3595, 16
      %v3738 = vrot.slane %v3736, 5
      %v3739 = vsel %vm775, %v3734, %v3738
      %v3740 = vshrl.u32 %v3595, 16
      %v3742 = vrot.slane %v3740, 4
      %v3743 = vor.u32 %v3742, %v3738
      %v3744 = vrot.slane %v3743, 4
      %v3746 = vshll.u32 %v3596, 16
      %v3748 = vrot.slane %v3746, 5
      %v3749 = vsel %vm775, %v3744, %v3748
      %v3751 = vshrl.u32 %v3597, 16
      %v3753 = vrot.slane %v3751, 4
      %v3754 = vshll.u32 %v3597, 16
      %v3756 = vrot.slane %v3754, 5
      %v3757 = vor.u32 %v3753, %v3756
      %v3758 = vrot.slane %v3757, 4
      %v3760 = vshll.u32 %v3598, 16
      %v3762 = vrot.slane %v3760, 5
      %v3763 = vsel %vm775, %v3758, %v3762
      %v3764 = vshrl.u32 %v3598, 16
      %v3766 = vrot.slane %v3764, 4
      %v3767 = vor.u32 %v3766, %v3762
      %v3768 = vrot.slane %v3767, 4
      %v3770 = vshll.u32 %v3599, 16
      %v3772 = vrot.slane %v3770, 5
      %v3773 = vsel %vm775, %v3768, %v3772
      %v3775 = vshrl.u32 %v3600, 16
      %v3777 = vrot.slane %v3775, 4
      %v3778 = vshll.u32 %v3600, 16
      %v3780 = vrot.slane %v3778, 5
      %v3781 = vor.u32 %v3777, %v3780
      %v3782 = vrot.slane %v3781, 4
      %v3784 = vshll.u32 %v3601, 16
      %v3786 = vrot.slane %v3784, 5
      %v3787 = vsel %vm775, %v3782, %v3786
      %v3788 = vshrl.u32 %v3601, 16
      %v3790 = vrot.slane %v3788, 4
      %v3791 = vor.u32 %v3790, %v3786
      %v3792 = vrot.slane %v3791, 4
      %v3794 = vshll.u32 %v3602, 16
      %v3796 = vrot.slane %v3794, 5
      %v3797 = vsel %vm775, %v3792, %v3796
      %v3799 = vshrl.u32 %v3603, 16
      %v3801 = vrot.slane %v3799, 4
      %v3802 = vshll.u32 %v3603, 16
      %v3804 = vrot.slane %v3802, 5
      %v3805 = vor.u32 %v3801, %v3804
      %v3806 = vrot.slane %v3805, 4
      %v3808 = vshll.u32 %v3604, 16
      %v3810 = vrot.slane %v3808, 5
      %v3811 = vsel %vm775, %v3806, %v3810
      %v3812 = vshrl.u32 %v3604, 16
      %v3814 = vrot.slane %v3812, 4
      %v3815 = vor.u32 %v3814, %v3810
      %v3816 = vrot.slane %v3815, 4
      %v3818 = vshll.u32 %v3605, 16
      %v3820 = vrot.slane %v3818, 5
      %v3821 = vsel %vm775, %v3816, %v3820
      %v3823 = vshrl.u32 %v3606, 16
      %v3825 = vrot.slane %v3823, 4
      %v3826 = vshll.u32 %v3606, 16
      %v3828 = vrot.slane %v3826, 5
      %v3829 = vor.u32 %v3825, %v3828
      %v3830 = vrot.slane %v3829, 4
      %v3832 = vshll.u32 %v3607, 16
      %v3834 = vrot.slane %v3832, 5
      %v3835 = vsel %vm775, %v3830, %v3834
      %v3836 = vshrl.u32 %v3607, 16
      %v3838 = vrot.slane %v3836, 4
      %v3839 = vor.u32 %v3838, %v3834
      %v3840 = vrot.slane %v3839, 4
      %v3842 = vshll.u32 %v3608, 16
      %v3844 = vrot.slane %v3842, 5
      %v3845 = vsel %vm775, %v3840, %v3844
      %v3847 = vshrl.u32 %v3609, 16
      %v3849 = vrot.slane %v3847, 4
      %v3850 = vshll.u32 %v3609, 16
      %v3852 = vrot.slane %v3850, 5
      %v3853 = vor.u32 %v3849, %v3852
      %v3854 = vrot.slane %v3853, 4
      %v3856 = vshll.u32 %v3610, 16
      %v3858 = vrot.slane %v3856, 5
      %v3859 = vsel %vm775, %v3854, %v3858
      %v3860 = vshrl.u32 %v3610, 16
      %v3862 = vrot.slane %v3860, 4
      %v3863 = vor.u32 %v3862, %v3858
      %v3864 = vrot.slane %v3863, 4
      %v3866 = vshll.u32 %v3611, 16
      %v3868 = vrot.slane %v3866, 5
      %v3869 = vsel %vm775, %v3864, %v3868
      %v3871 = vshrl.u32 %v3612, 16
      %v3873 = vrot.slane %v3871, 4
      %v3874 = vshll.u32 %v3612, 16
      %v3876 = vrot.slane %v3874, 5
      %v3877 = vor.u32 %v3873, %v3876
      %v3878 = vrot.slane %v3877, 4
      %v3880 = vshll.u32 %v3613, 16
      %v3882 = vrot.slane %v3880, 5
      %v3883 = vsel %vm775, %v3878, %v3882
      %v3884 = vshrl.u32 %v3613, 16
      %v3886 = vrot.slane %v3884, 4
      %v3887 = vor.u32 %v3886, %v3882
      %v3888 = vrot.slane %v3887, 4
      %v3890 = vshll.u32 %v3614, 16
      %v3892 = vrot.slane %v3890, 5
      %v3893 = vsel %vm775, %v3888, %v3892
      %v3895 = vshrl.u32 %v3615, 16
      %v3897 = vrot.slane %v3895, 4
      %v3898 = vshll.u32 %v3615, 16
      %v3900 = vrot.slane %v3898, 5
      %v3901 = vor.u32 %v3897, %v3900
      %v3902 = vrot.slane %v3901, 4
      %v3904 = vshll.u32 %v3616, 16
      %v3906 = vrot.slane %v3904, 5
      %v3907 = vsel %vm775, %v3902, %v3906
      %v3908 = vshrl.u32 %v3616, 16
      %v3910 = vrot.slane %v3908, 4
      %v3911 = vor.u32 %v3910, %v3906
      %v3912 = vrot.slane %v3911, 4
      %v3914 = vshll.u32 %v3617, 16
      %v3916 = vrot.slane %v3914, 5
      %v3917 = vsel %vm775, %v3912, %v3916
      %v3919 = vshrl.u32 %v3618, 16
      %v3921 = vrot.slane %v3919, 4
      %v3922 = vshll.u32 %v3618, 16
      %v3924 = vrot.slane %v3922, 5
      %v3925 = vor.u32 %v3921, %v3924
      %v3926 = vrot.slane %v3925, 4
      %v3928 = vshll.u32 %v3619, 16
      %v3930 = vrot.slane %v3928, 5
      %v3931 = vsel %vm775, %v3926, %v3930
      %v3932 = vshrl.u32 %v3619, 16
      %v3934 = vrot.slane %v3932, 4
      %v3935 = vor.u32 %v3934, %v3930
      %v3936 = vrot.slane %v3935, 4
      %v3938 = vshll.u32 %v3620, 16
      %v3940 = vrot.slane %v3938, 5
      %v3941 = vsel %vm775, %v3936, %v3940
      %v3943 = vshrl.u32 %v3621, 16
      %v3945 = vrot.slane %v3943, 4
      %v3946 = vshll.u32 %v3621, 16
      %v3948 = vrot.slane %v3946, 5
      %v3949 = vor.u32 %v3945, %v3948
      %v3950 = vrot.slane %v3949, 4
      %v3952 = vshll.u32 %v3622, 16
      %v3954 = vrot.slane %v3952, 5
      %v3955 = vsel %vm775, %v3950, %v3954
      %v3956 = vshrl.u32 %v3622, 16
      %v3958 = vrot.slane %v3956, 4
      %v3959 = vor.u32 %v3958, %v3954
      %v3960 = vrot.slane %v3959, 4
      %v3962 = vshll.u32 %v3623, 16
      %v3964 = vrot.slane %v3962, 5
      %v3965 = vsel %vm775, %v3960, %v3964
      %v3967 = vshrl.u32 %v3624, 16
      %v3969 = vrot.slane %v3967, 4
      %v3970 = vshll.u32 %v3624, 16
      %v3972 = vrot.slane %v3970, 5
      %v3973 = vor.u32 %v3969, %v3972
      %v3974 = vrot.slane %v3973, 4
      %v3976 = vshll.u32 %v3625, 16
      %v3978 = vrot.slane %v3976, 5
      %v3979 = vsel %vm775, %v3974, %v3978
      %v3980 = vshrl.u32 %v3625, 16
      %v3982 = vrot.slane %v3980, 4
      %v3983 = vor.u32 %v3982, %v3978
      %v3984 = vrot.slane %v3983, 4
      %v3986 = vshll.u32 %v3626, 16
      %v3988 = vrot.slane %v3986, 5
      %v3989 = vsel %vm775, %v3984, %v3988
      %v3991 = vshrl.u32 %v3627, 16
      %v3993 = vrot.slane %v3991, 4
      %v3994 = vshll.u32 %v3627, 16
      %v3996 = vrot.slane %v3994, 5
      %v3997 = vor.u32 %v3993, %v3996
      %v3998 = vrot.slane %v3997, 4
      %v4000 = vshll.u32 %v3628, 16
      %v4002 = vrot.slane %v4000, 5
      %v4003 = vsel %vm775, %v3998, %v4002
      %v4004 = vshrl.u32 %v3628, 16
      %v4006 = vrot.slane %v4004, 4
      %v4007 = vor.u32 %v4006, %v4002
      %v4008 = vrot.slane %v4007, 4
      %v4010 = vshll.u32 %v3629, 16
      %v4012 = vrot.slane %v4010, 5
      %v4013 = vsel %vm775, %v4008, %v4012
      %s4014 = scalar_lea.vmem %s1, 14
      %v4015 = vld [vmem:[%s4014] sm:$0x3]
      %v4016 = vunpack.c.l.b16 %v3643
      %v4017 = vunpack.c.l.b16 %v3653
      %v4018 = vunpack.c.l.b16 %v3667
      %v4019 = vunpack.c.l.b16 %v3677
      %v4020 = vunpack.c.l.b16 %v3691
      %v4021 = vunpack.c.l.b16 %v3701
      %v4022 = vunpack.c.l.b16 %v3715
      %v4023 = vunpack.c.l.b16 %v3725
      %v4024 = vunpack.c.l.b16 %v3739
      %v4025 = vunpack.c.l.b16 %v3749
      %v4026 = vunpack.c.l.b16 %v3763
      %v4027 = vunpack.c.l.b16 %v3773
      %v4028 = vunpack.c.l.b16 %v3787
      %v4029 = vunpack.c.l.b16 %v3797
      %v4030 = vunpack.c.l.b16 %v3811
      %v4031 = vunpack.c.l.b16 %v3821
      %v4032 = vunpack.c.l.b16 %v3835
      %v4033 = vunpack.c.l.b16 %v3845
      %v4034 = vunpack.c.l.b16 %v3859
      %v4035 = vunpack.c.l.b16 %v3869
      %v4036 = vunpack.c.l.b16 %v3883
      %v4037 = vunpack.c.l.b16 %v3893
      %v4038 = vunpack.c.l.b16 %v3907
      %v4039 = vunpack.c.l.b16 %v3917
      %v4040 = vunpack.c.l.b16 %v3931
      %v4041 = vunpack.c.l.b16 %v3941
      %v4042 = vunpack.c.l.b16 %v3955
      %v4043 = vunpack.c.l.b16 %v3965
      %v4044 = vunpack.c.l.b16 %v3979
      %v4045 = vunpack.c.l.b16 %v3989
      %v4046 = vunpack.c.l.b16 %v4003
      %v4047 = vunpack.c.l.b16 %v4013
      %v4048 = vpack.c.b16 %v4017, %v4016
      %v4049 = vpack.c.b16 %v4019, %v4018
      %v4050 = vpack.c.b16 %v4021, %v4020
      %v4051 = vpack.c.b16 %v4023, %v4022
      %v4052 = vpack.c.b16 %v4025, %v4024
      %v4053 = vpack.c.b16 %v4027, %v4026
      %v4054 = vpack.c.b16 %v4029, %v4028
      %v4055 = vpack.c.b16 %v4031, %v4030
      %v4056 = vpack.c.b16 %v4033, %v4032
      %v4057 = vpack.c.b16 %v4035, %v4034
      %v4058 = vpack.c.b16 %v4037, %v4036
      %v4059 = vpack.c.b16 %v4039, %v4038
      %v4060 = vpack.c.b16 %v4041, %v4040
      %v4061 = vpack.c.b16 %v4043, %v4042
      %v4062 = vpack.c.b16 %v4045, %v4044
      %v4063 = vpack.c.b16 %v4047, %v4046
      %v4065 = vsel %vm1210, %v4048, 0
      %v4068 = vsel %vm1210, %v4049, 0
      %v4071 = vsel %vm1210, %v4050, 0
      %v4074 = vsel %vm1210, %v4051, 0
      %v4077 = vsel %vm1210, %v4052, 0
      %v4080 = vsel %vm1210, %v4053, 0
      %v4083 = vsel %vm1210, %v4054, 0
      %v4086 = vsel %vm1210, %v4055, 0
      %v4089 = vsel %vm1210, %v4056, 0
      %v4092 = vsel %vm1210, %v4057, 0
      %v4095 = vsel %vm1210, %v4058, 0
      %v4098 = vsel %vm1210, %v4059, 0
      %v4101 = vsel %vm1210, %v4060, 0
      %v4104 = vsel %vm1210, %v4061, 0
      %v4107 = vsel %vm1210, %v4062, 0
      %v4110 = vsel %vm1210, %v4063, 0
      %v4113 = vsel %vm1259, %v4015, 0
      %4115 = vmatpush.bf16.msra.mxu0 0
      %4116 = vmatpush.bf16.msra.mxu0 0
      %4117 = vmatpush.bf16.msra.mxu0 0
      %4118 = vmatpush.bf16.msra.mxu0 0
      %4119 = vmatpush.bf16.msra.mxu0 0
      %4120 = vmatpush.bf16.msra.mxu0 0
      %4121 = vmatpush.bf16.msra.mxu0 0
      %4122 = vmatpush.bf16.msra.mxu0 %v4113
      %4123 = vmatmul.bf16.gmra.mxu0 %v4065
      %v4124 = vpop.f32.mrf.mxu0
      %v4125 = vadd.f32 0.0, %v4124
      %v4126 = vpop.f32.mrf.mxu0
      %v4127 = vadd.f32 0.0, %v4126
      %4128 = vmatmul.bf16.gmra.mxu0 %v4068
      %v4129 = vpop.f32.mrf.mxu0
      %v4130 = vadd.f32 0.0, %v4129
      %v4131 = vpop.f32.mrf.mxu0
      %v4132 = vadd.f32 0.0, %v4131
      %4133 = vmatmul.bf16.gmra.mxu0 %v4071
      %v4134 = vpop.f32.mrf.mxu0
      %v4135 = vadd.f32 0.0, %v4134
      %v4136 = vpop.f32.mrf.mxu0
      %v4137 = vadd.f32 0.0, %v4136
      %4138 = vmatmul.bf16.gmra.mxu0 %v4074
      %v4139 = vpop.f32.mrf.mxu0
      %v4140 = vadd.f32 0.0, %v4139
      %v4141 = vpop.f32.mrf.mxu0
      %v4142 = vadd.f32 0.0, %v4141
      %4143 = vmatmul.bf16.gmra.mxu0 %v4077
      %v4144 = vpop.f32.mrf.mxu0
      %v4145 = vadd.f32 0.0, %v4144
      %v4146 = vpop.f32.mrf.mxu0
      %v4147 = vadd.f32 0.0, %v4146
      %4148 = vmatmul.bf16.gmra.mxu0 %v4080
      %v4149 = vpop.f32.mrf.mxu0
      %v4150 = vadd.f32 0.0, %v4149
      %v4151 = vpop.f32.mrf.mxu0
      %v4152 = vadd.f32 0.0, %v4151
      %4153 = vmatmul.bf16.gmra.mxu0 %v4083
      %v4154 = vpop.f32.mrf.mxu0
      %v4155 = vadd.f32 0.0, %v4154
      %v4156 = vpop.f32.mrf.mxu0
      %v4157 = vadd.f32 0.0, %v4156
      %4158 = vmatmul.bf16.gmra.mxu0 %v4086
      %v4159 = vpop.f32.mrf.mxu0
      %v4160 = vadd.f32 0.0, %v4159
      %v4161 = vpop.f32.mrf.mxu0
      %v4162 = vadd.f32 0.0, %v4161
      %4163 = vmatmul.bf16.gmra.mxu0 %v4089
      %v4164 = vpop.f32.mrf.mxu0
      %v4165 = vadd.f32 0.0, %v4164
      %v4166 = vpop.f32.mrf.mxu0
      %v4167 = vadd.f32 0.0, %v4166
      %4168 = vmatmul.bf16.gmra.mxu0 %v4092
      %v4169 = vpop.f32.mrf.mxu0
      %v4170 = vadd.f32 0.0, %v4169
      %v4171 = vpop.f32.mrf.mxu0
      %v4172 = vadd.f32 0.0, %v4171
      %4173 = vmatmul.bf16.gmra.mxu0 %v4095
      %v4174 = vpop.f32.mrf.mxu0
      %v4175 = vadd.f32 0.0, %v4174
      %v4176 = vpop.f32.mrf.mxu0
      %v4177 = vadd.f32 0.0, %v4176
      %4178 = vmatmul.bf16.gmra.mxu0 %v4098
      %v4179 = vpop.f32.mrf.mxu0
      %v4180 = vadd.f32 0.0, %v4179
      %v4181 = vpop.f32.mrf.mxu0
      %v4182 = vadd.f32 0.0, %v4181
      %4183 = vmatmul.bf16.gmra.mxu0 %v4101
      %v4184 = vpop.f32.mrf.mxu0
      %v4185 = vadd.f32 0.0, %v4184
      %v4186 = vpop.f32.mrf.mxu0
      %v4187 = vadd.f32 0.0, %v4186
      %4188 = vmatmul.bf16.gmra.mxu0 %v4104
      %v4189 = vpop.f32.mrf.mxu0
      %v4190 = vadd.f32 0.0, %v4189
      %v4191 = vpop.f32.mrf.mxu0
      %v4192 = vadd.f32 0.0, %v4191
      %4193 = vmatmul.bf16.gmra.mxu0 %v4107
      %v4194 = vpop.f32.mrf.mxu0
      %v4195 = vadd.f32 0.0, %v4194
      %v4196 = vpop.f32.mrf.mxu0
      %v4197 = vadd.f32 0.0, %v4196
      %4198 = vmatmul.bf16.gmra.mxu0 %v4110
      %v4199 = vpop.f32.mrf.mxu0
      %v4200 = vadd.f32 0.0, %v4199
      %v4201 = vpop.f32.mrf.mxu0
      %v4202 = vadd.f32 0.0, %v4201
      %4203 = vdwg.mxu0
      %v4204 = vadd.f32 %v3550, %v4125
      %v4205 = vadd.f32 %v3551, %v4127
      %v4206 = vadd.f32 %v3552, %v4130
      %v4207 = vadd.f32 %v3553, %v4132
      %v4208 = vadd.f32 %v3554, %v4135
      %v4209 = vadd.f32 %v3555, %v4137
      %v4210 = vadd.f32 %v3556, %v4140
      %v4211 = vadd.f32 %v3557, %v4142
      %v4212 = vadd.f32 %v3558, %v4145
      %v4213 = vadd.f32 %v3559, %v4147
      %v4214 = vadd.f32 %v3560, %v4150
      %v4215 = vadd.f32 %v3561, %v4152
      %v4216 = vadd.f32 %v3562, %v4155
      %v4217 = vadd.f32 %v3563, %v4157
      %v4218 = vadd.f32 %v3564, %v4160
      %v4219 = vadd.f32 %v3565, %v4162
      %v4220 = vadd.f32 %v3566, %v4165
      %v4221 = vadd.f32 %v3567, %v4167
      %v4222 = vadd.f32 %v3568, %v4170
      %v4223 = vadd.f32 %v3569, %v4172
      %v4224 = vadd.f32 %v3570, %v4175
      %v4225 = vadd.f32 %v3571, %v4177
      %v4226 = vadd.f32 %v3572, %v4180
      %v4227 = vadd.f32 %v3573, %v4182
      %v4228 = vadd.f32 %v3574, %v4185
      %v4229 = vadd.f32 %v3575, %v4187
      %v4230 = vadd.f32 %v3576, %v4190
      %v4231 = vadd.f32 %v3577, %v4192
      %v4232 = vadd.f32 %v3578, %v4195
      %v4233 = vadd.f32 %v3579, %v4197
      %v4234 = vadd.f32 %v3580, %v4200
      %v4235 = vadd.f32 %v3581, %v4202
      %v4236 = vld [vmem:[%s3295] sm:$0xe]
      %v4237 = vld [vmem:[%s3295 + $0xc] sm:$0xe]
      %v4238 = vld [vmem:[%s3295 + $0x18] sm:$0xe]
      %v4239 = vld [vmem:[%s3295 + $0x24] sm:$0xe]
      %v4240 = vld [vmem:[%s3295 + $0x30] sm:$0xe]
      %v4241 = vld [vmem:[%s3295 + $0x3c] sm:$0xe]
      %v4242 = vld [vmem:[%s3295 + $0x48] sm:$0xe]
      %v4243 = vld [vmem:[%s3295 + $0x54] sm:$0xe]
      %v4244 = vld [vmem:[%s3295 + $0x60] sm:$0xe]
      %v4245 = vld [vmem:[%s3295 + $0x6c] sm:$0xe]
      %v4246 = vld [vmem:[%s3295 + $0x78] sm:$0xe]
      %v4247 = vld [vmem:[%s3295 + $0x84] sm:$0xe]
      %v4248 = vld [vmem:[%s3295 + $0x90] sm:$0xe]
      %v4249 = vld [vmem:[%s3295 + $0x9c] sm:$0xe]
      %v4250 = vld [vmem:[%s3295 + $0xa8] sm:$0xe]
      %v4251 = vld [vmem:[%s3295 + $0xb4] sm:$0xe]
      %v4300 = vrot.slane %v4236, 5
      %v4301 = vrot.slane %v4300, 4
      %v4302 = vrot.slane %v3583, 5
      %v4303 = vsel %vm1622, %v4301, %v4302
      %v4304 = vrot.slane %v4302, 4
      %v4305 = vrot.slane %v3584, 5
      %v4306 = vsel %vm1622, %v4304, %v4305
      %v4307 = vrot.slane %v4237, 5
      %v4308 = vrot.slane %v4307, 4
      %v4309 = vrot.slane %v3586, 5
      %v4310 = vsel %vm1622, %v4308, %v4309
      %v4311 = vrot.slane %v4309, 4
      %v4312 = vrot.slane %v3587, 5
      %v4313 = vsel %vm1622, %v4311, %v4312
      %v4314 = vrot.slane %v4238, 5
      %v4315 = vrot.slane %v4314, 4
      %v4316 = vrot.slane %v3589, 5
      %v4317 = vsel %vm1622, %v4315, %v4316
      %v4318 = vrot.slane %v4316, 4
      %v4319 = vrot.slane %v3590, 5
      %v4320 = vsel %vm1622, %v4318, %v4319
      %v4321 = vrot.slane %v4239, 5
      %v4322 = vrot.slane %v4321, 4
      %v4323 = vrot.slane %v3592, 5
      %v4324 = vsel %vm1622, %v4322, %v4323
      %v4325 = vrot.slane %v4323, 4
      %v4326 = vrot.slane %v3593, 5
      %v4327 = vsel %vm1622, %v4325, %v4326
      %v4328 = vrot.slane %v4240, 5
      %v4329 = vrot.slane %v4328, 4
      %v4330 = vrot.slane %v3595, 5
      %v4331 = vsel %vm1622, %v4329, %v4330
      %v4332 = vrot.slane %v4330, 4
      %v4333 = vrot.slane %v3596, 5
      %v4334 = vsel %vm1622, %v4332, %v4333
      %v4335 = vrot.slane %v4241, 5
      %v4336 = vrot.slane %v4335, 4
      %v4337 = vrot.slane %v3598, 5
      %v4338 = vsel %vm1622, %v4336, %v4337
      %v4339 = vrot.slane %v4337, 4
      %v4340 = vrot.slane %v3599, 5
      %v4341 = vsel %vm1622, %v4339, %v4340
      %v4342 = vrot.slane %v4242, 5
      %v4343 = vrot.slane %v4342, 4
      %v4344 = vrot.slane %v3601, 5
      %v4345 = vsel %vm1622, %v4343, %v4344
      %v4346 = vrot.slane %v4344, 4
      %v4347 = vrot.slane %v3602, 5
      %v4348 = vsel %vm1622, %v4346, %v4347
      %v4349 = vrot.slane %v4243, 5
      %v4350 = vrot.slane %v4349, 4
      %v4351 = vrot.slane %v3604, 5
      %v4352 = vsel %vm1622, %v4350, %v4351
      %v4353 = vrot.slane %v4351, 4
      %v4354 = vrot.slane %v3605, 5
      %v4355 = vsel %vm1622, %v4353, %v4354
      %v4356 = vrot.slane %v4244, 5
      %v4357 = vrot.slane %v4356, 4
      %v4358 = vrot.slane %v3607, 5
      %v4359 = vsel %vm1622, %v4357, %v4358
      %v4360 = vrot.slane %v4358, 4
      %v4361 = vrot.slane %v3608, 5
      %v4362 = vsel %vm1622, %v4360, %v4361
      %v4363 = vrot.slane %v4245, 5
      %v4364 = vrot.slane %v4363, 4
      %v4365 = vrot.slane %v3610, 5
      %v4366 = vsel %vm1622, %v4364, %v4365
      %v4367 = vrot.slane %v4365, 4
      %v4368 = vrot.slane %v3611, 5
      %v4369 = vsel %vm1622, %v4367, %v4368
      %v4370 = vrot.slane %v4246, 5
      %v4371 = vrot.slane %v4370, 4
      %v4372 = vrot.slane %v3613, 5
      %v4373 = vsel %vm1622, %v4371, %v4372
      %v4374 = vrot.slane %v4372, 4
      %v4375 = vrot.slane %v3614, 5
      %v4376 = vsel %vm1622, %v4374, %v4375
      %v4377 = vrot.slane %v4247, 5
      %v4378 = vrot.slane %v4377, 4
      %v4379 = vrot.slane %v3616, 5
      %v4380 = vsel %vm1622, %v4378, %v4379
      %v4381 = vrot.slane %v4379, 4
      %v4382 = vrot.slane %v3617, 5
      %v4383 = vsel %vm1622, %v4381, %v4382
      %v4384 = vrot.slane %v4248, 5
      %v4385 = vrot.slane %v4384, 4
      %v4386 = vrot.slane %v3619, 5
      %v4387 = vsel %vm1622, %v4385, %v4386
      %v4388 = vrot.slane %v4386, 4
      %v4389 = vrot.slane %v3620, 5
      %v4390 = vsel %vm1622, %v4388, %v4389
      %v4391 = vrot.slane %v4249, 5
      %v4392 = vrot.slane %v4391, 4
      %v4393 = vrot.slane %v3622, 5
      %v4394 = vsel %vm1622, %v4392, %v4393
      %v4395 = vrot.slane %v4393, 4
      %v4396 = vrot.slane %v3623, 5
      %v4397 = vsel %vm1622, %v4395, %v4396
      %v4398 = vrot.slane %v4250, 5
      %v4399 = vrot.slane %v4398, 4
      %v4400 = vrot.slane %v3625, 5
      %v4401 = vsel %vm1622, %v4399, %v4400
      %v4402 = vrot.slane %v4400, 4
      %v4403 = vrot.slane %v3626, 5
      %v4404 = vsel %vm1622, %v4402, %v4403
      %v4405 = vrot.slane %v4251, 5
      %v4406 = vrot.slane %v4405, 4
      %v4407 = vrot.slane %v3628, 5
      %v4408 = vsel %vm1622, %v4406, %v4407
      %v4409 = vrot.slane %v4407, 4
      %v4410 = vrot.slane %v3629, 5
      %v4411 = vsel %vm1622, %v4409, %v4410
      %s4412 = scalar_lea.vmem %s1, 16
      %v4413 = vld [vmem:[%s4412] sm:$0x3]
      %v4414 = vunpack.c.l.b16 %v4303
      %v4415 = vunpack.c.l.b16 %v4306
      %v4416 = vunpack.c.l.b16 %v4310
      %v4417 = vunpack.c.l.b16 %v4313
      %v4418 = vunpack.c.l.b16 %v4317
      %v4419 = vunpack.c.l.b16 %v4320
      %v4420 = vunpack.c.l.b16 %v4324
      %v4421 = vunpack.c.l.b16 %v4327
      %v4422 = vunpack.c.l.b16 %v4331
      %v4423 = vunpack.c.l.b16 %v4334
      %v4424 = vunpack.c.l.b16 %v4338
      %v4425 = vunpack.c.l.b16 %v4341
      %v4426 = vunpack.c.l.b16 %v4345
      %v4427 = vunpack.c.l.b16 %v4348
      %v4428 = vunpack.c.l.b16 %v4352
      %v4429 = vunpack.c.l.b16 %v4355
      %v4430 = vunpack.c.l.b16 %v4359
      %v4431 = vunpack.c.l.b16 %v4362
      %v4432 = vunpack.c.l.b16 %v4366
      %v4433 = vunpack.c.l.b16 %v4369
      %v4434 = vunpack.c.l.b16 %v4373
      %v4435 = vunpack.c.l.b16 %v4376
      %v4436 = vunpack.c.l.b16 %v4380
      %v4437 = vunpack.c.l.b16 %v4383
      %v4438 = vunpack.c.l.b16 %v4387
      %v4439 = vunpack.c.l.b16 %v4390
      %v4440 = vunpack.c.l.b16 %v4394
      %v4441 = vunpack.c.l.b16 %v4397
      %v4442 = vunpack.c.l.b16 %v4401
      %v4443 = vunpack.c.l.b16 %v4404
      %v4444 = vunpack.c.l.b16 %v4408
      %v4445 = vunpack.c.l.b16 %v4411
      %v4446 = vpack.c.b16 %v4415, %v4414
      %v4447 = vpack.c.b16 %v4417, %v4416
      %v4448 = vpack.c.b16 %v4419, %v4418
      %v4449 = vpack.c.b16 %v4421, %v4420
      %v4450 = vpack.c.b16 %v4423, %v4422
      %v4451 = vpack.c.b16 %v4425, %v4424
      %v4452 = vpack.c.b16 %v4427, %v4426
      %v4453 = vpack.c.b16 %v4429, %v4428
      %v4454 = vpack.c.b16 %v4431, %v4430
      %v4455 = vpack.c.b16 %v4433, %v4432
      %v4456 = vpack.c.b16 %v4435, %v4434
      %v4457 = vpack.c.b16 %v4437, %v4436
      %v4458 = vpack.c.b16 %v4439, %v4438
      %v4459 = vpack.c.b16 %v4441, %v4440
      %v4460 = vpack.c.b16 %v4443, %v4442
      %v4461 = vpack.c.b16 %v4445, %v4444
      %v4463 = vsel %vm1210, %v4446, 0
      %v4466 = vsel %vm1210, %v4447, 0
      %v4469 = vsel %vm1210, %v4448, 0
      %v4472 = vsel %vm1210, %v4449, 0
      %v4475 = vsel %vm1210, %v4450, 0
      %v4478 = vsel %vm1210, %v4451, 0
      %v4481 = vsel %vm1210, %v4452, 0
      %v4484 = vsel %vm1210, %v4453, 0
      %v4487 = vsel %vm1210, %v4454, 0
      %v4490 = vsel %vm1210, %v4455, 0
      %v4493 = vsel %vm1210, %v4456, 0
      %v4496 = vsel %vm1210, %v4457, 0
      %v4499 = vsel %vm1210, %v4458, 0
      %v4502 = vsel %vm1210, %v4459, 0
      %v4505 = vsel %vm1210, %v4460, 0
      %v4508 = vsel %vm1210, %v4461, 0
      %v4511 = vsel %vm1259, %v4413, 0
      %4513 = vmatpush.bf16.msra.mxu0 0
      %4514 = vmatpush.bf16.msra.mxu0 0
      %4515 = vmatpush.bf16.msra.mxu0 0
      %4516 = vmatpush.bf16.msra.mxu0 0
      %4517 = vmatpush.bf16.msra.mxu0 0
      %4518 = vmatpush.bf16.msra.mxu0 0
      %4519 = vmatpush.bf16.msra.mxu0 0
      %4520 = vmatpush.bf16.msra.mxu0 %v4511
      %4521 = vmatmul.bf16.gmra.mxu0 %v4463
      %v4522 = vpop.f32.mrf.mxu0
      %v4523 = vadd.f32 0.0, %v4522
      %v4524 = vpop.f32.mrf.mxu0
      %v4525 = vadd.f32 0.0, %v4524
      %4526 = vmatmul.bf16.gmra.mxu0 %v4466
      %v4527 = vpop.f32.mrf.mxu0
      %v4528 = vadd.f32 0.0, %v4527
      %v4529 = vpop.f32.mrf.mxu0
      %v4530 = vadd.f32 0.0, %v4529
      %4531 = vmatmul.bf16.gmra.mxu0 %v4469
      %v4532 = vpop.f32.mrf.mxu0
      %v4533 = vadd.f32 0.0, %v4532
      %v4534 = vpop.f32.mrf.mxu0
      %v4535 = vadd.f32 0.0, %v4534
      %4536 = vmatmul.bf16.gmra.mxu0 %v4472
      %v4537 = vpop.f32.mrf.mxu0
      %v4538 = vadd.f32 0.0, %v4537
      %v4539 = vpop.f32.mrf.mxu0
      %v4540 = vadd.f32 0.0, %v4539
      %4541 = vmatmul.bf16.gmra.mxu0 %v4475
      %v4542 = vpop.f32.mrf.mxu0
      %v4543 = vadd.f32 0.0, %v4542
      %v4544 = vpop.f32.mrf.mxu0
      %v4545 = vadd.f32 0.0, %v4544
      %4546 = vmatmul.bf16.gmra.mxu0 %v4478
      %v4547 = vpop.f32.mrf.mxu0
      %v4548 = vadd.f32 0.0, %v4547
      %v4549 = vpop.f32.mrf.mxu0
      %v4550 = vadd.f32 0.0, %v4549
      %4551 = vmatmul.bf16.gmra.mxu0 %v4481
      %v4552 = vpop.f32.mrf.mxu0
      %v4553 = vadd.f32 0.0, %v4552
      %v4554 = vpop.f32.mrf.mxu0
      %v4555 = vadd.f32 0.0, %v4554
      %4556 = vmatmul.bf16.gmra.mxu0 %v4484
      %v4557 = vpop.f32.mrf.mxu0
      %v4558 = vadd.f32 0.0, %v4557
      %v4559 = vpop.f32.mrf.mxu0
      %v4560 = vadd.f32 0.0, %v4559
      %4561 = vmatmul.bf16.gmra.mxu0 %v4487
      %v4562 = vpop.f32.mrf.mxu0
      %v4563 = vadd.f32 0.0, %v4562
      %v4564 = vpop.f32.mrf.mxu0
      %v4565 = vadd.f32 0.0, %v4564
      %4566 = vmatmul.bf16.gmra.mxu0 %v4490
      %v4567 = vpop.f32.mrf.mxu0
      %v4568 = vadd.f32 0.0, %v4567
      %v4569 = vpop.f32.mrf.mxu0
      %v4570 = vadd.f32 0.0, %v4569
      %4571 = vmatmul.bf16.gmra.mxu0 %v4493
      %v4572 = vpop.f32.mrf.mxu0
      %v4573 = vadd.f32 0.0, %v4572
      %v4574 = vpop.f32.mrf.mxu0
      %v4575 = vadd.f32 0.0, %v4574
      %4576 = vmatmul.bf16.gmra.mxu0 %v4496
      %v4577 = vpop.f32.mrf.mxu0
      %v4578 = vadd.f32 0.0, %v4577
      %v4579 = vpop.f32.mrf.mxu0
      %v4580 = vadd.f32 0.0, %v4579
      %4581 = vmatmul.bf16.gmra.mxu0 %v4499
      %v4582 = vpop.f32.mrf.mxu0
      %v4583 = vadd.f32 0.0, %v4582
      %v4584 = vpop.f32.mrf.mxu0
      %v4585 = vadd.f32 0.0, %v4584
      %4586 = vmatmul.bf16.gmra.mxu0 %v4502
      %v4587 = vpop.f32.mrf.mxu0
      %v4588 = vadd.f32 0.0, %v4587
      %v4589 = vpop.f32.mrf.mxu0
      %v4590 = vadd.f32 0.0, %v4589
      %4591 = vmatmul.bf16.gmra.mxu0 %v4505
      %v4592 = vpop.f32.mrf.mxu0
      %v4593 = vadd.f32 0.0, %v4592
      %v4594 = vpop.f32.mrf.mxu0
      %v4595 = vadd.f32 0.0, %v4594
      %4596 = vmatmul.bf16.gmra.mxu0 %v4508
      %v4597 = vpop.f32.mrf.mxu0
      %v4598 = vadd.f32 0.0, %v4597
      %v4599 = vpop.f32.mrf.mxu0
      %v4600 = vadd.f32 0.0, %v4599
      %4601 = vdwg.mxu0
      %v4602 = vadd.f32 %v4204, %v4523
      %v4603 = vadd.f32 %v4205, %v4525
      %v4604 = vadd.f32 %v4206, %v4528
      %v4605 = vadd.f32 %v4207, %v4530
      %v4606 = vadd.f32 %v4208, %v4533
      %v4607 = vadd.f32 %v4209, %v4535
      %v4608 = vadd.f32 %v4210, %v4538
      %v4609 = vadd.f32 %v4211, %v4540
      %v4610 = vadd.f32 %v4212, %v4543
      %v4611 = vadd.f32 %v4213, %v4545
      %v4612 = vadd.f32 %v4214, %v4548
      %v4613 = vadd.f32 %v4215, %v4550
      %v4614 = vadd.f32 %v4216, %v4553
      %v4615 = vadd.f32 %v4217, %v4555
      %v4616 = vadd.f32 %v4218, %v4558
      %v4617 = vadd.f32 %v4219, %v4560
      %v4618 = vadd.f32 %v4220, %v4563
      %v4619 = vadd.f32 %v4221, %v4565
      %v4620 = vadd.f32 %v4222, %v4568
      %v4621 = vadd.f32 %v4223, %v4570
      %v4622 = vadd.f32 %v4224, %v4573
      %v4623 = vadd.f32 %v4225, %v4575
      %v4624 = vadd.f32 %v4226, %v4578
      %v4625 = vadd.f32 %v4227, %v4580
      %v4626 = vadd.f32 %v4228, %v4583
      %v4627 = vadd.f32 %v4229, %v4585
      %v4628 = vadd.f32 %v4230, %v4588
      %v4629 = vadd.f32 %v4231, %v4590
      %v4630 = vadd.f32 %v4232, %v4593
      %v4631 = vadd.f32 %v4233, %v4595
      %v4632 = vadd.f32 %v4234, %v4598
      %v4633 = vadd.f32 %v4235, %v4600
      %vm4634 = vcmask 64512
      %v4635 = vsel %vm4634, %v4602, 0.0
      %v4636 = vsel %vm4634, %v4603, 0.0
      %v4637 = vadd.f32 %v4635, %v4636
      %v4638 = vsel %vm4634, %v4604, 0.0
      %v4639 = vadd.f32 %v4637, %v4638
      %v4640 = vsel %vm4634, %v4605, 0.0
      %v4641 = vadd.f32 %v4639, %v4640
      %v4642 = vsel %vm4634, %v4606, 0.0
      %v4643 = vadd.f32 %v4641, %v4642
      %v4644 = vsel %vm4634, %v4607, 0.0
      %v4645 = vadd.f32 %v4643, %v4644
      %v4646 = vsel %vm4634, %v4608, 0.0
      %v4647 = vadd.f32 %v4645, %v4646
      %v4648 = vsel %vm4634, %v4609, 0.0
      %v4649 = vadd.f32 %v4647, %v4648
      %v4650 = vsel %vm4634, %v4610, 0.0
      %v4651 = vadd.f32 %v4649, %v4650
      %v4652 = vsel %vm4634, %v4611, 0.0
      %v4653 = vadd.f32 %v4651, %v4652
      %v4654 = vsel %vm4634, %v4612, 0.0
      %v4655 = vadd.f32 %v4653, %v4654
      %v4656 = vsel %vm4634, %v4613, 0.0
      %v4657 = vadd.f32 %v4655, %v4656
      %v4658 = vsel %vm4634, %v4614, 0.0
      %v4659 = vadd.f32 %v4657, %v4658
      %v4660 = vsel %vm4634, %v4615, 0.0
      %v4661 = vadd.f32 %v4659, %v4660
      %v4662 = vsel %vm4634, %v4616, 0.0
      %v4663 = vadd.f32 %v4661, %v4662
      %v4664 = vsel %vm4634, %v4617, 0.0
      %v4665 = vadd.f32 %v4663, %v4664
      %v4666 = vsel %vm4634, %v4618, 0.0
      %v4667 = vadd.f32 %v4665, %v4666
      %v4668 = vsel %vm4634, %v4619, 0.0
      %v4669 = vadd.f32 %v4667, %v4668
      %v4670 = vsel %vm4634, %v4620, 0.0
      %v4671 = vadd.f32 %v4669, %v4670
      %v4672 = vsel %vm4634, %v4621, 0.0
      %v4673 = vadd.f32 %v4671, %v4672
      %v4674 = vsel %vm4634, %v4622, 0.0
      %v4675 = vadd.f32 %v4673, %v4674
      %v4676 = vsel %vm4634, %v4623, 0.0
      %v4677 = vadd.f32 %v4675, %v4676
      %v4678 = vsel %vm4634, %v4624, 0.0
      %v4679 = vadd.f32 %v4677, %v4678
      %v4680 = vsel %vm4634, %v4625, 0.0
      %v4681 = vadd.f32 %v4679, %v4680
      %v4682 = vsel %vm4634, %v4626, 0.0
      %v4683 = vadd.f32 %v4681, %v4682
      %v4684 = vsel %vm4634, %v4627, 0.0
      %v4685 = vadd.f32 %v4683, %v4684
      %v4686 = vsel %vm4634, %v4628, 0.0
      %v4687 = vadd.f32 %v4685, %v4686
      %v4688 = vsel %vm4634, %v4629, 0.0
      %v4689 = vadd.f32 %v4687, %v4688
      %v4690 = vsel %vm4634, %v4630, 0.0
      %v4691 = vadd.f32 %v4689, %v4690
      %v4692 = vsel %vm4634, %v4631, 0.0
      %v4693 = vadd.f32 %v4691, %v4692
      %v4694 = vsel %vm4634, %v4632, 0.0
      %v4695 = vadd.f32 %v4693, %v4694
      %v4696 = vsel %vm4634, %v4633, 0.0
      %v4697 = vadd.f32 %v4695, %v4696
      %v4698 = vrot.slane %v4697, 4
      %v4699 = vadd.f32 %v4697, %v4698
      %v4700 = vrot.slane %v4699, 2
      %v4701 = vadd.f32 %v4699, %v4700
      %v4702 = vrot.slane %v4701, 1
      %v4703 = vadd.f32 %v4701, %v4702
      %v4704 = vmul.f32 %v4602, %v4602
      %v4705 = vmul.f32 %v4603, %v4603
      %v4706 = vmul.f32 %v4604, %v4604
      %v4707 = vmul.f32 %v4605, %v4605
      %v4708 = vmul.f32 %v4606, %v4606
      %v4709 = vmul.f32 %v4607, %v4607
      %v4710 = vmul.f32 %v4608, %v4608
      %v4711 = vmul.f32 %v4609, %v4609
      %v4712 = vmul.f32 %v4610, %v4610
      %v4713 = vmul.f32 %v4611, %v4611
      %v4714 = vmul.f32 %v4612, %v4612
      %v4715 = vmul.f32 %v4613, %v4613
      %v4716 = vmul.f32 %v4614, %v4614
      %v4717 = vmul.f32 %v4615, %v4615
      %v4718 = vmul.f32 %v4616, %v4616
      %v4719 = vmul.f32 %v4617, %v4617
      %v4720 = vmul.f32 %v4618, %v4618
      %v4721 = vmul.f32 %v4619, %v4619
      %v4722 = vmul.f32 %v4620, %v4620
      %v4723 = vmul.f32 %v4621, %v4621
      %v4724 = vmul.f32 %v4622, %v4622
      %v4725 = vmul.f32 %v4623, %v4623
      %v4726 = vmul.f32 %v4624, %v4624
      %v4727 = vmul.f32 %v4625, %v4625
      %v4728 = vmul.f32 %v4626, %v4626
      %v4729 = vmul.f32 %v4627, %v4627
      %v4730 = vmul.f32 %v4628, %v4628
      %v4731 = vmul.f32 %v4629, %v4629
      %v4732 = vmul.f32 %v4630, %v4630
      %v4733 = vmul.f32 %v4631, %v4631
      %v4734 = vmul.f32 %v4632, %v4632
      %v4735 = vmul.f32 %v4633, %v4633
      %v4736 = vsel %vm4634, %v4704, 0.0
      %v4737 = vsel %vm4634, %v4705, 0.0
      %v4738 = vadd.f32 %v4736, %v4737
      %v4739 = vsel %vm4634, %v4706, 0.0
      %v4740 = vadd.f32 %v4738, %v4739
      %v4741 = vsel %vm4634, %v4707, 0.0
      %v4742 = vadd.f32 %v4740, %v4741
      %v4743 = vsel %vm4634, %v4708, 0.0
      %v4744 = vadd.f32 %v4742, %v4743
      %v4745 = vsel %vm4634, %v4709, 0.0
      %v4746 = vadd.f32 %v4744, %v4745
      %v4747 = vsel %vm4634, %v4710, 0.0
      %v4748 = vadd.f32 %v4746, %v4747
      %v4749 = vsel %vm4634, %v4711, 0.0
      %v4750 = vadd.f32 %v4748, %v4749
      %v4751 = vsel %vm4634, %v4712, 0.0
      %v4752 = vadd.f32 %v4750, %v4751
      %v4753 = vsel %vm4634, %v4713, 0.0
      %v4754 = vadd.f32 %v4752, %v4753
      %v4755 = vsel %vm4634, %v4714, 0.0
      %v4756 = vadd.f32 %v4754, %v4755
      %v4757 = vsel %vm4634, %v4715, 0.0
      %v4758 = vadd.f32 %v4756, %v4757
      %v4759 = vsel %vm4634, %v4716, 0.0
      %v4760 = vadd.f32 %v4758, %v4759
      %v4761 = vsel %vm4634, %v4717, 0.0
      %v4762 = vadd.f32 %v4760, %v4761
      %v4763 = vsel %vm4634, %v4718, 0.0
      %v4764 = vadd.f32 %v4762, %v4763
      %v4765 = vsel %vm4634, %v4719, 0.0
      %v4766 = vadd.f32 %v4764, %v4765
      %v4767 = vsel %vm4634, %v4720, 0.0
      %v4768 = vadd.f32 %v4766, %v4767
      %v4769 = vsel %vm4634, %v4721, 0.0
      %v4770 = vadd.f32 %v4768, %v4769
      %v4771 = vsel %vm4634, %v4722, 0.0
      %v4772 = vadd.f32 %v4770, %v4771
      %v4773 = vsel %vm4634, %v4723, 0.0
      %v4774 = vadd.f32 %v4772, %v4773
      %v4775 = vsel %vm4634, %v4724, 0.0
      %v4776 = vadd.f32 %v4774, %v4775
      %v4777 = vsel %vm4634, %v4725, 0.0
      %v4778 = vadd.f32 %v4776, %v4777
      %v4779 = vsel %vm4634, %v4726, 0.0
      %v4780 = vadd.f32 %v4778, %v4779
      %v4781 = vsel %vm4634, %v4727, 0.0
      %v4782 = vadd.f32 %v4780, %v4781
      %v4783 = vsel %vm4634, %v4728, 0.0
      %v4784 = vadd.f32 %v4782, %v4783
      %v4785 = vsel %vm4634, %v4729, 0.0
      %v4786 = vadd.f32 %v4784, %v4785
      %v4787 = vsel %vm4634, %v4730, 0.0
      %v4788 = vadd.f32 %v4786, %v4787
      %v4789 = vsel %vm4634, %v4731, 0.0
      %v4790 = vadd.f32 %v4788, %v4789
      %v4791 = vsel %vm4634, %v4732, 0.0
      %v4792 = vadd.f32 %v4790, %v4791
      %v4793 = vsel %vm4634, %v4733, 0.0
      %v4794 = vadd.f32 %v4792, %v4793
      %v4795 = vsel %vm4634, %v4734, 0.0
      %v4796 = vadd.f32 %v4794, %v4795
      %v4797 = vsel %vm4634, %v4735, 0.0
      %v4798 = vadd.f32 %v4796, %v4797
      %v4799 = vrot.slane %v4798, 4
      %v4800 = vadd.f32 %v4798, %v4799
      %v4801 = vrot.slane %v4800, 2
      %v4802 = vadd.f32 %v4800, %v4801
      %v4803 = vrot.slane %v4802, 1
      %v4804 = vadd.f32 %v4802, %v4803
      %v4805 = vmul.f32 %v4703, 0.00390625
      %v4806 = vmul.f32 %v4804, 0.00390625
      %v4807 = vmul.f32 %v4805, %v4805
      %v4808 = vsub.f32 %v4806, %v4807
      %v4809 = vmax.f32 %v4808, 0.0
      %v4810 = vsub.f32 %v4602, %v4805
      %v4811 = vsub.f32 %v4603, %v4805
      %v4812 = vsub.f32 %v4604, %v4805
      %v4813 = vsub.f32 %v4605, %v4805
      %v4814 = vsub.f32 %v4606, %v4805
      %v4815 = vsub.f32 %v4607, %v4805
      %v4816 = vsub.f32 %v4608, %v4805
      %v4817 = vsub.f32 %v4609, %v4805
      %v4818 = vsub.f32 %v4610, %v4805
      %v4819 = vsub.f32 %v4611, %v4805
      %v4820 = vsub.f32 %v4612, %v4805
      %v4821 = vsub.f32 %v4613, %v4805
      %v4822 = vsub.f32 %v4614, %v4805
      %v4823 = vsub.f32 %v4615, %v4805
      %v4824 = vsub.f32 %v4616, %v4805
      %v4825 = vsub.f32 %v4617, %v4805
      %v4826 = vsub.f32 %v4618, %v4805
      %v4827 = vsub.f32 %v4619, %v4805
      %v4828 = vsub.f32 %v4620, %v4805
      %v4829 = vsub.f32 %v4621, %v4805
      %v4830 = vsub.f32 %v4622, %v4805
      %v4831 = vsub.f32 %v4623, %v4805
      %v4832 = vsub.f32 %v4624, %v4805
      %v4833 = vsub.f32 %v4625, %v4805
      %v4834 = vsub.f32 %v4626, %v4805
      %v4835 = vsub.f32 %v4627, %v4805
      %v4836 = vsub.f32 %v4628, %v4805
      %v4837 = vsub.f32 %v4629, %v4805
      %v4838 = vsub.f32 %v4630, %v4805
      %v4839 = vsub.f32 %v4631, %v4805
      %v4840 = vsub.f32 %v4632, %v4805
      %v4841 = vsub.f32 %v4633, %v4805
      %v4842 = vadd.f32 %v4809, 1e-05
      %v4843 = vrsqrt.pop %v4842
      %v4844 = vmul.f32 %v4843, %v4842
      %v4845 = vmul.f32 %v4844, %v4843
      %v4846 = vmul.f32 0.5, %v4845
      %v4847 = vsub.f32 1.5, %v4846
      %v4848 = vmul.f32 %v4843, %v4847
      %vm4849 = vweird.f32 %v4842
      %vm4850 = vweird.f32 %v4843
      %vm4851 = vmor %vm4849, %vm4850
      %v4852 = vsel %vm4851, %v4843, %v4848
      %v4853 = vmul.f32 %v4810, %v4852
      %v4854 = vmul.f32 %v4811, %v4852
      %v4855 = vmul.f32 %v4812, %v4852
      %v4856 = vmul.f32 %v4813, %v4852
      %v4857 = vmul.f32 %v4814, %v4852
      %v4858 = vmul.f32 %v4815, %v4852
      %v4859 = vmul.f32 %v4816, %v4852
      %v4860 = vmul.f32 %v4817, %v4852
      %v4861 = vmul.f32 %v4818, %v4852
      %v4862 = vmul.f32 %v4819, %v4852
      %v4863 = vmul.f32 %v4820, %v4852
      %v4864 = vmul.f32 %v4821, %v4852
      %v4865 = vmul.f32 %v4822, %v4852
      %v4866 = vmul.f32 %v4823, %v4852
      %v4867 = vmul.f32 %v4824, %v4852
      %v4868 = vmul.f32 %v4825, %v4852
      %v4869 = vmul.f32 %v4826, %v4852
      %v4870 = vmul.f32 %v4827, %v4852
      %v4871 = vmul.f32 %v4828, %v4852
      %v4872 = vmul.f32 %v4829, %v4852
      %v4873 = vmul.f32 %v4830, %v4852
      %v4874 = vmul.f32 %v4831, %v4852
      %v4875 = vmul.f32 %v4832, %v4852
      %v4876 = vmul.f32 %v4833, %v4852
      %v4877 = vmul.f32 %v4834, %v4852
      %v4878 = vmul.f32 %v4835, %v4852
      %v4879 = vmul.f32 %v4836, %v4852
      %v4880 = vmul.f32 %v4837, %v4852
      %v4881 = vmul.f32 %v4838, %v4852
      %v4882 = vmul.f32 %v4839, %v4852
      %v4883 = vmul.f32 %v4840, %v4852
      %v4884 = vmul.f32 %v4841, %v4852
      %v4885 = vmax.f32 %v4853, 0.0
      %v4886 = vmax.f32 %v4854, 0.0
      %v4887 = vmax.f32 %v4855, 0.0
      %v4888 = vmax.f32 %v4856, 0.0
      %v4889 = vmax.f32 %v4857, 0.0
      %v4890 = vmax.f32 %v4858, 0.0
      %v4891 = vmax.f32 %v4859, 0.0
      %v4892 = vmax.f32 %v4860, 0.0
      %v4893 = vmax.f32 %v4861, 0.0
      %v4894 = vmax.f32 %v4862, 0.0
      %v4895 = vmax.f32 %v4863, 0.0
      %v4896 = vmax.f32 %v4864, 0.0
      %v4897 = vmax.f32 %v4865, 0.0
      %v4898 = vmax.f32 %v4866, 0.0
      %v4899 = vmax.f32 %v4867, 0.0
      %v4900 = vmax.f32 %v4868, 0.0
      %v4901 = vmax.f32 %v4869, 0.0
      %v4902 = vmax.f32 %v4870, 0.0
      %v4903 = vmax.f32 %v4871, 0.0
      %v4904 = vmax.f32 %v4872, 0.0
      %v4905 = vmax.f32 %v4873, 0.0
      %v4906 = vmax.f32 %v4874, 0.0
      %v4907 = vmax.f32 %v4875, 0.0
      %v4908 = vmax.f32 %v4876, 0.0
      %v4909 = vmax.f32 %v4877, 0.0
      %v4910 = vmax.f32 %v4878, 0.0
      %v4911 = vmax.f32 %v4879, 0.0
      %v4912 = vmax.f32 %v4880, 0.0
      %v4913 = vmax.f32 %v4881, 0.0
      %v4914 = vmax.f32 %v4882, 0.0
      %v4915 = vmax.f32 %v4883, 0.0
      %v4916 = vmax.f32 %v4884, 0.0
      %v4917 = vpack.c.bf16 %v4885, %v4885
      %v4918 = vpack.c.bf16 %v4886, %v4886
      %v4919 = vpack.c.bf16 %v4887, %v4887
      %v4920 = vpack.c.bf16 %v4888, %v4888
      %v4921 = vpack.c.bf16 %v4889, %v4889
      %v4922 = vpack.c.bf16 %v4890, %v4890
      %v4923 = vpack.c.bf16 %v4891, %v4891
      %v4924 = vpack.c.bf16 %v4892, %v4892
      %v4925 = vpack.c.bf16 %v4893, %v4893
      %v4926 = vpack.c.bf16 %v4894, %v4894
      %v4927 = vpack.c.bf16 %v4895, %v4895
      %v4928 = vpack.c.bf16 %v4896, %v4896
      %v4929 = vpack.c.bf16 %v4897, %v4897
      %v4930 = vpack.c.bf16 %v4898, %v4898
      %v4931 = vpack.c.bf16 %v4899, %v4899
      %v4932 = vpack.c.bf16 %v4900, %v4900
      %v4933 = vpack.c.bf16 %v4901, %v4901
      %v4934 = vpack.c.bf16 %v4902, %v4902
      %v4935 = vpack.c.bf16 %v4903, %v4903
      %v4936 = vpack.c.bf16 %v4904, %v4904
      %v4937 = vpack.c.bf16 %v4905, %v4905
      %v4938 = vpack.c.bf16 %v4906, %v4906
      %v4939 = vpack.c.bf16 %v4907, %v4907
      %v4940 = vpack.c.bf16 %v4908, %v4908
      %v4941 = vpack.c.bf16 %v4909, %v4909
      %v4942 = vpack.c.bf16 %v4910, %v4910
      %v4943 = vpack.c.bf16 %v4911, %v4911
      %v4944 = vpack.c.bf16 %v4912, %v4912
      %v4945 = vpack.c.bf16 %v4913, %v4913
      %v4946 = vpack.c.bf16 %v4914, %v4914
      %v4947 = vpack.c.bf16 %v4915, %v4915
      %v4948 = vpack.c.bf16 %v4916, %v4916
      %vm4949 = vcmask 60416
      %4950 = vst.msk [vmem:[%s143] sm:$0xf] %vm4949, %v4917
      %4951 = vst.msk [vmem:[%s143 + $0x4] sm:$0xf] %vm4949, %v4918
      %4952 = vst.msk [vmem:[%s143 + $0x8] sm:$0xf] %vm4949, %v4919
      %4953 = vst.msk [vmem:[%s143 + $0xc] sm:$0xf] %vm4949, %v4920
      %4954 = vst.msk [vmem:[%s143 + $0x10] sm:$0xf] %vm4949, %v4921
      %4955 = vst.msk [vmem:[%s143 + $0x14] sm:$0xf] %vm4949, %v4922
      %4956 = vst.msk [vmem:[%s143 + $0x18] sm:$0xf] %vm4949, %v4923
      %4957 = vst.msk [vmem:[%s143 + $0x1c] sm:$0xf] %vm4949, %v4924
      %4958 = vst.msk [vmem:[%s143 + $0x20] sm:$0xf] %vm4949, %v4925
      %4959 = vst.msk [vmem:[%s143 + $0x24] sm:$0xf] %vm4949, %v4926
      %4960 = vst.msk [vmem:[%s143 + $0x28] sm:$0xf] %vm4949, %v4927
      %4961 = vst.msk [vmem:[%s143 + $0x2c] sm:$0xf] %vm4949, %v4928
      %4962 = vst.msk [vmem:[%s143 + $0x30] sm:$0xf] %vm4949, %v4929
      %4963 = vst.msk [vmem:[%s143 + $0x34] sm:$0xf] %vm4949, %v4930
      %4964 = vst.msk [vmem:[%s143 + $0x38] sm:$0xf] %vm4949, %v4931
      %4965 = vst.msk [vmem:[%s143 + $0x3c] sm:$0xf] %vm4949, %v4932
      %4966 = vst.msk [vmem:[%s143 + $0x40] sm:$0xf] %vm4949, %v4933
      %4967 = vst.msk [vmem:[%s143 + $0x44] sm:$0xf] %vm4949, %v4934
      %4968 = vst.msk [vmem:[%s143 + $0x48] sm:$0xf] %vm4949, %v4935
      %4969 = vst.msk [vmem:[%s143 + $0x4c] sm:$0xf] %vm4949, %v4936
      %4970 = vst.msk [vmem:[%s143 + $0x50] sm:$0xf] %vm4949, %v4937
      %4971 = vst.msk [vmem:[%s143 + $0x54] sm:$0xf] %vm4949, %v4938
      %4972 = vst.msk [vmem:[%s143 + $0x58] sm:$0xf] %vm4949, %v4939
      %4973 = vst.msk [vmem:[%s143 + $0x5c] sm:$0xf] %vm4949, %v4940
      %4974 = vst.msk [vmem:[%s143 + $0x60] sm:$0xf] %vm4949, %v4941
      %4975 = vst.msk [vmem:[%s143 + $0x64] sm:$0xf] %vm4949, %v4942
      %4976 = vst.msk [vmem:[%s143 + $0x68] sm:$0xf] %vm4949, %v4943
      %4977 = vst.msk [vmem:[%s143 + $0x6c] sm:$0xf] %vm4949, %v4944
      %4978 = vst.msk [vmem:[%s143 + $0x70] sm:$0xf] %vm4949, %v4945
      %4979 = vst.msk [vmem:[%s143 + $0x74] sm:$0xf] %vm4949, %v4946
      %4980 = vst.msk [vmem:[%s143 + $0x78] sm:$0xf] %vm4949, %v4947
      %4981 = vst.msk [vmem:[%s143 + $0x7c] sm:$0xf] %vm4949, %v4948
      %p4982 = scmp.lt.s32.totalorder %s13, 1
      %s4983 = scalar_select %p4982, %s13, 1
      %s4984 = smul.addr %s4983, 32
      %s4985 = smul.addr %s4984, 4
      %s4986 = scalar_lea.vmem %s2, %s4985
      // Predicated region
      $region29: #{pallas_forward.4} parent=27 // pred_check
        %p4987 = pneg %p78
      $region30: #{pallas_forward.4} parent=27 // pred_check_branch
        %4989 = sbr.rel (%p4987) target = $region32
      $region31: #{pallas_forward.4} parent=27 // pred_region
        _
      $region32: #{pallas_forward.4} parent=27 // pred_fallthru
        _
    $region28: #{pallas_forward.4} parent=5 // pred_fallthru
      _
    %p4990 = scmp.le.s32.totalorder 2, %s8
    // Predicated region
    $region33: #{pallas_forward.4} parent=5 // pred_check
      %p4991 = pneg %p4990
    $region34: #{pallas_forward.4} parent=5 // pred_check_branch
      %4993 = sbr.rel (%p4991) target = $region36
    $region35: #{pallas_forward.4} parent=5 // pred_region
      %s4994 = ssub.s32 %s8, 2
      // Predicated region
      $region37: #{pallas_forward.4} parent=35 // pred_check
        %p4995 = pneg %p84
      $region38: #{pallas_forward.4} parent=35 // pred_check_branch
        %4997 = sbr.rel (%p4995) target = $region40
      $region39: #{pallas_forward.4} parent=35 // pred_region
        %p4998 = scmp.lt.s32.totalorder %s14, 1
        %s4999 = scalar_select %p4998, %s14, 1
        %s5000 = smul.addr %s4999, 32
        %s5001 = smul.addr %s5000, 4
        %s5002 = scalar_lea.vmem %s2, %s5001
      $region40: #{pallas_forward.4} parent=35 // pred_fallthru
        _
    $region36: #{pallas_forward.4} parent=5 // pred_fallthru
      _
  $region6: #{pallas_forward.4} parent=0 // loop_footer
    %s12 = sadd.s32 1, %s8
  $region7: #{pallas_forward.4} parent=0 // loop_footer_branch
    %7 = sbr.rel target = $region3
  $region8: #{pallas_forward.4} parent=0 // loop_exit
    _

</llo_original>
